<compile_context>
chip_gen: v5e
topology: v5e:2x2
jax: 0.10.0
libtpu: 0.0.40
codegen_flags: <defaults>
</compile_context>

<pallas_src>
import functools

import jax
import jax.numpy as jnp
from jax.experimental import pallas as pl
from jax.experimental.pallas import tpu as pltpu

NEG = -1.0e9
LANE = 128
SUB = 8


def _round_up(x, m):
    return ((x + m - 1) // m) * m


def _pick_time_block(T):
    """TT timesteps per grid step (8..32), single block for short sequences."""
    if T <= 32:
        return _round_up(T, SUB)
    return 16


# ----------------------------------------------------------------------------
# Pallas kernel 1: fused fw+bw LSTM recurrence (PyTorch gate order i,f,g,o),
# TT timesteps per grid step.  Input projections (x @ W_ih + b) are hoisted;
# gates are padded so each gate occupies an aligned 128-lane block and padded
# lanes stay exactly zero.
# ----------------------------------------------------------------------------
def _bilstm_kernel(xpf_ref, xpb_ref, whhf_ref, whhb_ref,
                   hf_out_ref, hb_out_ref,
                   h_fw, c_fw, h_bw, c_bw):
    blk = pl.program_id(0)
    TT = xpf_ref.shape[0]
    Hp = h_fw.shape[-1]

    @pl.when(blk == 0)
    def _():
        h_fw[...] = jnp.zeros_like(h_fw)
        c_fw[...] = jnp.zeros_like(c_fw)
        h_bw[...] = jnp.zeros_like(h_bw)
        c_bw[...] = jnp.zeros_like(c_bw)

    def cell(xp_t, h_ref, c_ref, whh_ref):
        gates = xp_t + jnp.dot(h_ref[...], whh_ref[...],
                               preferred_element_type=jnp.float32)   # (B, 4Hp)
        i_g = jax.nn.sigmoid(gates[:, 0 * Hp:1 * Hp])
        f_g = jax.nn.sigmoid(gates[:, 1 * Hp:2 * Hp])
        g_g = jnp.tanh(gates[:, 2 * Hp:3 * Hp])
        o_g = jax.nn.sigmoid(gates[:, 3 * Hp:4 * Hp])
        c_new = f_g * c_ref[...] + i_g * g_g
        h_new = o_g * jnp.tanh(c_new)
        c_ref[...] = c_new
        h_ref[...] = h_new
        return h_new

    def step(tt, carry):
        hf_out_ref[tt] = cell(xpf_ref[tt], h_fw, c_fw, whhf_ref)
        hb_out_ref[tt] = cell(xpb_ref[tt], h_bw, c_bw, whhb_ref)
        return carry

    jax.lax.fori_loop(0, TT, step, 0, unroll=True)


def bilstm_run(xp_fw, xp_bw, whh_fw_p, whh_bw_p, tt):
    """xp_*: [T_pad, B, 4*Hp] f32 (hoisted projections); whh_*_p: [Hp, 4*Hp]."""
    Tp, B, G = xp_fw.shape
    Hp = G // 4
    return pl.pallas_call(
        _bilstm_kernel,
        out_shape=(jax.ShapeDtypeStruct((Tp, B, Hp), jnp.float32),
                   jax.ShapeDtypeStruct((Tp, B, Hp), jnp.float32)),
        grid_spec=pltpu.PrefetchScalarGridSpec(
            num_scalar_prefetch=0,
            grid=(Tp // tt,),
            in_specs=[
                pl.BlockSpec((tt, B, G), lambda i: (i, 0, 0)),
                pl.BlockSpec((tt, B, G), lambda i: (i, 0, 0)),
                pl.BlockSpec((Hp, G), lambda i: (0, 0)),
                pl.BlockSpec((Hp, G), lambda i: (0, 0)),
            ],
            out_specs=[
                pl.BlockSpec((tt, B, Hp), lambda i: (i, 0, 0)),
                pl.BlockSpec((tt, B, Hp), lambda i: (i, 0, 0)),
            ],
            scratch_shapes=[pltpu.VMEM((B, Hp), jnp.float32)] * 4,
        ),
        compiler_params=pltpu.CompilerParams(dimension_semantics=("arbitrary",)),
    )(xp_fw, xp_bw, whh_fw_p, whh_bw_p)


# ----------------------------------------------------------------------------
# Pallas kernel 2: fused hidden2tag projection + CRF viterbi forward recurrence
# (max-plus), masked by (t < length).  TT timesteps per grid step.  The cur
# axis of the max-plus cube is shrunk to Nc=round_up(ntags,8) sublanes; the
# prev axis stays 128-lane dense and so do the part / bp stores.
# ----------------------------------------------------------------------------
def _tag_viterbi_kernel(hf_ref, hb_ref, wt_top_ref, wt_bot_ref, bt_ref,
                        transTc_ref, start_ref, len_ref, bp_ref, part_ref):
    blk = pl.program_id(0)
    TT, B, _ = hf_ref.shape
    Np = part_ref.shape[-1]
    Nc = transTc_ref.shape[0]

    # small constants hoisted out of the per-timestep loop
    trans_tc = transTc_ref[...]                                        # (Nc, Np)
    bias = bt_ref[...]                                                 # (1, Np)
    lens = len_ref[...]                                                # (B, 1)
    ident_full = jax.lax.broadcasted_iota(jnp.int32, (B, Np), 1)
    idx_cube = jax.lax.broadcasted_iota(jnp.int32, (B, Nc, Np), 2)
    if Nc < Np:
        ident_pad = jax.lax.broadcasted_iota(jnp.int32, (B, Np - Nc), 1) + Nc
        neg_pad = jnp.full((B, Np - Nc), NEG, jnp.float32)
    else:
        ident_pad = None
        neg_pad = None

    def pad_lanes(x_c, pad_arr):
        if Nc == Np:
            return x_c
        return jnp.concatenate([x_c, pad_arr], axis=-1)

    def feat_at(tt):
        # hidden2tag fused in: two K=Hp dots instead of a concat'd slab
        return (jnp.dot(hf_ref[tt], wt_top_ref[...],
                        preferred_element_type=jnp.float32)
                + jnp.dot(hb_ref[tt], wt_bot_ref[...],
                          preferred_element_type=jnp.float32)
                + bias)                                                # (B, Np)

    @pl.when(blk == 0)
    def _():
        # t == 0: transition from the START tag, no recurrence yet.
        part_ref[...] = feat_at(0) + start_ref[...]

    def step(tt, carry):
        t = blk * TT + tt
        feat = feat_at(tt)                                             # (B, Np)
        old = part_ref[...]                                            # (B, Np)
        # scores[b, cur, prev] = old[b, prev] + trans[prev, cur]
        scores = old[:, None, :] + trans_tc[None, :, :]                # (B,Nc,Np)
        best = jnp.max(scores, axis=-1)                                # (B, Nc)
        argbest = jnp.min(jnp.where(scores >= best[:, :, None], idx_cube, Np),
                          axis=-1).astype(jnp.int32)                   # (B, Nc)
        new_part = pad_lanes(best + feat[:, :Nc], neg_pad)             # (B, Np)
        new_bp = pad_lanes(argbest, ident_pad)                         # (B, Np)
        do = jnp.logical_and(lens > t, t > 0)                          # (B, 1)
        part_ref[...] = jnp.where(do, new_part, old)
        bp_ref[tt] = jnp.where(do, new_bp, ident_full)
        return carry

    jax.lax.fori_loop(0, TT, step, 0, unroll=True)


def tag_viterbi_run(hf, hb, w_top_p, w_bot_p, b_tag_p, trans_tc_p,
                    start_row_p, lens_b1, tt):
    Tp, B, Hp = hf.shape
    Np = w_top_p.shape[1]
    Nc = trans_tc_p.shape[0]
    return pl.pallas_call(
        _tag_viterbi_kernel,
        out_shape=(jax.ShapeDtypeStruct((Tp, B, Np), jnp.int32),
                   jax.ShapeDtypeStruct((B, Np), jnp.float32)),
        grid_spec=pltpu.PrefetchScalarGridSpec(
            num_scalar_prefetch=0,
            grid=(Tp // tt,),
            in_specs=[
                pl.BlockSpec((tt, B, Hp), lambda i: (i, 0, 0)),
                pl.BlockSpec((tt, B, Hp), lambda i: (i, 0, 0)),
                pl.BlockSpec((Hp, Np), lambda i: (0, 0)),
                pl.BlockSpec((Hp, Np), lambda i: (0, 0)),
                pl.BlockSpec((1, Np), lambda i: (0, 0)),
                pl.BlockSpec((Nc, Np), lambda i: (0, 0)),
                pl.BlockSpec((1, Np), lambda i: (0, 0)),
                pl.BlockSpec((B, 1), lambda i: (0, 0)),
            ],
            out_specs=[
                pl.BlockSpec((tt, B, Np), lambda i: (i, 0, 0)),
                pl.BlockSpec((B, Np), lambda i: (0, 0)),
            ],
        ),
        compiler_params=pltpu.CompilerParams(dimension_semantics=("arbitrary",)),
    )(hf, hb, w_top_p, w_bot_p, b_tag_p, trans_tc_p, start_row_p, lens_b1)


# ----------------------------------------------------------------------------
# Plain-JAX glue
# ----------------------------------------------------------------------------
def reverse_padded_sequence(x, lengths):
    """Reverse each sequence within its valid length; padding stays in place.
    x: [B, T, ...], lengths: [B] int32."""
    B, T = x.shape[0], x.shape[1]
    pos = jnp.arange(T)[None, :]
    L = lengths[:, None]
    idx = jnp.where(pos < L, L - 1 - pos, pos)        # (B, T)
    idx = idx.reshape((B, T) + (1,) * (x.ndim - 2))
    idx = jnp.broadcast_to(idx, (B, T) + x.shape[2:])
    return jnp.take_along_axis(x, idx, axis=1)


def _pad_lstm_params(w_ih, w_hh, b, H, Hp):
    """Re-lay gate weights so each gate occupies an aligned Hp(=128)-lane block."""
    E = w_ih.shape[0]
    w_ih_p = jnp.zeros((E, 4 * Hp), jnp.float32)
    w_hh_p = jnp.zeros((Hp, 4 * Hp), jnp.float32)
    b_p = jnp.zeros((1, 4 * Hp), jnp.float32)
    for g in range(4):
        w_ih_p = w_ih_p.at[:, g * Hp:g * Hp + H].set(w_ih[:, g * H:(g + 1) * H])
        w_hh_p = w_hh_p.at[:H, g * Hp:g * Hp + H].set(w_hh[:, g * H:(g + 1) * H])
        b_p = b_p.at[:, g * Hp:g * Hp + H].set(b[:, g * H:(g + 1) * H])
    # TODO(synk): when 4*H <= 128 a single packed-gate 128-lane layout would
    # cut EUP (sigmoid/tanh) work ~4x; kept the aligned-gate layout for safety.
    return w_ih_p, w_hh_p, b_p


def char_ner_forward(params, char_inputs, char_seq_lengths, mask):
    """Forward pass mirroring Char_NER.forward -> returns tag_seq [B, T] int32."""
    B, T = char_inputs.shape
    H = params["w_hh_fw"].shape[0]
    ntags = params["trans"].shape[0]
    Hp = _round_up(H, LANE)
    Np = _round_up(ntags, LANE)
    Nc = _round_up(ntags, SUB)              # 'cur' axis of the viterbi cube
    start_tag, stop_tag = ntags - 2, ntags - 1
    TT = _pick_time_block(T)
    T_pad = _round_up(T, TT)

    # embedding lookup; reversed embeddings reuse the same gather (glue)
    char_emb = jnp.take(params["embedding"], char_inputs, axis=0)        # (B,T,E)
    rev_char_emb = reverse_padded_sequence(char_emb, char_seq_lengths)   # (B,T,E)
    x_fw = jnp.transpose(char_emb, (1, 0, 2)).astype(jnp.float32)        # (T,B,E)
    x_bw = jnp.transpose(rev_char_emb, (1, 0, 2)).astype(jnp.float32)    # (T,B,E)

    # lane-aligned (padded) parameter layout; constant-folded under jit
    wih_fw_p, whh_fw_p, b_fw_p = _pad_lstm_params(
        params["w_ih_fw"], params["w_hh_fw"], params["b_fw"], H, Hp)
    wih_bw_p, whh_bw_p, b_bw_p = _pad_lstm_params(
        params["w_ih_bw"], params["w_hh_bw"], params["b_bw"], H, Hp)

    # hoisted input projections: one batched matmul per direction (plain XLA)
    # TODO(synk): on v5e, if the LSTM kernel profiles DMA-bound, fold this
    # projection back into the kernel and stream x instead of xp.
    xp_fw = jnp.einsum('tbe,ef->tbf', x_fw, wih_fw_p) + b_fw_p           # (T,B,4Hp)
    xp_bw = jnp.einsum('tbe,ef->tbf', x_bw, wih_bw_p) + b_bw_p           # (T,B,4Hp)
    pad_t = ((0, T_pad - T), (0, 0), (0, 0))
    xp_fw = jnp.pad(xp_fw, pad_t)
    xp_bw = jnp.pad(xp_bw, pad_t)

    # Char_BiLSTM: fused fw + bw recurrence, TT timesteps per grid step.
    # TODO(synk): Char_BiLSTM source not provided; assuming standard semantics
    # (re-reverse the backward outputs by length, combine along feature dim).
    h_fw_p, h_bw_p = bilstm_run(xp_fw, xp_bw, whh_fw_p, whh_bw_p, TT)    # (Tp,B,Hp)

    # re-align the backward direction in time (per-sequence length, glue)
    h_bw_al = reverse_padded_sequence(jnp.transpose(h_bw_p, (1, 0, 2)),
                                      char_seq_lengths)                  # (B,Tp,Hp)
    hb = jnp.transpose(h_bw_al, (1, 0, 2))                               # (Tp,B,Hp)
    hf = h_fw_p                                                          # (Tp,B,Hp)

    # padded hidden2tag + CRF params (NCRF++-style START/STOP transitions).
    # TODO(synk): CRF source not provided; implements standard masked viterbi.
    w_tag, b_tag, trans = params["w_tag"], params["b_tag"], params["trans"]
    w_top_p = jnp.zeros((Hp, Np), jnp.float32).at[:H, :ntags].set(w_tag[:H])
    w_bot_p = jnp.zeros((Hp, Np), jnp.float32).at[:H, :ntags].set(w_tag[H:2 * H])
    b_tag_p = jnp.full((1, Np), NEG, jnp.float32).at[0, :ntags].set(b_tag[0])
    trans_p = jnp.full((Np, Np), NEG, jnp.float32).at[:ntags, :ntags].set(trans)
    trans_tc_p = trans_p.T[:Nc, :]                                       # [cur,prev]
    start_row_p = jnp.full((1, Np), NEG, jnp.float32).at[0, :ntags].set(
        trans[start_tag])
    lens_b1 = char_seq_lengths.astype(jnp.int32).reshape(B, 1)

    # fused hidden2tag + viterbi forward recurrence (Pallas)
    bp, part = tag_viterbi_run(hf, hb, w_top_p, w_bot_p, b_tag_p,
                               trans_tc_p, start_row_p, lens_b1, TT)
    bp = bp[:T]                                                          # (T,B,Np)

    # backtrace (glue); padded tags sit at <= -1e9 so they are never selected
    final = part + trans_p[:, stop_tag][None, :]                         # (B,Np)
    last_tag = jnp.argmax(final, axis=-1).astype(jnp.int32)              # (B,)

    def back_step(tag, bp_t):
        prev = jnp.take_along_axis(bp_t, tag[:, None], axis=-1)[:, 0]
        return prev, prev

    bps_rev = bp[1:][::-1]                                               # (T-1,B,Np)
    _, prevs = jax.lax.scan(back_step, last_tag, bps_rev)                # (T-1,B)
    tags = jnp.concatenate([jnp.transpose(prevs[::-1], (1, 0)),
                            last_tag[:, None]], axis=1)                  # (B,T)
    tag_seq = jnp.where(mask, tags, 0).astype(jnp.int32)
    return tag_seq


# ----------------------------------------------------------------------------
# Deterministic parameter construction (synthetic, mirrors __init__ shapes)
# ----------------------------------------------------------------------------
def make_params(key, vocab, emb_dim, hidden_dim, label_size):
    ntags = label_size + 2
    ks = jax.random.split(key, 10)
    scale = jnp.sqrt(3.0 / emb_dim)
    params = {
        # nn.Embedding(char_alphabet.size(), emb_dim), random_embedding init
        "embedding": jax.random.uniform(ks[0], (vocab, emb_dim), jnp.float32,
                                        -scale, scale),
        # forward / backward unidirectional LSTMs, hidden = hidden_dim each
        "w_ih_fw": 0.1 * jax.random.normal(ks[1], (emb_dim, 4 * hidden_dim)),
        "w_hh_fw": 0.1 * jax.random.normal(ks[2], (hidden_dim, 4 * hidden_dim)),
        "b_fw": 0.1 * jax.random.normal(ks[3], (1, 4 * hidden_dim)),
        "w_ih_bw": 0.1 * jax.random.normal(ks[4], (emb_dim, 4 * hidden_dim)),
        "w_hh_bw": 0.1 * jax.random.normal(ks[5], (hidden_dim, 4 * hidden_dim)),
        "b_bw": 0.1 * jax.random.normal(ks[6], (1, 4 * hidden_dim)),
        # nn.Linear(hidden_dim * 2, label_alphabet_size + 2)
        "w_tag": 0.1 * jax.random.normal(ks[7], (2 * hidden_dim, ntags)),
        "b_tag": 0.1 * jax.random.normal(ks[8], (1, ntags)),
    }
    # CRF transitions (ntags x ntags), NCRF++ constraints on START/STOP
    trans = 0.1 * jax.random.normal(ks[9], (ntags, ntags))
    start_tag, stop_tag = ntags - 2, ntags - 1
    trans = trans.at[:, start_tag].set(-10000.0)
    trans = trans.at[stop_tag, :].set(-10000.0)
    params["trans"] = trans.astype(jnp.float32)
    return {k: v.astype(jnp.float32) if v.dtype != jnp.int32 else v
            for k, v in params.items()}


if __name__ == "__main__":
    B, T = 2, 8
    VOCAB, EMB, HID, LABELS = 50, 32, 32, 6          # ntags = 8

    key = jax.random.PRNGKey(0)
    k_par, k_ids = jax.random.split(key)
    params = make_params(k_par, VOCAB, EMB, HID, LABELS)

    char_inputs = jax.random.randint(k_ids, (B, T), 1, VOCAB, dtype=jnp.int32)
    char_seq_lengths = jnp.array([T, 5], dtype=jnp.int32)
    mask = (jnp.arange(T)[None, :] < char_seq_lengths[:, None])          # (B,T) bool
    char_inputs = jnp.where(mask, char_inputs, 0)

    fwd = jax.jit(functools.partial(char_ner_forward, params))
    tag_seq = fwd(char_inputs, char_seq_lengths, mask)
    jax.block_until_ready(tag_seq)
    assert tag_seq.shape == (B, T)
    assert int(jnp.max(tag_seq)) < LABELS + 2       # padded tags never decoded
    print("KERNEL_OK")
</pallas_src>

<mosaic_0001>
module attributes {stable_mosaic.version = 11 : i64} {
  func.func @_bilstm_kernel(%arg0: i32, %arg1: memref<8x2x512xf32, #tpu.memory_space<vmem>>, %arg2: memref<8x2x512xf32, #tpu.memory_space<vmem>>, %arg3: memref<128x512xf32, #tpu.memory_space<vmem>>, %arg4: memref<128x512xf32, #tpu.memory_space<vmem>>, %arg5: memref<8x2x128xf32, #tpu.memory_space<vmem>>, %arg6: memref<8x2x128xf32, #tpu.memory_space<vmem>>, %arg7: memref<2x128xf32, #tpu.memory_space<vmem>>, %arg8: memref<2x128xf32, #tpu.memory_space<vmem>>, %arg9: memref<2x128xf32, #tpu.memory_space<vmem>>, %arg10: memref<2x128xf32, #tpu.memory_space<vmem>>) attributes {dimension_semantics = [#tpu.dimension_semantics<arbitrary>], iteration_bounds = array<i64: 1>, scalar_prefetch = 0 : i64, scratch_operands = 4 : i64, tpu.core_type = #tpu.core_type<tc>, window_params = [{transform_indices = @transform_0, window_bounds = array<i64: 8, 2, 512>}, {transform_indices = @transform_1, window_bounds = array<i64: 8, 2, 512>}, {pipeline_mode = #tpu.pipeline_mode<synchronous>, transform_indices = @transform_2, window_bounds = array<i64: 128, 512>}, {pipeline_mode = #tpu.pipeline_mode<synchronous>, transform_indices = @transform_3, window_bounds = array<i64: 128, 512>}, {transform_indices = @transform_4, window_bounds = array<i64: 8, 2, 128>}, {transform_indices = @transform_5, window_bounds = array<i64: 8, 2, 128>}]} {
    %c0_i32 = arith.constant 0 : i32
    %0 = arith.cmpi eq, %arg0, %c0_i32 : i32
    %1 = arith.extui %0 : i1 to i32
    %c0_i32_0 = arith.constant 0 : i32
    %2 = arith.cmpi ne, %1, %c0_i32_0 : i32
    scf.if %2 {
      %cst_288 = arith.constant 0.000000e+00 : f32
      %627 = vector.broadcast %cst_288 : f32 to vector<2x128xf32>
      %c0_289 = arith.constant 0 : index
      %c0_290 = arith.constant 0 : index
      %628 = vector.load %arg7[%c0_289, %c0_290] : memref<2x128xf32, #tpu.memory_space<vmem>>, vector<2x128xf32>
      tpu.vector_store %arg7[%c0_289, %c0_290], %627 {strides = array<i32>} : memref<2x128xf32, #tpu.memory_space<vmem>>, vector<2x128xf32>,
      %cst_291 = arith.constant 0.000000e+00 : f32
      %629 = vector.broadcast %cst_291 : f32 to vector<2x128xf32>
      %c0_292 = arith.constant 0 : index
      %c0_293 = arith.constant 0 : index
      %630 = vector.load %arg8[%c0_292, %c0_293] : memref<2x128xf32, #tpu.memory_space<vmem>>, vector<2x128xf32>
      tpu.vector_store %arg8[%c0_292, %c0_293], %629 {strides = array<i32>} : memref<2x128xf32, #tpu.memory_space<vmem>>, vector<2x128xf32>,
      %cst_294 = arith.constant 0.000000e+00 : f32
      %631 = vector.broadcast %cst_294 : f32 to vector<2x128xf32>
      %c0_295 = arith.constant 0 : index
      %c0_296 = arith.constant 0 : index
      %632 = vector.load %arg9[%c0_295, %c0_296] : memref<2x128xf32, #tpu.memory_space<vmem>>, vector<2x128xf32>
      tpu.vector_store %arg9[%c0_295, %c0_296], %631 {strides = array<i32>} : memref<2x128xf32, #tpu.memory_space<vmem>>, vector<2x128xf32>,
      %cst_297 = arith.constant 0.000000e+00 : f32
      %633 = vector.broadcast %cst_297 : f32 to vector<2x128xf32>
      %c0_298 = arith.constant 0 : index
      %c0_299 = arith.constant 0 : index
      %634 = vector.load %arg10[%c0_298, %c0_299] : memref<2x128xf32, #tpu.memory_space<vmem>>, vector<2x128xf32>
      tpu.vector_store %arg10[%c0_298, %c0_299], %633 {strides = array<i32>} : memref<2x128xf32, #tpu.memory_space<vmem>>, vector<2x128xf32>,
    } else {
    }
    %c0_i32_1 = arith.constant 0 : i32
    %3 = arith.index_cast %c0_i32_1 : i32 to index
    %c0 = arith.constant 0 : index
    %c0_2 = arith.constant 0 : index
    %4 = vector.load %arg1[%3, %c0, %c0_2] : memref<8x2x512xf32, #tpu.memory_space<vmem>>, vector<1x2x512xf32>
    %5 = vector.shape_cast %4 : vector<1x2x512xf32> to vector<2x512xf32>
    %c0_3 = arith.constant 0 : index
    %c0_4 = arith.constant 0 : index
    %6 = vector.load %arg7[%c0_3, %c0_4] : memref<2x128xf32, #tpu.memory_space<vmem>>, vector<2x128xf32>
    %c0_5 = arith.constant 0 : index
    %c0_6 = arith.constant 0 : index
    %7 = vector.load %arg3[%c0_5, %c0_6] : memref<128x512xf32, #tpu.memory_space<vmem>>, vector<128x512xf32>
    %cst = arith.constant dense<0.000000e+00> : vector<2x512xf32>
    %8 = tpu.matmul %6, %7, %cst {dimension_numbers = #tpu.dot_dimension_numbers<[1], [0], [0], [1], [0, 0, 1, 1], [], []>} : vector<2x128xf32>, vector<128x512xf32>, vector<2x512xf32> -> vector<2x512xf32>
    %9 = arith.addf %5, %8 : vector<2x512xf32>
    %10 = vector.extract_strided_slice %9 {offsets = [0, 0], sizes = [2, 128], strides = [1, 1]} : vector<2x512xf32> to vector<2x128xf32>
    %11 = arith.negf %10 : vector<2x128xf32>
    %12 = math.exp %11 : vector<2x128xf32>
    %cst_7 = arith.constant 1.000000e+00 : f32
    %13 = vector.broadcast %cst_7 : f32 to vector<2x128xf32>
    %14 = arith.addf %13, %12 : vector<2x128xf32>
    %15 = arith.divf %13, %14 : vector<2x128xf32>
    %16 = vector.extract_strided_slice %9 {offsets = [0, 128], sizes = [2, 128], strides = [1, 1]} : vector<2x512xf32> to vector<2x128xf32>
    %17 = arith.negf %16 : vector<2x128xf32>
    %18 = math.exp %17 : vector<2x128xf32>
    %cst_8 = arith.constant 1.000000e+00 : f32
    %19 = vector.broadcast %cst_8 : f32 to vector<2x128xf32>
    %20 = arith.addf %19, %18 : vector<2x128xf32>
    %21 = arith.divf %19, %20 : vector<2x128xf32>
    %22 = vector.extract_strided_slice %9 {offsets = [0, 256], sizes = [2, 128], strides = [1, 1]} : vector<2x512xf32> to vector<2x128xf32>
    %23 = math.tanh %22 : vector<2x128xf32>
    %24 = vector.extract_strided_slice %9 {offsets = [0, 384], sizes = [2, 128], strides = [1, 1]} : vector<2x512xf32> to vector<2x128xf32>
    %25 = arith.negf %24 : vector<2x128xf32>
    %26 = math.exp %25 : vector<2x128xf32>
    %cst_9 = arith.constant 1.000000e+00 : f32
    %27 = vector.broadcast %cst_9 : f32 to vector<2x128xf32>
    %28 = arith.addf %27, %26 : vector<2x128xf32>
    %29 = arith.divf %27, %28 : vector<2x128xf32>
    %c0_10 = arith.constant 0 : index
    %c0_11 = arith.constant 0 : index
    %30 = vector.load %arg8[%c0_10, %c0_11] : memref<2x128xf32, #tpu.memory_space<vmem>>, vector<2x128xf32>
    %31 = arith.mulf %21, %30 : vector<2x128xf32>
    %32 = arith.mulf %15, %23 : vector<2x128xf32>
    %33 = arith.addf %31, %32 : vector<2x128xf32>
    %34 = math.tanh %33 : vector<2x128xf32>
    %35 = arith.mulf %29, %34 : vector<2x128xf32>
    %c0_12 = arith.constant 0 : index
    %c0_13 = arith.constant 0 : index
    %36 = vector.load %arg8[%c0_12, %c0_13] : memref<2x128xf32, #tpu.memory_space<vmem>>, vector<2x128xf32>
    tpu.vector_store %arg8[%c0_12, %c0_13], %33 {strides = array<i32>} : memref<2x128xf32, #tpu.memory_space<vmem>>, vector<2x128xf32>,
    %c0_14 = arith.constant 0 : index
    %c0_15 = arith.constant 0 : index
    %37 = vector.load %arg7[%c0_14, %c0_15] : memref<2x128xf32, #tpu.memory_space<vmem>>, vector<2x128xf32>
    tpu.vector_store %arg7[%c0_14, %c0_15], %35 {strides = array<i32>} : memref<2x128xf32, #tpu.memory_space<vmem>>, vector<2x128xf32>,
    %38 = arith.index_cast %c0_i32_1 : i32 to index
    %c0_16 = arith.constant 0 : index
    %c0_17 = arith.constant 0 : index
    %39 = vector.load %arg5[%38, %c0_16, %c0_17] : memref<8x2x128xf32, #tpu.memory_space<vmem>>, vector<1x2x128xf32>
    %40 = vector.shape_cast %39 : vector<1x2x128xf32> to vector<2x128xf32>
    %41 = vector.shape_cast %35 : vector<2x128xf32> to vector<1x2x128xf32>
    tpu.vector_store %arg5[%38, %c0_16, %c0_17], %41 {strides = array<i32>} : memref<8x2x128xf32, #tpu.memory_space<vmem>>, vector<1x2x128xf32>,
    %42 = arith.index_cast %c0_i32_1 : i32 to index
    %c0_18 = arith.constant 0 : index
    %c0_19 = arith.constant 0 : index
    %43 = vector.load %arg2[%42, %c0_18, %c0_19] : memref<8x2x512xf32, #tpu.memory_space<vmem>>, vector<1x2x512xf32>
    %44 = vector.shape_cast %43 : vector<1x2x512xf32> to vector<2x512xf32>
    %c0_20 = arith.constant 0 : index
    %c0_21 = arith.constant 0 : index
    %45 = vector.load %arg9[%c0_20, %c0_21] : memref<2x128xf32, #tpu.memory_space<vmem>>, vector<2x128xf32>
    %c0_22 = arith.constant 0 : index
    %c0_23 = arith.constant 0 : index
    %46 = vector.load %arg4[%c0_22, %c0_23] : memref<128x512xf32, #tpu.memory_space<vmem>>, vector<128x512xf32>
    %cst_24 = arith.constant dense<0.000000e+00> : vector<2x512xf32>
    %47 = tpu.matmul %45, %46, %cst_24 {dimension_numbers = #tpu.dot_dimension_numbers<[1], [0], [0], [1], [0, 0, 1, 1], [], []>} : vector<2x128xf32>, vector<128x512xf32>, vector<2x512xf32> -> vector<2x512xf32>
    %48 = arith.addf %44, %47 : vector<2x512xf32>
    %49 = vector.extract_strided_slice %48 {offsets = [0, 0], sizes = [2, 128], strides = [1, 1]} : vector<2x512xf32> to vector<2x128xf32>
    %50 = arith.negf %49 : vector<2x128xf32>
    %51 = math.exp %50 : vector<2x128xf32>
    %cst_25 = arith.constant 1.000000e+00 : f32
    %52 = vector.broadcast %cst_25 : f32 to vector<2x128xf32>
    %53 = arith.addf %52, %51 : vector<2x128xf32>
    %54 = arith.divf %52, %53 : vector<2x128xf32>
    %55 = vector.extract_strided_slice %48 {offsets = [0, 128], sizes = [2, 128], strides = [1, 1]} : vector<2x512xf32> to vector<2x128xf32>
    %56 = arith.negf %55 : vector<2x128xf32>
    %57 = math.exp %56 : vector<2x128xf32>
    %cst_26 = arith.constant 1.000000e+00 : f32
    %58 = vector.broadcast %cst_26 : f32 to vector<2x128xf32>
    %59 = arith.addf %58, %57 : vector<2x128xf32>
    %60 = arith.divf %58, %59 : vector<2x128xf32>
    %61 = vector.extract_strided_slice %48 {offsets = [0, 256], sizes = [2, 128], strides = [1, 1]} : vector<2x512xf32> to vector<2x128xf32>
    %62 = math.tanh %61 : vector<2x128xf32>
    %63 = vector.extract_strided_slice %48 {offsets = [0, 384], sizes = [2, 128], strides = [1, 1]} : vector<2x512xf32> to vector<2x128xf32>
    %64 = arith.negf %63 : vector<2x128xf32>
    %65 = math.exp %64 : vector<2x128xf32>
    %cst_27 = arith.constant 1.000000e+00 : f32
    %66 = vector.broadcast %cst_27 : f32 to vector<2x128xf32>
    %67 = arith.addf %66, %65 : vector<2x128xf32>
    %68 = arith.divf %66, %67 : vector<2x128xf32>
    %c0_28 = arith.constant 0 : index
    %c0_29 = arith.constant 0 : index
    %69 = vector.load %arg10[%c0_28, %c0_29] : memref<2x128xf32, #tpu.memory_space<vmem>>, vector<2x128xf32>
    %70 = arith.mulf %60, %69 : vector<2x128xf32>
    %71 = arith.mulf %54, %62 : vector<2x128xf32>
    %72 = arith.addf %70, %71 : vector<2x128xf32>
    %73 = math.tanh %72 : vector<2x128xf32>
    %74 = arith.mulf %68, %73 : vector<2x128xf32>
    %c0_30 = arith.constant 0 : index
    %c0_31 = arith.constant 0 : index
    %75 = vector.load %arg10[%c0_30, %c0_31] : memref<2x128xf32, #tpu.memory_space<vmem>>, vector<2x128xf32>
    tpu.vector_store %arg10[%c0_30, %c0_31], %72 {strides = array<i32>} : memref<2x128xf32, #tpu.memory_space<vmem>>, vector<2x128xf32>,
    %c0_32 = arith.constant 0 : index
    %c0_33 = arith.constant 0 : index
    %76 = vector.load %arg9[%c0_32, %c0_33] : memref<2x128xf32, #tpu.memory_space<vmem>>, vector<2x128xf32>
    tpu.vector_store %arg9[%c0_32, %c0_33], %74 {strides = array<i32>} : memref<2x128xf32, #tpu.memory_space<vmem>>, vector<2x128xf32>,
    %77 = arith.index_cast %c0_i32_1 : i32 to index
    %c0_34 = arith.constant 0 : index
    %c0_35 = arith.constant 0 : index
    %78 = vector.load %arg6[%77, %c0_34, %c0_35] : memref<8x2x128xf32, #tpu.memory_space<vmem>>, vector<1x2x128xf32>
    %79 = vector.shape_cast %78 : vector<1x2x128xf32> to vector<2x128xf32>
    %80 = vector.shape_cast %74 : vector<2x128xf32> to vector<1x2x128xf32>
    tpu.vector_store %arg6[%77, %c0_34, %c0_35], %80 {strides = array<i32>} : memref<8x2x128xf32, #tpu.memory_space<vmem>>, vector<1x2x128xf32>,
    %c1_i32 = arith.constant 1 : i32
    %81 = arith.index_cast %c1_i32 : i32 to index
    %c0_36 = arith.constant 0 : index
    %c0_37 = arith.constant 0 : index
    %82 = vector.load %arg1[%81, %c0_36, %c0_37] : memref<8x2x512xf32, #tpu.memory_space<vmem>>, vector<1x2x512xf32>
    %83 = vector.shape_cast %82 : vector<1x2x512xf32> to vector<2x512xf32>
    %c0_38 = arith.constant 0 : index
    %c0_39 = arith.constant 0 : index
    %84 = vector.load %arg7[%c0_38, %c0_39] : memref<2x128xf32, #tpu.memory_space<vmem>>, vector<2x128xf32>
    %c0_40 = arith.constant 0 : index
    %c0_41 = arith.constant 0 : index
    %85 = vector.load %arg3[%c0_40, %c0_41] : memref<128x512xf32, #tpu.memory_space<vmem>>, vector<128x512xf32>
    %cst_42 = arith.constant dense<0.000000e+00> : vector<2x512xf32>
    %86 = tpu.matmul %84, %85, %cst_42 {dimension_numbers = #tpu.dot_dimension_numbers<[1], [0], [0], [1], [0, 0, 1, 1], [], []>} : vector<2x128xf32>, vector<128x512xf32>, vector<2x512xf32> -> vector<2x512xf32>
    %87 = arith.addf %83, %86 : vector<2x512xf32>
    %88 = vector.extract_strided_slice %87 {offsets = [0, 0], sizes = [2, 128], strides = [1, 1]} : vector<2x512xf32> to vector<2x128xf32>
    %89 = arith.negf %88 : vector<2x128xf32>
    %90 = math.exp %89 : vector<2x128xf32>
    %cst_43 = arith.constant 1.000000e+00 : f32
    %91 = vector.broadcast %cst_43 : f32 to vector<2x128xf32>
    %92 = arith.addf %91, %90 : vector<2x128xf32>
    %93 = arith.divf %91, %92 : vector<2x128xf32>
    %94 = vector.extract_strided_slice %87 {offsets = [0, 128], sizes = [2, 128], strides = [1, 1]} : vector<2x512xf32> to vector<2x128xf32>
    %95 = arith.negf %94 : vector<2x128xf32>
    %96 = math.exp %95 : vector<2x128xf32>
    %cst_44 = arith.constant 1.000000e+00 : f32
    %97 = vector.broadcast %cst_44 : f32 to vector<2x128xf32>
    %98 = arith.addf %97, %96 : vector<2x128xf32>
    %99 = arith.divf %97, %98 : vector<2x128xf32>
    %100 = vector.extract_strided_slice %87 {offsets = [0, 256], sizes = [2, 128], strides = [1, 1]} : vector<2x512xf32> to vector<2x128xf32>
    %101 = math.tanh %100 : vector<2x128xf32>
    %102 = vector.extract_strided_slice %87 {offsets = [0, 384], sizes = [2, 128], strides = [1, 1]} : vector<2x512xf32> to vector<2x128xf32>
    %103 = arith.negf %102 : vector<2x128xf32>
    %104 = math.exp %103 : vector<2x128xf32>
    %cst_45 = arith.constant 1.000000e+00 : f32
    %105 = vector.broadcast %cst_45 : f32 to vector<2x128xf32>
    %106 = arith.addf %105, %104 : vector<2x128xf32>
    %107 = arith.divf %105, %106 : vector<2x128xf32>
    %c0_46 = arith.constant 0 : index
    %c0_47 = arith.constant 0 : index
    %108 = vector.load %arg8[%c0_46, %c0_47] : memref<2x128xf32, #tpu.memory_space<vmem>>, vector<2x128xf32>
    %109 = arith.mulf %99, %108 : vector<2x128xf32>
    %110 = arith.mulf %93, %101 : vector<2x128xf32>
    %111 = arith.addf %109, %110 : vector<2x128xf32>
    %112 = math.tanh %111 : vector<2x128xf32>
    %113 = arith.mulf %107, %112 : vector<2x128xf32>
    %c0_48 = arith.constant 0 : index
    %c0_49 = arith.constant 0 : index
    %114 = vector.load %arg8[%c0_48, %c0_49] : memref<2x128xf32, #tpu.memory_space<vmem>>, vector<2x128xf32>
    tpu.vector_store %arg8[%c0_48, %c0_49], %111 {strides = array<i32>} : memref<2x128xf32, #tpu.memory_space<vmem>>, vector<2x128xf32>,
    %c0_50 = arith.constant 0 : index
    %c0_51 = arith.constant 0 : index
    %115 = vector.load %arg7[%c0_50, %c0_51] : memref<2x128xf32, #tpu.memory_space<vmem>>, vector<2x128xf32>
    tpu.vector_store %arg7[%c0_50, %c0_51], %113 {strides = array<i32>} : memref<2x128xf32, #tpu.memory_space<vmem>>, vector<2x128xf32>,
    %116 = arith.index_cast %c1_i32 : i32 to index
    %c0_52 = arith.constant 0 : index
    %c0_53 = arith.constant 0 : index
    %117 = vector.load %arg5[%116, %c0_52, %c0_53] : memref<8x2x128xf32, #tpu.memory_space<vmem>>, vector<1x2x128xf32>
    %118 = vector.shape_cast %117 : vector<1x2x128xf32> to vector<2x128xf32>
    %119 = vector.shape_cast %113 : vector<2x128xf32> to vector<1x2x128xf32>
    tpu.vector_store %arg5[%116, %c0_52, %c0_53], %119 {strides = array<i32>} : memref<8x2x128xf32, #tpu.memory_space<vmem>>, vector<1x2x128xf32>,
    %120 = arith.index_cast %c1_i32 : i32 to index
    %c0_54 = arith.constant 0 : index
    %c0_55 = arith.constant 0 : index
    %121 = vector.load %arg2[%120, %c0_54, %c0_55] : memref<8x2x512xf32, #tpu.memory_space<vmem>>, vector<1x2x512xf32>
    %122 = vector.shape_cast %121 : vector<1x2x512xf32> to vector<2x512xf32>
    %c0_56 = arith.constant 0 : index
    %c0_57 = arith.constant 0 : index
    %123 = vector.load %arg9[%c0_56, %c0_57] : memref<2x128xf32, #tpu.memory_space<vmem>>, vector<2x128xf32>
    %c0_58 = arith.constant 0 : index
    %c0_59 = arith.constant 0 : index
    %124 = vector.load %arg4[%c0_58, %c0_59] : memref<128x512xf32, #tpu.memory_space<vmem>>, vector<128x512xf32>
    %cst_60 = arith.constant dense<0.000000e+00> : vector<2x512xf32>
    %125 = tpu.matmul %123, %124, %cst_60 {dimension_numbers = #tpu.dot_dimension_numbers<[1], [0], [0], [1], [0, 0, 1, 1], [], []>} : vector<2x128xf32>, vector<128x512xf32>, vector<2x512xf32> -> vector<2x512xf32>
    %126 = arith.addf %122, %125 : vector<2x512xf32>
    %127 = vector.extract_strided_slice %126 {offsets = [0, 0], sizes = [2, 128], strides = [1, 1]} : vector<2x512xf32> to vector<2x128xf32>
    %128 = arith.negf %127 : vector<2x128xf32>
    %129 = math.exp %128 : vector<2x128xf32>
    %cst_61 = arith.constant 1.000000e+00 : f32
    %130 = vector.broadcast %cst_61 : f32 to vector<2x128xf32>
    %131 = arith.addf %130, %129 : vector<2x128xf32>
    %132 = arith.divf %130, %131 : vector<2x128xf32>
    %133 = vector.extract_strided_slice %126 {offsets = [0, 128], sizes = [2, 128], strides = [1, 1]} : vector<2x512xf32> to vector<2x128xf32>
    %134 = arith.negf %133 : vector<2x128xf32>
    %135 = math.exp %134 : vector<2x128xf32>
    %cst_62 = arith.constant 1.000000e+00 : f32
    %136 = vector.broadcast %cst_62 : f32 to vector<2x128xf32>
    %137 = arith.addf %136, %135 : vector<2x128xf32>
    %138 = arith.divf %136, %137 : vector<2x128xf32>
    %139 = vector.extract_strided_slice %126 {offsets = [0, 256], sizes = [2, 128], strides = [1, 1]} : vector<2x512xf32> to vector<2x128xf32>
    %140 = math.tanh %139 : vector<2x128xf32>
    %141 = vector.extract_strided_slice %126 {offsets = [0, 384], sizes = [2, 128], strides = [1, 1]} : vector<2x512xf32> to vector<2x128xf32>
    %142 = arith.negf %141 : vector<2x128xf32>
    %143 = math.exp %142 : vector<2x128xf32>
    %cst_63 = arith.constant 1.000000e+00 : f32
    %144 = vector.broadcast %cst_63 : f32 to vector<2x128xf32>
    %145 = arith.addf %144, %143 : vector<2x128xf32>
    %146 = arith.divf %144, %145 : vector<2x128xf32>
    %c0_64 = arith.constant 0 : index
    %c0_65 = arith.constant 0 : index
    %147 = vector.load %arg10[%c0_64, %c0_65] : memref<2x128xf32, #tpu.memory_space<vmem>>, vector<2x128xf32>
    %148 = arith.mulf %138, %147 : vector<2x128xf32>
    %149 = arith.mulf %132, %140 : vector<2x128xf32>
    %150 = arith.addf %148, %149 : vector<2x128xf32>
    %151 = math.tanh %150 : vector<2x128xf32>
    %152 = arith.mulf %146, %151 : vector<2x128xf32>
    %c0_66 = arith.constant 0 : index
    %c0_67 = arith.constant 0 : index
    %153 = vector.load %arg10[%c0_66, %c0_67] : memref<2x128xf32, #tpu.memory_space<vmem>>, vector<2x128xf32>
    tpu.vector_store %arg10[%c0_66, %c0_67], %150 {strides = array<i32>} : memref<2x128xf32, #tpu.memory_space<vmem>>, vector<2x128xf32>,
    %c0_68 = arith.constant 0 : index
    %c0_69 = arith.constant 0 : index
    %154 = vector.load %arg9[%c0_68, %c0_69] : memref<2x128xf32, #tpu.memory_space<vmem>>, vector<2x128xf32>
    tpu.vector_store %arg9[%c0_68, %c0_69], %152 {strides = array<i32>} : memref<2x128xf32, #tpu.memory_space<vmem>>, vector<2x128xf32>,
    %155 = arith.index_cast %c1_i32 : i32 to index
    %c0_70 = arith.constant 0 : index
    %c0_71 = arith.constant 0 : index
    %156 = vector.load %arg6[%155, %c0_70, %c0_71] : memref<8x2x128xf32, #tpu.memory_space<vmem>>, vector<1x2x128xf32>
    %157 = vector.shape_cast %156 : vector<1x2x128xf32> to vector<2x128xf32>
    %158 = vector.shape_cast %152 : vector<2x128xf32> to vector<1x2x128xf32>
    tpu.vector_store %arg6[%155, %c0_70, %c0_71], %158 {strides = array<i32>} : memref<8x2x128xf32, #tpu.memory_space<vmem>>, vector<1x2x128xf32>,
    %c2_i32 = arith.constant 2 : i32
    %159 = arith.index_cast %c2_i32 : i32 to index
    %c0_72 = arith.constant 0 : index
    %c0_73 = arith.constant 0 : index
    %160 = vector.load %arg1[%159, %c0_72, %c0_73] : memref<8x2x512xf32, #tpu.memory_space<vmem>>, vector<1x2x512xf32>
    %161 = vector.shape_cast %160 : vector<1x2x512xf32> to vector<2x512xf32>
    %c0_74 = arith.constant 0 : index
    %c0_75 = arith.constant 0 : index
    %162 = vector.load %arg7[%c0_74, %c0_75] : memref<2x128xf32, #tpu.memory_space<vmem>>, vector<2x128xf32>
    %c0_76 = arith.constant 0 : index
    %c0_77 = arith.constant 0 : index
    %163 = vector.load %arg3[%c0_76, %c0_77] : memref<128x512xf32, #tpu.memory_space<vmem>>, vector<128x512xf32>
    %cst_78 = arith.constant dense<0.000000e+00> : vector<2x512xf32>
    %164 = tpu.matmul %162, %163, %cst_78 {dimension_numbers = #tpu.dot_dimension_numbers<[1], [0], [0], [1], [0, 0, 1, 1], [], []>} : vector<2x128xf32>, vector<128x512xf32>, vector<2x512xf32> -> vector<2x512xf32>
    %165 = arith.addf %161, %164 : vector<2x512xf32>
    %166 = vector.extract_strided_slice %165 {offsets = [0, 0], sizes = [2, 128], strides = [1, 1]} : vector<2x512xf32> to vector<2x128xf32>
    %167 = arith.negf %166 : vector<2x128xf32>
    %168 = math.exp %167 : vector<2x128xf32>
    %cst_79 = arith.constant 1.000000e+00 : f32
    %169 = vector.broadcast %cst_79 : f32 to vector<2x128xf32>
    %170 = arith.addf %169, %168 : vector<2x128xf32>
    %171 = arith.divf %169, %170 : vector<2x128xf32>
    %172 = vector.extract_strided_slice %165 {offsets = [0, 128], sizes = [2, 128], strides = [1, 1]} : vector<2x512xf32> to vector<2x128xf32>
    %173 = arith.negf %172 : vector<2x128xf32>
    %174 = math.exp %173 : vector<2x128xf32>
    %cst_80 = arith.constant 1.000000e+00 : f32
    %175 = vector.broadcast %cst_80 : f32 to vector<2x128xf32>
    %176 = arith.addf %175, %174 : vector<2x128xf32>
    %177 = arith.divf %175, %176 : vector<2x128xf32>
    %178 = vector.extract_strided_slice %165 {offsets = [0, 256], sizes = [2, 128], strides = [1, 1]} : vector<2x512xf32> to vector<2x128xf32>
    %179 = math.tanh %178 : vector<2x128xf32>
    %180 = vector.extract_strided_slice %165 {offsets = [0, 384], sizes = [2, 128], strides = [1, 1]} : vector<2x512xf32> to vector<2x128xf32>
    %181 = arith.negf %180 : vector<2x128xf32>
    %182 = math.exp %181 : vector<2x128xf32>
    %cst_81 = arith.constant 1.000000e+00 : f32
    %183 = vector.broadcast %cst_81 : f32 to vector<2x128xf32>
    %184 = arith.addf %183, %182 : vector<2x128xf32>
    %185 = arith.divf %183, %184 : vector<2x128xf32>
    %c0_82 = arith.constant 0 : index
    %c0_83 = arith.constant 0 : index
    %186 = vector.load %arg8[%c0_82, %c0_83] : memref<2x128xf32, #tpu.memory_space<vmem>>, vector<2x128xf32>
    %187 = arith.mulf %177, %186 : vector<2x128xf32>
    %188 = arith.mulf %171, %179 : vector<2x128xf32>
    %189 = arith.addf %187, %188 : vector<2x128xf32>
    %190 = math.tanh %189 : vector<2x128xf32>
    %191 = arith.mulf %185, %190 : vector<2x128xf32>
    %c0_84 = arith.constant 0 : index
    %c0_85 = arith.constant 0 : index
    %192 = vector.load %arg8[%c0_84, %c0_85] : memref<2x128xf32, #tpu.memory_space<vmem>>, vector<2x128xf32>
    tpu.vector_store %arg8[%c0_84, %c0_85], %189 {strides = array<i32>} : memref<2x128xf32, #tpu.memory_space<vmem>>, vector<2x128xf32>,
    %c0_86 = arith.constant 0 : index
    %c0_87 = arith.constant 0 : index
    %193 = vector.load %arg7[%c0_86, %c0_87] : memref<2x128xf32, #tpu.memory_space<vmem>>, vector<2x128xf32>
    tpu.vector_store %arg7[%c0_86, %c0_87], %191 {strides = array<i32>} : memref<2x128xf32, #tpu.memory_space<vmem>>, vector<2x128xf32>,
    %194 = arith.index_cast %c2_i32 : i32 to index
    %c0_88 = arith.constant 0 : index
    %c0_89 = arith.constant 0 : index
    %195 = vector.load %arg5[%194, %c0_88, %c0_89] : memref<8x2x128xf32, #tpu.memory_space<vmem>>, vector<1x2x128xf32>
    %196 = vector.shape_cast %195 : vector<1x2x128xf32> to vector<2x128xf32>
    %197 = vector.shape_cast %191 : vector<2x128xf32> to vector<1x2x128xf32>
    tpu.vector_store %arg5[%194, %c0_88, %c0_89], %197 {strides = array<i32>} : memref<8x2x128xf32, #tpu.memory_space<vmem>>, vector<1x2x128xf32>,
    %198 = arith.index_cast %c2_i32 : i32 to index
    %c0_90 = arith.constant 0 : index
    %c0_91 = arith.constant 0 : index
    %199 = vector.load %arg2[%198, %c0_90, %c0_91] : memref<8x2x512xf32, #tpu.memory_space<vmem>>, vector<1x2x512xf32>
    %200 = vector.shape_cast %199 : vector<1x2x512xf32> to vector<2x512xf32>
    %c0_92 = arith.constant 0 : index
    %c0_93 = arith.constant 0 : index
    %201 = vector.load %arg9[%c0_92, %c0_93] : memref<2x128xf32, #tpu.memory_space<vmem>>, vector<2x128xf32>
    %c0_94 = arith.constant 0 : index
    %c0_95 = arith.constant 0 : index
    %202 = vector.load %arg4[%c0_94, %c0_95] : memref<128x512xf32, #tpu.memory_space<vmem>>, vector<128x512xf32>
    %cst_96 = arith.constant dense<0.000000e+00> : vector<2x512xf32>
    %203 = tpu.matmul %201, %202, %cst_96 {dimension_numbers = #tpu.dot_dimension_numbers<[1], [0], [0], [1], [0, 0, 1, 1], [], []>} : vector<2x128xf32>, vector<128x512xf32>, vector<2x512xf32> -> vector<2x512xf32>
    %204 = arith.addf %200, %203 : vector<2x512xf32>
    %205 = vector.extract_strided_slice %204 {offsets = [0, 0], sizes = [2, 128], strides = [1, 1]} : vector<2x512xf32> to vector<2x128xf32>
    %206 = arith.negf %205 : vector<2x128xf32>
    %207 = math.exp %206 : vector<2x128xf32>
    %cst_97 = arith.constant 1.000000e+00 : f32
    %208 = vector.broadcast %cst_97 : f32 to vector<2x128xf32>
    %209 = arith.addf %208, %207 : vector<2x128xf32>
    %210 = arith.divf %208, %209 : vector<2x128xf32>
    %211 = vector.extract_strided_slice %204 {offsets = [0, 128], sizes = [2, 128], strides = [1, 1]} : vector<2x512xf32> to vector<2x128xf32>
    %212 = arith.negf %211 : vector<2x128xf32>
    %213 = math.exp %212 : vector<2x128xf32>
    %cst_98 = arith.constant 1.000000e+00 : f32
    %214 = vector.broadcast %cst_98 : f32 to vector<2x128xf32>
    %215 = arith.addf %214, %213 : vector<2x128xf32>
    %216 = arith.divf %214, %215 : vector<2x128xf32>
    %217 = vector.extract_strided_slice %204 {offsets = [0, 256], sizes = [2, 128], strides = [1, 1]} : vector<2x512xf32> to vector<2x128xf32>
    %218 = math.tanh %217 : vector<2x128xf32>
    %219 = vector.extract_strided_slice %204 {offsets = [0, 384], sizes = [2, 128], strides = [1, 1]} : vector<2x512xf32> to vector<2x128xf32>
    %220 = arith.negf %219 : vector<2x128xf32>
    %221 = math.exp %220 : vector<2x128xf32>
    %cst_99 = arith.constant 1.000000e+00 : f32
    %222 = vector.broadcast %cst_99 : f32 to vector<2x128xf32>
    %223 = arith.addf %222, %221 : vector<2x128xf32>
    %224 = arith.divf %222, %223 : vector<2x128xf32>
    %c0_100 = arith.constant 0 : index
    %c0_101 = arith.constant 0 : index
    %225 = vector.load %arg10[%c0_100, %c0_101] : memref<2x128xf32, #tpu.memory_space<vmem>>, vector<2x128xf32>
    %226 = arith.mulf %216, %225 : vector<2x128xf32>
    %227 = arith.mulf %210, %218 : vector<2x128xf32>
    %228 = arith.addf %226, %227 : vector<2x128xf32>
    %229 = math.tanh %228 : vector<2x128xf32>
    %230 = arith.mulf %224, %229 : vector<2x128xf32>
    %c0_102 = arith.constant 0 : index
    %c0_103 = arith.constant 0 : index
    %231 = vector.load %arg10[%c0_102, %c0_103] : memref<2x128xf32, #tpu.memory_space<vmem>>, vector<2x128xf32>
    tpu.vector_store %arg10[%c0_102, %c0_103], %228 {strides = array<i32>} : memref<2x128xf32, #tpu.memory_space<vmem>>, vector<2x128xf32>,
    %c0_104 = arith.constant 0 : index
    %c0_105 = arith.constant 0 : index
    %232 = vector.load %arg9[%c0_104, %c0_105] : memref<2x128xf32, #tpu.memory_space<vmem>>, vector<2x128xf32>
    tpu.vector_store %arg9[%c0_104, %c0_105], %230 {strides = array<i32>} : memref<2x128xf32, #tpu.memory_space<vmem>>, vector<2x128xf32>,
    %233 = arith.index_cast %c2_i32 : i32 to index
    %c0_106 = arith.constant 0 : index
    %c0_107 = arith.constant 0 : index
    %234 = vector.load %arg6[%233, %c0_106, %c0_107] : memref<8x2x128xf32, #tpu.memory_space<vmem>>, vector<1x2x128xf32>
    %235 = vector.shape_cast %234 : vector<1x2x128xf32> to vector<2x128xf32>
    %236 = vector.shape_cast %230 : vector<2x128xf32> to vector<1x2x128xf32>
    tpu.vector_store %arg6[%233, %c0_106, %c0_107], %236 {strides = array<i32>} : memref<8x2x128xf32, #tpu.memory_space<vmem>>, vector<1x2x128xf32>,
    %c3_i32 = arith.constant 3 : i32
    %237 = arith.index_cast %c3_i32 : i32 to index
    %c0_108 = arith.constant 0 : index
    %c0_109 = arith.constant 0 : index
    %238 = vector.load %arg1[%237, %c0_108, %c0_109] : memref<8x2x512xf32, #tpu.memory_space<vmem>>, vector<1x2x512xf32>
    %239 = vector.shape_cast %238 : vector<1x2x512xf32> to vector<2x512xf32>
    %c0_110 = arith.constant 0 : index
    %c0_111 = arith.constant 0 : index
    %240 = vector.load %arg7[%c0_110, %c0_111] : memref<2x128xf32, #tpu.memory_space<vmem>>, vector<2x128xf32>
    %c0_112 = arith.constant 0 : index
    %c0_113 = arith.constant 0 : index
    %241 = vector.load %arg3[%c0_112, %c0_113] : memref<128x512xf32, #tpu.memory_space<vmem>>, vector<128x512xf32>
    %cst_114 = arith.constant dense<0.000000e+00> : vector<2x512xf32>
    %242 = tpu.matmul %240, %241, %cst_114 {dimension_numbers = #tpu.dot_dimension_numbers<[1], [0], [0], [1], [0, 0, 1, 1], [], []>} : vector<2x128xf32>, vector<128x512xf32>, vector<2x512xf32> -> vector<2x512xf32>
    %243 = arith.addf %239, %242 : vector<2x512xf32>
    %244 = vector.extract_strided_slice %243 {offsets = [0, 0], sizes = [2, 128], strides = [1, 1]} : vector<2x512xf32> to vector<2x128xf32>
    %245 = arith.negf %244 : vector<2x128xf32>
    %246 = math.exp %245 : vector<2x128xf32>
    %cst_115 = arith.constant 1.000000e+00 : f32
    %247 = vector.broadcast %cst_115 : f32 to vector<2x128xf32>
    %248 = arith.addf %247, %246 : vector<2x128xf32>
    %249 = arith.divf %247, %248 : vector<2x128xf32>
    %250 = vector.extract_strided_slice %243 {offsets = [0, 128], sizes = [2, 128], strides = [1, 1]} : vector<2x512xf32> to vector<2x128xf32>
    %251 = arith.negf %250 : vector<2x128xf32>
    %252 = math.exp %251 : vector<2x128xf32>
    %cst_116 = arith.constant 1.000000e+00 : f32
    %253 = vector.broadcast %cst_116 : f32 to vector<2x128xf32>
    %254 = arith.addf %253, %252 : vector<2x128xf32>
    %255 = arith.divf %253, %254 : vector<2x128xf32>
    %256 = vector.extract_strided_slice %243 {offsets = [0, 256], sizes = [2, 128], strides = [1, 1]} : vector<2x512xf32> to vector<2x128xf32>
    %257 = math.tanh %256 : vector<2x128xf32>
    %258 = vector.extract_strided_slice %243 {offsets = [0, 384], sizes = [2, 128], strides = [1, 1]} : vector<2x512xf32> to vector<2x128xf32>
    %259 = arith.negf %258 : vector<2x128xf32>
    %260 = math.exp %259 : vector<2x128xf32>
    %cst_117 = arith.constant 1.000000e+00 : f32
    %261 = vector.broadcast %cst_117 : f32 to vector<2x128xf32>
    %262 = arith.addf %261, %260 : vector<2x128xf32>
    %263 = arith.divf %261, %262 : vector<2x128xf32>
    %c0_118 = arith.constant 0 : index
    %c0_119 = arith.constant 0 : index
    %264 = vector.load %arg8[%c0_118, %c0_119] : memref<2x128xf32, #tpu.memory_space<vmem>>, vector<2x128xf32>
    %265 = arith.mulf %255, %264 : vector<2x128xf32>
    %266 = arith.mulf %249, %257 : vector<2x128xf32>
    %267 = arith.addf %265, %266 : vector<2x128xf32>
    %268 = math.tanh %267 : vector<2x128xf32>
    %269 = arith.mulf %263, %268 : vector<2x128xf32>
    %c0_120 = arith.constant 0 : index
    %c0_121 = arith.constant 0 : index
    %270 = vector.load %arg8[%c0_120, %c0_121] : memref<2x128xf32, #tpu.memory_space<vmem>>, vector<2x128xf32>
    tpu.vector_store %arg8[%c0_120, %c0_121], %267 {strides = array<i32>} : memref<2x128xf32, #tpu.memory_space<vmem>>, vector<2x128xf32>,
    %c0_122 = arith.constant 0 : index
    %c0_123 = arith.constant 0 : index
    %271 = vector.load %arg7[%c0_122, %c0_123] : memref<2x128xf32, #tpu.memory_space<vmem>>, vector<2x128xf32>
    tpu.vector_store %arg7[%c0_122, %c0_123], %269 {strides = array<i32>} : memref<2x128xf32, #tpu.memory_space<vmem>>, vector<2x128xf32>,
    %272 = arith.index_cast %c3_i32 : i32 to index
    %c0_124 = arith.constant 0 : index
    %c0_125 = arith.constant 0 : index
    %273 = vector.load %arg5[%272, %c0_124, %c0_125] : memref<8x2x128xf32, #tpu.memory_space<vmem>>, vector<1x2x128xf32>
    %274 = vector.shape_cast %273 : vector<1x2x128xf32> to vector<2x128xf32>
    %275 = vector.shape_cast %269 : vector<2x128xf32> to vector<1x2x128xf32>
    tpu.vector_store %arg5[%272, %c0_124, %c0_125], %275 {strides = array<i32>} : memref<8x2x128xf32, #tpu.memory_space<vmem>>, vector<1x2x128xf32>,
    %276 = arith.index_cast %c3_i32 : i32 to index
    %c0_126 = arith.constant 0 : index
    %c0_127 = arith.constant 0 : index
    %277 = vector.load %arg2[%276, %c0_126, %c0_127] : memref<8x2x512xf32, #tpu.memory_space<vmem>>, vector<1x2x512xf32>
    %278 = vector.shape_cast %277 : vector<1x2x512xf32> to vector<2x512xf32>
    %c0_128 = arith.constant 0 : index
    %c0_129 = arith.constant 0 : index
    %279 = vector.load %arg9[%c0_128, %c0_129] : memref<2x128xf32, #tpu.memory_space<vmem>>, vector<2x128xf32>
    %c0_130 = arith.constant 0 : index
    %c0_131 = arith.constant 0 : index
    %280 = vector.load %arg4[%c0_130, %c0_131] : memref<128x512xf32, #tpu.memory_space<vmem>>, vector<128x512xf32>
    %cst_132 = arith.constant dense<0.000000e+00> : vector<2x512xf32>
    %281 = tpu.matmul %279, %280, %cst_132 {dimension_numbers = #tpu.dot_dimension_numbers<[1], [0], [0], [1], [0, 0, 1, 1], [], []>} : vector<2x128xf32>, vector<128x512xf32>, vector<2x512xf32> -> vector<2x512xf32>
    %282 = arith.addf %278, %281 : vector<2x512xf32>
    %283 = vector.extract_strided_slice %282 {offsets = [0, 0], sizes = [2, 128], strides = [1, 1]} : vector<2x512xf32> to vector<2x128xf32>
    %284 = arith.negf %283 : vector<2x128xf32>
    %285 = math.exp %284 : vector<2x128xf32>
    %cst_133 = arith.constant 1.000000e+00 : f32
    %286 = vector.broadcast %cst_133 : f32 to vector<2x128xf32>
    %287 = arith.addf %286, %285 : vector<2x128xf32>
    %288 = arith.divf %286, %287 : vector<2x128xf32>
    %289 = vector.extract_strided_slice %282 {offsets = [0, 128], sizes = [2, 128], strides = [1, 1]} : vector<2x512xf32> to vector<2x128xf32>
    %290 = arith.negf %289 : vector<2x128xf32>
    %291 = math.exp %290 : vector<2x128xf32>
    %cst_134 = arith.constant 1.000000e+00 : f32
    %292 = vector.broadcast %cst_134 : f32 to vector<2x128xf32>
    %293 = arith.addf %292, %291 : vector<2x128xf32>
    %294 = arith.divf %292, %293 : vector<2x128xf32>
    %295 = vector.extract_strided_slice %282 {offsets = [0, 256], sizes = [2, 128], strides = [1, 1]} : vector<2x512xf32> to vector<2x128xf32>
    %296 = math.tanh %295 : vector<2x128xf32>
    %297 = vector.extract_strided_slice %282 {offsets = [0, 384], sizes = [2, 128], strides = [1, 1]} : vector<2x512xf32> to vector<2x128xf32>
    %298 = arith.negf %297 : vector<2x128xf32>
    %299 = math.exp %298 : vector<2x128xf32>
    %cst_135 = arith.constant 1.000000e+00 : f32
    %300 = vector.broadcast %cst_135 : f32 to vector<2x128xf32>
    %301 = arith.addf %300, %299 : vector<2x128xf32>
    %302 = arith.divf %300, %301 : vector<2x128xf32>
    %c0_136 = arith.constant 0 : index
    %c0_137 = arith.constant 0 : index
    %303 = vector.load %arg10[%c0_136, %c0_137] : memref<2x128xf32, #tpu.memory_space<vmem>>, vector<2x128xf32>
    %304 = arith.mulf %294, %303 : vector<2x128xf32>
    %305 = arith.mulf %288, %296 : vector<2x128xf32>
    %306 = arith.addf %304, %305 : vector<2x128xf32>
    %307 = math.tanh %306 : vector<2x128xf32>
    %308 = arith.mulf %302, %307 : vector<2x128xf32>
    %c0_138 = arith.constant 0 : index
    %c0_139 = arith.constant 0 : index
    %309 = vector.load %arg10[%c0_138, %c0_139] : memref<2x128xf32, #tpu.memory_space<vmem>>, vector<2x128xf32>
    tpu.vector_store %arg10[%c0_138, %c0_139], %306 {strides = array<i32>} : memref<2x128xf32, #tpu.memory_space<vmem>>, vector<2x128xf32>,
    %c0_140 = arith.constant 0 : index
    %c0_141 = arith.constant 0 : index
    %310 = vector.load %arg9[%c0_140, %c0_141] : memref<2x128xf32, #tpu.memory_space<vmem>>, vector<2x128xf32>
    tpu.vector_store %arg9[%c0_140, %c0_141], %308 {strides = array<i32>} : memref<2x128xf32, #tpu.memory_space<vmem>>, vector<2x128xf32>,
    %311 = arith.index_cast %c3_i32 : i32 to index
    %c0_142 = arith.constant 0 : index
    %c0_143 = arith.constant 0 : index
    %312 = vector.load %arg6[%311, %c0_142, %c0_143] : memref<8x2x128xf32, #tpu.memory_space<vmem>>, vector<1x2x128xf32>
    %313 = vector.shape_cast %312 : vector<1x2x128xf32> to vector<2x128xf32>
    %314 = vector.shape_cast %308 : vector<2x128xf32> to vector<1x2x128xf32>
    tpu.vector_store %arg6[%311, %c0_142, %c0_143], %314 {strides = array<i32>} : memref<8x2x128xf32, #tpu.memory_space<vmem>>, vector<1x2x128xf32>,
    %c4_i32 = arith.constant 4 : i32
    %315 = arith.index_cast %c4_i32 : i32 to index
    %c0_144 = arith.constant 0 : index
    %c0_145 = arith.constant 0 : index
    %316 = vector.load %arg1[%315, %c0_144, %c0_145] : memref<8x2x512xf32, #tpu.memory_space<vmem>>, vector<1x2x512xf32>
    %317 = vector.shape_cast %316 : vector<1x2x512xf32> to vector<2x512xf32>
    %c0_146 = arith.constant 0 : index
    %c0_147 = arith.constant 0 : index
    %318 = vector.load %arg7[%c0_146, %c0_147] : memref<2x128xf32, #tpu.memory_space<vmem>>, vector<2x128xf32>
    %c0_148 = arith.constant 0 : index
    %c0_149 = arith.constant 0 : index
    %319 = vector.load %arg3[%c0_148, %c0_149] : memref<128x512xf32, #tpu.memory_space<vmem>>, vector<128x512xf32>
    %cst_150 = arith.constant dense<0.000000e+00> : vector<2x512xf32>
    %320 = tpu.matmul %318, %319, %cst_150 {dimension_numbers = #tpu.dot_dimension_numbers<[1], [0], [0], [1], [0, 0, 1, 1], [], []>} : vector<2x128xf32>, vector<128x512xf32>, vector<2x512xf32> -> vector<2x512xf32>
    %321 = arith.addf %317, %320 : vector<2x512xf32>
    %322 = vector.extract_strided_slice %321 {offsets = [0, 0], sizes = [2, 128], strides = [1, 1]} : vector<2x512xf32> to vector<2x128xf32>
    %323 = arith.negf %322 : vector<2x128xf32>
    %324 = math.exp %323 : vector<2x128xf32>
    %cst_151 = arith.constant 1.000000e+00 : f32
    %325 = vector.broadcast %cst_151 : f32 to vector<2x128xf32>
    %326 = arith.addf %325, %324 : vector<2x128xf32>
    %327 = arith.divf %325, %326 : vector<2x128xf32>
    %328 = vector.extract_strided_slice %321 {offsets = [0, 128], sizes = [2, 128], strides = [1, 1]} : vector<2x512xf32> to vector<2x128xf32>
    %329 = arith.negf %328 : vector<2x128xf32>
    %330 = math.exp %329 : vector<2x128xf32>
    %cst_152 = arith.constant 1.000000e+00 : f32
    %331 = vector.broadcast %cst_152 : f32 to vector<2x128xf32>
    %332 = arith.addf %331, %330 : vector<2x128xf32>
    %333 = arith.divf %331, %332 : vector<2x128xf32>
    %334 = vector.extract_strided_slice %321 {offsets = [0, 256], sizes = [2, 128], strides = [1, 1]} : vector<2x512xf32> to vector<2x128xf32>
    %335 = math.tanh %334 : vector<2x128xf32>
    %336 = vector.extract_strided_slice %321 {offsets = [0, 384], sizes = [2, 128], strides = [1, 1]} : vector<2x512xf32> to vector<2x128xf32>
    %337 = arith.negf %336 : vector<2x128xf32>
    %338 = math.exp %337 : vector<2x128xf32>
    %cst_153 = arith.constant 1.000000e+00 : f32
    %339 = vector.broadcast %cst_153 : f32 to vector<2x128xf32>
    %340 = arith.addf %339, %338 : vector<2x128xf32>
    %341 = arith.divf %339, %340 : vector<2x128xf32>
    %c0_154 = arith.constant 0 : index
    %c0_155 = arith.constant 0 : index
    %342 = vector.load %arg8[%c0_154, %c0_155] : memref<2x128xf32, #tpu.memory_space<vmem>>, vector<2x128xf32>
    %343 = arith.mulf %333, %342 : vector<2x128xf32>
    %344 = arith.mulf %327, %335 : vector<2x128xf32>
    %345 = arith.addf %343, %344 : vector<2x128xf32>
    %346 = math.tanh %345 : vector<2x128xf32>
    %347 = arith.mulf %341, %346 : vector<2x128xf32>
    %c0_156 = arith.constant 0 : index
    %c0_157 = arith.constant 0 : index
    %348 = vector.load %arg8[%c0_156, %c0_157] : memref<2x128xf32, #tpu.memory_space<vmem>>, vector<2x128xf32>
    tpu.vector_store %arg8[%c0_156, %c0_157], %345 {strides = array<i32>} : memref<2x128xf32, #tpu.memory_space<vmem>>, vector<2x128xf32>,
    %c0_158 = arith.constant 0 : index
    %c0_159 = arith.constant 0 : index
    %349 = vector.load %arg7[%c0_158, %c0_159] : memref<2x128xf32, #tpu.memory_space<vmem>>, vector<2x128xf32>
    tpu.vector_store %arg7[%c0_158, %c0_159], %347 {strides = array<i32>} : memref<2x128xf32, #tpu.memory_space<vmem>>, vector<2x128xf32>,
    %350 = arith.index_cast %c4_i32 : i32 to index
    %c0_160 = arith.constant 0 : index
    %c0_161 = arith.constant 0 : index
    %351 = vector.load %arg5[%350, %c0_160, %c0_161] : memref<8x2x128xf32, #tpu.memory_space<vmem>>, vector<1x2x128xf32>
    %352 = vector.shape_cast %351 : vector<1x2x128xf32> to vector<2x128xf32>
    %353 = vector.shape_cast %347 : vector<2x128xf32> to vector<1x2x128xf32>
    tpu.vector_store %arg5[%350, %c0_160, %c0_161], %353 {strides = array<i32>} : memref<8x2x128xf32, #tpu.memory_space<vmem>>, vector<1x2x128xf32>,
    %354 = arith.index_cast %c4_i32 : i32 to index
    %c0_162 = arith.constant 0 : index
    %c0_163 = arith.constant 0 : index
    %355 = vector.load %arg2[%354, %c0_162, %c0_163] : memref<8x2x512xf32, #tpu.memory_space<vmem>>, vector<1x2x512xf32>
    %356 = vector.shape_cast %355 : vector<1x2x512xf32> to vector<2x512xf32>
    %c0_164 = arith.constant 0 : index
    %c0_165 = arith.constant 0 : index
    %357 = vector.load %arg9[%c0_164, %c0_165] : memref<2x128xf32, #tpu.memory_space<vmem>>, vector<2x128xf32>
    %c0_166 = arith.constant 0 : index
    %c0_167 = arith.constant 0 : index
    %358 = vector.load %arg4[%c0_166, %c0_167] : memref<128x512xf32, #tpu.memory_space<vmem>>, vector<128x512xf32>
    %cst_168 = arith.constant dense<0.000000e+00> : vector<2x512xf32>
    %359 = tpu.matmul %357, %358, %cst_168 {dimension_numbers = #tpu.dot_dimension_numbers<[1], [0], [0], [1], [0, 0, 1, 1], [], []>} : vector<2x128xf32>, vector<128x512xf32>, vector<2x512xf32> -> vector<2x512xf32>
    %360 = arith.addf %356, %359 : vector<2x512xf32>
    %361 = vector.extract_strided_slice %360 {offsets = [0, 0], sizes = [2, 128], strides = [1, 1]} : vector<2x512xf32> to vector<2x128xf32>
    %362 = arith.negf %361 : vector<2x128xf32>
    %363 = math.exp %362 : vector<2x128xf32>
    %cst_169 = arith.constant 1.000000e+00 : f32
    %364 = vector.broadcast %cst_169 : f32 to vector<2x128xf32>
    %365 = arith.addf %364, %363 : vector<2x128xf32>
    %366 = arith.divf %364, %365 : vector<2x128xf32>
    %367 = vector.extract_strided_slice %360 {offsets = [0, 128], sizes = [2, 128], strides = [1, 1]} : vector<2x512xf32> to vector<2x128xf32>
    %368 = arith.negf %367 : vector<2x128xf32>
    %369 = math.exp %368 : vector<2x128xf32>
    %cst_170 = arith.constant 1.000000e+00 : f32
    %370 = vector.broadcast %cst_170 : f32 to vector<2x128xf32>
    %371 = arith.addf %370, %369 : vector<2x128xf32>
    %372 = arith.divf %370, %371 : vector<2x128xf32>
    %373 = vector.extract_strided_slice %360 {offsets = [0, 256], sizes = [2, 128], strides = [1, 1]} : vector<2x512xf32> to vector<2x128xf32>
    %374 = math.tanh %373 : vector<2x128xf32>
    %375 = vector.extract_strided_slice %360 {offsets = [0, 384], sizes = [2, 128], strides = [1, 1]} : vector<2x512xf32> to vector<2x128xf32>
    %376 = arith.negf %375 : vector<2x128xf32>
    %377 = math.exp %376 : vector<2x128xf32>
    %cst_171 = arith.constant 1.000000e+00 : f32
    %378 = vector.broadcast %cst_171 : f32 to vector<2x128xf32>
    %379 = arith.addf %378, %377 : vector<2x128xf32>
    %380 = arith.divf %378, %379 : vector<2x128xf32>
    %c0_172 = arith.constant 0 : index
    %c0_173 = arith.constant 0 : index
    %381 = vector.load %arg10[%c0_172, %c0_173] : memref<2x128xf32, #tpu.memory_space<vmem>>, vector<2x128xf32>
    %382 = arith.mulf %372, %381 : vector<2x128xf32>
    %383 = arith.mulf %366, %374 : vector<2x128xf32>
    %384 = arith.addf %382, %383 : vector<2x128xf32>
    %385 = math.tanh %384 : vector<2x128xf32>
    %386 = arith.mulf %380, %385 : vector<2x128xf32>
    %c0_174 = arith.constant 0 : index
    %c0_175 = arith.constant 0 : index
    %387 = vector.load %arg10[%c0_174, %c0_175] : memref<2x128xf32, #tpu.memory_space<vmem>>, vector<2x128xf32>
    tpu.vector_store %arg10[%c0_174, %c0_175], %384 {strides = array<i32>} : memref<2x128xf32, #tpu.memory_space<vmem>>, vector<2x128xf32>,
    %c0_176 = arith.constant 0 : index
    %c0_177 = arith.constant 0 : index
    %388 = vector.load %arg9[%c0_176, %c0_177] : memref<2x128xf32, #tpu.memory_space<vmem>>, vector<2x128xf32>
    tpu.vector_store %arg9[%c0_176, %c0_177], %386 {strides = array<i32>} : memref<2x128xf32, #tpu.memory_space<vmem>>, vector<2x128xf32>,
    %389 = arith.index_cast %c4_i32 : i32 to index
    %c0_178 = arith.constant 0 : index
    %c0_179 = arith.constant 0 : index
    %390 = vector.load %arg6[%389, %c0_178, %c0_179] : memref<8x2x128xf32, #tpu.memory_space<vmem>>, vector<1x2x128xf32>
    %391 = vector.shape_cast %390 : vector<1x2x128xf32> to vector<2x128xf32>
    %392 = vector.shape_cast %386 : vector<2x128xf32> to vector<1x2x128xf32>
    tpu.vector_store %arg6[%389, %c0_178, %c0_179], %392 {strides = array<i32>} : memref<8x2x128xf32, #tpu.memory_space<vmem>>, vector<1x2x128xf32>,
    %c5_i32 = arith.constant 5 : i32
    %393 = arith.index_cast %c5_i32 : i32 to index
    %c0_180 = arith.constant 0 : index
    %c0_181 = arith.constant 0 : index
    %394 = vector.load %arg1[%393, %c0_180, %c0_181] : memref<8x2x512xf32, #tpu.memory_space<vmem>>, vector<1x2x512xf32>
    %395 = vector.shape_cast %394 : vector<1x2x512xf32> to vector<2x512xf32>
    %c0_182 = arith.constant 0 : index
    %c0_183 = arith.constant 0 : index
    %396 = vector.load %arg7[%c0_182, %c0_183] : memref<2x128xf32, #tpu.memory_space<vmem>>, vector<2x128xf32>
    %c0_184 = arith.constant 0 : index
    %c0_185 = arith.constant 0 : index
    %397 = vector.load %arg3[%c0_184, %c0_185] : memref<128x512xf32, #tpu.memory_space<vmem>>, vector<128x512xf32>
    %cst_186 = arith.constant dense<0.000000e+00> : vector<2x512xf32>
    %398 = tpu.matmul %396, %397, %cst_186 {dimension_numbers = #tpu.dot_dimension_numbers<[1], [0], [0], [1], [0, 0, 1, 1], [], []>} : vector<2x128xf32>, vector<128x512xf32>, vector<2x512xf32> -> vector<2x512xf32>
    %399 = arith.addf %395, %398 : vector<2x512xf32>
    %400 = vector.extract_strided_slice %399 {offsets = [0, 0], sizes = [2, 128], strides = [1, 1]} : vector<2x512xf32> to vector<2x128xf32>
    %401 = arith.negf %400 : vector<2x128xf32>
    %402 = math.exp %401 : vector<2x128xf32>
    %cst_187 = arith.constant 1.000000e+00 : f32
    %403 = vector.broadcast %cst_187 : f32 to vector<2x128xf32>
    %404 = arith.addf %403, %402 : vector<2x128xf32>
    %405 = arith.divf %403, %404 : vector<2x128xf32>
    %406 = vector.extract_strided_slice %399 {offsets = [0, 128], sizes = [2, 128], strides = [1, 1]} : vector<2x512xf32> to vector<2x128xf32>
    %407 = arith.negf %406 : vector<2x128xf32>
    %408 = math.exp %407 : vector<2x128xf32>
    %cst_188 = arith.constant 1.000000e+00 : f32
    %409 = vector.broadcast %cst_188 : f32 to vector<2x128xf32>
    %410 = arith.addf %409, %408 : vector<2x128xf32>
    %411 = arith.divf %409, %410 : vector<2x128xf32>
    %412 = vector.extract_strided_slice %399 {offsets = [0, 256], sizes = [2, 128], strides = [1, 1]} : vector<2x512xf32> to vector<2x128xf32>
    %413 = math.tanh %412 : vector<2x128xf32>
    %414 = vector.extract_strided_slice %399 {offsets = [0, 384], sizes = [2, 128], strides = [1, 1]} : vector<2x512xf32> to vector<2x128xf32>
    %415 = arith.negf %414 : vector<2x128xf32>
    %416 = math.exp %415 : vector<2x128xf32>
    %cst_189 = arith.constant 1.000000e+00 : f32
    %417 = vector.broadcast %cst_189 : f32 to vector<2x128xf32>
    %418 = arith.addf %417, %416 : vector<2x128xf32>
    %419 = arith.divf %417, %418 : vector<2x128xf32>
    %c0_190 = arith.constant 0 : index
    %c0_191 = arith.constant 0 : index
    %420 = vector.load %arg8[%c0_190, %c0_191] : memref<2x128xf32, #tpu.memory_space<vmem>>, vector<2x128xf32>
    %421 = arith.mulf %411, %420 : vector<2x128xf32>
    %422 = arith.mulf %405, %413 : vector<2x128xf32>
    %423 = arith.addf %421, %422 : vector<2x128xf32>
    %424 = math.tanh %423 : vector<2x128xf32>
    %425 = arith.mulf %419, %424 : vector<2x128xf32>
    %c0_192 = arith.constant 0 : index
    %c0_193 = arith.constant 0 : index
    %426 = vector.load %arg8[%c0_192, %c0_193] : memref<2x128xf32, #tpu.memory_space<vmem>>, vector<2x128xf32>
    tpu.vector_store %arg8[%c0_192, %c0_193], %423 {strides = array<i32>} : memref<2x128xf32, #tpu.memory_space<vmem>>, vector<2x128xf32>,
    %c0_194 = arith.constant 0 : index
    %c0_195 = arith.constant 0 : index
    %427 = vector.load %arg7[%c0_194, %c0_195] : memref<2x128xf32, #tpu.memory_space<vmem>>, vector<2x128xf32>
    tpu.vector_store %arg7[%c0_194, %c0_195], %425 {strides = array<i32>} : memref<2x128xf32, #tpu.memory_space<vmem>>, vector<2x128xf32>,
    %428 = arith.index_cast %c5_i32 : i32 to index
    %c0_196 = arith.constant 0 : index
    %c0_197 = arith.constant 0 : index
    %429 = vector.load %arg5[%428, %c0_196, %c0_197] : memref<8x2x128xf32, #tpu.memory_space<vmem>>, vector<1x2x128xf32>
    %430 = vector.shape_cast %429 : vector<1x2x128xf32> to vector<2x128xf32>
    %431 = vector.shape_cast %425 : vector<2x128xf32> to vector<1x2x128xf32>
    tpu.vector_store %arg5[%428, %c0_196, %c0_197], %431 {strides = array<i32>} : memref<8x2x128xf32, #tpu.memory_space<vmem>>, vector<1x2x128xf32>,
    %432 = arith.index_cast %c5_i32 : i32 to index
    %c0_198 = arith.constant 0 : index
    %c0_199 = arith.constant 0 : index
    %433 = vector.load %arg2[%432, %c0_198, %c0_199] : memref<8x2x512xf32, #tpu.memory_space<vmem>>, vector<1x2x512xf32>
    %434 = vector.shape_cast %433 : vector<1x2x512xf32> to vector<2x512xf32>
    %c0_200 = arith.constant 0 : index
    %c0_201 = arith.constant 0 : index
    %435 = vector.load %arg9[%c0_200, %c0_201] : memref<2x128xf32, #tpu.memory_space<vmem>>, vector<2x128xf32>
    %c0_202 = arith.constant 0 : index
    %c0_203 = arith.constant 0 : index
    %436 = vector.load %arg4[%c0_202, %c0_203] : memref<128x512xf32, #tpu.memory_space<vmem>>, vector<128x512xf32>
    %cst_204 = arith.constant dense<0.000000e+00> : vector<2x512xf32>
    %437 = tpu.matmul %435, %436, %cst_204 {dimension_numbers = #tpu.dot_dimension_numbers<[1], [0], [0], [1], [0, 0, 1, 1], [], []>} : vector<2x128xf32>, vector<128x512xf32>, vector<2x512xf32> -> vector<2x512xf32>
    %438 = arith.addf %434, %437 : vector<2x512xf32>
    %439 = vector.extract_strided_slice %438 {offsets = [0, 0], sizes = [2, 128], strides = [1, 1]} : vector<2x512xf32> to vector<2x128xf32>
    %440 = arith.negf %439 : vector<2x128xf32>
    %441 = math.exp %440 : vector<2x128xf32>
    %cst_205 = arith.constant 1.000000e+00 : f32
    %442 = vector.broadcast %cst_205 : f32 to vector<2x128xf32>
    %443 = arith.addf %442, %441 : vector<2x128xf32>
    %444 = arith.divf %442, %443 : vector<2x128xf32>
    %445 = vector.extract_strided_slice %438 {offsets = [0, 128], sizes = [2, 128], strides = [1, 1]} : vector<2x512xf32> to vector<2x128xf32>
    %446 = arith.negf %445 : vector<2x128xf32>
    %447 = math.exp %446 : vector<2x128xf32>
    %cst_206 = arith.constant 1.000000e+00 : f32
    %448 = vector.broadcast %cst_206 : f32 to vector<2x128xf32>
    %449 = arith.addf %448, %447 : vector<2x128xf32>
    %450 = arith.divf %448, %449 : vector<2x128xf32>
    %451 = vector.extract_strided_slice %438 {offsets = [0, 256], sizes = [2, 128], strides = [1, 1]} : vector<2x512xf32> to vector<2x128xf32>
    %452 = math.tanh %451 : vector<2x128xf32>
    %453 = vector.extract_strided_slice %438 {offsets = [0, 384], sizes = [2, 128], strides = [1, 1]} : vector<2x512xf32> to vector<2x128xf32>
    %454 = arith.negf %453 : vector<2x128xf32>
    %455 = math.exp %454 : vector<2x128xf32>
    %cst_207 = arith.constant 1.000000e+00 : f32
    %456 = vector.broadcast %cst_207 : f32 to vector<2x128xf32>
    %457 = arith.addf %456, %455 : vector<2x128xf32>
    %458 = arith.divf %456, %457 : vector<2x128xf32>
    %c0_208 = arith.constant 0 : index
    %c0_209 = arith.constant 0 : index
    %459 = vector.load %arg10[%c0_208, %c0_209] : memref<2x128xf32, #tpu.memory_space<vmem>>, vector<2x128xf32>
    %460 = arith.mulf %450, %459 : vector<2x128xf32>
    %461 = arith.mulf %444, %452 : vector<2x128xf32>
    %462 = arith.addf %460, %461 : vector<2x128xf32>
    %463 = math.tanh %462 : vector<2x128xf32>
    %464 = arith.mulf %458, %463 : vector<2x128xf32>
    %c0_210 = arith.constant 0 : index
    %c0_211 = arith.constant 0 : index
    %465 = vector.load %arg10[%c0_210, %c0_211] : memref<2x128xf32, #tpu.memory_space<vmem>>, vector<2x128xf32>
    tpu.vector_store %arg10[%c0_210, %c0_211], %462 {strides = array<i32>} : memref<2x128xf32, #tpu.memory_space<vmem>>, vector<2x128xf32>,
    %c0_212 = arith.constant 0 : index
    %c0_213 = arith.constant 0 : index
    %466 = vector.load %arg9[%c0_212, %c0_213] : memref<2x128xf32, #tpu.memory_space<vmem>>, vector<2x128xf32>
    tpu.vector_store %arg9[%c0_212, %c0_213], %464 {strides = array<i32>} : memref<2x128xf32, #tpu.memory_space<vmem>>, vector<2x128xf32>,
    %467 = arith.index_cast %c5_i32 : i32 to index
    %c0_214 = arith.constant 0 : index
    %c0_215 = arith.constant 0 : index
    %468 = vector.load %arg6[%467, %c0_214, %c0_215] : memref<8x2x128xf32, #tpu.memory_space<vmem>>, vector<1x2x128xf32>
    %469 = vector.shape_cast %468 : vector<1x2x128xf32> to vector<2x128xf32>
    %470 = vector.shape_cast %464 : vector<2x128xf32> to vector<1x2x128xf32>
    tpu.vector_store %arg6[%467, %c0_214, %c0_215], %470 {strides = array<i32>} : memref<8x2x128xf32, #tpu.memory_space<vmem>>, vector<1x2x128xf32>,
    %c6_i32 = arith.constant 6 : i32
    %471 = arith.index_cast %c6_i32 : i32 to index
    %c0_216 = arith.constant 0 : index
    %c0_217 = arith.constant 0 : index
    %472 = vector.load %arg1[%471, %c0_216, %c0_217] : memref<8x2x512xf32, #tpu.memory_space<vmem>>, vector<1x2x512xf32>
    %473 = vector.shape_cast %472 : vector<1x2x512xf32> to vector<2x512xf32>
    %c0_218 = arith.constant 0 : index
    %c0_219 = arith.constant 0 : index
    %474 = vector.load %arg7[%c0_218, %c0_219] : memref<2x128xf32, #tpu.memory_space<vmem>>, vector<2x128xf32>
    %c0_220 = arith.constant 0 : index
    %c0_221 = arith.constant 0 : index
    %475 = vector.load %arg3[%c0_220, %c0_221] : memref<128x512xf32, #tpu.memory_space<vmem>>, vector<128x512xf32>
    %cst_222 = arith.constant dense<0.000000e+00> : vector<2x512xf32>
    %476 = tpu.matmul %474, %475, %cst_222 {dimension_numbers = #tpu.dot_dimension_numbers<[1], [0], [0], [1], [0, 0, 1, 1], [], []>} : vector<2x128xf32>, vector<128x512xf32>, vector<2x512xf32> -> vector<2x512xf32>
    %477 = arith.addf %473, %476 : vector<2x512xf32>
    %478 = vector.extract_strided_slice %477 {offsets = [0, 0], sizes = [2, 128], strides = [1, 1]} : vector<2x512xf32> to vector<2x128xf32>
    %479 = arith.negf %478 : vector<2x128xf32>
    %480 = math.exp %479 : vector<2x128xf32>
    %cst_223 = arith.constant 1.000000e+00 : f32
    %481 = vector.broadcast %cst_223 : f32 to vector<2x128xf32>
    %482 = arith.addf %481, %480 : vector<2x128xf32>
    %483 = arith.divf %481, %482 : vector<2x128xf32>
    %484 = vector.extract_strided_slice %477 {offsets = [0, 128], sizes = [2, 128], strides = [1, 1]} : vector<2x512xf32> to vector<2x128xf32>
    %485 = arith.negf %484 : vector<2x128xf32>
    %486 = math.exp %485 : vector<2x128xf32>
    %cst_224 = arith.constant 1.000000e+00 : f32
    %487 = vector.broadcast %cst_224 : f32 to vector<2x128xf32>
    %488 = arith.addf %487, %486 : vector<2x128xf32>
    %489 = arith.divf %487, %488 : vector<2x128xf32>
    %490 = vector.extract_strided_slice %477 {offsets = [0, 256], sizes = [2, 128], strides = [1, 1]} : vector<2x512xf32> to vector<2x128xf32>
    %491 = math.tanh %490 : vector<2x128xf32>
    %492 = vector.extract_strided_slice %477 {offsets = [0, 384], sizes = [2, 128], strides = [1, 1]} : vector<2x512xf32> to vector<2x128xf32>
    %493 = arith.negf %492 : vector<2x128xf32>
    %494 = math.exp %493 : vector<2x128xf32>
    %cst_225 = arith.constant 1.000000e+00 : f32
    %495 = vector.broadcast %cst_225 : f32 to vector<2x128xf32>
    %496 = arith.addf %495, %494 : vector<2x128xf32>
    %497 = arith.divf %495, %496 : vector<2x128xf32>
    %c0_226 = arith.constant 0 : index
    %c0_227 = arith.constant 0 : index
    %498 = vector.load %arg8[%c0_226, %c0_227] : memref<2x128xf32, #tpu.memory_space<vmem>>, vector<2x128xf32>
    %499 = arith.mulf %489, %498 : vector<2x128xf32>
    %500 = arith.mulf %483, %491 : vector<2x128xf32>
    %501 = arith.addf %499, %500 : vector<2x128xf32>
    %502 = math.tanh %501 : vector<2x128xf32>
    %503 = arith.mulf %497, %502 : vector<2x128xf32>
    %c0_228 = arith.constant 0 : index
    %c0_229 = arith.constant 0 : index
    %504 = vector.load %arg8[%c0_228, %c0_229] : memref<2x128xf32, #tpu.memory_space<vmem>>, vector<2x128xf32>
    tpu.vector_store %arg8[%c0_228, %c0_229], %501 {strides = array<i32>} : memref<2x128xf32, #tpu.memory_space<vmem>>, vector<2x128xf32>,
    %c0_230 = arith.constant 0 : index
    %c0_231 = arith.constant 0 : index
    %505 = vector.load %arg7[%c0_230, %c0_231] : memref<2x128xf32, #tpu.memory_space<vmem>>, vector<2x128xf32>
    tpu.vector_store %arg7[%c0_230, %c0_231], %503 {strides = array<i32>} : memref<2x128xf32, #tpu.memory_space<vmem>>, vector<2x128xf32>,
    %506 = arith.index_cast %c6_i32 : i32 to index
    %c0_232 = arith.constant 0 : index
    %c0_233 = arith.constant 0 : index
    %507 = vector.load %arg5[%506, %c0_232, %c0_233] : memref<8x2x128xf32, #tpu.memory_space<vmem>>, vector<1x2x128xf32>
    %508 = vector.shape_cast %507 : vector<1x2x128xf32> to vector<2x128xf32>
    %509 = vector.shape_cast %503 : vector<2x128xf32> to vector<1x2x128xf32>
    tpu.vector_store %arg5[%506, %c0_232, %c0_233], %509 {strides = array<i32>} : memref<8x2x128xf32, #tpu.memory_space<vmem>>, vector<1x2x128xf32>,
    %510 = arith.index_cast %c6_i32 : i32 to index
    %c0_234 = arith.constant 0 : index
    %c0_235 = arith.constant 0 : index
    %511 = vector.load %arg2[%510, %c0_234, %c0_235] : memref<8x2x512xf32, #tpu.memory_space<vmem>>, vector<1x2x512xf32>
    %512 = vector.shape_cast %511 : vector<1x2x512xf32> to vector<2x512xf32>
    %c0_236 = arith.constant 0 : index
    %c0_237 = arith.constant 0 : index
    %513 = vector.load %arg9[%c0_236, %c0_237] : memref<2x128xf32, #tpu.memory_space<vmem>>, vector<2x128xf32>
    %c0_238 = arith.constant 0 : index
    %c0_239 = arith.constant 0 : index
    %514 = vector.load %arg4[%c0_238, %c0_239] : memref<128x512xf32, #tpu.memory_space<vmem>>, vector<128x512xf32>
    %cst_240 = arith.constant dense<0.000000e+00> : vector<2x512xf32>
    %515 = tpu.matmul %513, %514, %cst_240 {dimension_numbers = #tpu.dot_dimension_numbers<[1], [0], [0], [1], [0, 0, 1, 1], [], []>} : vector<2x128xf32>, vector<128x512xf32>, vector<2x512xf32> -> vector<2x512xf32>
    %516 = arith.addf %512, %515 : vector<2x512xf32>
    %517 = vector.extract_strided_slice %516 {offsets = [0, 0], sizes = [2, 128], strides = [1, 1]} : vector<2x512xf32> to vector<2x128xf32>
    %518 = arith.negf %517 : vector<2x128xf32>
    %519 = math.exp %518 : vector<2x128xf32>
    %cst_241 = arith.constant 1.000000e+00 : f32
    %520 = vector.broadcast %cst_241 : f32 to vector<2x128xf32>
    %521 = arith.addf %520, %519 : vector<2x128xf32>
    %522 = arith.divf %520, %521 : vector<2x128xf32>
    %523 = vector.extract_strided_slice %516 {offsets = [0, 128], sizes = [2, 128], strides = [1, 1]} : vector<2x512xf32> to vector<2x128xf32>
    %524 = arith.negf %523 : vector<2x128xf32>
    %525 = math.exp %524 : vector<2x128xf32>
    %cst_242 = arith.constant 1.000000e+00 : f32
    %526 = vector.broadcast %cst_242 : f32 to vector<2x128xf32>
    %527 = arith.addf %526, %525 : vector<2x128xf32>
    %528 = arith.divf %526, %527 : vector<2x128xf32>
    %529 = vector.extract_strided_slice %516 {offsets = [0, 256], sizes = [2, 128], strides = [1, 1]} : vector<2x512xf32> to vector<2x128xf32>
    %530 = math.tanh %529 : vector<2x128xf32>
    %531 = vector.extract_strided_slice %516 {offsets = [0, 384], sizes = [2, 128], strides = [1, 1]} : vector<2x512xf32> to vector<2x128xf32>
    %532 = arith.negf %531 : vector<2x128xf32>
    %533 = math.exp %532 : vector<2x128xf32>
    %cst_243 = arith.constant 1.000000e+00 : f32
    %534 = vector.broadcast %cst_243 : f32 to vector<2x128xf32>
    %535 = arith.addf %534, %533 : vector<2x128xf32>
    %536 = arith.divf %534, %535 : vector<2x128xf32>
    %c0_244 = arith.constant 0 : index
    %c0_245 = arith.constant 0 : index
    %537 = vector.load %arg10[%c0_244, %c0_245] : memref<2x128xf32, #tpu.memory_space<vmem>>, vector<2x128xf32>
    %538 = arith.mulf %528, %537 : vector<2x128xf32>
    %539 = arith.mulf %522, %530 : vector<2x128xf32>
    %540 = arith.addf %538, %539 : vector<2x128xf32>
    %541 = math.tanh %540 : vector<2x128xf32>
    %542 = arith.mulf %536, %541 : vector<2x128xf32>
    %c0_246 = arith.constant 0 : index
    %c0_247 = arith.constant 0 : index
    %543 = vector.load %arg10[%c0_246, %c0_247] : memref<2x128xf32, #tpu.memory_space<vmem>>, vector<2x128xf32>
    tpu.vector_store %arg10[%c0_246, %c0_247], %540 {strides = array<i32>} : memref<2x128xf32, #tpu.memory_space<vmem>>, vector<2x128xf32>,
    %c0_248 = arith.constant 0 : index
    %c0_249 = arith.constant 0 : index
    %544 = vector.load %arg9[%c0_248, %c0_249] : memref<2x128xf32, #tpu.memory_space<vmem>>, vector<2x128xf32>
    tpu.vector_store %arg9[%c0_248, %c0_249], %542 {strides = array<i32>} : memref<2x128xf32, #tpu.memory_space<vmem>>, vector<2x128xf32>,
    %545 = arith.index_cast %c6_i32 : i32 to index
    %c0_250 = arith.constant 0 : index
    %c0_251 = arith.constant 0 : index
    %546 = vector.load %arg6[%545, %c0_250, %c0_251] : memref<8x2x128xf32, #tpu.memory_space<vmem>>, vector<1x2x128xf32>
    %547 = vector.shape_cast %546 : vector<1x2x128xf32> to vector<2x128xf32>
    %548 = vector.shape_cast %542 : vector<2x128xf32> to vector<1x2x128xf32>
    tpu.vector_store %arg6[%545, %c0_250, %c0_251], %548 {strides = array<i32>} : memref<8x2x128xf32, #tpu.memory_space<vmem>>, vector<1x2x128xf32>,
    %c7_i32 = arith.constant 7 : i32
    %549 = arith.index_cast %c7_i32 : i32 to index
    %c0_252 = arith.constant 0 : index
    %c0_253 = arith.constant 0 : index
    %550 = vector.load %arg1[%549, %c0_252, %c0_253] : memref<8x2x512xf32, #tpu.memory_space<vmem>>, vector<1x2x512xf32>
    %551 = vector.shape_cast %550 : vector<1x2x512xf32> to vector<2x512xf32>
    %c0_254 = arith.constant 0 : index
    %c0_255 = arith.constant 0 : index
    %552 = vector.load %arg7[%c0_254, %c0_255] : memref<2x128xf32, #tpu.memory_space<vmem>>, vector<2x128xf32>
    %c0_256 = arith.constant 0 : index
    %c0_257 = arith.constant 0 : index
    %553 = vector.load %arg3[%c0_256, %c0_257] : memref<128x512xf32, #tpu.memory_space<vmem>>, vector<128x512xf32>
    %cst_258 = arith.constant dense<0.000000e+00> : vector<2x512xf32>
    %554 = tpu.matmul %552, %553, %cst_258 {dimension_numbers = #tpu.dot_dimension_numbers<[1], [0], [0], [1], [0, 0, 1, 1], [], []>} : vector<2x128xf32>, vector<128x512xf32>, vector<2x512xf32> -> vector<2x512xf32>
    %555 = arith.addf %551, %554 : vector<2x512xf32>
    %556 = vector.extract_strided_slice %555 {offsets = [0, 0], sizes = [2, 128], strides = [1, 1]} : vector<2x512xf32> to vector<2x128xf32>
    %557 = arith.negf %556 : vector<2x128xf32>
    %558 = math.exp %557 : vector<2x128xf32>
    %cst_259 = arith.constant 1.000000e+00 : f32
    %559 = vector.broadcast %cst_259 : f32 to vector<2x128xf32>
    %560 = arith.addf %559, %558 : vector<2x128xf32>
    %561 = arith.divf %559, %560 : vector<2x128xf32>
    %562 = vector.extract_strided_slice %555 {offsets = [0, 128], sizes = [2, 128], strides = [1, 1]} : vector<2x512xf32> to vector<2x128xf32>
    %563 = arith.negf %562 : vector<2x128xf32>
    %564 = math.exp %563 : vector<2x128xf32>
    %cst_260 = arith.constant 1.000000e+00 : f32
    %565 = vector.broadcast %cst_260 : f32 to vector<2x128xf32>
    %566 = arith.addf %565, %564 : vector<2x128xf32>
    %567 = arith.divf %565, %566 : vector<2x128xf32>
    %568 = vector.extract_strided_slice %555 {offsets = [0, 256], sizes = [2, 128], strides = [1, 1]} : vector<2x512xf32> to vector<2x128xf32>
    %569 = math.tanh %568 : vector<2x128xf32>
    %570 = vector.extract_strided_slice %555 {offsets = [0, 384], sizes = [2, 128], strides = [1, 1]} : vector<2x512xf32> to vector<2x128xf32>
    %571 = arith.negf %570 : vector<2x128xf32>
    %572 = math.exp %571 : vector<2x128xf32>
    %cst_261 = arith.constant 1.000000e+00 : f32
    %573 = vector.broadcast %cst_261 : f32 to vector<2x128xf32>
    %574 = arith.addf %573, %572 : vector<2x128xf32>
    %575 = arith.divf %573, %574 : vector<2x128xf32>
    %c0_262 = arith.constant 0 : index
    %c0_263 = arith.constant 0 : index
    %576 = vector.load %arg8[%c0_262, %c0_263] : memref<2x128xf32, #tpu.memory_space<vmem>>, vector<2x128xf32>
    %577 = arith.mulf %567, %576 : vector<2x128xf32>
    %578 = arith.mulf %561, %569 : vector<2x128xf32>
    %579 = arith.addf %577, %578 : vector<2x128xf32>
    %580 = math.tanh %579 : vector<2x128xf32>
    %581 = arith.mulf %575, %580 : vector<2x128xf32>
    %c0_264 = arith.constant 0 : index
    %c0_265 = arith.constant 0 : index
    %582 = vector.load %arg8[%c0_264, %c0_265] : memref<2x128xf32, #tpu.memory_space<vmem>>, vector<2x128xf32>
    tpu.vector_store %arg8[%c0_264, %c0_265], %579 {strides = array<i32>} : memref<2x128xf32, #tpu.memory_space<vmem>>, vector<2x128xf32>,
    %c0_266 = arith.constant 0 : index
    %c0_267 = arith.constant 0 : index
    %583 = vector.load %arg7[%c0_266, %c0_267] : memref<2x128xf32, #tpu.memory_space<vmem>>, vector<2x128xf32>
    tpu.vector_store %arg7[%c0_266, %c0_267], %581 {strides = array<i32>} : memref<2x128xf32, #tpu.memory_space<vmem>>, vector<2x128xf32>,
    %584 = arith.index_cast %c7_i32 : i32 to index
    %c0_268 = arith.constant 0 : index
    %c0_269 = arith.constant 0 : index
    %585 = vector.load %arg5[%584, %c0_268, %c0_269] : memref<8x2x128xf32, #tpu.memory_space<vmem>>, vector<1x2x128xf32>
    %586 = vector.shape_cast %585 : vector<1x2x128xf32> to vector<2x128xf32>
    %587 = vector.shape_cast %581 : vector<2x128xf32> to vector<1x2x128xf32>
    tpu.vector_store %arg5[%584, %c0_268, %c0_269], %587 {strides = array<i32>} : memref<8x2x128xf32, #tpu.memory_space<vmem>>, vector<1x2x128xf32>,
    %588 = arith.index_cast %c7_i32 : i32 to index
    %c0_270 = arith.constant 0 : index
    %c0_271 = arith.constant 0 : index
    %589 = vector.load %arg2[%588, %c0_270, %c0_271] : memref<8x2x512xf32, #tpu.memory_space<vmem>>, vector<1x2x512xf32>
    %590 = vector.shape_cast %589 : vector<1x2x512xf32> to vector<2x512xf32>
    %c0_272 = arith.constant 0 : index
    %c0_273 = arith.constant 0 : index
    %591 = vector.load %arg9[%c0_272, %c0_273] : memref<2x128xf32, #tpu.memory_space<vmem>>, vector<2x128xf32>
    %c0_274 = arith.constant 0 : index
    %c0_275 = arith.constant 0 : index
    %592 = vector.load %arg4[%c0_274, %c0_275] : memref<128x512xf32, #tpu.memory_space<vmem>>, vector<128x512xf32>
    %cst_276 = arith.constant dense<0.000000e+00> : vector<2x512xf32>
    %593 = tpu.matmul %591, %592, %cst_276 {dimension_numbers = #tpu.dot_dimension_numbers<[1], [0], [0], [1], [0, 0, 1, 1], [], []>} : vector<2x128xf32>, vector<128x512xf32>, vector<2x512xf32> -> vector<2x512xf32>
    %594 = arith.addf %590, %593 : vector<2x512xf32>
    %595 = vector.extract_strided_slice %594 {offsets = [0, 0], sizes = [2, 128], strides = [1, 1]} : vector<2x512xf32> to vector<2x128xf32>
    %596 = arith.negf %595 : vector<2x128xf32>
    %597 = math.exp %596 : vector<2x128xf32>
    %cst_277 = arith.constant 1.000000e+00 : f32
    %598 = vector.broadcast %cst_277 : f32 to vector<2x128xf32>
    %599 = arith.addf %598, %597 : vector<2x128xf32>
    %600 = arith.divf %598, %599 : vector<2x128xf32>
    %601 = vector.extract_strided_slice %594 {offsets = [0, 128], sizes = [2, 128], strides = [1, 1]} : vector<2x512xf32> to vector<2x128xf32>
    %602 = arith.negf %601 : vector<2x128xf32>
    %603 = math.exp %602 : vector<2x128xf32>
    %cst_278 = arith.constant 1.000000e+00 : f32
    %604 = vector.broadcast %cst_278 : f32 to vector<2x128xf32>
    %605 = arith.addf %604, %603 : vector<2x128xf32>
    %606 = arith.divf %604, %605 : vector<2x128xf32>
    %607 = vector.extract_strided_slice %594 {offsets = [0, 256], sizes = [2, 128], strides = [1, 1]} : vector<2x512xf32> to vector<2x128xf32>
    %608 = math.tanh %607 : vector<2x128xf32>
    %609 = vector.extract_strided_slice %594 {offsets = [0, 384], sizes = [2, 128], strides = [1, 1]} : vector<2x512xf32> to vector<2x128xf32>
    %610 = arith.negf %609 : vector<2x128xf32>
    %611 = math.exp %610 : vector<2x128xf32>
    %cst_279 = arith.constant 1.000000e+00 : f32
    %612 = vector.broadcast %cst_279 : f32 to vector<2x128xf32>
    %613 = arith.addf %612, %611 : vector<2x128xf32>
    %614 = arith.divf %612, %613 : vector<2x128xf32>
    %c0_280 = arith.constant 0 : index
    %c0_281 = arith.constant 0 : index
    %615 = vector.load %arg10[%c0_280, %c0_281] : memref<2x128xf32, #tpu.memory_space<vmem>>, vector<2x128xf32>
    %616 = arith.mulf %606, %615 : vector<2x128xf32>
    %617 = arith.mulf %600, %608 : vector<2x128xf32>
    %618 = arith.addf %616, %617 : vector<2x128xf32>
    %619 = math.tanh %618 : vector<2x128xf32>
    %620 = arith.mulf %614, %619 : vector<2x128xf32>
    %c0_282 = arith.constant 0 : index
    %c0_283 = arith.constant 0 : index
    %621 = vector.load %arg10[%c0_282, %c0_283] : memref<2x128xf32, #tpu.memory_space<vmem>>, vector<2x128xf32>
    tpu.vector_store %arg10[%c0_282, %c0_283], %618 {strides = array<i32>} : memref<2x128xf32, #tpu.memory_space<vmem>>, vector<2x128xf32>,
    %c0_284 = arith.constant 0 : index
    %c0_285 = arith.constant 0 : index
    %622 = vector.load %arg9[%c0_284, %c0_285] : memref<2x128xf32, #tpu.memory_space<vmem>>, vector<2x128xf32>
    tpu.vector_store %arg9[%c0_284, %c0_285], %620 {strides = array<i32>} : memref<2x128xf32, #tpu.memory_space<vmem>>, vector<2x128xf32>,
    %623 = arith.index_cast %c7_i32 : i32 to index
    %c0_286 = arith.constant 0 : index
    %c0_287 = arith.constant 0 : index
    %624 = vector.load %arg6[%623, %c0_286, %c0_287] : memref<8x2x128xf32, #tpu.memory_space<vmem>>, vector<1x2x128xf32>
    %625 = vector.shape_cast %624 : vector<1x2x128xf32> to vector<2x128xf32>
    %626 = vector.shape_cast %620 : vector<2x128xf32> to vector<1x2x128xf32>
    tpu.vector_store %arg6[%623, %c0_286, %c0_287], %626 {strides = array<i32>} : memref<8x2x128xf32, #tpu.memory_space<vmem>>, vector<1x2x128xf32>,
    %c8_i32 = arith.constant 8 : i32
    return
  }
  func.func @transform_0(%arg0: i32) -> (i32, i32, i32) {
    %c0_i32 = arith.constant 0 : i32
    %c0_i32_0 = arith.constant 0 : i32
    %c0_i32_1 = arith.constant 0 : i32
    return %arg0, %c0_i32, %c0_i32_0 : i32, i32, i32
  }
  func.func @transform_1(%arg0: i32) -> (i32, i32, i32) {
    %c0_i32 = arith.constant 0 : i32
    %c0_i32_0 = arith.constant 0 : i32
    %c0_i32_1 = arith.constant 0 : i32
    return %arg0, %c0_i32, %c0_i32_0 : i32, i32, i32
  }
  func.func @transform_2(%arg0: i32) -> (i32, i32) {
    %c0_i32 = arith.constant 0 : i32
    %c0_i32_0 = arith.constant 0 : i32
    %c0_i32_1 = arith.constant 0 : i32
    return %c0_i32, %c0_i32_0 : i32, i32
  }
  func.func @transform_3(%arg0: i32) -> (i32, i32) {
    %c0_i32 = arith.constant 0 : i32
    %c0_i32_0 = arith.constant 0 : i32
    %c0_i32_1 = arith.constant 0 : i32
    return %c0_i32, %c0_i32_0 : i32, i32
  }
  func.func @transform_4(%arg0: i32) -> (i32, i32, i32) {
    %c0_i32 = arith.constant 0 : i32
    %c0_i32_0 = arith.constant 0 : i32
    %c0_i32_1 = arith.constant 0 : i32
    return %arg0, %c0_i32, %c0_i32_0 : i32, i32, i32
  }
  func.func @transform_5(%arg0: i32) -> (i32, i32, i32) {
    %c0_i32 = arith.constant 0 : i32
    %c0_i32_0 = arith.constant 0 : i32
    %c0_i32_1 = arith.constant 0 : i32
    return %arg0, %c0_i32, %c0_i32_0 : i32, i32, i32
  }
}

module attributes {stable_mosaic.version = 11 : i64} {
  func.func @_tag_viterbi_kernel(%arg0: i32, %arg1: memref<8x2x128xf32, #tpu.memory_space<vmem>>, %arg2: memref<8x2x128xf32, #tpu.memory_space<vmem>>, %arg3: memref<128x128xf32, #tpu.memory_space<vmem>>, %arg4: memref<128x128xf32, #tpu.memory_space<vmem>>, %arg5: memref<1x128xf32, #tpu.memory_space<vmem>>, %arg6: memref<8x128xf32, #tpu.memory_space<vmem>>, %arg7: memref<1x128xf32, #tpu.memory_space<vmem>>, %arg8: memref<2x1xi32, #tpu.memory_space<vmem>>, %arg9: memref<8x2x128xi32, #tpu.memory_space<vmem>>, %arg10: memref<2x128xf32, #tpu.memory_space<vmem>>) attributes {dimension_semantics = [#tpu.dimension_semantics<arbitrary>], iteration_bounds = array<i64: 1>, scalar_prefetch = 0 : i64, scratch_operands = 0 : i64, tpu.core_type = #tpu.core_type<tc>, window_params = [{transform_indices = @transform_0, window_bounds = array<i64: 8, 2, 128>}, {transform_indices = @transform_1, window_bounds = array<i64: 8, 2, 128>}, {pipeline_mode = #tpu.pipeline_mode<synchronous>, transform_indices = @transform_2, window_bounds = array<i64: 128, 128>}, {pipeline_mode = #tpu.pipeline_mode<synchronous>, transform_indices = @transform_3, window_bounds = array<i64: 128, 128>}, {pipeline_mode = #tpu.pipeline_mode<synchronous>, transform_indices = @transform_4, window_bounds = array<i64: 1, 128>}, {pipeline_mode = #tpu.pipeline_mode<synchronous>, transform_indices = @transform_5, window_bounds = array<i64: 8, 128>}, {pipeline_mode = #tpu.pipeline_mode<synchronous>, transform_indices = @transform_6, window_bounds = array<i64: 1, 128>}, {pipeline_mode = #tpu.pipeline_mode<synchronous>, transform_indices = @transform_7, window_bounds = array<i64: 2, 1>}, {transform_indices = @transform_8, window_bounds = array<i64: 8, 2, 128>}, {pipeline_mode = #tpu.pipeline_mode<synchronous>, transform_indices = @transform_9, window_bounds = array<i64: 2, 128>}]} {
    %c0 = arith.constant 0 : index
    %c0_0 = arith.constant 0 : index
    %0 = vector.load %arg6[%c0, %c0_0] : memref<8x128xf32, #tpu.memory_space<vmem>>, vector<8x128xf32>
    %c0_1 = arith.constant 0 : index
    %c0_2 = arith.constant 0 : index
    %1 = vector.load %arg5[%c0_1, %c0_2] : memref<1x128xf32, #tpu.memory_space<vmem>>, vector<1x128xf32>
    %c0_3 = arith.constant 0 : index
    %c0_4 = arith.constant 0 : index
    %2 = vector.load %arg8[%c0_3, %c0_4] : memref<2x1xi32, #tpu.memory_space<vmem>>, vector<2x1xi32>
    %3 = tpu.iota {dimensions = array<i32: 1>} : vector<2x128xi32>
    %4 = tpu.iota {dimensions = array<i32: 2>} : vector<2x8x128xi32>
    %5 = tpu.iota {dimensions = array<i32: 1>} : vector<2x120xi32>
    %c8_i32 = arith.constant 8 : i32
    %6 = vector.broadcast %c8_i32 : i32 to vector<2x120xi32>
    %7 = arith.addi %5, %6 : vector<2x120xi32>
    %cst = arith.constant -1.000000e+09 : f32
    %8 = vector.broadcast %cst : f32 to vector<2x120xf32>
    %c0_i32 = arith.constant 0 : i32
    %9 = arith.cmpi eq, %arg0, %c0_i32 : i32
    %10 = arith.extui %9 : i1 to i32
    %c0_i32_5 = arith.constant 0 : i32
    %11 = arith.cmpi ne, %10, %c0_i32_5 : i32
    scf.if %11 {
      %c0_175 = arith.constant 0 : index
      %c0_176 = arith.constant 0 : index
      %c0_177 = arith.constant 0 : index
      %396 = vector.load %arg1[%c0_175, %c0_176, %c0_177] : memref<8x2x128xf32, #tpu.memory_space<vmem>>, vector<1x2x128xf32>
      %397 = vector.shape_cast %396 : vector<1x2x128xf32> to vector<2x128xf32>
      %c0_178 = arith.constant 0 : index
      %c0_179 = arith.constant 0 : index
      %398 = vector.load %arg3[%c0_178, %c0_179] : memref<128x128xf32, #tpu.memory_space<vmem>>, vector<128x128xf32>
      %cst_180 = arith.constant dense<0.000000e+00> : vector<2x128xf32>
      %399 = tpu.matmul %397, %398, %cst_180 {dimension_numbers = #tpu.dot_dimension_numbers<[1], [0], [0], [1], [0, 0, 1, 1], [], []>} : vector<2x128xf32>, vector<128x128xf32>, vector<2x128xf32> -> vector<2x128xf32>
      %c0_181 = arith.constant 0 : index
      %c0_182 = arith.constant 0 : index
      %c0_183 = arith.constant 0 : index
      %400 = vector.load %arg2[%c0_181, %c0_182, %c0_183] : memref<8x2x128xf32, #tpu.memory_space<vmem>>, vector<1x2x128xf32>
      %401 = vector.shape_cast %400 : vector<1x2x128xf32> to vector<2x128xf32>
      %c0_184 = arith.constant 0 : index
      %c0_185 = arith.constant 0 : index
      %402 = vector.load %arg4[%c0_184, %c0_185] : memref<128x128xf32, #tpu.memory_space<vmem>>, vector<128x128xf32>
      %cst_186 = arith.constant dense<0.000000e+00> : vector<2x128xf32>
      %403 = tpu.matmul %401, %402, %cst_186 {dimension_numbers = #tpu.dot_dimension_numbers<[1], [0], [0], [1], [0, 0, 1, 1], [], []>} : vector<2x128xf32>, vector<128x128xf32>, vector<2x128xf32> -> vector<2x128xf32>
      %404 = arith.addf %399, %403 : vector<2x128xf32>
      %405 = vector.broadcast %1 : vector<1x128xf32> to vector<2x128xf32>
      %406 = arith.addf %404, %405 : vector<2x128xf32>
      %c0_187 = arith.constant 0 : index
      %c0_188 = arith.constant 0 : index
      %407 = vector.load %arg7[%c0_187, %c0_188] : memref<1x128xf32, #tpu.memory_space<vmem>>, vector<1x128xf32>
      %408 = vector.broadcast %407 : vector<1x128xf32> to vector<2x128xf32>
      %409 = arith.addf %406, %408 : vector<2x128xf32>
      %c0_189 = arith.constant 0 : index
      %c0_190 = arith.constant 0 : index
      %410 = vector.load %arg10[%c0_189, %c0_190] : memref<2x128xf32, #tpu.memory_space<vmem>>, vector<2x128xf32>
      tpu.vector_store %arg10[%c0_189, %c0_190], %409 {strides = array<i32>} : memref<2x128xf32, #tpu.memory_space<vmem>>, vector<2x128xf32>,
    } else {
    }
    %c0_i32_6 = arith.constant 0 : i32
    %c8_i32_7 = arith.constant 8 : i32
    %12 = arith.muli %arg0, %c8_i32_7 : i32
    %13 = arith.addi %12, %c0_i32_6 : i32
    %14 = arith.index_cast %c0_i32_6 : i32 to index
    %c0_8 = arith.constant 0 : index
    %c0_9 = arith.constant 0 : index
    %15 = vector.load %arg1[%14, %c0_8, %c0_9] : memref<8x2x128xf32, #tpu.memory_space<vmem>>, vector<1x2x128xf32>
    %16 = vector.shape_cast %15 : vector<1x2x128xf32> to vector<2x128xf32>
    %c0_10 = arith.constant 0 : index
    %c0_11 = arith.constant 0 : index
    %17 = vector.load %arg3[%c0_10, %c0_11] : memref<128x128xf32, #tpu.memory_space<vmem>>, vector<128x128xf32>
    %cst_12 = arith.constant dense<0.000000e+00> : vector<2x128xf32>
    %18 = tpu.matmul %16, %17, %cst_12 {dimension_numbers = #tpu.dot_dimension_numbers<[1], [0], [0], [1], [0, 0, 1, 1], [], []>} : vector<2x128xf32>, vector<128x128xf32>, vector<2x128xf32> -> vector<2x128xf32>
    %19 = arith.index_cast %c0_i32_6 : i32 to index
    %c0_13 = arith.constant 0 : index
    %c0_14 = arith.constant 0 : index
    %20 = vector.load %arg2[%19, %c0_13, %c0_14] : memref<8x2x128xf32, #tpu.memory_space<vmem>>, vector<1x2x128xf32>
    %21 = vector.shape_cast %20 : vector<1x2x128xf32> to vector<2x128xf32>
    %c0_15 = arith.constant 0 : index
    %c0_16 = arith.constant 0 : index
    %22 = vector.load %arg4[%c0_15, %c0_16] : memref<128x128xf32, #tpu.memory_space<vmem>>, vector<128x128xf32>
    %cst_17 = arith.constant dense<0.000000e+00> : vector<2x128xf32>
    %23 = tpu.matmul %21, %22, %cst_17 {dimension_numbers = #tpu.dot_dimension_numbers<[1], [0], [0], [1], [0, 0, 1, 1], [], []>} : vector<2x128xf32>, vector<128x128xf32>, vector<2x128xf32> -> vector<2x128xf32>
    %24 = arith.addf %18, %23 : vector<2x128xf32>
    %25 = vector.broadcast %1 : vector<1x128xf32> to vector<2x128xf32>
    %26 = arith.addf %24, %25 : vector<2x128xf32>
    %c0_18 = arith.constant 0 : index
    %c0_19 = arith.constant 0 : index
    %27 = vector.load %arg10[%c0_18, %c0_19] : memref<2x128xf32, #tpu.memory_space<vmem>>, vector<2x128xf32>
    %28 = vector.shape_cast %27 : vector<2x128xf32> to vector<2x1x128xf32>
    %29 = vector.shape_cast %0 : vector<8x128xf32> to vector<1x8x128xf32>
    %30 = vector.broadcast %28 : vector<2x1x128xf32> to vector<2x8x128xf32>
    %31 = vector.broadcast %29 : vector<1x8x128xf32> to vector<2x8x128xf32>
    %32 = arith.addf %30, %31 : vector<2x8x128xf32>
    %cst_20 = arith.constant dense<0xFF800000> : vector<2x8xf32>
    %33 = vector.multi_reduction <maximumf>, %32, %cst_20 [2] : vector<2x8x128xf32> to vector<2x8xf32>
    %34 = vector.shape_cast %33 : vector<2x8xf32> to vector<2x8x1xf32>
    %35 = vector.broadcast %34 : vector<2x8x1xf32> to vector<2x8x128xf32>
    %36 = arith.cmpf oge, %32, %35 : vector<2x8x128xf32>
    %c128_i32 = arith.constant 128 : i32
    %37 = vector.broadcast %c128_i32 : i32 to vector<2x8x128xi32>
    %38 = arith.select %36, %4, %37 : vector<2x8x128xi1>, vector<2x8x128xi32>
    %cst_21 = arith.constant dense<2147483647> : vector<2x8xi32>
    %39 = vector.multi_reduction <minsi>, %38, %cst_21 [2] : vector<2x8x128xi32> to vector<2x8xi32>
    %40 = vector.extract_strided_slice %26 {offsets = [0, 0], sizes = [2, 8], strides = [1, 1]} : vector<2x128xf32> to vector<2x8xf32>
    %41 = arith.addf %33, %40 : vector<2x8xf32>
    %42 = tpu.concatenate %41, %8 in 1 : vector<2x8xf32>, vector<2x120xf32> -> vector<2x128xf32>
    %43 = tpu.concatenate %39, %7 in 1 : vector<2x8xi32>, vector<2x120xi32> -> vector<2x128xi32>
    %44 = vector.broadcast %13 : i32 to vector<2x1xi32>
    %45 = arith.cmpi sgt, %2, %44 : vector<2x1xi32>
    %c0_i32_22 = arith.constant 0 : i32
    %46 = arith.cmpi sgt, %13, %c0_i32_22 : i32
    %47 = vector.broadcast %46 : i1 to vector<2x1xi1>
    %48 = arith.andi %45, %47 : vector<2x1xi1>
    %49 = vector.shape_cast %48 : vector<2x1xi1> to vector<2x1xi1>
    %50 = vector.broadcast %49 : vector<2x1xi1> to vector<2x128xi1>
    %51 = arith.select %50, %42, %27 : vector<2x128xi1>, vector<2x128xf32>
    %c0_23 = arith.constant 0 : index
    %c0_24 = arith.constant 0 : index
    %52 = vector.load %arg10[%c0_23, %c0_24] : memref<2x128xf32, #tpu.memory_space<vmem>>, vector<2x128xf32>
    tpu.vector_store %arg10[%c0_23, %c0_24], %51 {strides = array<i32>} : memref<2x128xf32, #tpu.memory_space<vmem>>, vector<2x128xf32>,
    %53 = vector.shape_cast %48 : vector<2x1xi1> to vector<2x1xi1>
    %54 = vector.broadcast %53 : vector<2x1xi1> to vector<2x128xi1>
    %55 = arith.select %54, %43, %3 : vector<2x128xi1>, vector<2x128xi32>
    %56 = arith.index_cast %c0_i32_6 : i32 to index
    %c0_25 = arith.constant 0 : index
    %c0_26 = arith.constant 0 : index
    %57 = vector.load %arg9[%56, %c0_25, %c0_26] : memref<8x2x128xi32, #tpu.memory_space<vmem>>, vector<1x2x128xi32>
    %58 = vector.shape_cast %57 : vector<1x2x128xi32> to vector<2x128xi32>
    %59 = vector.shape_cast %55 : vector<2x128xi32> to vector<1x2x128xi32>
    tpu.vector_store %arg9[%56, %c0_25, %c0_26], %59 {strides = array<i32>} : memref<8x2x128xi32, #tpu.memory_space<vmem>>, vector<1x2x128xi32>,
    %c1_i32 = arith.constant 1 : i32
    %c8_i32_27 = arith.constant 8 : i32
    %60 = arith.muli %arg0, %c8_i32_27 : i32
    %61 = arith.addi %60, %c1_i32 : i32
    %62 = arith.index_cast %c1_i32 : i32 to index
    %c0_28 = arith.constant 0 : index
    %c0_29 = arith.constant 0 : index
    %63 = vector.load %arg1[%62, %c0_28, %c0_29] : memref<8x2x128xf32, #tpu.memory_space<vmem>>, vector<1x2x128xf32>
    %64 = vector.shape_cast %63 : vector<1x2x128xf32> to vector<2x128xf32>
    %c0_30 = arith.constant 0 : index
    %c0_31 = arith.constant 0 : index
    %65 = vector.load %arg3[%c0_30, %c0_31] : memref<128x128xf32, #tpu.memory_space<vmem>>, vector<128x128xf32>
    %cst_32 = arith.constant dense<0.000000e+00> : vector<2x128xf32>
    %66 = tpu.matmul %64, %65, %cst_32 {dimension_numbers = #tpu.dot_dimension_numbers<[1], [0], [0], [1], [0, 0, 1, 1], [], []>} : vector<2x128xf32>, vector<128x128xf32>, vector<2x128xf32> -> vector<2x128xf32>
    %67 = arith.index_cast %c1_i32 : i32 to index
    %c0_33 = arith.constant 0 : index
    %c0_34 = arith.constant 0 : index
    %68 = vector.load %arg2[%67, %c0_33, %c0_34] : memref<8x2x128xf32, #tpu.memory_space<vmem>>, vector<1x2x128xf32>
    %69 = vector.shape_cast %68 : vector<1x2x128xf32> to vector<2x128xf32>
    %c0_35 = arith.constant 0 : index
    %c0_36 = arith.constant 0 : index
    %70 = vector.load %arg4[%c0_35, %c0_36] : memref<128x128xf32, #tpu.memory_space<vmem>>, vector<128x128xf32>
    %cst_37 = arith.constant dense<0.000000e+00> : vector<2x128xf32>
    %71 = tpu.matmul %69, %70, %cst_37 {dimension_numbers = #tpu.dot_dimension_numbers<[1], [0], [0], [1], [0, 0, 1, 1], [], []>} : vector<2x128xf32>, vector<128x128xf32>, vector<2x128xf32> -> vector<2x128xf32>
    %72 = arith.addf %66, %71 : vector<2x128xf32>
    %73 = vector.broadcast %1 : vector<1x128xf32> to vector<2x128xf32>
    %74 = arith.addf %72, %73 : vector<2x128xf32>
    %c0_38 = arith.constant 0 : index
    %c0_39 = arith.constant 0 : index
    %75 = vector.load %arg10[%c0_38, %c0_39] : memref<2x128xf32, #tpu.memory_space<vmem>>, vector<2x128xf32>
    %76 = vector.shape_cast %75 : vector<2x128xf32> to vector<2x1x128xf32>
    %77 = vector.shape_cast %0 : vector<8x128xf32> to vector<1x8x128xf32>
    %78 = vector.broadcast %76 : vector<2x1x128xf32> to vector<2x8x128xf32>
    %79 = vector.broadcast %77 : vector<1x8x128xf32> to vector<2x8x128xf32>
    %80 = arith.addf %78, %79 : vector<2x8x128xf32>
    %cst_40 = arith.constant dense<0xFF800000> : vector<2x8xf32>
    %81 = vector.multi_reduction <maximumf>, %80, %cst_40 [2] : vector<2x8x128xf32> to vector<2x8xf32>
    %82 = vector.shape_cast %81 : vector<2x8xf32> to vector<2x8x1xf32>
    %83 = vector.broadcast %82 : vector<2x8x1xf32> to vector<2x8x128xf32>
    %84 = arith.cmpf oge, %80, %83 : vector<2x8x128xf32>
    %c128_i32_41 = arith.constant 128 : i32
    %85 = vector.broadcast %c128_i32_41 : i32 to vector<2x8x128xi32>
    %86 = arith.select %84, %4, %85 : vector<2x8x128xi1>, vector<2x8x128xi32>
    %cst_42 = arith.constant dense<2147483647> : vector<2x8xi32>
    %87 = vector.multi_reduction <minsi>, %86, %cst_42 [2] : vector<2x8x128xi32> to vector<2x8xi32>
    %88 = vector.extract_strided_slice %74 {offsets = [0, 0], sizes = [2, 8], strides = [1, 1]} : vector<2x128xf32> to vector<2x8xf32>
    %89 = arith.addf %81, %88 : vector<2x8xf32>
    %90 = tpu.concatenate %89, %8 in 1 : vector<2x8xf32>, vector<2x120xf32> -> vector<2x128xf32>
    %91 = tpu.concatenate %87, %7 in 1 : vector<2x8xi32>, vector<2x120xi32> -> vector<2x128xi32>
    %92 = vector.broadcast %61 : i32 to vector<2x1xi32>
    %93 = arith.cmpi sgt, %2, %92 : vector<2x1xi32>
    %c0_i32_43 = arith.constant 0 : i32
    %94 = arith.cmpi sgt, %61, %c0_i32_43 : i32
    %95 = vector.broadcast %94 : i1 to vector<2x1xi1>
    %96 = arith.andi %93, %95 : vector<2x1xi1>
    %97 = vector.shape_cast %96 : vector<2x1xi1> to vector<2x1xi1>
    %98 = vector.broadcast %97 : vector<2x1xi1> to vector<2x128xi1>
    %99 = arith.select %98, %90, %75 : vector<2x128xi1>, vector<2x128xf32>
    %c0_44 = arith.constant 0 : index
    %c0_45 = arith.constant 0 : index
    %100 = vector.load %arg10[%c0_44, %c0_45] : memref<2x128xf32, #tpu.memory_space<vmem>>, vector<2x128xf32>
    tpu.vector_store %arg10[%c0_44, %c0_45], %99 {strides = array<i32>} : memref<2x128xf32, #tpu.memory_space<vmem>>, vector<2x128xf32>,
    %101 = vector.shape_cast %96 : vector<2x1xi1> to vector<2x1xi1>
    %102 = vector.broadcast %101 : vector<2x1xi1> to vector<2x128xi1>
    %103 = arith.select %102, %91, %3 : vector<2x128xi1>, vector<2x128xi32>
    %104 = arith.index_cast %c1_i32 : i32 to index
    %c0_46 = arith.constant 0 : index
    %c0_47 = arith.constant 0 : index
    %105 = vector.load %arg9[%104, %c0_46, %c0_47] : memref<8x2x128xi32, #tpu.memory_space<vmem>>, vector<1x2x128xi32>
    %106 = vector.shape_cast %105 : vector<1x2x128xi32> to vector<2x128xi32>
    %107 = vector.shape_cast %103 : vector<2x128xi32> to vector<1x2x128xi32>
    tpu.vector_store %arg9[%104, %c0_46, %c0_47], %107 {strides = array<i32>} : memref<8x2x128xi32, #tpu.memory_space<vmem>>, vector<1x2x128xi32>,
    %c2_i32 = arith.constant 2 : i32
    %c8_i32_48 = arith.constant 8 : i32
    %108 = arith.muli %arg0, %c8_i32_48 : i32
    %109 = arith.addi %108, %c2_i32 : i32
    %110 = arith.index_cast %c2_i32 : i32 to index
    %c0_49 = arith.constant 0 : index
    %c0_50 = arith.constant 0 : index
    %111 = vector.load %arg1[%110, %c0_49, %c0_50] : memref<8x2x128xf32, #tpu.memory_space<vmem>>, vector<1x2x128xf32>
    %112 = vector.shape_cast %111 : vector<1x2x128xf32> to vector<2x128xf32>
    %c0_51 = arith.constant 0 : index
    %c0_52 = arith.constant 0 : index
    %113 = vector.load %arg3[%c0_51, %c0_52] : memref<128x128xf32, #tpu.memory_space<vmem>>, vector<128x128xf32>
    %cst_53 = arith.constant dense<0.000000e+00> : vector<2x128xf32>
    %114 = tpu.matmul %112, %113, %cst_53 {dimension_numbers = #tpu.dot_dimension_numbers<[1], [0], [0], [1], [0, 0, 1, 1], [], []>} : vector<2x128xf32>, vector<128x128xf32>, vector<2x128xf32> -> vector<2x128xf32>
    %115 = arith.index_cast %c2_i32 : i32 to index
    %c0_54 = arith.constant 0 : index
    %c0_55 = arith.constant 0 : index
    %116 = vector.load %arg2[%115, %c0_54, %c0_55] : memref<8x2x128xf32, #tpu.memory_space<vmem>>, vector<1x2x128xf32>
    %117 = vector.shape_cast %116 : vector<1x2x128xf32> to vector<2x128xf32>
    %c0_56 = arith.constant 0 : index
    %c0_57 = arith.constant 0 : index
    %118 = vector.load %arg4[%c0_56, %c0_57] : memref<128x128xf32, #tpu.memory_space<vmem>>, vector<128x128xf32>
    %cst_58 = arith.constant dense<0.000000e+00> : vector<2x128xf32>
    %119 = tpu.matmul %117, %118, %cst_58 {dimension_numbers = #tpu.dot_dimension_numbers<[1], [0], [0], [1], [0, 0, 1, 1], [], []>} : vector<2x128xf32>, vector<128x128xf32>, vector<2x128xf32> -> vector<2x128xf32>
    %120 = arith.addf %114, %119 : vector<2x128xf32>
    %121 = vector.broadcast %1 : vector<1x128xf32> to vector<2x128xf32>
    %122 = arith.addf %120, %121 : vector<2x128xf32>
    %c0_59 = arith.constant 0 : index
    %c0_60 = arith.constant 0 : index
    %123 = vector.load %arg10[%c0_59, %c0_60] : memref<2x128xf32, #tpu.memory_space<vmem>>, vector<2x128xf32>
    %124 = vector.shape_cast %123 : vector<2x128xf32> to vector<2x1x128xf32>
    %125 = vector.shape_cast %0 : vector<8x128xf32> to vector<1x8x128xf32>
    %126 = vector.broadcast %124 : vector<2x1x128xf32> to vector<2x8x128xf32>
    %127 = vector.broadcast %125 : vector<1x8x128xf32> to vector<2x8x128xf32>
    %128 = arith.addf %126, %127 : vector<2x8x128xf32>
    %cst_61 = arith.constant dense<0xFF800000> : vector<2x8xf32>
    %129 = vector.multi_reduction <maximumf>, %128, %cst_61 [2] : vector<2x8x128xf32> to vector<2x8xf32>
    %130 = vector.shape_cast %129 : vector<2x8xf32> to vector<2x8x1xf32>
    %131 = vector.broadcast %130 : vector<2x8x1xf32> to vector<2x8x128xf32>
    %132 = arith.cmpf oge, %128, %131 : vector<2x8x128xf32>
    %c128_i32_62 = arith.constant 128 : i32
    %133 = vector.broadcast %c128_i32_62 : i32 to vector<2x8x128xi32>
    %134 = arith.select %132, %4, %133 : vector<2x8x128xi1>, vector<2x8x128xi32>
    %cst_63 = arith.constant dense<2147483647> : vector<2x8xi32>
    %135 = vector.multi_reduction <minsi>, %134, %cst_63 [2] : vector<2x8x128xi32> to vector<2x8xi32>
    %136 = vector.extract_strided_slice %122 {offsets = [0, 0], sizes = [2, 8], strides = [1, 1]} : vector<2x128xf32> to vector<2x8xf32>
    %137 = arith.addf %129, %136 : vector<2x8xf32>
    %138 = tpu.concatenate %137, %8 in 1 : vector<2x8xf32>, vector<2x120xf32> -> vector<2x128xf32>
    %139 = tpu.concatenate %135, %7 in 1 : vector<2x8xi32>, vector<2x120xi32> -> vector<2x128xi32>
    %140 = vector.broadcast %109 : i32 to vector<2x1xi32>
    %141 = arith.cmpi sgt, %2, %140 : vector<2x1xi32>
    %c0_i32_64 = arith.constant 0 : i32
    %142 = arith.cmpi sgt, %109, %c0_i32_64 : i32
    %143 = vector.broadcast %142 : i1 to vector<2x1xi1>
    %144 = arith.andi %141, %143 : vector<2x1xi1>
    %145 = vector.shape_cast %144 : vector<2x1xi1> to vector<2x1xi1>
    %146 = vector.broadcast %145 : vector<2x1xi1> to vector<2x128xi1>
    %147 = arith.select %146, %138, %123 : vector<2x128xi1>, vector<2x128xf32>
    %c0_65 = arith.constant 0 : index
    %c0_66 = arith.constant 0 : index
    %148 = vector.load %arg10[%c0_65, %c0_66] : memref<2x128xf32, #tpu.memory_space<vmem>>, vector<2x128xf32>
    tpu.vector_store %arg10[%c0_65, %c0_66], %147 {strides = array<i32>} : memref<2x128xf32, #tpu.memory_space<vmem>>, vector<2x128xf32>,
    %149 = vector.shape_cast %144 : vector<2x1xi1> to vector<2x1xi1>
    %150 = vector.broadcast %149 : vector<2x1xi1> to vector<2x128xi1>
    %151 = arith.select %150, %139, %3 : vector<2x128xi1>, vector<2x128xi32>
    %152 = arith.index_cast %c2_i32 : i32 to index
    %c0_67 = arith.constant 0 : index
    %c0_68 = arith.constant 0 : index
    %153 = vector.load %arg9[%152, %c0_67, %c0_68] : memref<8x2x128xi32, #tpu.memory_space<vmem>>, vector<1x2x128xi32>
    %154 = vector.shape_cast %153 : vector<1x2x128xi32> to vector<2x128xi32>
    %155 = vector.shape_cast %151 : vector<2x128xi32> to vector<1x2x128xi32>
    tpu.vector_store %arg9[%152, %c0_67, %c0_68], %155 {strides = array<i32>} : memref<8x2x128xi32, #tpu.memory_space<vmem>>, vector<1x2x128xi32>,
    %c3_i32 = arith.constant 3 : i32
    %c8_i32_69 = arith.constant 8 : i32
    %156 = arith.muli %arg0, %c8_i32_69 : i32
    %157 = arith.addi %156, %c3_i32 : i32
    %158 = arith.index_cast %c3_i32 : i32 to index
    %c0_70 = arith.constant 0 : index
    %c0_71 = arith.constant 0 : index
    %159 = vector.load %arg1[%158, %c0_70, %c0_71] : memref<8x2x128xf32, #tpu.memory_space<vmem>>, vector<1x2x128xf32>
    %160 = vector.shape_cast %159 : vector<1x2x128xf32> to vector<2x128xf32>
    %c0_72 = arith.constant 0 : index
    %c0_73 = arith.constant 0 : index
    %161 = vector.load %arg3[%c0_72, %c0_73] : memref<128x128xf32, #tpu.memory_space<vmem>>, vector<128x128xf32>
    %cst_74 = arith.constant dense<0.000000e+00> : vector<2x128xf32>
    %162 = tpu.matmul %160, %161, %cst_74 {dimension_numbers = #tpu.dot_dimension_numbers<[1], [0], [0], [1], [0, 0, 1, 1], [], []>} : vector<2x128xf32>, vector<128x128xf32>, vector<2x128xf32> -> vector<2x128xf32>
    %163 = arith.index_cast %c3_i32 : i32 to index
    %c0_75 = arith.constant 0 : index
    %c0_76 = arith.constant 0 : index
    %164 = vector.load %arg2[%163, %c0_75, %c0_76] : memref<8x2x128xf32, #tpu.memory_space<vmem>>, vector<1x2x128xf32>
    %165 = vector.shape_cast %164 : vector<1x2x128xf32> to vector<2x128xf32>
    %c0_77 = arith.constant 0 : index
    %c0_78 = arith.constant 0 : index
    %166 = vector.load %arg4[%c0_77, %c0_78] : memref<128x128xf32, #tpu.memory_space<vmem>>, vector<128x128xf32>
    %cst_79 = arith.constant dense<0.000000e+00> : vector<2x128xf32>
    %167 = tpu.matmul %165, %166, %cst_79 {dimension_numbers = #tpu.dot_dimension_numbers<[1], [0], [0], [1], [0, 0, 1, 1], [], []>} : vector<2x128xf32>, vector<128x128xf32>, vector<2x128xf32> -> vector<2x128xf32>
    %168 = arith.addf %162, %167 : vector<2x128xf32>
    %169 = vector.broadcast %1 : vector<1x128xf32> to vector<2x128xf32>
    %170 = arith.addf %168, %169 : vector<2x128xf32>
    %c0_80 = arith.constant 0 : index
    %c0_81 = arith.constant 0 : index
    %171 = vector.load %arg10[%c0_80, %c0_81] : memref<2x128xf32, #tpu.memory_space<vmem>>, vector<2x128xf32>
    %172 = vector.shape_cast %171 : vector<2x128xf32> to vector<2x1x128xf32>
    %173 = vector.shape_cast %0 : vector<8x128xf32> to vector<1x8x128xf32>
    %174 = vector.broadcast %172 : vector<2x1x128xf32> to vector<2x8x128xf32>
    %175 = vector.broadcast %173 : vector<1x8x128xf32> to vector<2x8x128xf32>
    %176 = arith.addf %174, %175 : vector<2x8x128xf32>
    %cst_82 = arith.constant dense<0xFF800000> : vector<2x8xf32>
    %177 = vector.multi_reduction <maximumf>, %176, %cst_82 [2] : vector<2x8x128xf32> to vector<2x8xf32>
    %178 = vector.shape_cast %177 : vector<2x8xf32> to vector<2x8x1xf32>
    %179 = vector.broadcast %178 : vector<2x8x1xf32> to vector<2x8x128xf32>
    %180 = arith.cmpf oge, %176, %179 : vector<2x8x128xf32>
    %c128_i32_83 = arith.constant 128 : i32
    %181 = vector.broadcast %c128_i32_83 : i32 to vector<2x8x128xi32>
    %182 = arith.select %180, %4, %181 : vector<2x8x128xi1>, vector<2x8x128xi32>
    %cst_84 = arith.constant dense<2147483647> : vector<2x8xi32>
    %183 = vector.multi_reduction <minsi>, %182, %cst_84 [2] : vector<2x8x128xi32> to vector<2x8xi32>
    %184 = vector.extract_strided_slice %170 {offsets = [0, 0], sizes = [2, 8], strides = [1, 1]} : vector<2x128xf32> to vector<2x8xf32>
    %185 = arith.addf %177, %184 : vector<2x8xf32>
    %186 = tpu.concatenate %185, %8 in 1 : vector<2x8xf32>, vector<2x120xf32> -> vector<2x128xf32>
    %187 = tpu.concatenate %183, %7 in 1 : vector<2x8xi32>, vector<2x120xi32> -> vector<2x128xi32>
    %188 = vector.broadcast %157 : i32 to vector<2x1xi32>
    %189 = arith.cmpi sgt, %2, %188 : vector<2x1xi32>
    %c0_i32_85 = arith.constant 0 : i32
    %190 = arith.cmpi sgt, %157, %c0_i32_85 : i32
    %191 = vector.broadcast %190 : i1 to vector<2x1xi1>
    %192 = arith.andi %189, %191 : vector<2x1xi1>
    %193 = vector.shape_cast %192 : vector<2x1xi1> to vector<2x1xi1>
    %194 = vector.broadcast %193 : vector<2x1xi1> to vector<2x128xi1>
    %195 = arith.select %194, %186, %171 : vector<2x128xi1>, vector<2x128xf32>
    %c0_86 = arith.constant 0 : index
    %c0_87 = arith.constant 0 : index
    %196 = vector.load %arg10[%c0_86, %c0_87] : memref<2x128xf32, #tpu.memory_space<vmem>>, vector<2x128xf32>
    tpu.vector_store %arg10[%c0_86, %c0_87], %195 {strides = array<i32>} : memref<2x128xf32, #tpu.memory_space<vmem>>, vector<2x128xf32>,
    %197 = vector.shape_cast %192 : vector<2x1xi1> to vector<2x1xi1>
    %198 = vector.broadcast %197 : vector<2x1xi1> to vector<2x128xi1>
    %199 = arith.select %198, %187, %3 : vector<2x128xi1>, vector<2x128xi32>
    %200 = arith.index_cast %c3_i32 : i32 to index
    %c0_88 = arith.constant 0 : index
    %c0_89 = arith.constant 0 : index
    %201 = vector.load %arg9[%200, %c0_88, %c0_89] : memref<8x2x128xi32, #tpu.memory_space<vmem>>, vector<1x2x128xi32>
    %202 = vector.shape_cast %201 : vector<1x2x128xi32> to vector<2x128xi32>
    %203 = vector.shape_cast %199 : vector<2x128xi32> to vector<1x2x128xi32>
    tpu.vector_store %arg9[%200, %c0_88, %c0_89], %203 {strides = array<i32>} : memref<8x2x128xi32, #tpu.memory_space<vmem>>, vector<1x2x128xi32>,
    %c4_i32 = arith.constant 4 : i32
    %c8_i32_90 = arith.constant 8 : i32
    %204 = arith.muli %arg0, %c8_i32_90 : i32
    %205 = arith.addi %204, %c4_i32 : i32
    %206 = arith.index_cast %c4_i32 : i32 to index
    %c0_91 = arith.constant 0 : index
    %c0_92 = arith.constant 0 : index
    %207 = vector.load %arg1[%206, %c0_91, %c0_92] : memref<8x2x128xf32, #tpu.memory_space<vmem>>, vector<1x2x128xf32>
    %208 = vector.shape_cast %207 : vector<1x2x128xf32> to vector<2x128xf32>
    %c0_93 = arith.constant 0 : index
    %c0_94 = arith.constant 0 : index
    %209 = vector.load %arg3[%c0_93, %c0_94] : memref<128x128xf32, #tpu.memory_space<vmem>>, vector<128x128xf32>
    %cst_95 = arith.constant dense<0.000000e+00> : vector<2x128xf32>
    %210 = tpu.matmul %208, %209, %cst_95 {dimension_numbers = #tpu.dot_dimension_numbers<[1], [0], [0], [1], [0, 0, 1, 1], [], []>} : vector<2x128xf32>, vector<128x128xf32>, vector<2x128xf32> -> vector<2x128xf32>
    %211 = arith.index_cast %c4_i32 : i32 to index
    %c0_96 = arith.constant 0 : index
    %c0_97 = arith.constant 0 : index
    %212 = vector.load %arg2[%211, %c0_96, %c0_97] : memref<8x2x128xf32, #tpu.memory_space<vmem>>, vector<1x2x128xf32>
    %213 = vector.shape_cast %212 : vector<1x2x128xf32> to vector<2x128xf32>
    %c0_98 = arith.constant 0 : index
    %c0_99 = arith.constant 0 : index
    %214 = vector.load %arg4[%c0_98, %c0_99] : memref<128x128xf32, #tpu.memory_space<vmem>>, vector<128x128xf32>
    %cst_100 = arith.constant dense<0.000000e+00> : vector<2x128xf32>
    %215 = tpu.matmul %213, %214, %cst_100 {dimension_numbers = #tpu.dot_dimension_numbers<[1], [0], [0], [1], [0, 0, 1, 1], [], []>} : vector<2x128xf32>, vector<128x128xf32>, vector<2x128xf32> -> vector<2x128xf32>
    %216 = arith.addf %210, %215 : vector<2x128xf32>
    %217 = vector.broadcast %1 : vector<1x128xf32> to vector<2x128xf32>
    %218 = arith.addf %216, %217 : vector<2x128xf32>
    %c0_101 = arith.constant 0 : index
    %c0_102 = arith.constant 0 : index
    %219 = vector.load %arg10[%c0_101, %c0_102] : memref<2x128xf32, #tpu.memory_space<vmem>>, vector<2x128xf32>
    %220 = vector.shape_cast %219 : vector<2x128xf32> to vector<2x1x128xf32>
    %221 = vector.shape_cast %0 : vector<8x128xf32> to vector<1x8x128xf32>
    %222 = vector.broadcast %220 : vector<2x1x128xf32> to vector<2x8x128xf32>
    %223 = vector.broadcast %221 : vector<1x8x128xf32> to vector<2x8x128xf32>
    %224 = arith.addf %222, %223 : vector<2x8x128xf32>
    %cst_103 = arith.constant dense<0xFF800000> : vector<2x8xf32>
    %225 = vector.multi_reduction <maximumf>, %224, %cst_103 [2] : vector<2x8x128xf32> to vector<2x8xf32>
    %226 = vector.shape_cast %225 : vector<2x8xf32> to vector<2x8x1xf32>
    %227 = vector.broadcast %226 : vector<2x8x1xf32> to vector<2x8x128xf32>
    %228 = arith.cmpf oge, %224, %227 : vector<2x8x128xf32>
    %c128_i32_104 = arith.constant 128 : i32
    %229 = vector.broadcast %c128_i32_104 : i32 to vector<2x8x128xi32>
    %230 = arith.select %228, %4, %229 : vector<2x8x128xi1>, vector<2x8x128xi32>
    %cst_105 = arith.constant dense<2147483647> : vector<2x8xi32>
    %231 = vector.multi_reduction <minsi>, %230, %cst_105 [2] : vector<2x8x128xi32> to vector<2x8xi32>
    %232 = vector.extract_strided_slice %218 {offsets = [0, 0], sizes = [2, 8], strides = [1, 1]} : vector<2x128xf32> to vector<2x8xf32>
    %233 = arith.addf %225, %232 : vector<2x8xf32>
    %234 = tpu.concatenate %233, %8 in 1 : vector<2x8xf32>, vector<2x120xf32> -> vector<2x128xf32>
    %235 = tpu.concatenate %231, %7 in 1 : vector<2x8xi32>, vector<2x120xi32> -> vector<2x128xi32>
    %236 = vector.broadcast %205 : i32 to vector<2x1xi32>
    %237 = arith.cmpi sgt, %2, %236 : vector<2x1xi32>
    %c0_i32_106 = arith.constant 0 : i32
    %238 = arith.cmpi sgt, %205, %c0_i32_106 : i32
    %239 = vector.broadcast %238 : i1 to vector<2x1xi1>
    %240 = arith.andi %237, %239 : vector<2x1xi1>
    %241 = vector.shape_cast %240 : vector<2x1xi1> to vector<2x1xi1>
    %242 = vector.broadcast %241 : vector<2x1xi1> to vector<2x128xi1>
    %243 = arith.select %242, %234, %219 : vector<2x128xi1>, vector<2x128xf32>
    %c0_107 = arith.constant 0 : index
    %c0_108 = arith.constant 0 : index
    %244 = vector.load %arg10[%c0_107, %c0_108] : memref<2x128xf32, #tpu.memory_space<vmem>>, vector<2x128xf32>
    tpu.vector_store %arg10[%c0_107, %c0_108], %243 {strides = array<i32>} : memref<2x128xf32, #tpu.memory_space<vmem>>, vector<2x128xf32>,
    %245 = vector.shape_cast %240 : vector<2x1xi1> to vector<2x1xi1>
    %246 = vector.broadcast %245 : vector<2x1xi1> to vector<2x128xi1>
    %247 = arith.select %246, %235, %3 : vector<2x128xi1>, vector<2x128xi32>
    %248 = arith.index_cast %c4_i32 : i32 to index
    %c0_109 = arith.constant 0 : index
    %c0_110 = arith.constant 0 : index
    %249 = vector.load %arg9[%248, %c0_109, %c0_110] : memref<8x2x128xi32, #tpu.memory_space<vmem>>, vector<1x2x128xi32>
    %250 = vector.shape_cast %249 : vector<1x2x128xi32> to vector<2x128xi32>
    %251 = vector.shape_cast %247 : vector<2x128xi32> to vector<1x2x128xi32>
    tpu.vector_store %arg9[%248, %c0_109, %c0_110], %251 {strides = array<i32>} : memref<8x2x128xi32, #tpu.memory_space<vmem>>, vector<1x2x128xi32>,
    %c5_i32 = arith.constant 5 : i32
    %c8_i32_111 = arith.constant 8 : i32
    %252 = arith.muli %arg0, %c8_i32_111 : i32
    %253 = arith.addi %252, %c5_i32 : i32
    %254 = arith.index_cast %c5_i32 : i32 to index
    %c0_112 = arith.constant 0 : index
    %c0_113 = arith.constant 0 : index
    %255 = vector.load %arg1[%254, %c0_112, %c0_113] : memref<8x2x128xf32, #tpu.memory_space<vmem>>, vector<1x2x128xf32>
    %256 = vector.shape_cast %255 : vector<1x2x128xf32> to vector<2x128xf32>
    %c0_114 = arith.constant 0 : index
    %c0_115 = arith.constant 0 : index
    %257 = vector.load %arg3[%c0_114, %c0_115] : memref<128x128xf32, #tpu.memory_space<vmem>>, vector<128x128xf32>
    %cst_116 = arith.constant dense<0.000000e+00> : vector<2x128xf32>
    %258 = tpu.matmul %256, %257, %cst_116 {dimension_numbers = #tpu.dot_dimension_numbers<[1], [0], [0], [1], [0, 0, 1, 1], [], []>} : vector<2x128xf32>, vector<128x128xf32>, vector<2x128xf32> -> vector<2x128xf32>
    %259 = arith.index_cast %c5_i32 : i32 to index
    %c0_117 = arith.constant 0 : index
    %c0_118 = arith.constant 0 : index
    %260 = vector.load %arg2[%259, %c0_117, %c0_118] : memref<8x2x128xf32, #tpu.memory_space<vmem>>, vector<1x2x128xf32>
    %261 = vector.shape_cast %260 : vector<1x2x128xf32> to vector<2x128xf32>
    %c0_119 = arith.constant 0 : index
    %c0_120 = arith.constant 0 : index
    %262 = vector.load %arg4[%c0_119, %c0_120] : memref<128x128xf32, #tpu.memory_space<vmem>>, vector<128x128xf32>
    %cst_121 = arith.constant dense<0.000000e+00> : vector<2x128xf32>
    %263 = tpu.matmul %261, %262, %cst_121 {dimension_numbers = #tpu.dot_dimension_numbers<[1], [0], [0], [1], [0, 0, 1, 1], [], []>} : vector<2x128xf32>, vector<128x128xf32>, vector<2x128xf32> -> vector<2x128xf32>
    %264 = arith.addf %258, %263 : vector<2x128xf32>
    %265 = vector.broadcast %1 : vector<1x128xf32> to vector<2x128xf32>
    %266 = arith.addf %264, %265 : vector<2x128xf32>
    %c0_122 = arith.constant 0 : index
    %c0_123 = arith.constant 0 : index
    %267 = vector.load %arg10[%c0_122, %c0_123] : memref<2x128xf32, #tpu.memory_space<vmem>>, vector<2x128xf32>
    %268 = vector.shape_cast %267 : vector<2x128xf32> to vector<2x1x128xf32>
    %269 = vector.shape_cast %0 : vector<8x128xf32> to vector<1x8x128xf32>
    %270 = vector.broadcast %268 : vector<2x1x128xf32> to vector<2x8x128xf32>
    %271 = vector.broadcast %269 : vector<1x8x128xf32> to vector<2x8x128xf32>
    %272 = arith.addf %270, %271 : vector<2x8x128xf32>
    %cst_124 = arith.constant dense<0xFF800000> : vector<2x8xf32>
    %273 = vector.multi_reduction <maximumf>, %272, %cst_124 [2] : vector<2x8x128xf32> to vector<2x8xf32>
    %274 = vector.shape_cast %273 : vector<2x8xf32> to vector<2x8x1xf32>
    %275 = vector.broadcast %274 : vector<2x8x1xf32> to vector<2x8x128xf32>
    %276 = arith.cmpf oge, %272, %275 : vector<2x8x128xf32>
    %c128_i32_125 = arith.constant 128 : i32
    %277 = vector.broadcast %c128_i32_125 : i32 to vector<2x8x128xi32>
    %278 = arith.select %276, %4, %277 : vector<2x8x128xi1>, vector<2x8x128xi32>
    %cst_126 = arith.constant dense<2147483647> : vector<2x8xi32>
    %279 = vector.multi_reduction <minsi>, %278, %cst_126 [2] : vector<2x8x128xi32> to vector<2x8xi32>
    %280 = vector.extract_strided_slice %266 {offsets = [0, 0], sizes = [2, 8], strides = [1, 1]} : vector<2x128xf32> to vector<2x8xf32>
    %281 = arith.addf %273, %280 : vector<2x8xf32>
    %282 = tpu.concatenate %281, %8 in 1 : vector<2x8xf32>, vector<2x120xf32> -> vector<2x128xf32>
    %283 = tpu.concatenate %279, %7 in 1 : vector<2x8xi32>, vector<2x120xi32> -> vector<2x128xi32>
    %284 = vector.broadcast %253 : i32 to vector<2x1xi32>
    %285 = arith.cmpi sgt, %2, %284 : vector<2x1xi32>
    %c0_i32_127 = arith.constant 0 : i32
    %286 = arith.cmpi sgt, %253, %c0_i32_127 : i32
    %287 = vector.broadcast %286 : i1 to vector<2x1xi1>
    %288 = arith.andi %285, %287 : vector<2x1xi1>
    %289 = vector.shape_cast %288 : vector<2x1xi1> to vector<2x1xi1>
    %290 = vector.broadcast %289 : vector<2x1xi1> to vector<2x128xi1>
    %291 = arith.select %290, %282, %267 : vector<2x128xi1>, vector<2x128xf32>
    %c0_128 = arith.constant 0 : index
    %c0_129 = arith.constant 0 : index
    %292 = vector.load %arg10[%c0_128, %c0_129] : memref<2x128xf32, #tpu.memory_space<vmem>>, vector<2x128xf32>
    tpu.vector_store %arg10[%c0_128, %c0_129], %291 {strides = array<i32>} : memref<2x128xf32, #tpu.memory_space<vmem>>, vector<2x128xf32>,
    %293 = vector.shape_cast %288 : vector<2x1xi1> to vector<2x1xi1>
    %294 = vector.broadcast %293 : vector<2x1xi1> to vector<2x128xi1>
    %295 = arith.select %294, %283, %3 : vector<2x128xi1>, vector<2x128xi32>
    %296 = arith.index_cast %c5_i32 : i32 to index
    %c0_130 = arith.constant 0 : index
    %c0_131 = arith.constant 0 : index
    %297 = vector.load %arg9[%296, %c0_130, %c0_131] : memref<8x2x128xi32, #tpu.memory_space<vmem>>, vector<1x2x128xi32>
    %298 = vector.shape_cast %297 : vector<1x2x128xi32> to vector<2x128xi32>
    %299 = vector.shape_cast %295 : vector<2x128xi32> to vector<1x2x128xi32>
    tpu.vector_store %arg9[%296, %c0_130, %c0_131], %299 {strides = array<i32>} : memref<8x2x128xi32, #tpu.memory_space<vmem>>, vector<1x2x128xi32>,
    %c6_i32 = arith.constant 6 : i32
    %c8_i32_132 = arith.constant 8 : i32
    %300 = arith.muli %arg0, %c8_i32_132 : i32
    %301 = arith.addi %300, %c6_i32 : i32
    %302 = arith.index_cast %c6_i32 : i32 to index
    %c0_133 = arith.constant 0 : index
    %c0_134 = arith.constant 0 : index
    %303 = vector.load %arg1[%302, %c0_133, %c0_134] : memref<8x2x128xf32, #tpu.memory_space<vmem>>, vector<1x2x128xf32>
    %304 = vector.shape_cast %303 : vector<1x2x128xf32> to vector<2x128xf32>
    %c0_135 = arith.constant 0 : index
    %c0_136 = arith.constant 0 : index
    %305 = vector.load %arg3[%c0_135, %c0_136] : memref<128x128xf32, #tpu.memory_space<vmem>>, vector<128x128xf32>
    %cst_137 = arith.constant dense<0.000000e+00> : vector<2x128xf32>
    %306 = tpu.matmul %304, %305, %cst_137 {dimension_numbers = #tpu.dot_dimension_numbers<[1], [0], [0], [1], [0, 0, 1, 1], [], []>} : vector<2x128xf32>, vector<128x128xf32>, vector<2x128xf32> -> vector<2x128xf32>
    %307 = arith.index_cast %c6_i32 : i32 to index
    %c0_138 = arith.constant 0 : index
    %c0_139 = arith.constant 0 : index
    %308 = vector.load %arg2[%307, %c0_138, %c0_139] : memref<8x2x128xf32, #tpu.memory_space<vmem>>, vector<1x2x128xf32>
    %309 = vector.shape_cast %308 : vector<1x2x128xf32> to vector<2x128xf32>
    %c0_140 = arith.constant 0 : index
    %c0_141 = arith.constant 0 : index
    %310 = vector.load %arg4[%c0_140, %c0_141] : memref<128x128xf32, #tpu.memory_space<vmem>>, vector<128x128xf32>
    %cst_142 = arith.constant dense<0.000000e+00> : vector<2x128xf32>
    %311 = tpu.matmul %309, %310, %cst_142 {dimension_numbers = #tpu.dot_dimension_numbers<[1], [0], [0], [1], [0, 0, 1, 1], [], []>} : vector<2x128xf32>, vector<128x128xf32>, vector<2x128xf32> -> vector<2x128xf32>
    %312 = arith.addf %306, %311 : vector<2x128xf32>
    %313 = vector.broadcast %1 : vector<1x128xf32> to vector<2x128xf32>
    %314 = arith.addf %312, %313 : vector<2x128xf32>
    %c0_143 = arith.constant 0 : index
    %c0_144 = arith.constant 0 : index
    %315 = vector.load %arg10[%c0_143, %c0_144] : memref<2x128xf32, #tpu.memory_space<vmem>>, vector<2x128xf32>
    %316 = vector.shape_cast %315 : vector<2x128xf32> to vector<2x1x128xf32>
    %317 = vector.shape_cast %0 : vector<8x128xf32> to vector<1x8x128xf32>
    %318 = vector.broadcast %316 : vector<2x1x128xf32> to vector<2x8x128xf32>
    %319 = vector.broadcast %317 : vector<1x8x128xf32> to vector<2x8x128xf32>
    %320 = arith.addf %318, %319 : vector<2x8x128xf32>
    %cst_145 = arith.constant dense<0xFF800000> : vector<2x8xf32>
    %321 = vector.multi_reduction <maximumf>, %320, %cst_145 [2] : vector<2x8x128xf32> to vector<2x8xf32>
    %322 = vector.shape_cast %321 : vector<2x8xf32> to vector<2x8x1xf32>
    %323 = vector.broadcast %322 : vector<2x8x1xf32> to vector<2x8x128xf32>
    %324 = arith.cmpf oge, %320, %323 : vector<2x8x128xf32>
    %c128_i32_146 = arith.constant 128 : i32
    %325 = vector.broadcast %c128_i32_146 : i32 to vector<2x8x128xi32>
    %326 = arith.select %324, %4, %325 : vector<2x8x128xi1>, vector<2x8x128xi32>
    %cst_147 = arith.constant dense<2147483647> : vector<2x8xi32>
    %327 = vector.multi_reduction <minsi>, %326, %cst_147 [2] : vector<2x8x128xi32> to vector<2x8xi32>
    %328 = vector.extract_strided_slice %314 {offsets = [0, 0], sizes = [2, 8], strides = [1, 1]} : vector<2x128xf32> to vector<2x8xf32>
    %329 = arith.addf %321, %328 : vector<2x8xf32>
    %330 = tpu.concatenate %329, %8 in 1 : vector<2x8xf32>, vector<2x120xf32> -> vector<2x128xf32>
    %331 = tpu.concatenate %327, %7 in 1 : vector<2x8xi32>, vector<2x120xi32> -> vector<2x128xi32>
    %332 = vector.broadcast %301 : i32 to vector<2x1xi32>
    %333 = arith.cmpi sgt, %2, %332 : vector<2x1xi32>
    %c0_i32_148 = arith.constant 0 : i32
    %334 = arith.cmpi sgt, %301, %c0_i32_148 : i32
    %335 = vector.broadcast %334 : i1 to vector<2x1xi1>
    %336 = arith.andi %333, %335 : vector<2x1xi1>
    %337 = vector.shape_cast %336 : vector<2x1xi1> to vector<2x1xi1>
    %338 = vector.broadcast %337 : vector<2x1xi1> to vector<2x128xi1>
    %339 = arith.select %338, %330, %315 : vector<2x128xi1>, vector<2x128xf32>
    %c0_149 = arith.constant 0 : index
    %c0_150 = arith.constant 0 : index
    %340 = vector.load %arg10[%c0_149, %c0_150] : memref<2x128xf32, #tpu.memory_space<vmem>>, vector<2x128xf32>
    tpu.vector_store %arg10[%c0_149, %c0_150], %339 {strides = array<i32>} : memref<2x128xf32, #tpu.memory_space<vmem>>, vector<2x128xf32>,
    %341 = vector.shape_cast %336 : vector<2x1xi1> to vector<2x1xi1>
    %342 = vector.broadcast %341 : vector<2x1xi1> to vector<2x128xi1>
    %343 = arith.select %342, %331, %3 : vector<2x128xi1>, vector<2x128xi32>
    %344 = arith.index_cast %c6_i32 : i32 to index
    %c0_151 = arith.constant 0 : index
    %c0_152 = arith.constant 0 : index
    %345 = vector.load %arg9[%344, %c0_151, %c0_152] : memref<8x2x128xi32, #tpu.memory_space<vmem>>, vector<1x2x128xi32>
    %346 = vector.shape_cast %345 : vector<1x2x128xi32> to vector<2x128xi32>
    %347 = vector.shape_cast %343 : vector<2x128xi32> to vector<1x2x128xi32>
    tpu.vector_store %arg9[%344, %c0_151, %c0_152], %347 {strides = array<i32>} : memref<8x2x128xi32, #tpu.memory_space<vmem>>, vector<1x2x128xi32>,
    %c7_i32 = arith.constant 7 : i32
    %c8_i32_153 = arith.constant 8 : i32
    %348 = arith.muli %arg0, %c8_i32_153 : i32
    %349 = arith.addi %348, %c7_i32 : i32
    %350 = arith.index_cast %c7_i32 : i32 to index
    %c0_154 = arith.constant 0 : index
    %c0_155 = arith.constant 0 : index
    %351 = vector.load %arg1[%350, %c0_154, %c0_155] : memref<8x2x128xf32, #tpu.memory_space<vmem>>, vector<1x2x128xf32>
    %352 = vector.shape_cast %351 : vector<1x2x128xf32> to vector<2x128xf32>
    %c0_156 = arith.constant 0 : index
    %c0_157 = arith.constant 0 : index
    %353 = vector.load %arg3[%c0_156, %c0_157] : memref<128x128xf32, #tpu.memory_space<vmem>>, vector<128x128xf32>
    %cst_158 = arith.constant dense<0.000000e+00> : vector<2x128xf32>
    %354 = tpu.matmul %352, %353, %cst_158 {dimension_numbers = #tpu.dot_dimension_numbers<[1], [0], [0], [1], [0, 0, 1, 1], [], []>} : vector<2x128xf32>, vector<128x128xf32>, vector<2x128xf32> -> vector<2x128xf32>
    %355 = arith.index_cast %c7_i32 : i32 to index
    %c0_159 = arith.constant 0 : index
    %c0_160 = arith.constant 0 : index
    %356 = vector.load %arg2[%355, %c0_159, %c0_160] : memref<8x2x128xf32, #tpu.memory_space<vmem>>, vector<1x2x128xf32>
    %357 = vector.shape_cast %356 : vector<1x2x128xf32> to vector<2x128xf32>
    %c0_161 = arith.constant 0 : index
    %c0_162 = arith.constant 0 : index
    %358 = vector.load %arg4[%c0_161, %c0_162] : memref<128x128xf32, #tpu.memory_space<vmem>>, vector<128x128xf32>
    %cst_163 = arith.constant dense<0.000000e+00> : vector<2x128xf32>
    %359 = tpu.matmul %357, %358, %cst_163 {dimension_numbers = #tpu.dot_dimension_numbers<[1], [0], [0], [1], [0, 0, 1, 1], [], []>} : vector<2x128xf32>, vector<128x128xf32>, vector<2x128xf32> -> vector<2x128xf32>
    %360 = arith.addf %354, %359 : vector<2x128xf32>
    %361 = vector.broadcast %1 : vector<1x128xf32> to vector<2x128xf32>
    %362 = arith.addf %360, %361 : vector<2x128xf32>
    %c0_164 = arith.constant 0 : index
    %c0_165 = arith.constant 0 : index
    %363 = vector.load %arg10[%c0_164, %c0_165] : memref<2x128xf32, #tpu.memory_space<vmem>>, vector<2x128xf32>
    %364 = vector.shape_cast %363 : vector<2x128xf32> to vector<2x1x128xf32>
    %365 = vector.shape_cast %0 : vector<8x128xf32> to vector<1x8x128xf32>
    %366 = vector.broadcast %364 : vector<2x1x128xf32> to vector<2x8x128xf32>
    %367 = vector.broadcast %365 : vector<1x8x128xf32> to vector<2x8x128xf32>
    %368 = arith.addf %366, %367 : vector<2x8x128xf32>
    %cst_166 = arith.constant dense<0xFF800000> : vector<2x8xf32>
    %369 = vector.multi_reduction <maximumf>, %368, %cst_166 [2] : vector<2x8x128xf32> to vector<2x8xf32>
    %370 = vector.shape_cast %369 : vector<2x8xf32> to vector<2x8x1xf32>
    %371 = vector.broadcast %370 : vector<2x8x1xf32> to vector<2x8x128xf32>
    %372 = arith.cmpf oge, %368, %371 : vector<2x8x128xf32>
    %c128_i32_167 = arith.constant 128 : i32
    %373 = vector.broadcast %c128_i32_167 : i32 to vector<2x8x128xi32>
    %374 = arith.select %372, %4, %373 : vector<2x8x128xi1>, vector<2x8x128xi32>
    %cst_168 = arith.constant dense<2147483647> : vector<2x8xi32>
    %375 = vector.multi_reduction <minsi>, %374, %cst_168 [2] : vector<2x8x128xi32> to vector<2x8xi32>
    %376 = vector.extract_strided_slice %362 {offsets = [0, 0], sizes = [2, 8], strides = [1, 1]} : vector<2x128xf32> to vector<2x8xf32>
    %377 = arith.addf %369, %376 : vector<2x8xf32>
    %378 = tpu.concatenate %377, %8 in 1 : vector<2x8xf32>, vector<2x120xf32> -> vector<2x128xf32>
    %379 = tpu.concatenate %375, %7 in 1 : vector<2x8xi32>, vector<2x120xi32> -> vector<2x128xi32>
    %380 = vector.broadcast %349 : i32 to vector<2x1xi32>
    %381 = arith.cmpi sgt, %2, %380 : vector<2x1xi32>
    %c0_i32_169 = arith.constant 0 : i32
    %382 = arith.cmpi sgt, %349, %c0_i32_169 : i32
    %383 = vector.broadcast %382 : i1 to vector<2x1xi1>
    %384 = arith.andi %381, %383 : vector<2x1xi1>
    %385 = vector.shape_cast %384 : vector<2x1xi1> to vector<2x1xi1>
    %386 = vector.broadcast %385 : vector<2x1xi1> to vector<2x128xi1>
    %387 = arith.select %386, %378, %363 : vector<2x128xi1>, vector<2x128xf32>
    %c0_170 = arith.constant 0 : index
    %c0_171 = arith.constant 0 : index
    %388 = vector.load %arg10[%c0_170, %c0_171] : memref<2x128xf32, #tpu.memory_space<vmem>>, vector<2x128xf32>
    tpu.vector_store %arg10[%c0_170, %c0_171], %387 {strides = array<i32>} : memref<2x128xf32, #tpu.memory_space<vmem>>, vector<2x128xf32>,
    %389 = vector.shape_cast %384 : vector<2x1xi1> to vector<2x1xi1>
    %390 = vector.broadcast %389 : vector<2x1xi1> to vector<2x128xi1>
    %391 = arith.select %390, %379, %3 : vector<2x128xi1>, vector<2x128xi32>
    %392 = arith.index_cast %c7_i32 : i32 to index
    %c0_172 = arith.constant 0 : index
    %c0_173 = arith.constant 0 : index
    %393 = vector.load %arg9[%392, %c0_172, %c0_173] : memref<8x2x128xi32, #tpu.memory_space<vmem>>, vector<1x2x128xi32>
    %394 = vector.shape_cast %393 : vector<1x2x128xi32> to vector<2x128xi32>
    %395 = vector.shape_cast %391 : vector<2x128xi32> to vector<1x2x128xi32>
    tpu.vector_store %arg9[%392, %c0_172, %c0_173], %395 {strides = array<i32>} : memref<8x2x128xi32, #tpu.memory_space<vmem>>, vector<1x2x128xi32>,
    %c8_i32_174 = arith.constant 8 : i32
    return
  }
  func.func @transform_0(%arg0: i32) -> (i32, i32, i32) {
    %c0_i32 = arith.constant 0 : i32
    %c0_i32_0 = arith.constant 0 : i32
    %c0_i32_1 = arith.constant 0 : i32
    return %arg0, %c0_i32, %c0_i32_0 : i32, i32, i32
  }
  func.func @transform_1(%arg0: i32) -> (i32, i32, i32) {
    %c0_i32 = arith.constant 0 : i32
    %c0_i32_0 = arith.constant 0 : i32
    %c0_i32_1 = arith.constant 0 : i32
    return %arg0, %c0_i32, %c0_i32_0 : i32, i32, i32
  }
  func.func @transform_2(%arg0: i32) -> (i32, i32) {
    %c0_i32 = arith.constant 0 : i32
    %c0_i32_0 = arith.constant 0 : i32
    %c0_i32_1 = arith.constant 0 : i32
    return %c0_i32, %c0_i32_0 : i32, i32
  }
  func.func @transform_3(%arg0: i32) -> (i32, i32) {
    %c0_i32 = arith.constant 0 : i32
    %c0_i32_0 = arith.constant 0 : i32
    %c0_i32_1 = arith.constant 0 : i32
    return %c0_i32, %c0_i32_0 : i32, i32
  }
  func.func @transform_4(%arg0: i32) -> (i32, i32) {
    %c0_i32 = arith.constant 0 : i32
    %c0_i32_0 = arith.constant 0 : i32
    %c0_i32_1 = arith.constant 0 : i32
    return %c0_i32, %c0_i32_0 : i32, i32
  }
  func.func @transform_5(%arg0: i32) -> (i32, i32) {
    %c0_i32 = arith.constant 0 : i32
    %c0_i32_0 = arith.constant 0 : i32
    %c0_i32_1 = arith.constant 0 : i32
    return %c0_i32, %c0_i32_0 : i32, i32
  }
  func.func @transform_6(%arg0: i32) -> (i32, i32) {
    %c0_i32 = arith.constant 0 : i32
    %c0_i32_0 = arith.constant 0 : i32
    %c0_i32_1 = arith.constant 0 : i32
    return %c0_i32, %c0_i32_0 : i32, i32
  }
  func.func @transform_7(%arg0: i32) -> (i32, i32) {
    %c0_i32 = arith.constant 0 : i32
    %c0_i32_0 = arith.constant 0 : i32
    %c0_i32_1 = arith.constant 0 : i32
    return %c0_i32, %c0_i32_0 : i32, i32
  }
  func.func @transform_8(%arg0: i32) -> (i32, i32, i32) {
    %c0_i32 = arith.constant 0 : i32
    %c0_i32_0 = arith.constant 0 : i32
    %c0_i32_1 = arith.constant 0 : i32
    return %arg0, %c0_i32, %c0_i32_0 : i32, i32, i32
  }
  func.func @transform_9(%arg0: i32) -> (i32, i32) {
    %c0_i32 = arith.constant 0 : i32
    %c0_i32_0 = arith.constant 0 : i32
    %c0_i32_1 = arith.constant 0 : i32
    return %c0_i32, %c0_i32_0 : i32, i32
  }
}

</mosaic_0001>

<llo_original>
// kernel: custom-call.8
$region0: #{custom-call.8}
  %s0 = inlined_call_operand.vmem [shape: s32[7,2], index: 0, kind: output, shape index: {}]

// kernel: char_ner_forward.3
$region0: #{char_ner_forward.3}
  #allocation0 [shape = 'u32[]', space=smem, size = 0x4, offset = 0x4, fixed_abs, tag = 'smem constant byte address 0x4 - core index']
  #allocation1 [shape = 'u32[72,128]{1,0:T(1,128)}', space=vmem, size = 0x9000, scoped, tag = 'internal scratch']
  %s0 = inlined_call_operand.vmem [shape: f32[8,2,128], index: 0, kind: input, shape index: {}]
  %s1 = inlined_call_operand.vmem [shape: f32[8,2,128], index: 1, kind: input, shape index: {}]
  %s2 = inlined_call_operand.vmem [shape: f32[128,128], index: 2, kind: input, shape index: {}]
  %s3 = inlined_call_operand.vmem [shape: f32[128,128], index: 3, kind: input, shape index: {}]
  %s4 = inlined_call_operand.vmem [shape: f32[1,128], index: 4, kind: input, shape index: {}]
  %s5 = inlined_call_operand.vmem [shape: f32[8,128], index: 5, kind: input, shape index: {}]
  %s6 = inlined_call_operand.vmem [shape: f32[1,128], index: 6, kind: input, shape index: {}]
  %s7 = inlined_call_operand.vmem [shape: s32[2,1], index: 7, kind: input, shape index: {}]
  %s8 = inlined_call_operand.vmem [shape: s32[8,2,128], index: 8, kind: output, shape index: {0}]
  %s9 = inlined_call_operand.vmem [shape: f32[2,128], index: 9, kind: output, shape index: {1}]
  %10 = xla_tuple %s8, %s9
  %s11 = sld [smem:[#allocation0]]
  $region54: #{char_ner_forward.3} parent=0
    _
  %s13 = ssub.s32 1, %s11
  %s14 = scalar_select 0, %s13, %s11
  // Predicated region
  $region2: #{char_ner_forward.3} parent=0 // pred_check
    _
  $region3: #{char_ner_forward.3} parent=0 // pred_check_branch
    %16 = sbr.rel (0) target = $region5
  $region4: #{char_ner_forward.3} parent=0 // pred_region
    _
  $region5: #{char_ner_forward.3} parent=0 // pred_fallthru
    _
  // Predicated region
  $region6: #{char_ner_forward.3} parent=0 // pred_check
    _
  $region7: #{char_ner_forward.3} parent=0 // pred_check_branch
    %18 = sbr.rel (0) target = $region9
  $region8: #{char_ner_forward.3} parent=0 // pred_region
    _
  $region9: #{char_ner_forward.3} parent=0 // pred_fallthru
    _
  // Predicated region
  $region10: #{char_ner_forward.3} parent=0 // pred_check
    _
  $region11: #{char_ner_forward.3} parent=0 // pred_check_branch
    %20 = sbr.rel (0) target = $region13
  $region12: #{char_ner_forward.3} parent=0 // pred_region
    _
  $region13: #{char_ner_forward.3} parent=0 // pred_fallthru
    _
  // Predicated region
  $region14: #{char_ner_forward.3} parent=0 // pred_check
    _
  $region15: #{char_ner_forward.3} parent=0 // pred_check_branch
    %22 = sbr.rel (0) target = $region17
  $region16: #{char_ner_forward.3} parent=0 // pred_region
    _
  $region17: #{char_ner_forward.3} parent=0 // pred_fallthru
    _
  // Predicated region
  $region18: #{char_ner_forward.3} parent=0 // pred_check
    _
  $region19: #{char_ner_forward.3} parent=0 // pred_check_branch
    %24 = sbr.rel (0) target = $region21
  $region20: #{char_ner_forward.3} parent=0 // pred_region
    _
  $region21: #{char_ner_forward.3} parent=0 // pred_fallthru
    _
  // Predicated region
  $region22: #{char_ner_forward.3} parent=0 // pred_check
    _
  $region23: #{char_ner_forward.3} parent=0 // pred_check_branch
    %26 = sbr.rel (0) target = $region25
  $region24: #{char_ner_forward.3} parent=0 // pred_region
    _
  $region25: #{char_ner_forward.3} parent=0 // pred_fallthru
    _
  // Predicated region
  $region26: #{char_ner_forward.3} parent=0 // pred_check
    _
  $region27: #{char_ner_forward.3} parent=0 // pred_check_branch
    %28 = sbr.rel (0) target = $region29
  $region28: #{char_ner_forward.3} parent=0 // pred_region
    _
  $region29: #{char_ner_forward.3} parent=0 // pred_fallthru
    _
  // Predicated region
  $region30: #{char_ner_forward.3} parent=0 // pred_check
    _
  $region31: #{char_ner_forward.3} parent=0 // pred_check_branch
    %30 = sbr.rel (0) target = $region33
  $region32: #{char_ner_forward.3} parent=0 // pred_region
    _
  $region33: #{char_ner_forward.3} parent=0 // pred_fallthru
    _
  %v31 = vld [vmem:[%s5] sm:$0xff]
  %v32 = vld [vmem:[%s4] sm:$0x1]
  %v33 = vld [vmem:[%s7] sm:$0x3]
  %v34 = vlaneseq
  %v35 = vand.u32 %v34, 127
  %v36 = vadd.s32 %v35, 8
  %p37 = scmp.eq.s32.totalorder 0, 0
  // Predicated region
  $region34: #{char_ner_forward.3} parent=0 // pred_check
    %p38 = pneg %p37
  $region35: #{char_ner_forward.3} parent=0 // pred_check_branch
    %40 = sbr.rel (%p38) target = $region37
  $region36: #{char_ner_forward.3} parent=0 // pred_region
    %v41 = vld [vmem:[%s0] sm:$0x3]
    %v42 = vld [vmem:[%s2] sm:$0xff]
    %v43 = vld [vmem:[%s2 + $0x8] sm:$0xff]
    %v44 = vld [vmem:[%s2 + $0x10] sm:$0xff]
    %v45 = vld [vmem:[%s2 + $0x18] sm:$0xff]
    %v46 = vld [vmem:[%s2 + $0x20] sm:$0xff]
    %v47 = vld [vmem:[%s2 + $0x28] sm:$0xff]
    %v48 = vld [vmem:[%s2 + $0x30] sm:$0xff]
    %v49 = vld [vmem:[%s2 + $0x38] sm:$0xff]
    %v50 = vld [vmem:[%s2 + $0x40] sm:$0xff]
    %v51 = vld [vmem:[%s2 + $0x48] sm:$0xff]
    %v52 = vld [vmem:[%s2 + $0x50] sm:$0xff]
    %v53 = vld [vmem:[%s2 + $0x58] sm:$0xff]
    %v54 = vld [vmem:[%s2 + $0x60] sm:$0xff]
    %v55 = vld [vmem:[%s2 + $0x68] sm:$0xff]
    %v56 = vld [vmem:[%s2 + $0x70] sm:$0xff]
    %v57 = vld [vmem:[%s2 + $0x78] sm:$0xff]
    %v58 = vld [vmem:[%s1] sm:$0x3]
    %v59 = vld [vmem:[%s3] sm:$0xff]
    %v60 = vld [vmem:[%s3 + $0x8] sm:$0xff]
    %v61 = vld [vmem:[%s3 + $0x10] sm:$0xff]
    %v62 = vld [vmem:[%s3 + $0x18] sm:$0xff]
    %v63 = vld [vmem:[%s3 + $0x20] sm:$0xff]
    %v64 = vld [vmem:[%s3 + $0x28] sm:$0xff]
    %v65 = vld [vmem:[%s3 + $0x30] sm:$0xff]
    %v66 = vld [vmem:[%s3 + $0x38] sm:$0xff]
    %v67 = vld [vmem:[%s3 + $0x40] sm:$0xff]
    %v68 = vld [vmem:[%s3 + $0x48] sm:$0xff]
    %v69 = vld [vmem:[%s3 + $0x50] sm:$0xff]
    %v70 = vld [vmem:[%s3 + $0x58] sm:$0xff]
    %v71 = vld [vmem:[%s3 + $0x60] sm:$0xff]
    %v72 = vld [vmem:[%s3 + $0x68] sm:$0xff]
    %v73 = vld [vmem:[%s3 + $0x70] sm:$0xff]
    %v74 = vld [vmem:[%s3 + $0x78] sm:$0xff]
    %75 = vmatpush.msra.mxu0 %v74
    %76 = vmatpush.msra.mxu0 %v73
    %77 = vmatpush.msra.mxu0 %v72
    %78 = vmatpush.msra.mxu0 %v71
    %79 = vmatpush.msra.mxu0 %v70
    %80 = vmatpush.msra.mxu0 %v69
    %81 = vmatpush.msra.mxu0 %v68
    %82 = vmatpush.msra.mxu0 %v67
    %83 = vmatpush.msra.mxu0 %v66
    %84 = vmatpush.msra.mxu0 %v65
    %85 = vmatpush.msra.mxu0 %v64
    %86 = vmatpush.msra.mxu0 %v63
    %87 = vmatpush.msra.mxu0 %v62
    %88 = vmatpush.msra.mxu0 %v61
    %89 = vmatpush.msra.mxu0 %v60
    %90 = vmatpush.msra.mxu0 %v59
    %91 = vmatmul.f32.gmra.mxu0 %v58
    %v92 = vpop.f32.mrf.mxu0
    %v93 = vadd.f32 0.0, %v92
    %94 = vdwg.mxu0
    %95 = vmatpush.msra.mxu0 %v57
    %96 = vmatpush.msra.mxu0 %v56
    %97 = vmatpush.msra.mxu0 %v55
    %98 = vmatpush.msra.mxu0 %v54
    %99 = vmatpush.msra.mxu0 %v53
    %100 = vmatpush.msra.mxu0 %v52
    %101 = vmatpush.msra.mxu0 %v51
    %102 = vmatpush.msra.mxu0 %v50
    %103 = vmatpush.msra.mxu0 %v49
    %104 = vmatpush.msra.mxu0 %v48
    %105 = vmatpush.msra.mxu0 %v47
    %106 = vmatpush.msra.mxu0 %v46
    %107 = vmatpush.msra.mxu0 %v45
    %108 = vmatpush.msra.mxu0 %v44
    %109 = vmatpush.msra.mxu0 %v43
    %110 = vmatpush.msra.mxu0 %v42
    %111 = vmatmul.f32.gmra.mxu0 %v41
    %v112 = vpop.f32.mrf.mxu0
    %v113 = vadd.f32 %v93, %v112
    %114 = vdwg.mxu0
    %v116 = vperm.slane %v32, 0
    %v118 = vadd.f32 %v113, %v116
    %v119 = vld [vmem:[%s6] sm:$0x1]
    %v121 = vperm.slane %v119, 0
    %v123 = vadd.f32 %v118, %v121
    %124 = vst [vmem:[%s9] sm:$0x3] %v123
  $region37: #{char_ner_forward.3} parent=0 // pred_fallthru
    _
  %s125 = smul.u32 0, 8
  %v126 = vld [vmem:[%s0] sm:$0x3]
  %v127 = vld [vmem:[%s2] sm:$0xff]
  %v128 = vld [vmem:[%s2 + $0x8] sm:$0xff]
  %v129 = vld [vmem:[%s2 + $0x10] sm:$0xff]
  %v130 = vld [vmem:[%s2 + $0x18] sm:$0xff]
  %v131 = vld [vmem:[%s2 + $0x20] sm:$0xff]
  %v132 = vld [vmem:[%s2 + $0x28] sm:$0xff]
  %v133 = vld [vmem:[%s2 + $0x30] sm:$0xff]
  %v134 = vld [vmem:[%s2 + $0x38] sm:$0xff]
  %v135 = vld [vmem:[%s2 + $0x40] sm:$0xff]
  %v136 = vld [vmem:[%s2 + $0x48] sm:$0xff]
  %v137 = vld [vmem:[%s2 + $0x50] sm:$0xff]
  %v138 = vld [vmem:[%s2 + $0x58] sm:$0xff]
  %v139 = vld [vmem:[%s2 + $0x60] sm:$0xff]
  %v140 = vld [vmem:[%s2 + $0x68] sm:$0xff]
  %v141 = vld [vmem:[%s2 + $0x70] sm:$0xff]
  %v142 = vld [vmem:[%s2 + $0x78] sm:$0xff]
  %v143 = vld [vmem:[%s1] sm:$0x3]
  %v144 = vld [vmem:[%s3] sm:$0xff]
  %v145 = vld [vmem:[%s3 + $0x8] sm:$0xff]
  %v146 = vld [vmem:[%s3 + $0x10] sm:$0xff]
  %v147 = vld [vmem:[%s3 + $0x18] sm:$0xff]
  %v148 = vld [vmem:[%s3 + $0x20] sm:$0xff]
  %v149 = vld [vmem:[%s3 + $0x28] sm:$0xff]
  %v150 = vld [vmem:[%s3 + $0x30] sm:$0xff]
  %v151 = vld [vmem:[%s3 + $0x38] sm:$0xff]
  %v152 = vld [vmem:[%s3 + $0x40] sm:$0xff]
  %v153 = vld [vmem:[%s3 + $0x48] sm:$0xff]
  %v154 = vld [vmem:[%s3 + $0x50] sm:$0xff]
  %v155 = vld [vmem:[%s3 + $0x58] sm:$0xff]
  %v156 = vld [vmem:[%s3 + $0x60] sm:$0xff]
  %v157 = vld [vmem:[%s3 + $0x68] sm:$0xff]
  %v158 = vld [vmem:[%s3 + $0x70] sm:$0xff]
  %v159 = vld [vmem:[%s3 + $0x78] sm:$0xff]
  %160 = vmatpush.msra.mxu0 %v159
  %161 = vmatpush.msra.mxu0 %v158
  %162 = vmatpush.msra.mxu0 %v157
  %163 = vmatpush.msra.mxu0 %v156
  %164 = vmatpush.msra.mxu0 %v155
  %165 = vmatpush.msra.mxu0 %v154
  %166 = vmatpush.msra.mxu0 %v153
  %167 = vmatpush.msra.mxu0 %v152
  %168 = vmatpush.msra.mxu0 %v151
  %169 = vmatpush.msra.mxu0 %v150
  %170 = vmatpush.msra.mxu0 %v149
  %171 = vmatpush.msra.mxu0 %v148
  %172 = vmatpush.msra.mxu0 %v147
  %173 = vmatpush.msra.mxu0 %v146
  %174 = vmatpush.msra.mxu0 %v145
  %175 = vmatpush.msra.mxu0 %v144
  %176 = vmatmul.f32.gmra.mxu0 %v143
  %v177 = vpop.f32.mrf.mxu0
  %v178 = vadd.f32 0.0, %v177
  %179 = vdwg.mxu0
  %180 = vmatpush.msra.mxu0 %v142
  %181 = vmatpush.msra.mxu0 %v141
  %182 = vmatpush.msra.mxu0 %v140
  %183 = vmatpush.msra.mxu0 %v139
  %184 = vmatpush.msra.mxu0 %v138
  %185 = vmatpush.msra.mxu0 %v137
  %186 = vmatpush.msra.mxu0 %v136
  %187 = vmatpush.msra.mxu0 %v135
  %188 = vmatpush.msra.mxu0 %v134
  %189 = vmatpush.msra.mxu0 %v133
  %190 = vmatpush.msra.mxu0 %v132
  %191 = vmatpush.msra.mxu0 %v131
  %192 = vmatpush.msra.mxu0 %v130
  %193 = vmatpush.msra.mxu0 %v129
  %194 = vmatpush.msra.mxu0 %v128
  %195 = vmatpush.msra.mxu0 %v127
  %196 = vmatmul.f32.gmra.mxu0 %v126
  %v197 = vpop.f32.mrf.mxu0
  %v198 = vadd.f32 %v178, %v197
  %199 = vdwg.mxu0
  %v201 = vperm.slane %v32, 0
  %v203 = vadd.f32 %v198, %v201
  %v204 = vld [vmem:[%s9] sm:$0x3]
  %v206 = vrot.slane %v204, 1
  %v207 = vperm.slane %v204, 0
  %v208 = vperm.slane %v206, 0
  %v211 = vadd.f32 %v207, %v31
  %v212 = vadd.f32 %v208, %v31
  %213 = vmax.xlane.f32.xlu0 %v211
  %v214 = vpop.xlane.xlu0 %213
  %215 = vmax.xlane.f32.xlu0 %v212
  %v216 = vpop.xlane.xlu0 %215
  %vm217 = vcmp.ge.f32.partialorder %v211, %v214
  %vm218 = vcmp.ge.f32.partialorder %v212, %v216
  %v219 = vsel %vm217, %v35, 128
  %v220 = vsel %vm218, %v35, 128
  %v221 = vand.u32 %v219, 65535
  %v222 = vshra.s32 %v219, 16
  %v223 = vcvt.s32.f32 %v221
  %v224 = vcvt.s32.f32 %v222
  %225 = vmin.xlane.f32.xlu0 %v224
  %v226 = vpop.xlane.xlu0 %225
  %vm227 = vcmp.eq.f32.partialorder %v224, %v226
  %v228 = vsel %vm227, %v223, inf
  %229 = vmin.xlane.f32.xlu0 %v228
  %v230 = vpop.xlane.xlu0 %229
  %v231 = vcvt.f32.s32 %v230
  %v232 = vcvt.f32.s32 %v226
  %v233 = vshll.u32 %v232, 16
  %v234 = vadd.s32 %v233, %v231
  %v235 = vand.u32 %v220, 65535
  %v236 = vshra.s32 %v220, 16
  %v237 = vcvt.s32.f32 %v235
  %v238 = vcvt.s32.f32 %v236
  %239 = vmin.xlane.f32.xlu0 %v238
  %v240 = vpop.xlane.xlu0 %239
  %vm241 = vcmp.eq.f32.partialorder %v238, %v240
  %v242 = vsel %vm241, %v237, inf
  %243 = vmin.xlane.f32.xlu0 %v242
  %v244 = vpop.xlane.xlu0 %243
  %v245 = vcvt.f32.s32 %v244
  %v246 = vcvt.f32.s32 %v240
  %v247 = vshll.u32 %v246, 16
  %v248 = vadd.s32 %v247, %v245
  %v250 = vperm.slane %v203, 0
  %v251 = vlaneseq
  %v252 = vshrl.u32 %v251, 7
  %254 = vset.pattern.permute.xlu0 %v252
  %255 = vperm.xlu0 %254, %v250
  %v256 = vpop.permute.xlu0 %255
  %v257 = vperm.slane %v203, 1
  %v258 = vlaneseq
  %v259 = vshrl.u32 %v258, 7
  %261 = vset.pattern.permute.xlu0 %v259
  %262 = vperm.xlu0 %261, %v257
  %v263 = vpop.permute.xlu0 %262
  %v266 = vadd.f32 %v214, %v256
  %v267 = vadd.f32 %v216, %v263
  %270 = vset.pattern.permute.xlu0 0
  %271 = vperm.xlu0 %270, %v266
  %v272 = vpop.permute.xlu0 %271
  %273 = vset.pattern.permute.xlu0 0
  %274 = vperm.xlu0 %273, %v267
  %v275 = vpop.permute.xlu0 %274
  %v276 = vperm.slane %v272, %v35
  %v277 = vperm.slane %v275, %v35
  %vm278 = vcmask 1041409
  %v279 = vsel %vm278, %v277, %v276
  %vm281 = vcmask 64512
  %v282 = vsel %vm281, %v279, -1e+09
  %v283 = vperm.slane %v234, %v35
  %v284 = vperm.slane %v248, %v35
  %v285 = vsel %vm278, %v284, %v283
  %286 = vrot.lane.b32.xlu0 %v36, 8
  %v287 = vpop.permute.xlu0 %286
  %v288 = vsel %vm281, %v285, %v287
  %v289 = vstv %s125
  %vm290 = vcmp.gt.s32.totalorder %v33, %v289
  %p291 = scmp.gt.s32.totalorder %s125, 0
  %s292 = scalar_select %p291, 1, 0
  %v293 = vstv %s292
  %vm294 = vcmp.eq.s32.totalorder %v293, 1
  %vm295 = vmand %vm290, %vm294
  %v296 = vsel %vm295, 1, 0
  %297 = vset.pattern.permute.xlu0 0
  %298 = vperm.xlu0 %297, %v296
  %v299 = vpop.permute.xlu0 %298
  %vm300 = vcmp.eq.s32.totalorder %v299, 1
  %v301 = vsel %vm300, %v282, %v204
  %302 = vst [vmem:[%s9] sm:$0x3] %v301
  %v303 = vsel %vm300, %v288, %v35
  %304 = vst [vmem:[%s8] sm:$0x3] %v303
  %s305 = sadd.s32 %s125, 1
  %s306 = scalar_lea.vmem %s0, 2
  %v307 = vld [vmem:[%s306] sm:$0x3]
  %v308 = vld [vmem:[%s2] sm:$0xff]
  %v309 = vld [vmem:[%s2 + $0x8] sm:$0xff]
  %v310 = vld [vmem:[%s2 + $0x10] sm:$0xff]
  %v311 = vld [vmem:[%s2 + $0x18] sm:$0xff]
  %v312 = vld [vmem:[%s2 + $0x20] sm:$0xff]
  %v313 = vld [vmem:[%s2 + $0x28] sm:$0xff]
  %v314 = vld [vmem:[%s2 + $0x30] sm:$0xff]
  %v315 = vld [vmem:[%s2 + $0x38] sm:$0xff]
  %v316 = vld [vmem:[%s2 + $0x40] sm:$0xff]
  %v317 = vld [vmem:[%s2 + $0x48] sm:$0xff]
  %v318 = vld [vmem:[%s2 + $0x50] sm:$0xff]
  %v319 = vld [vmem:[%s2 + $0x58] sm:$0xff]
  %v320 = vld [vmem:[%s2 + $0x60] sm:$0xff]
  %v321 = vld [vmem:[%s2 + $0x68] sm:$0xff]
  %v322 = vld [vmem:[%s2 + $0x70] sm:$0xff]
  %v323 = vld [vmem:[%s2 + $0x78] sm:$0xff]
  %s324 = scalar_lea.vmem %s1, 2
  %v325 = vld [vmem:[%s324] sm:$0x3]
  %v326 = vld [vmem:[%s3] sm:$0xff]
  %v327 = vld [vmem:[%s3 + $0x8] sm:$0xff]
  %v328 = vld [vmem:[%s3 + $0x10] sm:$0xff]
  %v329 = vld [vmem:[%s3 + $0x18] sm:$0xff]
  %v330 = vld [vmem:[%s3 + $0x20] sm:$0xff]
  %v331 = vld [vmem:[%s3 + $0x28] sm:$0xff]
  %v332 = vld [vmem:[%s3 + $0x30] sm:$0xff]
  %v333 = vld [vmem:[%s3 + $0x38] sm:$0xff]
  %v334 = vld [vmem:[%s3 + $0x40] sm:$0xff]
  %v335 = vld [vmem:[%s3 + $0x48] sm:$0xff]
  %v336 = vld [vmem:[%s3 + $0x50] sm:$0xff]
  %v337 = vld [vmem:[%s3 + $0x58] sm:$0xff]
  %v338 = vld [vmem:[%s3 + $0x60] sm:$0xff]
  %v339 = vld [vmem:[%s3 + $0x68] sm:$0xff]
  %v340 = vld [vmem:[%s3 + $0x70] sm:$0xff]
  %v341 = vld [vmem:[%s3 + $0x78] sm:$0xff]
  %342 = vmatpush.msra.mxu0 %v341
  %343 = vmatpush.msra.mxu0 %v340
  %344 = vmatpush.msra.mxu0 %v339
  %345 = vmatpush.msra.mxu0 %v338
  %346 = vmatpush.msra.mxu0 %v337
  %347 = vmatpush.msra.mxu0 %v336
  %348 = vmatpush.msra.mxu0 %v335
  %349 = vmatpush.msra.mxu0 %v334
  %350 = vmatpush.msra.mxu0 %v333
  %351 = vmatpush.msra.mxu0 %v332
  %352 = vmatpush.msra.mxu0 %v331
  %353 = vmatpush.msra.mxu0 %v330
  %354 = vmatpush.msra.mxu0 %v329
  %355 = vmatpush.msra.mxu0 %v328
  %356 = vmatpush.msra.mxu0 %v327
  %357 = vmatpush.msra.mxu0 %v326
  %358 = vmatmul.f32.gmra.mxu0 %v325
  %v359 = vpop.f32.mrf.mxu0
  %v360 = vadd.f32 0.0, %v359
  %361 = vdwg.mxu0
  %362 = vmatpush.msra.mxu0 %v323
  %363 = vmatpush.msra.mxu0 %v322
  %364 = vmatpush.msra.mxu0 %v321
  %365 = vmatpush.msra.mxu0 %v320
  %366 = vmatpush.msra.mxu0 %v319
  %367 = vmatpush.msra.mxu0 %v318
  %368 = vmatpush.msra.mxu0 %v317
  %369 = vmatpush.msra.mxu0 %v316
  %370 = vmatpush.msra.mxu0 %v315
  %371 = vmatpush.msra.mxu0 %v314
  %372 = vmatpush.msra.mxu0 %v313
  %373 = vmatpush.msra.mxu0 %v312
  %374 = vmatpush.msra.mxu0 %v311
  %375 = vmatpush.msra.mxu0 %v310
  %376 = vmatpush.msra.mxu0 %v309
  %377 = vmatpush.msra.mxu0 %v308
  %378 = vmatmul.f32.gmra.mxu0 %v307
  %v379 = vpop.f32.mrf.mxu0
  %v380 = vadd.f32 %v360, %v379
  %381 = vdwg.mxu0
  %v382 = vadd.f32 %v380, %v201
  %v383 = vld [vmem:[%s9] sm:$0x3]
  %v385 = vrot.slane %v383, 1
  %v386 = vperm.slane %v383, 0
  %v387 = vperm.slane %v385, 0
  %v390 = vadd.f32 %v386, %v31
  %v391 = vadd.f32 %v387, %v31
  %392 = vmax.xlane.f32.xlu0 %v390
  %v393 = vpop.xlane.xlu0 %392
  %394 = vmax.xlane.f32.xlu0 %v391
  %v395 = vpop.xlane.xlu0 %394
  %vm396 = vcmp.ge.f32.partialorder %v390, %v393
  %vm397 = vcmp.ge.f32.partialorder %v391, %v395
  %v398 = vsel %vm396, %v35, 128
  %v399 = vsel %vm397, %v35, 128
  %v400 = vand.u32 %v398, 65535
  %v401 = vshra.s32 %v398, 16
  %v402 = vcvt.s32.f32 %v400
  %v403 = vcvt.s32.f32 %v401
  %404 = vmin.xlane.f32.xlu0 %v403
  %v405 = vpop.xlane.xlu0 %404
  %vm406 = vcmp.eq.f32.partialorder %v403, %v405
  %v407 = vsel %vm406, %v402, inf
  %408 = vmin.xlane.f32.xlu0 %v407
  %v409 = vpop.xlane.xlu0 %408
  %v410 = vcvt.f32.s32 %v409
  %v411 = vcvt.f32.s32 %v405
  %v412 = vshll.u32 %v411, 16
  %v413 = vadd.s32 %v412, %v410
  %v414 = vand.u32 %v399, 65535
  %v415 = vshra.s32 %v399, 16
  %v416 = vcvt.s32.f32 %v414
  %v417 = vcvt.s32.f32 %v415
  %418 = vmin.xlane.f32.xlu0 %v417
  %v419 = vpop.xlane.xlu0 %418
  %vm420 = vcmp.eq.f32.partialorder %v417, %v419
  %v421 = vsel %vm420, %v416, inf
  %422 = vmin.xlane.f32.xlu0 %v421
  %v423 = vpop.xlane.xlu0 %422
  %v424 = vcvt.f32.s32 %v423
  %v425 = vcvt.f32.s32 %v419
  %v426 = vshll.u32 %v425, 16
  %v427 = vadd.s32 %v426, %v424
  %v429 = vperm.slane %v382, 0
  %v430 = vlaneseq
  %v431 = vshrl.u32 %v430, 7
  %433 = vset.pattern.permute.xlu0 %v431
  %434 = vperm.xlu0 %433, %v429
  %v435 = vpop.permute.xlu0 %434
  %v436 = vperm.slane %v382, 1
  %v437 = vlaneseq
  %v438 = vshrl.u32 %v437, 7
  %440 = vset.pattern.permute.xlu0 %v438
  %441 = vperm.xlu0 %440, %v436
  %v442 = vpop.permute.xlu0 %441
  %v445 = vadd.f32 %v393, %v435
  %v446 = vadd.f32 %v395, %v442
  %449 = vset.pattern.permute.xlu0 0
  %450 = vperm.xlu0 %449, %v445
  %v451 = vpop.permute.xlu0 %450
  %452 = vset.pattern.permute.xlu0 0
  %453 = vperm.xlu0 %452, %v446
  %v454 = vpop.permute.xlu0 %453
  %v455 = vperm.slane %v451, %v35
  %v456 = vperm.slane %v454, %v35
  %v457 = vsel %vm278, %v456, %v455
  %v459 = vsel %vm281, %v457, -1e+09
  %v460 = vperm.slane %v413, %v35
  %v461 = vperm.slane %v427, %v35
  %v462 = vsel %vm278, %v461, %v460
  %v463 = vsel %vm281, %v462, %v287
  %v464 = vstv %s305
  %vm465 = vcmp.gt.s32.totalorder %v33, %v464
  %p466 = scmp.gt.s32.totalorder %s305, 0
  %s467 = scalar_select %p466, 1, 0
  %v468 = vstv %s467
  %vm469 = vcmp.eq.s32.totalorder %v468, 1
  %vm470 = vmand %vm465, %vm469
  %v471 = vsel %vm470, 1, 0
  %472 = vset.pattern.permute.xlu0 0
  %473 = vperm.xlu0 %472, %v471
  %v474 = vpop.permute.xlu0 %473
  %vm475 = vcmp.eq.s32.totalorder %v474, 1
  %v476 = vsel %vm475, %v459, %v383
  %477 = vst [vmem:[%s9] sm:$0x3] %v476
  %v478 = vsel %vm475, %v463, %v35
  %s479 = scalar_lea.vmem %s8, 2
  %480 = vst [vmem:[%s479] sm:$0x3] %v478
  %s481 = sadd.s32 %s125, 2
  %s482 = scalar_lea.vmem %s0, 4
  %v483 = vld [vmem:[%s482] sm:$0x3]
  %v484 = vld [vmem:[%s2] sm:$0xff]
  %v485 = vld [vmem:[%s2 + $0x8] sm:$0xff]
  %v486 = vld [vmem:[%s2 + $0x10] sm:$0xff]
  %v487 = vld [vmem:[%s2 + $0x18] sm:$0xff]
  %v488 = vld [vmem:[%s2 + $0x20] sm:$0xff]
  %v489 = vld [vmem:[%s2 + $0x28] sm:$0xff]
  %v490 = vld [vmem:[%s2 + $0x30] sm:$0xff]
  %v491 = vld [vmem:[%s2 + $0x38] sm:$0xff]
  %v492 = vld [vmem:[%s2 + $0x40] sm:$0xff]
  %v493 = vld [vmem:[%s2 + $0x48] sm:$0xff]
  %v494 = vld [vmem:[%s2 + $0x50] sm:$0xff]
  %v495 = vld [vmem:[%s2 + $0x58] sm:$0xff]
  %v496 = vld [vmem:[%s2 + $0x60] sm:$0xff]
  %v497 = vld [vmem:[%s2 + $0x68] sm:$0xff]
  %v498 = vld [vmem:[%s2 + $0x70] sm:$0xff]
  %v499 = vld [vmem:[%s2 + $0x78] sm:$0xff]
  %s500 = scalar_lea.vmem %s1, 4
  %v501 = vld [vmem:[%s500] sm:$0x3]
  %v502 = vld [vmem:[%s3] sm:$0xff]
  %v503 = vld [vmem:[%s3 + $0x8] sm:$0xff]
  %v504 = vld [vmem:[%s3 + $0x10] sm:$0xff]
  %v505 = vld [vmem:[%s3 + $0x18] sm:$0xff]
  %v506 = vld [vmem:[%s3 + $0x20] sm:$0xff]
  %v507 = vld [vmem:[%s3 + $0x28] sm:$0xff]
  %v508 = vld [vmem:[%s3 + $0x30] sm:$0xff]
  %v509 = vld [vmem:[%s3 + $0x38] sm:$0xff]
  %v510 = vld [vmem:[%s3 + $0x40] sm:$0xff]
  %v511 = vld [vmem:[%s3 + $0x48] sm:$0xff]
  %v512 = vld [vmem:[%s3 + $0x50] sm:$0xff]
  %v513 = vld [vmem:[%s3 + $0x58] sm:$0xff]
  %v514 = vld [vmem:[%s3 + $0x60] sm:$0xff]
  %v515 = vld [vmem:[%s3 + $0x68] sm:$0xff]
  %v516 = vld [vmem:[%s3 + $0x70] sm:$0xff]
  %v517 = vld [vmem:[%s3 + $0x78] sm:$0xff]
  %518 = vmatpush.msra.mxu0 %v517
  %519 = vmatpush.msra.mxu0 %v516
  %520 = vmatpush.msra.mxu0 %v515
  %521 = vmatpush.msra.mxu0 %v514
  %522 = vmatpush.msra.mxu0 %v513
  %523 = vmatpush.msra.mxu0 %v512
  %524 = vmatpush.msra.mxu0 %v511
  %525 = vmatpush.msra.mxu0 %v510
  %526 = vmatpush.msra.mxu0 %v509
  %527 = vmatpush.msra.mxu0 %v508
  %528 = vmatpush.msra.mxu0 %v507
  %529 = vmatpush.msra.mxu0 %v506
  %530 = vmatpush.msra.mxu0 %v505
  %531 = vmatpush.msra.mxu0 %v504
  %532 = vmatpush.msra.mxu0 %v503
  %533 = vmatpush.msra.mxu0 %v502
  %534 = vmatmul.f32.gmra.mxu0 %v501
  %v535 = vpop.f32.mrf.mxu0
  %v536 = vadd.f32 0.0, %v535
  %537 = vdwg.mxu0
  %538 = vmatpush.msra.mxu0 %v499
  %539 = vmatpush.msra.mxu0 %v498
  %540 = vmatpush.msra.mxu0 %v497
  %541 = vmatpush.msra.mxu0 %v496
  %542 = vmatpush.msra.mxu0 %v495
  %543 = vmatpush.msra.mxu0 %v494
  %544 = vmatpush.msra.mxu0 %v493
  %545 = vmatpush.msra.mxu0 %v492
  %546 = vmatpush.msra.mxu0 %v491
  %547 = vmatpush.msra.mxu0 %v490
  %548 = vmatpush.msra.mxu0 %v489
  %549 = vmatpush.msra.mxu0 %v488
  %550 = vmatpush.msra.mxu0 %v487
  %551 = vmatpush.msra.mxu0 %v486
  %552 = vmatpush.msra.mxu0 %v485
  %553 = vmatpush.msra.mxu0 %v484
  %554 = vmatmul.f32.gmra.mxu0 %v483
  %v555 = vpop.f32.mrf.mxu0
  %v556 = vadd.f32 %v536, %v555
  %557 = vdwg.mxu0
  %v558 = vadd.f32 %v556, %v201
  %v559 = vld [vmem:[%s9] sm:$0x3]
  %v561 = vrot.slane %v559, 1
  %v562 = vperm.slane %v559, 0
  %v563 = vperm.slane %v561, 0
  %v566 = vadd.f32 %v562, %v31
  %v567 = vadd.f32 %v563, %v31
  %568 = vmax.xlane.f32.xlu0 %v566
  %v569 = vpop.xlane.xlu0 %568
  %570 = vmax.xlane.f32.xlu0 %v567
  %v571 = vpop.xlane.xlu0 %570
  %vm572 = vcmp.ge.f32.partialorder %v566, %v569
  %vm573 = vcmp.ge.f32.partialorder %v567, %v571
  %v574 = vsel %vm572, %v35, 128
  %v575 = vsel %vm573, %v35, 128
  %v576 = vand.u32 %v574, 65535
  %v577 = vshra.s32 %v574, 16
  %v578 = vcvt.s32.f32 %v576
  %v579 = vcvt.s32.f32 %v577
  %580 = vmin.xlane.f32.xlu0 %v579
  %v581 = vpop.xlane.xlu0 %580
  %vm582 = vcmp.eq.f32.partialorder %v579, %v581
  %v583 = vsel %vm582, %v578, inf
  %584 = vmin.xlane.f32.xlu0 %v583
  %v585 = vpop.xlane.xlu0 %584
  %v586 = vcvt.f32.s32 %v585
  %v587 = vcvt.f32.s32 %v581
  %v588 = vshll.u32 %v587, 16
  %v589 = vadd.s32 %v588, %v586
  %v590 = vand.u32 %v575, 65535
  %v591 = vshra.s32 %v575, 16
  %v592 = vcvt.s32.f32 %v590
  %v593 = vcvt.s32.f32 %v591
  %594 = vmin.xlane.f32.xlu0 %v593
  %v595 = vpop.xlane.xlu0 %594
  %vm596 = vcmp.eq.f32.partialorder %v593, %v595
  %v597 = vsel %vm596, %v592, inf
  %598 = vmin.xlane.f32.xlu0 %v597
  %v599 = vpop.xlane.xlu0 %598
  %v600 = vcvt.f32.s32 %v599
  %v601 = vcvt.f32.s32 %v595
  %v602 = vshll.u32 %v601, 16
  %v603 = vadd.s32 %v602, %v600
  %v605 = vperm.slane %v558, 0
  %v606 = vlaneseq
  %v607 = vshrl.u32 %v606, 7
  %609 = vset.pattern.permute.xlu0 %v607
  %610 = vperm.xlu0 %609, %v605
  %v611 = vpop.permute.xlu0 %610
  %v612 = vperm.slane %v558, 1
  %v613 = vlaneseq
  %v614 = vshrl.u32 %v613, 7
  %616 = vset.pattern.permute.xlu0 %v614
  %617 = vperm.xlu0 %616, %v612
  %v618 = vpop.permute.xlu0 %617
  %v621 = vadd.f32 %v569, %v611
  %v622 = vadd.f32 %v571, %v618
  %625 = vset.pattern.permute.xlu0 0
  %626 = vperm.xlu0 %625, %v621
  %v627 = vpop.permute.xlu0 %626
  %628 = vset.pattern.permute.xlu0 0
  %629 = vperm.xlu0 %628, %v622
  %v630 = vpop.permute.xlu0 %629
  %v631 = vperm.slane %v627, %v35
  %v632 = vperm.slane %v630, %v35
  %v633 = vsel %vm278, %v632, %v631
  %v635 = vsel %vm281, %v633, -1e+09
  %v636 = vperm.slane %v589, %v35
  %v637 = vperm.slane %v603, %v35
  %v638 = vsel %vm278, %v637, %v636
  %v639 = vsel %vm281, %v638, %v287
  %v640 = vstv %s481
  %vm641 = vcmp.gt.s32.totalorder %v33, %v640
  %p642 = scmp.gt.s32.totalorder %s481, 0
  %s643 = scalar_select %p642, 1, 0
  %v644 = vstv %s643
  %vm645 = vcmp.eq.s32.totalorder %v644, 1
  %vm646 = vmand %vm641, %vm645
  %v647 = vsel %vm646, 1, 0
  %648 = vset.pattern.permute.xlu0 0
  %649 = vperm.xlu0 %648, %v647
  %v650 = vpop.permute.xlu0 %649
  %vm651 = vcmp.eq.s32.totalorder %v650, 1
  %v652 = vsel %vm651, %v635, %v559
  %653 = vst [vmem:[%s9] sm:$0x3] %v652
  %v654 = vsel %vm651, %v639, %v35
  %s655 = scalar_lea.vmem %s8, 4
  %656 = vst [vmem:[%s655] sm:$0x3] %v654
  %s657 = sadd.s32 %s125, 3
  %s658 = scalar_lea.vmem %s0, 6
  %v659 = vld [vmem:[%s658] sm:$0x3]
  %v660 = vld [vmem:[%s2] sm:$0xff]
  %v661 = vld [vmem:[%s2 + $0x8] sm:$0xff]
  %v662 = vld [vmem:[%s2 + $0x10] sm:$0xff]
  %v663 = vld [vmem:[%s2 + $0x18] sm:$0xff]
  %v664 = vld [vmem:[%s2 + $0x20] sm:$0xff]
  %v665 = vld [vmem:[%s2 + $0x28] sm:$0xff]
  %v666 = vld [vmem:[%s2 + $0x30] sm:$0xff]
  %v667 = vld [vmem:[%s2 + $0x38] sm:$0xff]
  %v668 = vld [vmem:[%s2 + $0x40] sm:$0xff]
  %v669 = vld [vmem:[%s2 + $0x48] sm:$0xff]
  %v670 = vld [vmem:[%s2 + $0x50] sm:$0xff]
  %v671 = vld [vmem:[%s2 + $0x58] sm:$0xff]
  %v672 = vld [vmem:[%s2 + $0x60] sm:$0xff]
  %v673 = vld [vmem:[%s2 + $0x68] sm:$0xff]
  %v674 = vld [vmem:[%s2 + $0x70] sm:$0xff]
  %v675 = vld [vmem:[%s2 + $0x78] sm:$0xff]
  %s676 = scalar_lea.vmem %s1, 6
  %v677 = vld [vmem:[%s676] sm:$0x3]
  %v678 = vld [vmem:[%s3] sm:$0xff]
  %v679 = vld [vmem:[%s3 + $0x8] sm:$0xff]
  %v680 = vld [vmem:[%s3 + $0x10] sm:$0xff]
  %v681 = vld [vmem:[%s3 + $0x18] sm:$0xff]
  %v682 = vld [vmem:[%s3 + $0x20] sm:$0xff]
  %v683 = vld [vmem:[%s3 + $0x28] sm:$0xff]
  %v684 = vld [vmem:[%s3 + $0x30] sm:$0xff]
  %v685 = vld [vmem:[%s3 + $0x38] sm:$0xff]
  %v686 = vld [vmem:[%s3 + $0x40] sm:$0xff]
  %v687 = vld [vmem:[%s3 + $0x48] sm:$0xff]
  %v688 = vld [vmem:[%s3 + $0x50] sm:$0xff]
  %v689 = vld [vmem:[%s3 + $0x58] sm:$0xff]
  %v690 = vld [vmem:[%s3 + $0x60] sm:$0xff]
  %v691 = vld [vmem:[%s3 + $0x68] sm:$0xff]
  %v692 = vld [vmem:[%s3 + $0x70] sm:$0xff]
  %v693 = vld [vmem:[%s3 + $0x78] sm:$0xff]
  %694 = vmatpush.msra.mxu0 %v693
  %695 = vmatpush.msra.mxu0 %v692
  %696 = vmatpush.msra.mxu0 %v691
  %697 = vmatpush.msra.mxu0 %v690
  %698 = vmatpush.msra.mxu0 %v689
  %699 = vmatpush.msra.mxu0 %v688
  %700 = vmatpush.msra.mxu0 %v687
  %701 = vmatpush.msra.mxu0 %v686
  %702 = vmatpush.msra.mxu0 %v685
  %703 = vmatpush.msra.mxu0 %v684
  %704 = vmatpush.msra.mxu0 %v683
  %705 = vmatpush.msra.mxu0 %v682
  %706 = vmatpush.msra.mxu0 %v681
  %707 = vmatpush.msra.mxu0 %v680
  %708 = vmatpush.msra.mxu0 %v679
  %709 = vmatpush.msra.mxu0 %v678
  %710 = vmatmul.f32.gmra.mxu0 %v677
  %v711 = vpop.f32.mrf.mxu0
  %v712 = vadd.f32 0.0, %v711
  %713 = vdwg.mxu0
  %714 = vmatpush.msra.mxu0 %v675
  %715 = vmatpush.msra.mxu0 %v674
  %716 = vmatpush.msra.mxu0 %v673
  %717 = vmatpush.msra.mxu0 %v672
  %718 = vmatpush.msra.mxu0 %v671
  %719 = vmatpush.msra.mxu0 %v670
  %720 = vmatpush.msra.mxu0 %v669
  %721 = vmatpush.msra.mxu0 %v668
  %722 = vmatpush.msra.mxu0 %v667
  %723 = vmatpush.msra.mxu0 %v666
  %724 = vmatpush.msra.mxu0 %v665
  %725 = vmatpush.msra.mxu0 %v664
  %726 = vmatpush.msra.mxu0 %v663
  %727 = vmatpush.msra.mxu0 %v662
  %728 = vmatpush.msra.mxu0 %v661
  %729 = vmatpush.msra.mxu0 %v660
  %730 = vmatmul.f32.gmra.mxu0 %v659
  %v731 = vpop.f32.mrf.mxu0
  %v732 = vadd.f32 %v712, %v731
  %733 = vdwg.mxu0
  %v734 = vadd.f32 %v732, %v201
  %v735 = vld [vmem:[%s9] sm:$0x3]
  %v737 = vrot.slane %v735, 1
  %v738 = vperm.slane %v735, 0
  %v739 = vperm.slane %v737, 0
  %v742 = vadd.f32 %v738, %v31
  %v743 = vadd.f32 %v739, %v31
  %744 = vmax.xlane.f32.xlu0 %v742
  %v745 = vpop.xlane.xlu0 %744
  %746 = vmax.xlane.f32.xlu0 %v743
  %v747 = vpop.xlane.xlu0 %746
  %vm748 = vcmp.ge.f32.partialorder %v742, %v745
  %vm749 = vcmp.ge.f32.partialorder %v743, %v747
  %v750 = vsel %vm748, %v35, 128
  %v751 = vsel %vm749, %v35, 128
  %v752 = vand.u32 %v750, 65535
  %v753 = vshra.s32 %v750, 16
  %v754 = vcvt.s32.f32 %v752
  %v755 = vcvt.s32.f32 %v753
  %756 = vmin.xlane.f32.xlu0 %v755
  %v757 = vpop.xlane.xlu0 %756
  %vm758 = vcmp.eq.f32.partialorder %v755, %v757
  %v759 = vsel %vm758, %v754, inf
  %760 = vmin.xlane.f32.xlu0 %v759
  %v761 = vpop.xlane.xlu0 %760
  %v762 = vcvt.f32.s32 %v761
  %v763 = vcvt.f32.s32 %v757
  %v764 = vshll.u32 %v763, 16
  %v765 = vadd.s32 %v764, %v762
  %v766 = vand.u32 %v751, 65535
  %v767 = vshra.s32 %v751, 16
  %v768 = vcvt.s32.f32 %v766
  %v769 = vcvt.s32.f32 %v767
  %770 = vmin.xlane.f32.xlu0 %v769
  %v771 = vpop.xlane.xlu0 %770
  %vm772 = vcmp.eq.f32.partialorder %v769, %v771
  %v773 = vsel %vm772, %v768, inf
  %774 = vmin.xlane.f32.xlu0 %v773
  %v775 = vpop.xlane.xlu0 %774
  %v776 = vcvt.f32.s32 %v775
  %v777 = vcvt.f32.s32 %v771
  %v778 = vshll.u32 %v777, 16
  %v779 = vadd.s32 %v778, %v776
  %v781 = vperm.slane %v734, 0
  %v782 = vlaneseq
  %v783 = vshrl.u32 %v782, 7
  %785 = vset.pattern.permute.xlu0 %v783
  %786 = vperm.xlu0 %785, %v781
  %v787 = vpop.permute.xlu0 %786
  %v788 = vperm.slane %v734, 1
  %v789 = vlaneseq
  %v790 = vshrl.u32 %v789, 7
  %792 = vset.pattern.permute.xlu0 %v790
  %793 = vperm.xlu0 %792, %v788
  %v794 = vpop.permute.xlu0 %793
  %v797 = vadd.f32 %v745, %v787
  %v798 = vadd.f32 %v747, %v794
  %801 = vset.pattern.permute.xlu0 0
  %802 = vperm.xlu0 %801, %v797
  %v803 = vpop.permute.xlu0 %802
  %804 = vset.pattern.permute.xlu0 0
  %805 = vperm.xlu0 %804, %v798
  %v806 = vpop.permute.xlu0 %805
  %v807 = vperm.slane %v803, %v35
  %v808 = vperm.slane %v806, %v35
  %v809 = vsel %vm278, %v808, %v807
  %v811 = vsel %vm281, %v809, -1e+09
  %v812 = vperm.slane %v765, %v35
  %v813 = vperm.slane %v779, %v35
  %v814 = vsel %vm278, %v813, %v812
  %v815 = vsel %vm281, %v814, %v287
  %v816 = vstv %s657
  %vm817 = vcmp.gt.s32.totalorder %v33, %v816
  %p818 = scmp.gt.s32.totalorder %s657, 0
  %s819 = scalar_select %p818, 1, 0
  %v820 = vstv %s819
  %vm821 = vcmp.eq.s32.totalorder %v820, 1
  %vm822 = vmand %vm817, %vm821
  %v823 = vsel %vm822, 1, 0
  %824 = vset.pattern.permute.xlu0 0
  %825 = vperm.xlu0 %824, %v823
  %v826 = vpop.permute.xlu0 %825
  %vm827 = vcmp.eq.s32.totalorder %v826, 1
  %v828 = vsel %vm827, %v811, %v735
  %829 = vst [vmem:[%s9] sm:$0x3] %v828
  %v830 = vsel %vm827, %v815, %v35
  %s831 = scalar_lea.vmem %s8, 6
  %832 = vst [vmem:[%s831] sm:$0x3] %v830
  %s833 = sadd.s32 %s125, 4
  %s834 = scalar_lea.vmem %s0, 8
  %v835 = vld [vmem:[%s834] sm:$0x3]
  %v836 = vld [vmem:[%s2] sm:$0xff]
  %v837 = vld [vmem:[%s2 + $0x8] sm:$0xff]
  %v838 = vld [vmem:[%s2 + $0x10] sm:$0xff]
  %v839 = vld [vmem:[%s2 + $0x18] sm:$0xff]
  %v840 = vld [vmem:[%s2 + $0x20] sm:$0xff]
  %v841 = vld [vmem:[%s2 + $0x28] sm:$0xff]
  %v842 = vld [vmem:[%s2 + $0x30] sm:$0xff]
  %v843 = vld [vmem:[%s2 + $0x38] sm:$0xff]
  %v844 = vld [vmem:[%s2 + $0x40] sm:$0xff]
  %v845 = vld [vmem:[%s2 + $0x48] sm:$0xff]
  %v846 = vld [vmem:[%s2 + $0x50] sm:$0xff]
  %v847 = vld [vmem:[%s2 + $0x58] sm:$0xff]
  %v848 = vld [vmem:[%s2 + $0x60] sm:$0xff]
  %v849 = vld [vmem:[%s2 + $0x68] sm:$0xff]
  %v850 = vld [vmem:[%s2 + $0x70] sm:$0xff]
  %v851 = vld [vmem:[%s2 + $0x78] sm:$0xff]
  %s852 = scalar_lea.vmem %s1, 8
  %v853 = vld [vmem:[%s852] sm:$0x3]
  %v854 = vld [vmem:[%s3] sm:$0xff]
  %v855 = vld [vmem:[%s3 + $0x8] sm:$0xff]
  %v856 = vld [vmem:[%s3 + $0x10] sm:$0xff]
  %v857 = vld [vmem:[%s3 + $0x18] sm:$0xff]
  %v858 = vld [vmem:[%s3 + $0x20] sm:$0xff]
  %v859 = vld [vmem:[%s3 + $0x28] sm:$0xff]
  %v860 = vld [vmem:[%s3 + $0x30] sm:$0xff]
  %v861 = vld [vmem:[%s3 + $0x38] sm:$0xff]
  %v862 = vld [vmem:[%s3 + $0x40] sm:$0xff]
  %v863 = vld [vmem:[%s3 + $0x48] sm:$0xff]
  %v864 = vld [vmem:[%s3 + $0x50] sm:$0xff]
  %v865 = vld [vmem:[%s3 + $0x58] sm:$0xff]
  %v866 = vld [vmem:[%s3 + $0x60] sm:$0xff]
  %v867 = vld [vmem:[%s3 + $0x68] sm:$0xff]
  %v868 = vld [vmem:[%s3 + $0x70] sm:$0xff]
  %v869 = vld [vmem:[%s3 + $0x78] sm:$0xff]
  %870 = vmatpush.msra.mxu0 %v869
  %871 = vmatpush.msra.mxu0 %v868
  %872 = vmatpush.msra.mxu0 %v867
  %873 = vmatpush.msra.mxu0 %v866
  %874 = vmatpush.msra.mxu0 %v865
  %875 = vmatpush.msra.mxu0 %v864
  %876 = vmatpush.msra.mxu0 %v863
  %877 = vmatpush.msra.mxu0 %v862
  %878 = vmatpush.msra.mxu0 %v861
  %879 = vmatpush.msra.mxu0 %v860
  %880 = vmatpush.msra.mxu0 %v859
  %881 = vmatpush.msra.mxu0 %v858
  %882 = vmatpush.msra.mxu0 %v857
  %883 = vmatpush.msra.mxu0 %v856
  %884 = vmatpush.msra.mxu0 %v855
  %885 = vmatpush.msra.mxu0 %v854
  %886 = vmatmul.f32.gmra.mxu0 %v853
  %v887 = vpop.f32.mrf.mxu0
  %v888 = vadd.f32 0.0, %v887
  %889 = vdwg.mxu0
  %890 = vmatpush.msra.mxu0 %v851
  %891 = vmatpush.msra.mxu0 %v850
  %892 = vmatpush.msra.mxu0 %v849
  %893 = vmatpush.msra.mxu0 %v848
  %894 = vmatpush.msra.mxu0 %v847
  %895 = vmatpush.msra.mxu0 %v846
  %896 = vmatpush.msra.mxu0 %v845
  %897 = vmatpush.msra.mxu0 %v844
  %898 = vmatpush.msra.mxu0 %v843
  %899 = vmatpush.msra.mxu0 %v842
  %900 = vmatpush.msra.mxu0 %v841
  %901 = vmatpush.msra.mxu0 %v840
  %902 = vmatpush.msra.mxu0 %v839
  %903 = vmatpush.msra.mxu0 %v838
  %904 = vmatpush.msra.mxu0 %v837
  %905 = vmatpush.msra.mxu0 %v836
  %906 = vmatmul.f32.gmra.mxu0 %v835
  %v907 = vpop.f32.mrf.mxu0
  %v908 = vadd.f32 %v888, %v907
  %909 = vdwg.mxu0
  %v910 = vadd.f32 %v908, %v201
  %v911 = vld [vmem:[%s9] sm:$0x3]
  %v913 = vrot.slane %v911, 1
  %v914 = vperm.slane %v911, 0
  %v915 = vperm.slane %v913, 0
  %v918 = vadd.f32 %v914, %v31
  %v919 = vadd.f32 %v915, %v31
  %920 = vmax.xlane.f32.xlu0 %v918
  %v921 = vpop.xlane.xlu0 %920
  %922 = vmax.xlane.f32.xlu0 %v919
  %v923 = vpop.xlane.xlu0 %922
  %vm924 = vcmp.ge.f32.partialorder %v918, %v921
  %vm925 = vcmp.ge.f32.partialorder %v919, %v923
  %v926 = vsel %vm924, %v35, 128
  %v927 = vsel %vm925, %v35, 128
  %v928 = vand.u32 %v926, 65535
  %v929 = vshra.s32 %v926, 16
  %v930 = vcvt.s32.f32 %v928
  %v931 = vcvt.s32.f32 %v929
  %932 = vmin.xlane.f32.xlu0 %v931
  %v933 = vpop.xlane.xlu0 %932
  %vm934 = vcmp.eq.f32.partialorder %v931, %v933
  %v935 = vsel %vm934, %v930, inf
  %936 = vmin.xlane.f32.xlu0 %v935
  %v937 = vpop.xlane.xlu0 %936
  %v938 = vcvt.f32.s32 %v937
  %v939 = vcvt.f32.s32 %v933
  %v940 = vshll.u32 %v939, 16
  %v941 = vadd.s32 %v940, %v938
  %v942 = vand.u32 %v927, 65535
  %v943 = vshra.s32 %v927, 16
  %v944 = vcvt.s32.f32 %v942
  %v945 = vcvt.s32.f32 %v943
  %946 = vmin.xlane.f32.xlu0 %v945
  %v947 = vpop.xlane.xlu0 %946
  %vm948 = vcmp.eq.f32.partialorder %v945, %v947
  %v949 = vsel %vm948, %v944, inf
  %950 = vmin.xlane.f32.xlu0 %v949
  %v951 = vpop.xlane.xlu0 %950
  %v952 = vcvt.f32.s32 %v951
  %v953 = vcvt.f32.s32 %v947
  %v954 = vshll.u32 %v953, 16
  %v955 = vadd.s32 %v954, %v952
  %v957 = vperm.slane %v910, 0
  %v958 = vlaneseq
  %v959 = vshrl.u32 %v958, 7
  %961 = vset.pattern.permute.xlu0 %v959
  %962 = vperm.xlu0 %961, %v957
  %v963 = vpop.permute.xlu0 %962
  %v964 = vperm.slane %v910, 1
  %v965 = vlaneseq
  %v966 = vshrl.u32 %v965, 7
  %968 = vset.pattern.permute.xlu0 %v966
  %969 = vperm.xlu0 %968, %v964
  %v970 = vpop.permute.xlu0 %969
  %v973 = vadd.f32 %v921, %v963
  %v974 = vadd.f32 %v923, %v970
  %977 = vset.pattern.permute.xlu0 0
  %978 = vperm.xlu0 %977, %v973
  %v979 = vpop.permute.xlu0 %978
  %980 = vset.pattern.permute.xlu0 0
  %981 = vperm.xlu0 %980, %v974
  %v982 = vpop.permute.xlu0 %981
  %v983 = vperm.slane %v979, %v35
  %v984 = vperm.slane %v982, %v35
  %v985 = vsel %vm278, %v984, %v983
  %v987 = vsel %vm281, %v985, -1e+09
  %v988 = vperm.slane %v941, %v35
  %v989 = vperm.slane %v955, %v35
  %v990 = vsel %vm278, %v989, %v988
  %v991 = vsel %vm281, %v990, %v287
  %v992 = vstv %s833
  %vm993 = vcmp.gt.s32.totalorder %v33, %v992
  %p994 = scmp.gt.s32.totalorder %s833, 0
  %s995 = scalar_select %p994, 1, 0
  %v996 = vstv %s995
  %vm997 = vcmp.eq.s32.totalorder %v996, 1
  %vm998 = vmand %vm993, %vm997
  %v999 = vsel %vm998, 1, 0
  %1000 = vset.pattern.permute.xlu0 0
  %1001 = vperm.xlu0 %1000, %v999
  %v1002 = vpop.permute.xlu0 %1001
  %vm1003 = vcmp.eq.s32.totalorder %v1002, 1
  %v1004 = vsel %vm1003, %v987, %v911
  %1005 = vst [vmem:[%s9] sm:$0x3] %v1004
  %v1006 = vsel %vm1003, %v991, %v35
  %s1007 = scalar_lea.vmem %s8, 8
  %1008 = vst [vmem:[%s1007] sm:$0x3] %v1006
  %s1009 = sadd.s32 %s125, 5
  %s1010 = scalar_lea.vmem %s0, 10
  %v1011 = vld [vmem:[%s1010] sm:$0x3]
  %v1012 = vld [vmem:[%s2] sm:$0xff]
  %v1013 = vld [vmem:[%s2 + $0x8] sm:$0xff]
  %v1014 = vld [vmem:[%s2 + $0x10] sm:$0xff]
  %v1015 = vld [vmem:[%s2 + $0x18] sm:$0xff]
  %v1016 = vld [vmem:[%s2 + $0x20] sm:$0xff]
  %v1017 = vld [vmem:[%s2 + $0x28] sm:$0xff]
  %v1018 = vld [vmem:[%s2 + $0x30] sm:$0xff]
  %v1019 = vld [vmem:[%s2 + $0x38] sm:$0xff]
  %v1020 = vld [vmem:[%s2 + $0x40] sm:$0xff]
  %v1021 = vld [vmem:[%s2 + $0x48] sm:$0xff]
  %v1022 = vld [vmem:[%s2 + $0x50] sm:$0xff]
  %v1023 = vld [vmem:[%s2 + $0x58] sm:$0xff]
  %v1024 = vld [vmem:[%s2 + $0x60] sm:$0xff]
  %v1025 = vld [vmem:[%s2 + $0x68] sm:$0xff]
  %v1026 = vld [vmem:[%s2 + $0x70] sm:$0xff]
  %v1027 = vld [vmem:[%s2 + $0x78] sm:$0xff]
  %s1028 = scalar_lea.vmem %s1, 10
  %v1029 = vld [vmem:[%s1028] sm:$0x3]
  %v1030 = vld [vmem:[%s3] sm:$0xff]
  %v1031 = vld [vmem:[%s3 + $0x8] sm:$0xff]
  %v1032 = vld [vmem:[%s3 + $0x10] sm:$0xff]
  %v1033 = vld [vmem:[%s3 + $0x18] sm:$0xff]
  %v1034 = vld [vmem:[%s3 + $0x20] sm:$0xff]
  %v1035 = vld [vmem:[%s3 + $0x28] sm:$0xff]
  %v1036 = vld [vmem:[%s3 + $0x30] sm:$0xff]
  %v1037 = vld [vmem:[%s3 + $0x38] sm:$0xff]
  %v1038 = vld [vmem:[%s3 + $0x40] sm:$0xff]
  %v1039 = vld [vmem:[%s3 + $0x48] sm:$0xff]
  %v1040 = vld [vmem:[%s3 + $0x50] sm:$0xff]
  %v1041 = vld [vmem:[%s3 + $0x58] sm:$0xff]
  %v1042 = vld [vmem:[%s3 + $0x60] sm:$0xff]
  %v1043 = vld [vmem:[%s3 + $0x68] sm:$0xff]
  %v1044 = vld [vmem:[%s3 + $0x70] sm:$0xff]
  %v1045 = vld [vmem:[%s3 + $0x78] sm:$0xff]
  %1046 = vmatpush.msra.mxu0 %v1045
  %1047 = vmatpush.msra.mxu0 %v1044
  %1048 = vmatpush.msra.mxu0 %v1043
  %1049 = vmatpush.msra.mxu0 %v1042
  %1050 = vmatpush.msra.mxu0 %v1041
  %1051 = vmatpush.msra.mxu0 %v1040
  %1052 = vmatpush.msra.mxu0 %v1039
  %1053 = vmatpush.msra.mxu0 %v1038
  %1054 = vmatpush.msra.mxu0 %v1037
  %1055 = vmatpush.msra.mxu0 %v1036
  %1056 = vmatpush.msra.mxu0 %v1035
  %1057 = vmatpush.msra.mxu0 %v1034
  %1058 = vmatpush.msra.mxu0 %v1033
  %1059 = vmatpush.msra.mxu0 %v1032
  %1060 = vmatpush.msra.mxu0 %v1031
  %1061 = vmatpush.msra.mxu0 %v1030
  %1062 = vmatmul.f32.gmra.mxu0 %v1029
  %v1063 = vpop.f32.mrf.mxu0
  %v1064 = vadd.f32 0.0, %v1063
  %1065 = vdwg.mxu0
  %1066 = vmatpush.msra.mxu0 %v1027
  %1067 = vmatpush.msra.mxu0 %v1026
  %1068 = vmatpush.msra.mxu0 %v1025
  %1069 = vmatpush.msra.mxu0 %v1024
  %1070 = vmatpush.msra.mxu0 %v1023
  %1071 = vmatpush.msra.mxu0 %v1022
  %1072 = vmatpush.msra.mxu0 %v1021
  %1073 = vmatpush.msra.mxu0 %v1020
  %1074 = vmatpush.msra.mxu0 %v1019
  %1075 = vmatpush.msra.mxu0 %v1018
  %1076 = vmatpush.msra.mxu0 %v1017
  %1077 = vmatpush.msra.mxu0 %v1016
  %1078 = vmatpush.msra.mxu0 %v1015
  %1079 = vmatpush.msra.mxu0 %v1014
  %1080 = vmatpush.msra.mxu0 %v1013
  %1081 = vmatpush.msra.mxu0 %v1012
  %1082 = vmatmul.f32.gmra.mxu0 %v1011
  %v1083 = vpop.f32.mrf.mxu0
  %v1084 = vadd.f32 %v1064, %v1083
  %1085 = vdwg.mxu0
  %v1086 = vadd.f32 %v1084, %v201
  %v1087 = vld [vmem:[%s9] sm:$0x3]
  %v1089 = vrot.slane %v1087, 1
  %v1090 = vperm.slane %v1087, 0
  %v1091 = vperm.slane %v1089, 0
  %v1094 = vadd.f32 %v1090, %v31
  %v1095 = vadd.f32 %v1091, %v31
  %1096 = vmax.xlane.f32.xlu0 %v1094
  %v1097 = vpop.xlane.xlu0 %1096
  %1098 = vmax.xlane.f32.xlu0 %v1095
  %v1099 = vpop.xlane.xlu0 %1098
  %vm1100 = vcmp.ge.f32.partialorder %v1094, %v1097
  %vm1101 = vcmp.ge.f32.partialorder %v1095, %v1099
  %v1102 = vsel %vm1100, %v35, 128
  %v1103 = vsel %vm1101, %v35, 128
  %v1104 = vand.u32 %v1102, 65535
  %v1105 = vshra.s32 %v1102, 16
  %v1106 = vcvt.s32.f32 %v1104
  %v1107 = vcvt.s32.f32 %v1105
  %1108 = vmin.xlane.f32.xlu0 %v1107
  %v1109 = vpop.xlane.xlu0 %1108
  %vm1110 = vcmp.eq.f32.partialorder %v1107, %v1109
  %v1111 = vsel %vm1110, %v1106, inf
  %1112 = vmin.xlane.f32.xlu0 %v1111
  %v1113 = vpop.xlane.xlu0 %1112
  %v1114 = vcvt.f32.s32 %v1113
  %v1115 = vcvt.f32.s32 %v1109
  %v1116 = vshll.u32 %v1115, 16
  %v1117 = vadd.s32 %v1116, %v1114
  %v1118 = vand.u32 %v1103, 65535
  %v1119 = vshra.s32 %v1103, 16
  %v1120 = vcvt.s32.f32 %v1118
  %v1121 = vcvt.s32.f32 %v1119
  %1122 = vmin.xlane.f32.xlu0 %v1121
  %v1123 = vpop.xlane.xlu0 %1122
  %vm1124 = vcmp.eq.f32.partialorder %v1121, %v1123
  %v1125 = vsel %vm1124, %v1120, inf
  %1126 = vmin.xlane.f32.xlu0 %v1125
  %v1127 = vpop.xlane.xlu0 %1126
  %v1128 = vcvt.f32.s32 %v1127
  %v1129 = vcvt.f32.s32 %v1123
  %v1130 = vshll.u32 %v1129, 16
  %v1131 = vadd.s32 %v1130, %v1128
  %v1133 = vperm.slane %v1086, 0
  %v1134 = vlaneseq
  %v1135 = vshrl.u32 %v1134, 7
  %1137 = vset.pattern.permute.xlu0 %v1135
  %1138 = vperm.xlu0 %1137, %v1133
  %v1139 = vpop.permute.xlu0 %1138
  %v1140 = vperm.slane %v1086, 1
  %v1141 = vlaneseq
  %v1142 = vshrl.u32 %v1141, 7
  %1144 = vset.pattern.permute.xlu0 %v1142
  %1145 = vperm.xlu0 %1144, %v1140
  %v1146 = vpop.permute.xlu0 %1145
  %v1149 = vadd.f32 %v1097, %v1139
  %v1150 = vadd.f32 %v1099, %v1146
  %1153 = vset.pattern.permute.xlu0 0
  %1154 = vperm.xlu0 %1153, %v1149
  %v1155 = vpop.permute.xlu0 %1154
  %1156 = vset.pattern.permute.xlu0 0
  %1157 = vperm.xlu0 %1156, %v1150
  %v1158 = vpop.permute.xlu0 %1157
  %v1159 = vperm.slane %v1155, %v35
  %v1160 = vperm.slane %v1158, %v35
  %v1161 = vsel %vm278, %v1160, %v1159
  %v1163 = vsel %vm281, %v1161, -1e+09
  %v1164 = vperm.slane %v1117, %v35
  %v1165 = vperm.slane %v1131, %v35
  %v1166 = vsel %vm278, %v1165, %v1164
  %v1167 = vsel %vm281, %v1166, %v287
  %v1168 = vstv %s1009
  %vm1169 = vcmp.gt.s32.totalorder %v33, %v1168
  %p1170 = scmp.gt.s32.totalorder %s1009, 0
  %s1171 = scalar_select %p1170, 1, 0
  %v1172 = vstv %s1171
  %vm1173 = vcmp.eq.s32.totalorder %v1172, 1
  %vm1174 = vmand %vm1169, %vm1173
  %v1175 = vsel %vm1174, 1, 0
  %1176 = vset.pattern.permute.xlu0 0
  %1177 = vperm.xlu0 %1176, %v1175
  %v1178 = vpop.permute.xlu0 %1177
  %vm1179 = vcmp.eq.s32.totalorder %v1178, 1
  %v1180 = vsel %vm1179, %v1163, %v1087
  %1181 = vst [vmem:[%s9] sm:$0x3] %v1180
  %v1182 = vsel %vm1179, %v1167, %v35
  %s1183 = scalar_lea.vmem %s8, 10
  %1184 = vst [vmem:[%s1183] sm:$0x3] %v1182
  %s1185 = sadd.s32 %s125, 6
  %s1186 = scalar_lea.vmem %s0, 12
  %v1187 = vld [vmem:[%s1186] sm:$0x3]
  %v1188 = vld [vmem:[%s2] sm:$0xff]
  %v1189 = vld [vmem:[%s2 + $0x8] sm:$0xff]
  %v1190 = vld [vmem:[%s2 + $0x10] sm:$0xff]
  %v1191 = vld [vmem:[%s2 + $0x18] sm:$0xff]
  %v1192 = vld [vmem:[%s2 + $0x20] sm:$0xff]
  %v1193 = vld [vmem:[%s2 + $0x28] sm:$0xff]
  %v1194 = vld [vmem:[%s2 + $0x30] sm:$0xff]
  %v1195 = vld [vmem:[%s2 + $0x38] sm:$0xff]
  %v1196 = vld [vmem:[%s2 + $0x40] sm:$0xff]
  %v1197 = vld [vmem:[%s2 + $0x48] sm:$0xff]
  %v1198 = vld [vmem:[%s2 + $0x50] sm:$0xff]
  %v1199 = vld [vmem:[%s2 + $0x58] sm:$0xff]
  %v1200 = vld [vmem:[%s2 + $0x60] sm:$0xff]
  %v1201 = vld [vmem:[%s2 + $0x68] sm:$0xff]
  %v1202 = vld [vmem:[%s2 + $0x70] sm:$0xff]
  %v1203 = vld [vmem:[%s2 + $0x78] sm:$0xff]
  %s1204 = scalar_lea.vmem %s1, 12
  %v1205 = vld [vmem:[%s1204] sm:$0x3]
  %v1206 = vld [vmem:[%s3] sm:$0xff]
  %v1207 = vld [vmem:[%s3 + $0x8] sm:$0xff]
  %v1208 = vld [vmem:[%s3 + $0x10] sm:$0xff]
  %v1209 = vld [vmem:[%s3 + $0x18] sm:$0xff]
  %v1210 = vld [vmem:[%s3 + $0x20] sm:$0xff]
  %v1211 = vld [vmem:[%s3 + $0x28] sm:$0xff]
  %v1212 = vld [vmem:[%s3 + $0x30] sm:$0xff]
  %v1213 = vld [vmem:[%s3 + $0x38] sm:$0xff]
  %v1214 = vld [vmem:[%s3 + $0x40] sm:$0xff]
  %v1215 = vld [vmem:[%s3 + $0x48] sm:$0xff]
  %v1216 = vld [vmem:[%s3 + $0x50] sm:$0xff]
  %v1217 = vld [vmem:[%s3 + $0x58] sm:$0xff]
  %v1218 = vld [vmem:[%s3 + $0x60] sm:$0xff]
  %v1219 = vld [vmem:[%s3 + $0x68] sm:$0xff]
  %v1220 = vld [vmem:[%s3 + $0x70] sm:$0xff]
  %v1221 = vld [vmem:[%s3 + $0x78] sm:$0xff]
  %1222 = vmatpush.msra.mxu0 %v1221
  %1223 = vmatpush.msra.mxu0 %v1220
  %1224 = vmatpush.msra.mxu0 %v1219
  %1225 = vmatpush.msra.mxu0 %v1218
  %1226 = vmatpush.msra.mxu0 %v1217
  %1227 = vmatpush.msra.mxu0 %v1216
  %1228 = vmatpush.msra.mxu0 %v1215
  %1229 = vmatpush.msra.mxu0 %v1214
  %1230 = vmatpush.msra.mxu0 %v1213
  %1231 = vmatpush.msra.mxu0 %v1212
  %1232 = vmatpush.msra.mxu0 %v1211
  %1233 = vmatpush.msra.mxu0 %v1210
  %1234 = vmatpush.msra.mxu0 %v1209
  %1235 = vmatpush.msra.mxu0 %v1208
  %1236 = vmatpush.msra.mxu0 %v1207
  %1237 = vmatpush.msra.mxu0 %v1206
  %1238 = vmatmul.f32.gmra.mxu0 %v1205
  %v1239 = vpop.f32.mrf.mxu0
  %v1240 = vadd.f32 0.0, %v1239
  %1241 = vdwg.mxu0
  %1242 = vmatpush.msra.mxu0 %v1203
  %1243 = vmatpush.msra.mxu0 %v1202
  %1244 = vmatpush.msra.mxu0 %v1201
  %1245 = vmatpush.msra.mxu0 %v1200
  %1246 = vmatpush.msra.mxu0 %v1199
  %1247 = vmatpush.msra.mxu0 %v1198
  %1248 = vmatpush.msra.mxu0 %v1197
  %1249 = vmatpush.msra.mxu0 %v1196
  %1250 = vmatpush.msra.mxu0 %v1195
  %1251 = vmatpush.msra.mxu0 %v1194
  %1252 = vmatpush.msra.mxu0 %v1193
  %1253 = vmatpush.msra.mxu0 %v1192
  %1254 = vmatpush.msra.mxu0 %v1191
  %1255 = vmatpush.msra.mxu0 %v1190
  %1256 = vmatpush.msra.mxu0 %v1189
  %1257 = vmatpush.msra.mxu0 %v1188
  %1258 = vmatmul.f32.gmra.mxu0 %v1187
  %v1259 = vpop.f32.mrf.mxu0
  %v1260 = vadd.f32 %v1240, %v1259
  %1261 = vdwg.mxu0
  %v1262 = vadd.f32 %v1260, %v201
  %v1263 = vld [vmem:[%s9] sm:$0x3]
  %v1265 = vrot.slane %v1263, 1
  %v1266 = vperm.slane %v1263, 0
  %v1267 = vperm.slane %v1265, 0
  %v1270 = vadd.f32 %v1266, %v31
  %v1271 = vadd.f32 %v1267, %v31
  %1272 = vmax.xlane.f32.xlu0 %v1270
  %v1273 = vpop.xlane.xlu0 %1272
  %1274 = vmax.xlane.f32.xlu0 %v1271
  %v1275 = vpop.xlane.xlu0 %1274
  %vm1276 = vcmp.ge.f32.partialorder %v1270, %v1273
  %vm1277 = vcmp.ge.f32.partialorder %v1271, %v1275
  %v1278 = vsel %vm1276, %v35, 128
  %v1279 = vsel %vm1277, %v35, 128
  %v1280 = vand.u32 %v1278, 65535
  %v1281 = vshra.s32 %v1278, 16
  %v1282 = vcvt.s32.f32 %v1280
  %v1283 = vcvt.s32.f32 %v1281
  %1284 = vmin.xlane.f32.xlu0 %v1283
  %v1285 = vpop.xlane.xlu0 %1284
  %vm1286 = vcmp.eq.f32.partialorder %v1283, %v1285
  %v1287 = vsel %vm1286, %v1282, inf
  %1288 = vmin.xlane.f32.xlu0 %v1287
  %v1289 = vpop.xlane.xlu0 %1288
  %v1290 = vcvt.f32.s32 %v1289
  %v1291 = vcvt.f32.s32 %v1285
  %v1292 = vshll.u32 %v1291, 16
  %v1293 = vadd.s32 %v1292, %v1290
  %v1294 = vand.u32 %v1279, 65535
  %v1295 = vshra.s32 %v1279, 16
  %v1296 = vcvt.s32.f32 %v1294
  %v1297 = vcvt.s32.f32 %v1295
  %1298 = vmin.xlane.f32.xlu0 %v1297
  %v1299 = vpop.xlane.xlu0 %1298
  %vm1300 = vcmp.eq.f32.partialorder %v1297, %v1299
  %v1301 = vsel %vm1300, %v1296, inf
  %1302 = vmin.xlane.f32.xlu0 %v1301
  %v1303 = vpop.xlane.xlu0 %1302
  %v1304 = vcvt.f32.s32 %v1303
  %v1305 = vcvt.f32.s32 %v1299
  %v1306 = vshll.u32 %v1305, 16
  %v1307 = vadd.s32 %v1306, %v1304
  %v1309 = vperm.slane %v1262, 0
  %v1310 = vlaneseq
  %v1311 = vshrl.u32 %v1310, 7
  %1313 = vset.pattern.permute.xlu0 %v1311
  %1314 = vperm.xlu0 %1313, %v1309
  %v1315 = vpop.permute.xlu0 %1314
  %v1316 = vperm.slane %v1262, 1
  %v1317 = vlaneseq
  %v1318 = vshrl.u32 %v1317, 7
  %1320 = vset.pattern.permute.xlu0 %v1318
  %1321 = vperm.xlu0 %1320, %v1316
  %v1322 = vpop.permute.xlu0 %1321
  %v1325 = vadd.f32 %v1273, %v1315
  %v1326 = vadd.f32 %v1275, %v1322
  %1329 = vset.pattern.permute.xlu0 0
  %1330 = vperm.xlu0 %1329, %v1325
  %v1331 = vpop.permute.xlu0 %1330
  %1332 = vset.pattern.permute.xlu0 0
  %1333 = vperm.xlu0 %1332, %v1326
  %v1334 = vpop.permute.xlu0 %1333
  %v1335 = vperm.slane %v1331, %v35
  %v1336 = vperm.slane %v1334, %v35
  %v1337 = vsel %vm278, %v1336, %v1335
  %v1339 = vsel %vm281, %v1337, -1e+09
  %v1340 = vperm.slane %v1293, %v35
  %v1341 = vperm.slane %v1307, %v35
  %v1342 = vsel %vm278, %v1341, %v1340
  %v1343 = vsel %vm281, %v1342, %v287
  %v1344 = vstv %s1185
  %vm1345 = vcmp.gt.s32.totalorder %v33, %v1344
  %p1346 = scmp.gt.s32.totalorder %s1185, 0
  %s1347 = scalar_select %p1346, 1, 0
  %v1348 = vstv %s1347
  %vm1349 = vcmp.eq.s32.totalorder %v1348, 1
  %vm1350 = vmand %vm1345, %vm1349
  %v1351 = vsel %vm1350, 1, 0
  %1352 = vset.pattern.permute.xlu0 0
  %1353 = vperm.xlu0 %1352, %v1351
  %v1354 = vpop.permute.xlu0 %1353
  %vm1355 = vcmp.eq.s32.totalorder %v1354, 1
  %v1356 = vsel %vm1355, %v1339, %v1263
  %1357 = vst [vmem:[%s9] sm:$0x3] %v1356
  %v1358 = vsel %vm1355, %v1343, %v35
  %s1359 = scalar_lea.vmem %s8, 12
  %1360 = vst [vmem:[%s1359] sm:$0x3] %v1358
  %s1361 = sadd.s32 %s125, 7
  %s1362 = scalar_lea.vmem %s0, 14
  %v1363 = vld [vmem:[%s1362] sm:$0x3]
  %v1364 = vld [vmem:[%s2] sm:$0xff]
  %v1365 = vld [vmem:[%s2 + $0x8] sm:$0xff]
  %v1366 = vld [vmem:[%s2 + $0x10] sm:$0xff]
  %v1367 = vld [vmem:[%s2 + $0x18] sm:$0xff]
  %v1368 = vld [vmem:[%s2 + $0x20] sm:$0xff]
  %v1369 = vld [vmem:[%s2 + $0x28] sm:$0xff]
  %v1370 = vld [vmem:[%s2 + $0x30] sm:$0xff]
  %v1371 = vld [vmem:[%s2 + $0x38] sm:$0xff]
  %v1372 = vld [vmem:[%s2 + $0x40] sm:$0xff]
  %v1373 = vld [vmem:[%s2 + $0x48] sm:$0xff]
  %v1374 = vld [vmem:[%s2 + $0x50] sm:$0xff]
  %v1375 = vld [vmem:[%s2 + $0x58] sm:$0xff]
  %v1376 = vld [vmem:[%s2 + $0x60] sm:$0xff]
  %v1377 = vld [vmem:[%s2 + $0x68] sm:$0xff]
  %v1378 = vld [vmem:[%s2 + $0x70] sm:$0xff]
  %v1379 = vld [vmem:[%s2 + $0x78] sm:$0xff]
  %s1380 = scalar_lea.vmem %s1, 14
  %v1381 = vld [vmem:[%s1380] sm:$0x3]
  %v1382 = vld [vmem:[%s3] sm:$0xff]
  %v1383 = vld [vmem:[%s3 + $0x8] sm:$0xff]
  %v1384 = vld [vmem:[%s3 + $0x10] sm:$0xff]
  %v1385 = vld [vmem:[%s3 + $0x18] sm:$0xff]
  %v1386 = vld [vmem:[%s3 + $0x20] sm:$0xff]
  %v1387 = vld [vmem:[%s3 + $0x28] sm:$0xff]
  %v1388 = vld [vmem:[%s3 + $0x30] sm:$0xff]
  %v1389 = vld [vmem:[%s3 + $0x38] sm:$0xff]
  %v1390 = vld [vmem:[%s3 + $0x40] sm:$0xff]
  %v1391 = vld [vmem:[%s3 + $0x48] sm:$0xff]
  %v1392 = vld [vmem:[%s3 + $0x50] sm:$0xff]
  %v1393 = vld [vmem:[%s3 + $0x58] sm:$0xff]
  %v1394 = vld [vmem:[%s3 + $0x60] sm:$0xff]
  %v1395 = vld [vmem:[%s3 + $0x68] sm:$0xff]
  %v1396 = vld [vmem:[%s3 + $0x70] sm:$0xff]
  %v1397 = vld [vmem:[%s3 + $0x78] sm:$0xff]
  %1398 = vmatpush.msra.mxu0 %v1397
  %1399 = vmatpush.msra.mxu0 %v1396
  %1400 = vmatpush.msra.mxu0 %v1395
  %1401 = vmatpush.msra.mxu0 %v1394
  %1402 = vmatpush.msra.mxu0 %v1393
  %1403 = vmatpush.msra.mxu0 %v1392
  %1404 = vmatpush.msra.mxu0 %v1391
  %1405 = vmatpush.msra.mxu0 %v1390
  %1406 = vmatpush.msra.mxu0 %v1389
  %1407 = vmatpush.msra.mxu0 %v1388
  %1408 = vmatpush.msra.mxu0 %v1387
  %1409 = vmatpush.msra.mxu0 %v1386
  %1410 = vmatpush.msra.mxu0 %v1385
  %1411 = vmatpush.msra.mxu0 %v1384
  %1412 = vmatpush.msra.mxu0 %v1383
  %1413 = vmatpush.msra.mxu0 %v1382
  %1414 = vmatmul.f32.gmra.mxu0 %v1381
  %v1415 = vpop.f32.mrf.mxu0
  %v1416 = vadd.f32 0.0, %v1415
  %1417 = vdwg.mxu0
  %1418 = vmatpush.msra.mxu0 %v1379
  %1419 = vmatpush.msra.mxu0 %v1378
  %1420 = vmatpush.msra.mxu0 %v1377
  %1421 = vmatpush.msra.mxu0 %v1376
  %1422 = vmatpush.msra.mxu0 %v1375
  %1423 = vmatpush.msra.mxu0 %v1374
  %1424 = vmatpush.msra.mxu0 %v1373
  %1425 = vmatpush.msra.mxu0 %v1372
  %1426 = vmatpush.msra.mxu0 %v1371
  %1427 = vmatpush.msra.mxu0 %v1370
  %1428 = vmatpush.msra.mxu0 %v1369
  %1429 = vmatpush.msra.mxu0 %v1368
  %1430 = vmatpush.msra.mxu0 %v1367
  %1431 = vmatpush.msra.mxu0 %v1366
  %1432 = vmatpush.msra.mxu0 %v1365
  %1433 = vmatpush.msra.mxu0 %v1364
  %1434 = vmatmul.f32.gmra.mxu0 %v1363
  %v1435 = vpop.f32.mrf.mxu0
  %v1436 = vadd.f32 %v1416, %v1435
  %1437 = vdwg.mxu0
  %v1438 = vadd.f32 %v1436, %v201
  %v1439 = vld [vmem:[%s9] sm:$0x3]
  %v1441 = vrot.slane %v1439, 1
  %v1442 = vperm.slane %v1439, 0
  %v1443 = vperm.slane %v1441, 0
  %v1446 = vadd.f32 %v1442, %v31
  %v1447 = vadd.f32 %v1443, %v31
  %1448 = vmax.xlane.f32.xlu0 %v1446
  %v1449 = vpop.xlane.xlu0 %1448
  %1450 = vmax.xlane.f32.xlu0 %v1447
  %v1451 = vpop.xlane.xlu0 %1450
  %vm1452 = vcmp.ge.f32.partialorder %v1446, %v1449
  %vm1453 = vcmp.ge.f32.partialorder %v1447, %v1451
  %v1454 = vsel %vm1452, %v35, 128
  %v1455 = vsel %vm1453, %v35, 128
  %v1456 = vand.u32 %v1454, 65535
  %v1457 = vshra.s32 %v1454, 16
  %v1458 = vcvt.s32.f32 %v1456
  %v1459 = vcvt.s32.f32 %v1457
  %1460 = vmin.xlane.f32.xlu0 %v1459
  %v1461 = vpop.xlane.xlu0 %1460
  %vm1462 = vcmp.eq.f32.partialorder %v1459, %v1461
  %v1463 = vsel %vm1462, %v1458, inf
  %1464 = vmin.xlane.f32.xlu0 %v1463
  %v1465 = vpop.xlane.xlu0 %1464
  %v1466 = vcvt.f32.s32 %v1465
  %v1467 = vcvt.f32.s32 %v1461
  %v1468 = vshll.u32 %v1467, 16
  %v1469 = vadd.s32 %v1468, %v1466
  %v1470 = vand.u32 %v1455, 65535
  %v1471 = vshra.s32 %v1455, 16
  %v1472 = vcvt.s32.f32 %v1470
  %v1473 = vcvt.s32.f32 %v1471
  %1474 = vmin.xlane.f32.xlu0 %v1473
  %v1475 = vpop.xlane.xlu0 %1474
  %vm1476 = vcmp.eq.f32.partialorder %v1473, %v1475
  %v1477 = vsel %vm1476, %v1472, inf
  %1478 = vmin.xlane.f32.xlu0 %v1477
  %v1479 = vpop.xlane.xlu0 %1478
  %v1480 = vcvt.f32.s32 %v1479
  %v1481 = vcvt.f32.s32 %v1475
  %v1482 = vshll.u32 %v1481, 16
  %v1483 = vadd.s32 %v1482, %v1480
  %v1485 = vperm.slane %v1438, 0
  %v1486 = vlaneseq
  %v1487 = vshrl.u32 %v1486, 7
  %1489 = vset.pattern.permute.xlu0 %v1487
  %1490 = vperm.xlu0 %1489, %v1485
  %v1491 = vpop.permute.xlu0 %1490
  %v1492 = vperm.slane %v1438, 1
  %v1493 = vlaneseq
  %v1494 = vshrl.u32 %v1493, 7
  %1496 = vset.pattern.permute.xlu0 %v1494
  %1497 = vperm.xlu0 %1496, %v1492
  %v1498 = vpop.permute.xlu0 %1497
  %v1501 = vadd.f32 %v1449, %v1491
  %v1502 = vadd.f32 %v1451, %v1498
  %1505 = vset.pattern.permute.xlu0 0
  %1506 = vperm.xlu0 %1505, %v1501
  %v1507 = vpop.permute.xlu0 %1506
  %1508 = vset.pattern.permute.xlu0 0
  %1509 = vperm.xlu0 %1508, %v1502
  %v1510 = vpop.permute.xlu0 %1509
  %v1511 = vperm.slane %v1507, %v35
  %v1512 = vperm.slane %v1510, %v35
  %v1513 = vsel %vm278, %v1512, %v1511
  %v1515 = vsel %vm281, %v1513, -1e+09
  %v1516 = vperm.slane %v1469, %v35
  %v1517 = vperm.slane %v1483, %v35
  %v1518 = vsel %vm278, %v1517, %v1516
  %v1519 = vsel %vm281, %v1518, %v287
  %v1520 = vstv %s1361
  %vm1521 = vcmp.gt.s32.totalorder %v33, %v1520
  %p1522 = scmp.gt.s32.totalorder %s1361, 0
  %s1523 = scalar_select %p1522, 1, 0
  %v1524 = vstv %s1523
  %vm1525 = vcmp.eq.s32.totalorder %v1524, 1
  %vm1526 = vmand %vm1521, %vm1525
  %v1527 = vsel %vm1526, 1, 0
  %1528 = vset.pattern.permute.xlu0 0
  %1529 = vperm.xlu0 %1528, %v1527
  %v1530 = vpop.permute.xlu0 %1529
  %vm1531 = vcmp.eq.s32.totalorder %v1530, 1
  %v1532 = vsel %vm1531, %v1515, %v1439
  %1533 = vst [vmem:[%s9] sm:$0x3] %v1532
  %v1534 = vsel %vm1531, %v1519, %v35
  %s1535 = scalar_lea.vmem %s8, 14
  %1536 = vst [vmem:[%s1535] sm:$0x3] %v1534
  // Predicated region
  $region38: #{char_ner_forward.3} parent=0 // pred_check
    _
  $region39: #{char_ner_forward.3} parent=0 // pred_check_branch
    %1538 = sbr.rel (0) target = $region41
  $region40: #{char_ner_forward.3} parent=0 // pred_region
    _
  $region41: #{char_ner_forward.3} parent=0 // pred_fallthru
    _
  // Predicated region
  $region42: #{char_ner_forward.3} parent=0 // pred_check
    _
  $region43: #{char_ner_forward.3} parent=0 // pred_check_branch
    %1540 = sbr.rel (0) target = $region45
  $region44: #{char_ner_forward.3} parent=0 // pred_region
    _
  $region45: #{char_ner_forward.3} parent=0 // pred_fallthru
    _
  // Predicated region
  $region46: #{char_ner_forward.3} parent=0 // pred_check
    _
  $region47: #{char_ner_forward.3} parent=0 // pred_check_branch
    %1542 = sbr.rel (0) target = $region49
  $region48: #{char_ner_forward.3} parent=0 // pred_region
    _
  $region49: #{char_ner_forward.3} parent=0 // pred_fallthru
    _
  // Predicated region
  $region50: #{char_ner_forward.3} parent=0 // pred_check
    _
  $region51: #{char_ner_forward.3} parent=0 // pred_check_branch
    %1544 = sbr.rel (0) target = $region53
  $region52: #{char_ner_forward.3} parent=0 // pred_region
    _
  $region53: #{char_ner_forward.3} parent=0 // pred_fallthru
    _

// kernel: char_ner_forward.2
$region0: #{char_ner_forward.2}
  #allocation0 [shape = 'u32[]', space=smem, size = 0x4, offset = 0x4, fixed_abs, tag = 'smem constant byte address 0x4 - core index']
  #allocation1 [shape = 'u32[72,128]{1,0:T(1,128)}', space=vmem, size = 0x9000, scoped, tag = 'internal scratch']
  #allocation2 [shape = 'f32[2,128]{1,0:T(2,128)}', space=vmem, size = 0x400, scoped, tag = 'scratch operand']
  #allocation3 [shape = 'f32[2,128]{1,0:T(2,128)}', space=vmem, size = 0x400, scoped, tag = 'scratch operand']
  #allocation4 [shape = 'f32[2,128]{1,0:T(2,128)}', space=vmem, size = 0x400, scoped, tag = 'scratch operand']
  #allocation5 [shape = 'f32[2,128]{1,0:T(2,128)}', space=vmem, size = 0x400, scoped, tag = 'scratch operand']
  %s0 = inlined_call_operand.vmem [shape: f32[8,2,512], index: 0, kind: input, shape index: {}]
  %s1 = inlined_call_operand.vmem [shape: f32[8,2,512], index: 1, kind: input, shape index: {}]
  %s2 = inlined_call_operand.vmem [shape: f32[128,512], index: 2, kind: input, shape index: {}]
  %s3 = inlined_call_operand.vmem [shape: f32[128,512], index: 3, kind: input, shape index: {}]
  %s4 = inlined_call_operand.vmem [shape: f32[8,2,128], index: 4, kind: output, shape index: {0}]
  %s5 = inlined_call_operand.vmem [shape: f32[8,2,128], index: 5, kind: output, shape index: {1}]
  %6 = xla_tuple %s4, %s5
  %s7 = sld [smem:[#allocation0]]
  $region38: #{char_ner_forward.2} parent=0
    _
  %s9 = ssub.s32 1, %s7
  %s10 = scalar_select 0, %s9, %s7
  // Predicated region
  $region2: #{char_ner_forward.2} parent=0 // pred_check
    _
  $region3: #{char_ner_forward.2} parent=0 // pred_check_branch
    %12 = sbr.rel (0) target = $region5
  $region4: #{char_ner_forward.2} parent=0 // pred_region
    _
  $region5: #{char_ner_forward.2} parent=0 // pred_fallthru
    _
  // Predicated region
  $region6: #{char_ner_forward.2} parent=0 // pred_check
    _
  $region7: #{char_ner_forward.2} parent=0 // pred_check_branch
    %14 = sbr.rel (0) target = $region9
  $region8: #{char_ner_forward.2} parent=0 // pred_region
    _
  $region9: #{char_ner_forward.2} parent=0 // pred_fallthru
    _
  // Predicated region
  $region10: #{char_ner_forward.2} parent=0 // pred_check
    _
  $region11: #{char_ner_forward.2} parent=0 // pred_check_branch
    %16 = sbr.rel (0) target = $region13
  $region12: #{char_ner_forward.2} parent=0 // pred_region
    _
  $region13: #{char_ner_forward.2} parent=0 // pred_fallthru
    _
  // Predicated region
  $region14: #{char_ner_forward.2} parent=0 // pred_check
    _
  $region15: #{char_ner_forward.2} parent=0 // pred_check_branch
    %18 = sbr.rel (0) target = $region17
  $region16: #{char_ner_forward.2} parent=0 // pred_region
    _
  $region17: #{char_ner_forward.2} parent=0 // pred_fallthru
    _
  %p19 = scmp.eq.s32.totalorder 0, 0
  // Predicated region
  $region18: #{char_ner_forward.2} parent=0 // pred_check
    %p20 = pneg %p19
  $region19: #{char_ner_forward.2} parent=0 // pred_check_branch
    %22 = sbr.rel (%p20) target = $region21
  $region20: #{char_ner_forward.2} parent=0 // pred_region
    %23 = vst [vmem:[#allocation2] sm:$0x3] 0.0
    %24 = vst [vmem:[#allocation3] sm:$0x3] 0.0
    %25 = vst [vmem:[#allocation4] sm:$0x3] 0.0
    %26 = vst [vmem:[#allocation5] sm:$0x3] 0.0
  $region21: #{char_ner_forward.2} parent=0 // pred_fallthru
    _
  %v27 = vld [vmem:[%s0] sm:$0xff]
  %v28 = vld [vmem:[#allocation2] sm:$0x3]
  %v29 = vld [vmem:[%s2] sm:$0xff]
  %v30 = vld [vmem:[%s2 + $0x8] sm:$0xff]
  %v31 = vld [vmem:[%s2 + $0x10] sm:$0xff]
  %v32 = vld [vmem:[%s2 + $0x18] sm:$0xff]
  %v33 = vld [vmem:[%s2 + $0x20] sm:$0xff]
  %v34 = vld [vmem:[%s2 + $0x28] sm:$0xff]
  %v35 = vld [vmem:[%s2 + $0x30] sm:$0xff]
  %v36 = vld [vmem:[%s2 + $0x38] sm:$0xff]
  %v37 = vld [vmem:[%s2 + $0x40] sm:$0xff]
  %v38 = vld [vmem:[%s2 + $0x48] sm:$0xff]
  %v39 = vld [vmem:[%s2 + $0x50] sm:$0xff]
  %v40 = vld [vmem:[%s2 + $0x58] sm:$0xff]
  %v41 = vld [vmem:[%s2 + $0x60] sm:$0xff]
  %v42 = vld [vmem:[%s2 + $0x68] sm:$0xff]
  %v43 = vld [vmem:[%s2 + $0x70] sm:$0xff]
  %v44 = vld [vmem:[%s2 + $0x78] sm:$0xff]
  %v45 = vld [vmem:[%s2 + $0x80] sm:$0xff]
  %v46 = vld [vmem:[%s2 + $0x88] sm:$0xff]
  %v47 = vld [vmem:[%s2 + $0x90] sm:$0xff]
  %v48 = vld [vmem:[%s2 + $0x98] sm:$0xff]
  %v49 = vld [vmem:[%s2 + $0xa0] sm:$0xff]
  %v50 = vld [vmem:[%s2 + $0xa8] sm:$0xff]
  %v51 = vld [vmem:[%s2 + $0xb0] sm:$0xff]
  %v52 = vld [vmem:[%s2 + $0xb8] sm:$0xff]
  %v53 = vld [vmem:[%s2 + $0xc0] sm:$0xff]
  %v54 = vld [vmem:[%s2 + $0xc8] sm:$0xff]
  %v55 = vld [vmem:[%s2 + $0xd0] sm:$0xff]
  %v56 = vld [vmem:[%s2 + $0xd8] sm:$0xff]
  %v57 = vld [vmem:[%s2 + $0xe0] sm:$0xff]
  %v58 = vld [vmem:[%s2 + $0xe8] sm:$0xff]
  %v59 = vld [vmem:[%s2 + $0xf0] sm:$0xff]
  %v60 = vld [vmem:[%s2 + $0xf8] sm:$0xff]
  %v61 = vld [vmem:[%s2 + $0x100] sm:$0xff]
  %v62 = vld [vmem:[%s2 + $0x108] sm:$0xff]
  %v63 = vld [vmem:[%s2 + $0x110] sm:$0xff]
  %v64 = vld [vmem:[%s2 + $0x118] sm:$0xff]
  %v65 = vld [vmem:[%s2 + $0x120] sm:$0xff]
  %v66 = vld [vmem:[%s2 + $0x128] sm:$0xff]
  %v67 = vld [vmem:[%s2 + $0x130] sm:$0xff]
  %v68 = vld [vmem:[%s2 + $0x138] sm:$0xff]
  %v69 = vld [vmem:[%s2 + $0x140] sm:$0xff]
  %v70 = vld [vmem:[%s2 + $0x148] sm:$0xff]
  %v71 = vld [vmem:[%s2 + $0x150] sm:$0xff]
  %v72 = vld [vmem:[%s2 + $0x158] sm:$0xff]
  %v73 = vld [vmem:[%s2 + $0x160] sm:$0xff]
  %v74 = vld [vmem:[%s2 + $0x168] sm:$0xff]
  %v75 = vld [vmem:[%s2 + $0x170] sm:$0xff]
  %v76 = vld [vmem:[%s2 + $0x178] sm:$0xff]
  %v77 = vld [vmem:[%s2 + $0x180] sm:$0xff]
  %v78 = vld [vmem:[%s2 + $0x188] sm:$0xff]
  %v79 = vld [vmem:[%s2 + $0x190] sm:$0xff]
  %v80 = vld [vmem:[%s2 + $0x198] sm:$0xff]
  %v81 = vld [vmem:[%s2 + $0x1a0] sm:$0xff]
  %v82 = vld [vmem:[%s2 + $0x1a8] sm:$0xff]
  %v83 = vld [vmem:[%s2 + $0x1b0] sm:$0xff]
  %v84 = vld [vmem:[%s2 + $0x1b8] sm:$0xff]
  %v85 = vld [vmem:[%s2 + $0x1c0] sm:$0xff]
  %v86 = vld [vmem:[%s2 + $0x1c8] sm:$0xff]
  %v87 = vld [vmem:[%s2 + $0x1d0] sm:$0xff]
  %v88 = vld [vmem:[%s2 + $0x1d8] sm:$0xff]
  %v89 = vld [vmem:[%s2 + $0x1e0] sm:$0xff]
  %v90 = vld [vmem:[%s2 + $0x1e8] sm:$0xff]
  %v91 = vld [vmem:[%s2 + $0x1f0] sm:$0xff]
  %v92 = vld [vmem:[%s2 + $0x1f8] sm:$0xff]
  %93 = vmatpush.msra.mxu0 %v89
  %94 = vmatpush.msra.mxu0 %v85
  %95 = vmatpush.msra.mxu0 %v81
  %96 = vmatpush.msra.mxu0 %v77
  %97 = vmatpush.msra.mxu0 %v73
  %98 = vmatpush.msra.mxu0 %v69
  %99 = vmatpush.msra.mxu0 %v65
  %100 = vmatpush.msra.mxu0 %v61
  %101 = vmatpush.msra.mxu0 %v57
  %102 = vmatpush.msra.mxu0 %v53
  %103 = vmatpush.msra.mxu0 %v49
  %104 = vmatpush.msra.mxu0 %v45
  %105 = vmatpush.msra.mxu0 %v41
  %106 = vmatpush.msra.mxu0 %v37
  %107 = vmatpush.msra.mxu0 %v33
  %108 = vmatpush.msra.mxu0 %v29
  %109 = vmatmul.f32.gmra.mxu0 %v28
  %v110 = vpop.f32.mrf.mxu0
  %v111 = vadd.f32 0.0, %v110
  %112 = vdwg.mxu0
  %113 = vmatpush.msra.mxu0 %v90
  %114 = vmatpush.msra.mxu0 %v86
  %115 = vmatpush.msra.mxu0 %v82
  %116 = vmatpush.msra.mxu0 %v78
  %117 = vmatpush.msra.mxu0 %v74
  %118 = vmatpush.msra.mxu0 %v70
  %119 = vmatpush.msra.mxu0 %v66
  %120 = vmatpush.msra.mxu0 %v62
  %121 = vmatpush.msra.mxu0 %v58
  %122 = vmatpush.msra.mxu0 %v54
  %123 = vmatpush.msra.mxu0 %v50
  %124 = vmatpush.msra.mxu0 %v46
  %125 = vmatpush.msra.mxu0 %v42
  %126 = vmatpush.msra.mxu0 %v38
  %127 = vmatpush.msra.mxu0 %v34
  %128 = vmatpush.msra.mxu0 %v30
  %129 = vmatmul.f32.gmra.mxu0 %v28
  %v130 = vpop.f32.mrf.mxu0
  %v131 = vadd.f32 0.0, %v130
  %132 = vdwg.mxu0
  %133 = vmatpush.msra.mxu0 %v91
  %134 = vmatpush.msra.mxu0 %v87
  %135 = vmatpush.msra.mxu0 %v83
  %136 = vmatpush.msra.mxu0 %v79
  %137 = vmatpush.msra.mxu0 %v75
  %138 = vmatpush.msra.mxu0 %v71
  %139 = vmatpush.msra.mxu0 %v67
  %140 = vmatpush.msra.mxu0 %v63
  %141 = vmatpush.msra.mxu0 %v59
  %142 = vmatpush.msra.mxu0 %v55
  %143 = vmatpush.msra.mxu0 %v51
  %144 = vmatpush.msra.mxu0 %v47
  %145 = vmatpush.msra.mxu0 %v43
  %146 = vmatpush.msra.mxu0 %v39
  %147 = vmatpush.msra.mxu0 %v35
  %148 = vmatpush.msra.mxu0 %v31
  %149 = vmatmul.f32.gmra.mxu0 %v28
  %v150 = vpop.f32.mrf.mxu0
  %v151 = vadd.f32 0.0, %v150
  %152 = vdwg.mxu0
  %153 = vmatpush.msra.mxu0 %v92
  %154 = vmatpush.msra.mxu0 %v88
  %155 = vmatpush.msra.mxu0 %v84
  %156 = vmatpush.msra.mxu0 %v80
  %157 = vmatpush.msra.mxu0 %v76
  %158 = vmatpush.msra.mxu0 %v72
  %159 = vmatpush.msra.mxu0 %v68
  %160 = vmatpush.msra.mxu0 %v64
  %161 = vmatpush.msra.mxu0 %v60
  %162 = vmatpush.msra.mxu0 %v56
  %163 = vmatpush.msra.mxu0 %v52
  %164 = vmatpush.msra.mxu0 %v48
  %165 = vmatpush.msra.mxu0 %v44
  %166 = vmatpush.msra.mxu0 %v40
  %167 = vmatpush.msra.mxu0 %v36
  %168 = vmatpush.msra.mxu0 %v32
  %169 = vmatmul.f32.gmra.mxu0 %v28
  %v170 = vpop.f32.mrf.mxu0
  %v171 = vadd.f32 0.0, %v170
  %172 = vdwg.mxu0
  %v177 = vrot.slane %v131, 6
  %v178 = vrot.slane %v151, 4
  %v179 = vrot.slane %v171, 2
  %vm180 = vcmask 1041408
  %v181 = vsel %vm180, %v111, %v177
  %vm182 = vcmask 1045508
  %v183 = vsel %vm182, %v178, %v179
  %vm184 = vcmask 1043456
  %v185 = vsel %vm184, %v181, %v183
  %v187 = vadd.f32 %v27, %v185
  %v188 = vxor.u32 %v187, 2147483648
  %v189 = vmul.f32 %v188, 1.442695
  %v190 = vpow.pop %v189
  %v191 = vadd.f32 %v190, 1.0
  %v192 = vrcp.pop %v191
  %v193 = vmul.f32 %v191, %v192
  %v194 = vsub.f32 1.0, %v193
  %v195 = vmul.f32 %v192, %v194
  %v196 = vadd.f32 %v192, %v195
  %vm197 = vweird.f32 %v191
  %vm198 = vweird.f32 %v192
  %vm199 = vmor %vm197, %vm198
  %v200 = vsel %vm199, %v192, %v196
  %v201 = vand.u32 2147483647, %v191
  %vm202 = vcmp.eq.f32.partialorder %v201, 8.507059e+37
  %v203 = vand.u32 %v191, 2147483648
  %v204 = vor.u32 1.1754944e-38, %v203
  %v205 = vsel %vm202, %v204, %v200
  %v206 = vmul.f32 1.0, %v205
  %v208 = vrot.slane %v187, 2
  %v210 = vxor.u32 %v208, 2147483648
  %v211 = vmul.f32 %v210, 1.442695
  %v212 = vpow.pop %v211
  %v213 = vadd.f32 %v212, 1.0
  %v214 = vrcp.pop %v213
  %v215 = vmul.f32 %v213, %v214
  %v216 = vsub.f32 1.0, %v215
  %v217 = vmul.f32 %v214, %v216
  %v218 = vadd.f32 %v214, %v217
  %vm219 = vweird.f32 %v213
  %vm220 = vweird.f32 %v214
  %vm221 = vmor %vm219, %vm220
  %v222 = vsel %vm221, %v214, %v218
  %v223 = vand.u32 2147483647, %v213
  %vm224 = vcmp.eq.f32.partialorder %v223, 8.507059e+37
  %v225 = vand.u32 %v213, 2147483648
  %v226 = vor.u32 1.1754944e-38, %v225
  %v227 = vsel %vm224, %v226, %v222
  %v228 = vmul.f32 1.0, %v227
  %v229 = vrot.slane %v187, 4
  %v231 = vtanh.pop %v229
  %v232 = vrot.slane %v187, 6
  %v234 = vxor.u32 %v232, 2147483648
  %v235 = vmul.f32 %v234, 1.442695
  %v236 = vpow.pop %v235
  %v237 = vadd.f32 %v236, 1.0
  %v238 = vrcp.pop %v237
  %v239 = vmul.f32 %v237, %v238
  %v240 = vsub.f32 1.0, %v239
  %v241 = vmul.f32 %v238, %v240
  %v242 = vadd.f32 %v238, %v241
  %vm243 = vweird.f32 %v237
  %vm244 = vweird.f32 %v238
  %vm245 = vmor %vm243, %vm244
  %v246 = vsel %vm245, %v238, %v242
  %v247 = vand.u32 2147483647, %v237
  %vm248 = vcmp.eq.f32.partialorder %v247, 8.507059e+37
  %v249 = vand.u32 %v237, 2147483648
  %v250 = vor.u32 1.1754944e-38, %v249
  %v251 = vsel %vm248, %v250, %v246
  %v252 = vmul.f32 1.0, %v251
  %v253 = vld [vmem:[#allocation3] sm:$0x3]
  %v254 = vmul.f32 %v228, %v253
  %v255 = vmul.f32 %v206, %v231
  %v256 = vadd.f32 %v254, %v255
  %v257 = vtanh.pop %v256
  %v258 = vmul.f32 %v252, %v257
  %259 = vst [vmem:[#allocation3] sm:$0x3] %v256
  %260 = vst [vmem:[#allocation2] sm:$0x3] %v258
  %261 = vst [vmem:[%s4] sm:$0x3] %v258
  %v262 = vld [vmem:[%s1] sm:$0xff]
  %v263 = vld [vmem:[#allocation4] sm:$0x3]
  %v264 = vld [vmem:[%s3] sm:$0xff]
  %v265 = vld [vmem:[%s3 + $0x8] sm:$0xff]
  %v266 = vld [vmem:[%s3 + $0x10] sm:$0xff]
  %v267 = vld [vmem:[%s3 + $0x18] sm:$0xff]
  %v268 = vld [vmem:[%s3 + $0x20] sm:$0xff]
  %v269 = vld [vmem:[%s3 + $0x28] sm:$0xff]
  %v270 = vld [vmem:[%s3 + $0x30] sm:$0xff]
  %v271 = vld [vmem:[%s3 + $0x38] sm:$0xff]
  %v272 = vld [vmem:[%s3 + $0x40] sm:$0xff]
  %v273 = vld [vmem:[%s3 + $0x48] sm:$0xff]
  %v274 = vld [vmem:[%s3 + $0x50] sm:$0xff]
  %v275 = vld [vmem:[%s3 + $0x58] sm:$0xff]
  %v276 = vld [vmem:[%s3 + $0x60] sm:$0xff]
  %v277 = vld [vmem:[%s3 + $0x68] sm:$0xff]
  %v278 = vld [vmem:[%s3 + $0x70] sm:$0xff]
  %v279 = vld [vmem:[%s3 + $0x78] sm:$0xff]
  %v280 = vld [vmem:[%s3 + $0x80] sm:$0xff]
  %v281 = vld [vmem:[%s3 + $0x88] sm:$0xff]
  %v282 = vld [vmem:[%s3 + $0x90] sm:$0xff]
  %v283 = vld [vmem:[%s3 + $0x98] sm:$0xff]
  %v284 = vld [vmem:[%s3 + $0xa0] sm:$0xff]
  %v285 = vld [vmem:[%s3 + $0xa8] sm:$0xff]
  %v286 = vld [vmem:[%s3 + $0xb0] sm:$0xff]
  %v287 = vld [vmem:[%s3 + $0xb8] sm:$0xff]
  %v288 = vld [vmem:[%s3 + $0xc0] sm:$0xff]
  %v289 = vld [vmem:[%s3 + $0xc8] sm:$0xff]
  %v290 = vld [vmem:[%s3 + $0xd0] sm:$0xff]
  %v291 = vld [vmem:[%s3 + $0xd8] sm:$0xff]
  %v292 = vld [vmem:[%s3 + $0xe0] sm:$0xff]
  %v293 = vld [vmem:[%s3 + $0xe8] sm:$0xff]
  %v294 = vld [vmem:[%s3 + $0xf0] sm:$0xff]
  %v295 = vld [vmem:[%s3 + $0xf8] sm:$0xff]
  %v296 = vld [vmem:[%s3 + $0x100] sm:$0xff]
  %v297 = vld [vmem:[%s3 + $0x108] sm:$0xff]
  %v298 = vld [vmem:[%s3 + $0x110] sm:$0xff]
  %v299 = vld [vmem:[%s3 + $0x118] sm:$0xff]
  %v300 = vld [vmem:[%s3 + $0x120] sm:$0xff]
  %v301 = vld [vmem:[%s3 + $0x128] sm:$0xff]
  %v302 = vld [vmem:[%s3 + $0x130] sm:$0xff]
  %v303 = vld [vmem:[%s3 + $0x138] sm:$0xff]
  %v304 = vld [vmem:[%s3 + $0x140] sm:$0xff]
  %v305 = vld [vmem:[%s3 + $0x148] sm:$0xff]
  %v306 = vld [vmem:[%s3 + $0x150] sm:$0xff]
  %v307 = vld [vmem:[%s3 + $0x158] sm:$0xff]
  %v308 = vld [vmem:[%s3 + $0x160] sm:$0xff]
  %v309 = vld [vmem:[%s3 + $0x168] sm:$0xff]
  %v310 = vld [vmem:[%s3 + $0x170] sm:$0xff]
  %v311 = vld [vmem:[%s3 + $0x178] sm:$0xff]
  %v312 = vld [vmem:[%s3 + $0x180] sm:$0xff]
  %v313 = vld [vmem:[%s3 + $0x188] sm:$0xff]
  %v314 = vld [vmem:[%s3 + $0x190] sm:$0xff]
  %v315 = vld [vmem:[%s3 + $0x198] sm:$0xff]
  %v316 = vld [vmem:[%s3 + $0x1a0] sm:$0xff]
  %v317 = vld [vmem:[%s3 + $0x1a8] sm:$0xff]
  %v318 = vld [vmem:[%s3 + $0x1b0] sm:$0xff]
  %v319 = vld [vmem:[%s3 + $0x1b8] sm:$0xff]
  %v320 = vld [vmem:[%s3 + $0x1c0] sm:$0xff]
  %v321 = vld [vmem:[%s3 + $0x1c8] sm:$0xff]
  %v322 = vld [vmem:[%s3 + $0x1d0] sm:$0xff]
  %v323 = vld [vmem:[%s3 + $0x1d8] sm:$0xff]
  %v324 = vld [vmem:[%s3 + $0x1e0] sm:$0xff]
  %v325 = vld [vmem:[%s3 + $0x1e8] sm:$0xff]
  %v326 = vld [vmem:[%s3 + $0x1f0] sm:$0xff]
  %v327 = vld [vmem:[%s3 + $0x1f8] sm:$0xff]
  %328 = vmatpush.msra.mxu0 %v324
  %329 = vmatpush.msra.mxu0 %v320
  %330 = vmatpush.msra.mxu0 %v316
  %331 = vmatpush.msra.mxu0 %v312
  %332 = vmatpush.msra.mxu0 %v308
  %333 = vmatpush.msra.mxu0 %v304
  %334 = vmatpush.msra.mxu0 %v300
  %335 = vmatpush.msra.mxu0 %v296
  %336 = vmatpush.msra.mxu0 %v292
  %337 = vmatpush.msra.mxu0 %v288
  %338 = vmatpush.msra.mxu0 %v284
  %339 = vmatpush.msra.mxu0 %v280
  %340 = vmatpush.msra.mxu0 %v276
  %341 = vmatpush.msra.mxu0 %v272
  %342 = vmatpush.msra.mxu0 %v268
  %343 = vmatpush.msra.mxu0 %v264
  %344 = vmatmul.f32.gmra.mxu0 %v263
  %v345 = vpop.f32.mrf.mxu0
  %v346 = vadd.f32 0.0, %v345
  %347 = vdwg.mxu0
  %348 = vmatpush.msra.mxu0 %v325
  %349 = vmatpush.msra.mxu0 %v321
  %350 = vmatpush.msra.mxu0 %v317
  %351 = vmatpush.msra.mxu0 %v313
  %352 = vmatpush.msra.mxu0 %v309
  %353 = vmatpush.msra.mxu0 %v305
  %354 = vmatpush.msra.mxu0 %v301
  %355 = vmatpush.msra.mxu0 %v297
  %356 = vmatpush.msra.mxu0 %v293
  %357 = vmatpush.msra.mxu0 %v289
  %358 = vmatpush.msra.mxu0 %v285
  %359 = vmatpush.msra.mxu0 %v281
  %360 = vmatpush.msra.mxu0 %v277
  %361 = vmatpush.msra.mxu0 %v273
  %362 = vmatpush.msra.mxu0 %v269
  %363 = vmatpush.msra.mxu0 %v265
  %364 = vmatmul.f32.gmra.mxu0 %v263
  %v365 = vpop.f32.mrf.mxu0
  %v366 = vadd.f32 0.0, %v365
  %367 = vdwg.mxu0
  %368 = vmatpush.msra.mxu0 %v326
  %369 = vmatpush.msra.mxu0 %v322
  %370 = vmatpush.msra.mxu0 %v318
  %371 = vmatpush.msra.mxu0 %v314
  %372 = vmatpush.msra.mxu0 %v310
  %373 = vmatpush.msra.mxu0 %v306
  %374 = vmatpush.msra.mxu0 %v302
  %375 = vmatpush.msra.mxu0 %v298
  %376 = vmatpush.msra.mxu0 %v294
  %377 = vmatpush.msra.mxu0 %v290
  %378 = vmatpush.msra.mxu0 %v286
  %379 = vmatpush.msra.mxu0 %v282
  %380 = vmatpush.msra.mxu0 %v278
  %381 = vmatpush.msra.mxu0 %v274
  %382 = vmatpush.msra.mxu0 %v270
  %383 = vmatpush.msra.mxu0 %v266
  %384 = vmatmul.f32.gmra.mxu0 %v263
  %v385 = vpop.f32.mrf.mxu0
  %v386 = vadd.f32 0.0, %v385
  %387 = vdwg.mxu0
  %388 = vmatpush.msra.mxu0 %v327
  %389 = vmatpush.msra.mxu0 %v323
  %390 = vmatpush.msra.mxu0 %v319
  %391 = vmatpush.msra.mxu0 %v315
  %392 = vmatpush.msra.mxu0 %v311
  %393 = vmatpush.msra.mxu0 %v307
  %394 = vmatpush.msra.mxu0 %v303
  %395 = vmatpush.msra.mxu0 %v299
  %396 = vmatpush.msra.mxu0 %v295
  %397 = vmatpush.msra.mxu0 %v291
  %398 = vmatpush.msra.mxu0 %v287
  %399 = vmatpush.msra.mxu0 %v283
  %400 = vmatpush.msra.mxu0 %v279
  %401 = vmatpush.msra.mxu0 %v275
  %402 = vmatpush.msra.mxu0 %v271
  %403 = vmatpush.msra.mxu0 %v267
  %404 = vmatmul.f32.gmra.mxu0 %v263
  %v405 = vpop.f32.mrf.mxu0
  %v406 = vadd.f32 0.0, %v405
  %407 = vdwg.mxu0
  %v412 = vrot.slane %v366, 6
  %v413 = vrot.slane %v386, 4
  %v414 = vrot.slane %v406, 2
  %v415 = vsel %vm180, %v346, %v412
  %v416 = vsel %vm182, %v413, %v414
  %v417 = vsel %vm184, %v415, %v416
  %v419 = vadd.f32 %v262, %v417
  %v420 = vxor.u32 %v419, 2147483648
  %v421 = vmul.f32 %v420, 1.442695
  %v422 = vpow.pop %v421
  %v423 = vadd.f32 %v422, 1.0
  %v424 = vrcp.pop %v423
  %v425 = vmul.f32 %v423, %v424
  %v426 = vsub.f32 1.0, %v425
  %v427 = vmul.f32 %v424, %v426
  %v428 = vadd.f32 %v424, %v427
  %vm429 = vweird.f32 %v423
  %vm430 = vweird.f32 %v424
  %vm431 = vmor %vm429, %vm430
  %v432 = vsel %vm431, %v424, %v428
  %v433 = vand.u32 2147483647, %v423
  %vm434 = vcmp.eq.f32.partialorder %v433, 8.507059e+37
  %v435 = vand.u32 %v423, 2147483648
  %v436 = vor.u32 1.1754944e-38, %v435
  %v437 = vsel %vm434, %v436, %v432
  %v438 = vmul.f32 1.0, %v437
  %v440 = vrot.slane %v419, 2
  %v442 = vxor.u32 %v440, 2147483648
  %v443 = vmul.f32 %v442, 1.442695
  %v444 = vpow.pop %v443
  %v445 = vadd.f32 %v444, 1.0
  %v446 = vrcp.pop %v445
  %v447 = vmul.f32 %v445, %v446
  %v448 = vsub.f32 1.0, %v447
  %v449 = vmul.f32 %v446, %v448
  %v450 = vadd.f32 %v446, %v449
  %vm451 = vweird.f32 %v445
  %vm452 = vweird.f32 %v446
  %vm453 = vmor %vm451, %vm452
  %v454 = vsel %vm453, %v446, %v450
  %v455 = vand.u32 2147483647, %v445
  %vm456 = vcmp.eq.f32.partialorder %v455, 8.507059e+37
  %v457 = vand.u32 %v445, 2147483648
  %v458 = vor.u32 1.1754944e-38, %v457
  %v459 = vsel %vm456, %v458, %v454
  %v460 = vmul.f32 1.0, %v459
  %v461 = vrot.slane %v419, 4
  %v463 = vtanh.pop %v461
  %v464 = vrot.slane %v419, 6
  %v466 = vxor.u32 %v464, 2147483648
  %v467 = vmul.f32 %v466, 1.442695
  %v468 = vpow.pop %v467
  %v469 = vadd.f32 %v468, 1.0
  %v470 = vrcp.pop %v469
  %v471 = vmul.f32 %v469, %v470
  %v472 = vsub.f32 1.0, %v471
  %v473 = vmul.f32 %v470, %v472
  %v474 = vadd.f32 %v470, %v473
  %vm475 = vweird.f32 %v469
  %vm476 = vweird.f32 %v470
  %vm477 = vmor %vm475, %vm476
  %v478 = vsel %vm477, %v470, %v474
  %v479 = vand.u32 2147483647, %v469
  %vm480 = vcmp.eq.f32.partialorder %v479, 8.507059e+37
  %v481 = vand.u32 %v469, 2147483648
  %v482 = vor.u32 1.1754944e-38, %v481
  %v483 = vsel %vm480, %v482, %v478
  %v484 = vmul.f32 1.0, %v483
  %v485 = vld [vmem:[#allocation5] sm:$0x3]
  %v486 = vmul.f32 %v460, %v485
  %v487 = vmul.f32 %v438, %v463
  %v488 = vadd.f32 %v486, %v487
  %v489 = vtanh.pop %v488
  %v490 = vmul.f32 %v484, %v489
  %491 = vst [vmem:[#allocation5] sm:$0x3] %v488
  %492 = vst [vmem:[#allocation4] sm:$0x3] %v490
  %493 = vst [vmem:[%s5] sm:$0x3] %v490
  %s494 = scalar_lea.vmem %s0, 8
  %v495 = vld [vmem:[%s494] sm:$0xff]
  %v496 = vld [vmem:[#allocation2] sm:$0x3]
  %v497 = vld [vmem:[%s2] sm:$0xff]
  %v498 = vld [vmem:[%s2 + $0x8] sm:$0xff]
  %v499 = vld [vmem:[%s2 + $0x10] sm:$0xff]
  %v500 = vld [vmem:[%s2 + $0x18] sm:$0xff]
  %v501 = vld [vmem:[%s2 + $0x20] sm:$0xff]
  %v502 = vld [vmem:[%s2 + $0x28] sm:$0xff]
  %v503 = vld [vmem:[%s2 + $0x30] sm:$0xff]
  %v504 = vld [vmem:[%s2 + $0x38] sm:$0xff]
  %v505 = vld [vmem:[%s2 + $0x40] sm:$0xff]
  %v506 = vld [vmem:[%s2 + $0x48] sm:$0xff]
  %v507 = vld [vmem:[%s2 + $0x50] sm:$0xff]
  %v508 = vld [vmem:[%s2 + $0x58] sm:$0xff]
  %v509 = vld [vmem:[%s2 + $0x60] sm:$0xff]
  %v510 = vld [vmem:[%s2 + $0x68] sm:$0xff]
  %v511 = vld [vmem:[%s2 + $0x70] sm:$0xff]
  %v512 = vld [vmem:[%s2 + $0x78] sm:$0xff]
  %v513 = vld [vmem:[%s2 + $0x80] sm:$0xff]
  %v514 = vld [vmem:[%s2 + $0x88] sm:$0xff]
  %v515 = vld [vmem:[%s2 + $0x90] sm:$0xff]
  %v516 = vld [vmem:[%s2 + $0x98] sm:$0xff]
  %v517 = vld [vmem:[%s2 + $0xa0] sm:$0xff]
  %v518 = vld [vmem:[%s2 + $0xa8] sm:$0xff]
  %v519 = vld [vmem:[%s2 + $0xb0] sm:$0xff]
  %v520 = vld [vmem:[%s2 + $0xb8] sm:$0xff]
  %v521 = vld [vmem:[%s2 + $0xc0] sm:$0xff]
  %v522 = vld [vmem:[%s2 + $0xc8] sm:$0xff]
  %v523 = vld [vmem:[%s2 + $0xd0] sm:$0xff]
  %v524 = vld [vmem:[%s2 + $0xd8] sm:$0xff]
  %v525 = vld [vmem:[%s2 + $0xe0] sm:$0xff]
  %v526 = vld [vmem:[%s2 + $0xe8] sm:$0xff]
  %v527 = vld [vmem:[%s2 + $0xf0] sm:$0xff]
  %v528 = vld [vmem:[%s2 + $0xf8] sm:$0xff]
  %v529 = vld [vmem:[%s2 + $0x100] sm:$0xff]
  %v530 = vld [vmem:[%s2 + $0x108] sm:$0xff]
  %v531 = vld [vmem:[%s2 + $0x110] sm:$0xff]
  %v532 = vld [vmem:[%s2 + $0x118] sm:$0xff]
  %v533 = vld [vmem:[%s2 + $0x120] sm:$0xff]
  %v534 = vld [vmem:[%s2 + $0x128] sm:$0xff]
  %v535 = vld [vmem:[%s2 + $0x130] sm:$0xff]
  %v536 = vld [vmem:[%s2 + $0x138] sm:$0xff]
  %v537 = vld [vmem:[%s2 + $0x140] sm:$0xff]
  %v538 = vld [vmem:[%s2 + $0x148] sm:$0xff]
  %v539 = vld [vmem:[%s2 + $0x150] sm:$0xff]
  %v540 = vld [vmem:[%s2 + $0x158] sm:$0xff]
  %v541 = vld [vmem:[%s2 + $0x160] sm:$0xff]
  %v542 = vld [vmem:[%s2 + $0x168] sm:$0xff]
  %v543 = vld [vmem:[%s2 + $0x170] sm:$0xff]
  %v544 = vld [vmem:[%s2 + $0x178] sm:$0xff]
  %v545 = vld [vmem:[%s2 + $0x180] sm:$0xff]
  %v546 = vld [vmem:[%s2 + $0x188] sm:$0xff]
  %v547 = vld [vmem:[%s2 + $0x190] sm:$0xff]
  %v548 = vld [vmem:[%s2 + $0x198] sm:$0xff]
  %v549 = vld [vmem:[%s2 + $0x1a0] sm:$0xff]
  %v550 = vld [vmem:[%s2 + $0x1a8] sm:$0xff]
  %v551 = vld [vmem:[%s2 + $0x1b0] sm:$0xff]
  %v552 = vld [vmem:[%s2 + $0x1b8] sm:$0xff]
  %v553 = vld [vmem:[%s2 + $0x1c0] sm:$0xff]
  %v554 = vld [vmem:[%s2 + $0x1c8] sm:$0xff]
  %v555 = vld [vmem:[%s2 + $0x1d0] sm:$0xff]
  %v556 = vld [vmem:[%s2 + $0x1d8] sm:$0xff]
  %v557 = vld [vmem:[%s2 + $0x1e0] sm:$0xff]
  %v558 = vld [vmem:[%s2 + $0x1e8] sm:$0xff]
  %v559 = vld [vmem:[%s2 + $0x1f0] sm:$0xff]
  %v560 = vld [vmem:[%s2 + $0x1f8] sm:$0xff]
  %561 = vmatpush.msra.mxu0 %v557
  %562 = vmatpush.msra.mxu0 %v553
  %563 = vmatpush.msra.mxu0 %v549
  %564 = vmatpush.msra.mxu0 %v545
  %565 = vmatpush.msra.mxu0 %v541
  %566 = vmatpush.msra.mxu0 %v537
  %567 = vmatpush.msra.mxu0 %v533
  %568 = vmatpush.msra.mxu0 %v529
  %569 = vmatpush.msra.mxu0 %v525
  %570 = vmatpush.msra.mxu0 %v521
  %571 = vmatpush.msra.mxu0 %v517
  %572 = vmatpush.msra.mxu0 %v513
  %573 = vmatpush.msra.mxu0 %v509
  %574 = vmatpush.msra.mxu0 %v505
  %575 = vmatpush.msra.mxu0 %v501
  %576 = vmatpush.msra.mxu0 %v497
  %577 = vmatmul.f32.gmra.mxu0 %v496
  %v578 = vpop.f32.mrf.mxu0
  %v579 = vadd.f32 0.0, %v578
  %580 = vdwg.mxu0
  %581 = vmatpush.msra.mxu0 %v558
  %582 = vmatpush.msra.mxu0 %v554
  %583 = vmatpush.msra.mxu0 %v550
  %584 = vmatpush.msra.mxu0 %v546
  %585 = vmatpush.msra.mxu0 %v542
  %586 = vmatpush.msra.mxu0 %v538
  %587 = vmatpush.msra.mxu0 %v534
  %588 = vmatpush.msra.mxu0 %v530
  %589 = vmatpush.msra.mxu0 %v526
  %590 = vmatpush.msra.mxu0 %v522
  %591 = vmatpush.msra.mxu0 %v518
  %592 = vmatpush.msra.mxu0 %v514
  %593 = vmatpush.msra.mxu0 %v510
  %594 = vmatpush.msra.mxu0 %v506
  %595 = vmatpush.msra.mxu0 %v502
  %596 = vmatpush.msra.mxu0 %v498
  %597 = vmatmul.f32.gmra.mxu0 %v496
  %v598 = vpop.f32.mrf.mxu0
  %v599 = vadd.f32 0.0, %v598
  %600 = vdwg.mxu0
  %601 = vmatpush.msra.mxu0 %v559
  %602 = vmatpush.msra.mxu0 %v555
  %603 = vmatpush.msra.mxu0 %v551
  %604 = vmatpush.msra.mxu0 %v547
  %605 = vmatpush.msra.mxu0 %v543
  %606 = vmatpush.msra.mxu0 %v539
  %607 = vmatpush.msra.mxu0 %v535
  %608 = vmatpush.msra.mxu0 %v531
  %609 = vmatpush.msra.mxu0 %v527
  %610 = vmatpush.msra.mxu0 %v523
  %611 = vmatpush.msra.mxu0 %v519
  %612 = vmatpush.msra.mxu0 %v515
  %613 = vmatpush.msra.mxu0 %v511
  %614 = vmatpush.msra.mxu0 %v507
  %615 = vmatpush.msra.mxu0 %v503
  %616 = vmatpush.msra.mxu0 %v499
  %617 = vmatmul.f32.gmra.mxu0 %v496
  %v618 = vpop.f32.mrf.mxu0
  %v619 = vadd.f32 0.0, %v618
  %620 = vdwg.mxu0
  %621 = vmatpush.msra.mxu0 %v560
  %622 = vmatpush.msra.mxu0 %v556
  %623 = vmatpush.msra.mxu0 %v552
  %624 = vmatpush.msra.mxu0 %v548
  %625 = vmatpush.msra.mxu0 %v544
  %626 = vmatpush.msra.mxu0 %v540
  %627 = vmatpush.msra.mxu0 %v536
  %628 = vmatpush.msra.mxu0 %v532
  %629 = vmatpush.msra.mxu0 %v528
  %630 = vmatpush.msra.mxu0 %v524
  %631 = vmatpush.msra.mxu0 %v520
  %632 = vmatpush.msra.mxu0 %v516
  %633 = vmatpush.msra.mxu0 %v512
  %634 = vmatpush.msra.mxu0 %v508
  %635 = vmatpush.msra.mxu0 %v504
  %636 = vmatpush.msra.mxu0 %v500
  %637 = vmatmul.f32.gmra.mxu0 %v496
  %v638 = vpop.f32.mrf.mxu0
  %v639 = vadd.f32 0.0, %v638
  %640 = vdwg.mxu0
  %v645 = vrot.slane %v599, 6
  %v646 = vrot.slane %v619, 4
  %v647 = vrot.slane %v639, 2
  %v648 = vsel %vm180, %v579, %v645
  %v649 = vsel %vm182, %v646, %v647
  %v650 = vsel %vm184, %v648, %v649
  %v652 = vadd.f32 %v495, %v650
  %v653 = vxor.u32 %v652, 2147483648
  %v654 = vmul.f32 %v653, 1.442695
  %v655 = vpow.pop %v654
  %v656 = vadd.f32 %v655, 1.0
  %v657 = vrcp.pop %v656
  %v658 = vmul.f32 %v656, %v657
  %v659 = vsub.f32 1.0, %v658
  %v660 = vmul.f32 %v657, %v659
  %v661 = vadd.f32 %v657, %v660
  %vm662 = vweird.f32 %v656
  %vm663 = vweird.f32 %v657
  %vm664 = vmor %vm662, %vm663
  %v665 = vsel %vm664, %v657, %v661
  %v666 = vand.u32 2147483647, %v656
  %vm667 = vcmp.eq.f32.partialorder %v666, 8.507059e+37
  %v668 = vand.u32 %v656, 2147483648
  %v669 = vor.u32 1.1754944e-38, %v668
  %v670 = vsel %vm667, %v669, %v665
  %v671 = vmul.f32 1.0, %v670
  %v673 = vrot.slane %v652, 2
  %v675 = vxor.u32 %v673, 2147483648
  %v676 = vmul.f32 %v675, 1.442695
  %v677 = vpow.pop %v676
  %v678 = vadd.f32 %v677, 1.0
  %v679 = vrcp.pop %v678
  %v680 = vmul.f32 %v678, %v679
  %v681 = vsub.f32 1.0, %v680
  %v682 = vmul.f32 %v679, %v681
  %v683 = vadd.f32 %v679, %v682
  %vm684 = vweird.f32 %v678
  %vm685 = vweird.f32 %v679
  %vm686 = vmor %vm684, %vm685
  %v687 = vsel %vm686, %v679, %v683
  %v688 = vand.u32 2147483647, %v678
  %vm689 = vcmp.eq.f32.partialorder %v688, 8.507059e+37
  %v690 = vand.u32 %v678, 2147483648
  %v691 = vor.u32 1.1754944e-38, %v690
  %v692 = vsel %vm689, %v691, %v687
  %v693 = vmul.f32 1.0, %v692
  %v694 = vrot.slane %v652, 4
  %v696 = vtanh.pop %v694
  %v697 = vrot.slane %v652, 6
  %v699 = vxor.u32 %v697, 2147483648
  %v700 = vmul.f32 %v699, 1.442695
  %v701 = vpow.pop %v700
  %v702 = vadd.f32 %v701, 1.0
  %v703 = vrcp.pop %v702
  %v704 = vmul.f32 %v702, %v703
  %v705 = vsub.f32 1.0, %v704
  %v706 = vmul.f32 %v703, %v705
  %v707 = vadd.f32 %v703, %v706
  %vm708 = vweird.f32 %v702
  %vm709 = vweird.f32 %v703
  %vm710 = vmor %vm708, %vm709
  %v711 = vsel %vm710, %v703, %v707
  %v712 = vand.u32 2147483647, %v702
  %vm713 = vcmp.eq.f32.partialorder %v712, 8.507059e+37
  %v714 = vand.u32 %v702, 2147483648
  %v715 = vor.u32 1.1754944e-38, %v714
  %v716 = vsel %vm713, %v715, %v711
  %v717 = vmul.f32 1.0, %v716
  %v718 = vld [vmem:[#allocation3] sm:$0x3]
  %v719 = vmul.f32 %v693, %v718
  %v720 = vmul.f32 %v671, %v696
  %v721 = vadd.f32 %v719, %v720
  %v722 = vtanh.pop %v721
  %v723 = vmul.f32 %v717, %v722
  %724 = vst [vmem:[#allocation3] sm:$0x3] %v721
  %725 = vst [vmem:[#allocation2] sm:$0x3] %v723
  %s726 = scalar_lea.vmem %s4, 2
  %727 = vst [vmem:[%s726] sm:$0x3] %v723
  %s728 = scalar_lea.vmem %s1, 8
  %v729 = vld [vmem:[%s728] sm:$0xff]
  %v730 = vld [vmem:[#allocation4] sm:$0x3]
  %v731 = vld [vmem:[%s3] sm:$0xff]
  %v732 = vld [vmem:[%s3 + $0x8] sm:$0xff]
  %v733 = vld [vmem:[%s3 + $0x10] sm:$0xff]
  %v734 = vld [vmem:[%s3 + $0x18] sm:$0xff]
  %v735 = vld [vmem:[%s3 + $0x20] sm:$0xff]
  %v736 = vld [vmem:[%s3 + $0x28] sm:$0xff]
  %v737 = vld [vmem:[%s3 + $0x30] sm:$0xff]
  %v738 = vld [vmem:[%s3 + $0x38] sm:$0xff]
  %v739 = vld [vmem:[%s3 + $0x40] sm:$0xff]
  %v740 = vld [vmem:[%s3 + $0x48] sm:$0xff]
  %v741 = vld [vmem:[%s3 + $0x50] sm:$0xff]
  %v742 = vld [vmem:[%s3 + $0x58] sm:$0xff]
  %v743 = vld [vmem:[%s3 + $0x60] sm:$0xff]
  %v744 = vld [vmem:[%s3 + $0x68] sm:$0xff]
  %v745 = vld [vmem:[%s3 + $0x70] sm:$0xff]
  %v746 = vld [vmem:[%s3 + $0x78] sm:$0xff]
  %v747 = vld [vmem:[%s3 + $0x80] sm:$0xff]
  %v748 = vld [vmem:[%s3 + $0x88] sm:$0xff]
  %v749 = vld [vmem:[%s3 + $0x90] sm:$0xff]
  %v750 = vld [vmem:[%s3 + $0x98] sm:$0xff]
  %v751 = vld [vmem:[%s3 + $0xa0] sm:$0xff]
  %v752 = vld [vmem:[%s3 + $0xa8] sm:$0xff]
  %v753 = vld [vmem:[%s3 + $0xb0] sm:$0xff]
  %v754 = vld [vmem:[%s3 + $0xb8] sm:$0xff]
  %v755 = vld [vmem:[%s3 + $0xc0] sm:$0xff]
  %v756 = vld [vmem:[%s3 + $0xc8] sm:$0xff]
  %v757 = vld [vmem:[%s3 + $0xd0] sm:$0xff]
  %v758 = vld [vmem:[%s3 + $0xd8] sm:$0xff]
  %v759 = vld [vmem:[%s3 + $0xe0] sm:$0xff]
  %v760 = vld [vmem:[%s3 + $0xe8] sm:$0xff]
  %v761 = vld [vmem:[%s3 + $0xf0] sm:$0xff]
  %v762 = vld [vmem:[%s3 + $0xf8] sm:$0xff]
  %v763 = vld [vmem:[%s3 + $0x100] sm:$0xff]
  %v764 = vld [vmem:[%s3 + $0x108] sm:$0xff]
  %v765 = vld [vmem:[%s3 + $0x110] sm:$0xff]
  %v766 = vld [vmem:[%s3 + $0x118] sm:$0xff]
  %v767 = vld [vmem:[%s3 + $0x120] sm:$0xff]
  %v768 = vld [vmem:[%s3 + $0x128] sm:$0xff]
  %v769 = vld [vmem:[%s3 + $0x130] sm:$0xff]
  %v770 = vld [vmem:[%s3 + $0x138] sm:$0xff]
  %v771 = vld [vmem:[%s3 + $0x140] sm:$0xff]
  %v772 = vld [vmem:[%s3 + $0x148] sm:$0xff]
  %v773 = vld [vmem:[%s3 + $0x150] sm:$0xff]
  %v774 = vld [vmem:[%s3 + $0x158] sm:$0xff]
  %v775 = vld [vmem:[%s3 + $0x160] sm:$0xff]
  %v776 = vld [vmem:[%s3 + $0x168] sm:$0xff]
  %v777 = vld [vmem:[%s3 + $0x170] sm:$0xff]
  %v778 = vld [vmem:[%s3 + $0x178] sm:$0xff]
  %v779 = vld [vmem:[%s3 + $0x180] sm:$0xff]
  %v780 = vld [vmem:[%s3 + $0x188] sm:$0xff]
  %v781 = vld [vmem:[%s3 + $0x190] sm:$0xff]
  %v782 = vld [vmem:[%s3 + $0x198] sm:$0xff]
  %v783 = vld [vmem:[%s3 + $0x1a0] sm:$0xff]
  %v784 = vld [vmem:[%s3 + $0x1a8] sm:$0xff]
  %v785 = vld [vmem:[%s3 + $0x1b0] sm:$0xff]
  %v786 = vld [vmem:[%s3 + $0x1b8] sm:$0xff]
  %v787 = vld [vmem:[%s3 + $0x1c0] sm:$0xff]
  %v788 = vld [vmem:[%s3 + $0x1c8] sm:$0xff]
  %v789 = vld [vmem:[%s3 + $0x1d0] sm:$0xff]
  %v790 = vld [vmem:[%s3 + $0x1d8] sm:$0xff]
  %v791 = vld [vmem:[%s3 + $0x1e0] sm:$0xff]
  %v792 = vld [vmem:[%s3 + $0x1e8] sm:$0xff]
  %v793 = vld [vmem:[%s3 + $0x1f0] sm:$0xff]
  %v794 = vld [vmem:[%s3 + $0x1f8] sm:$0xff]
  %795 = vmatpush.msra.mxu0 %v791
  %796 = vmatpush.msra.mxu0 %v787
  %797 = vmatpush.msra.mxu0 %v783
  %798 = vmatpush.msra.mxu0 %v779
  %799 = vmatpush.msra.mxu0 %v775
  %800 = vmatpush.msra.mxu0 %v771
  %801 = vmatpush.msra.mxu0 %v767
  %802 = vmatpush.msra.mxu0 %v763
  %803 = vmatpush.msra.mxu0 %v759
  %804 = vmatpush.msra.mxu0 %v755
  %805 = vmatpush.msra.mxu0 %v751
  %806 = vmatpush.msra.mxu0 %v747
  %807 = vmatpush.msra.mxu0 %v743
  %808 = vmatpush.msra.mxu0 %v739
  %809 = vmatpush.msra.mxu0 %v735
  %810 = vmatpush.msra.mxu0 %v731
  %811 = vmatmul.f32.gmra.mxu0 %v730
  %v812 = vpop.f32.mrf.mxu0
  %v813 = vadd.f32 0.0, %v812
  %814 = vdwg.mxu0
  %815 = vmatpush.msra.mxu0 %v792
  %816 = vmatpush.msra.mxu0 %v788
  %817 = vmatpush.msra.mxu0 %v784
  %818 = vmatpush.msra.mxu0 %v780
  %819 = vmatpush.msra.mxu0 %v776
  %820 = vmatpush.msra.mxu0 %v772
  %821 = vmatpush.msra.mxu0 %v768
  %822 = vmatpush.msra.mxu0 %v764
  %823 = vmatpush.msra.mxu0 %v760
  %824 = vmatpush.msra.mxu0 %v756
  %825 = vmatpush.msra.mxu0 %v752
  %826 = vmatpush.msra.mxu0 %v748
  %827 = vmatpush.msra.mxu0 %v744
  %828 = vmatpush.msra.mxu0 %v740
  %829 = vmatpush.msra.mxu0 %v736
  %830 = vmatpush.msra.mxu0 %v732
  %831 = vmatmul.f32.gmra.mxu0 %v730
  %v832 = vpop.f32.mrf.mxu0
  %v833 = vadd.f32 0.0, %v832
  %834 = vdwg.mxu0
  %835 = vmatpush.msra.mxu0 %v793
  %836 = vmatpush.msra.mxu0 %v789
  %837 = vmatpush.msra.mxu0 %v785
  %838 = vmatpush.msra.mxu0 %v781
  %839 = vmatpush.msra.mxu0 %v777
  %840 = vmatpush.msra.mxu0 %v773
  %841 = vmatpush.msra.mxu0 %v769
  %842 = vmatpush.msra.mxu0 %v765
  %843 = vmatpush.msra.mxu0 %v761
  %844 = vmatpush.msra.mxu0 %v757
  %845 = vmatpush.msra.mxu0 %v753
  %846 = vmatpush.msra.mxu0 %v749
  %847 = vmatpush.msra.mxu0 %v745
  %848 = vmatpush.msra.mxu0 %v741
  %849 = vmatpush.msra.mxu0 %v737
  %850 = vmatpush.msra.mxu0 %v733
  %851 = vmatmul.f32.gmra.mxu0 %v730
  %v852 = vpop.f32.mrf.mxu0
  %v853 = vadd.f32 0.0, %v852
  %854 = vdwg.mxu0
  %855 = vmatpush.msra.mxu0 %v794
  %856 = vmatpush.msra.mxu0 %v790
  %857 = vmatpush.msra.mxu0 %v786
  %858 = vmatpush.msra.mxu0 %v782
  %859 = vmatpush.msra.mxu0 %v778
  %860 = vmatpush.msra.mxu0 %v774
  %861 = vmatpush.msra.mxu0 %v770
  %862 = vmatpush.msra.mxu0 %v766
  %863 = vmatpush.msra.mxu0 %v762
  %864 = vmatpush.msra.mxu0 %v758
  %865 = vmatpush.msra.mxu0 %v754
  %866 = vmatpush.msra.mxu0 %v750
  %867 = vmatpush.msra.mxu0 %v746
  %868 = vmatpush.msra.mxu0 %v742
  %869 = vmatpush.msra.mxu0 %v738
  %870 = vmatpush.msra.mxu0 %v734
  %871 = vmatmul.f32.gmra.mxu0 %v730
  %v872 = vpop.f32.mrf.mxu0
  %v873 = vadd.f32 0.0, %v872
  %874 = vdwg.mxu0
  %v879 = vrot.slane %v833, 6
  %v880 = vrot.slane %v853, 4
  %v881 = vrot.slane %v873, 2
  %v882 = vsel %vm180, %v813, %v879
  %v883 = vsel %vm182, %v880, %v881
  %v884 = vsel %vm184, %v882, %v883
  %v886 = vadd.f32 %v729, %v884
  %v887 = vxor.u32 %v886, 2147483648
  %v888 = vmul.f32 %v887, 1.442695
  %v889 = vpow.pop %v888
  %v890 = vadd.f32 %v889, 1.0
  %v891 = vrcp.pop %v890
  %v892 = vmul.f32 %v890, %v891
  %v893 = vsub.f32 1.0, %v892
  %v894 = vmul.f32 %v891, %v893
  %v895 = vadd.f32 %v891, %v894
  %vm896 = vweird.f32 %v890
  %vm897 = vweird.f32 %v891
  %vm898 = vmor %vm896, %vm897
  %v899 = vsel %vm898, %v891, %v895
  %v900 = vand.u32 2147483647, %v890
  %vm901 = vcmp.eq.f32.partialorder %v900, 8.507059e+37
  %v902 = vand.u32 %v890, 2147483648
  %v903 = vor.u32 1.1754944e-38, %v902
  %v904 = vsel %vm901, %v903, %v899
  %v905 = vmul.f32 1.0, %v904
  %v907 = vrot.slane %v886, 2
  %v909 = vxor.u32 %v907, 2147483648
  %v910 = vmul.f32 %v909, 1.442695
  %v911 = vpow.pop %v910
  %v912 = vadd.f32 %v911, 1.0
  %v913 = vrcp.pop %v912
  %v914 = vmul.f32 %v912, %v913
  %v915 = vsub.f32 1.0, %v914
  %v916 = vmul.f32 %v913, %v915
  %v917 = vadd.f32 %v913, %v916
  %vm918 = vweird.f32 %v912
  %vm919 = vweird.f32 %v913
  %vm920 = vmor %vm918, %vm919
  %v921 = vsel %vm920, %v913, %v917
  %v922 = vand.u32 2147483647, %v912
  %vm923 = vcmp.eq.f32.partialorder %v922, 8.507059e+37
  %v924 = vand.u32 %v912, 2147483648
  %v925 = vor.u32 1.1754944e-38, %v924
  %v926 = vsel %vm923, %v925, %v921
  %v927 = vmul.f32 1.0, %v926
  %v928 = vrot.slane %v886, 4
  %v930 = vtanh.pop %v928
  %v931 = vrot.slane %v886, 6
  %v933 = vxor.u32 %v931, 2147483648
  %v934 = vmul.f32 %v933, 1.442695
  %v935 = vpow.pop %v934
  %v936 = vadd.f32 %v935, 1.0
  %v937 = vrcp.pop %v936
  %v938 = vmul.f32 %v936, %v937
  %v939 = vsub.f32 1.0, %v938
  %v940 = vmul.f32 %v937, %v939
  %v941 = vadd.f32 %v937, %v940
  %vm942 = vweird.f32 %v936
  %vm943 = vweird.f32 %v937
  %vm944 = vmor %vm942, %vm943
  %v945 = vsel %vm944, %v937, %v941
  %v946 = vand.u32 2147483647, %v936
  %vm947 = vcmp.eq.f32.partialorder %v946, 8.507059e+37
  %v948 = vand.u32 %v936, 2147483648
  %v949 = vor.u32 1.1754944e-38, %v948
  %v950 = vsel %vm947, %v949, %v945
  %v951 = vmul.f32 1.0, %v950
  %v952 = vld [vmem:[#allocation5] sm:$0x3]
  %v953 = vmul.f32 %v927, %v952
  %v954 = vmul.f32 %v905, %v930
  %v955 = vadd.f32 %v953, %v954
  %v956 = vtanh.pop %v955
  %v957 = vmul.f32 %v951, %v956
  %958 = vst [vmem:[#allocation5] sm:$0x3] %v955
  %959 = vst [vmem:[#allocation4] sm:$0x3] %v957
  %s960 = scalar_lea.vmem %s5, 2
  %961 = vst [vmem:[%s960] sm:$0x3] %v957
  %s962 = scalar_lea.vmem %s0, 16
  %v963 = vld [vmem:[%s962] sm:$0xff]
  %v964 = vld [vmem:[#allocation2] sm:$0x3]
  %v965 = vld [vmem:[%s2] sm:$0xff]
  %v966 = vld [vmem:[%s2 + $0x8] sm:$0xff]
  %v967 = vld [vmem:[%s2 + $0x10] sm:$0xff]
  %v968 = vld [vmem:[%s2 + $0x18] sm:$0xff]
  %v969 = vld [vmem:[%s2 + $0x20] sm:$0xff]
  %v970 = vld [vmem:[%s2 + $0x28] sm:$0xff]
  %v971 = vld [vmem:[%s2 + $0x30] sm:$0xff]
  %v972 = vld [vmem:[%s2 + $0x38] sm:$0xff]
  %v973 = vld [vmem:[%s2 + $0x40] sm:$0xff]
  %v974 = vld [vmem:[%s2 + $0x48] sm:$0xff]
  %v975 = vld [vmem:[%s2 + $0x50] sm:$0xff]
  %v976 = vld [vmem:[%s2 + $0x58] sm:$0xff]
  %v977 = vld [vmem:[%s2 + $0x60] sm:$0xff]
  %v978 = vld [vmem:[%s2 + $0x68] sm:$0xff]
  %v979 = vld [vmem:[%s2 + $0x70] sm:$0xff]
  %v980 = vld [vmem:[%s2 + $0x78] sm:$0xff]
  %v981 = vld [vmem:[%s2 + $0x80] sm:$0xff]
  %v982 = vld [vmem:[%s2 + $0x88] sm:$0xff]
  %v983 = vld [vmem:[%s2 + $0x90] sm:$0xff]
  %v984 = vld [vmem:[%s2 + $0x98] sm:$0xff]
  %v985 = vld [vmem:[%s2 + $0xa0] sm:$0xff]
  %v986 = vld [vmem:[%s2 + $0xa8] sm:$0xff]
  %v987 = vld [vmem:[%s2 + $0xb0] sm:$0xff]
  %v988 = vld [vmem:[%s2 + $0xb8] sm:$0xff]
  %v989 = vld [vmem:[%s2 + $0xc0] sm:$0xff]
  %v990 = vld [vmem:[%s2 + $0xc8] sm:$0xff]
  %v991 = vld [vmem:[%s2 + $0xd0] sm:$0xff]
  %v992 = vld [vmem:[%s2 + $0xd8] sm:$0xff]
  %v993 = vld [vmem:[%s2 + $0xe0] sm:$0xff]
  %v994 = vld [vmem:[%s2 + $0xe8] sm:$0xff]
  %v995 = vld [vmem:[%s2 + $0xf0] sm:$0xff]
  %v996 = vld [vmem:[%s2 + $0xf8] sm:$0xff]
  %v997 = vld [vmem:[%s2 + $0x100] sm:$0xff]
  %v998 = vld [vmem:[%s2 + $0x108] sm:$0xff]
  %v999 = vld [vmem:[%s2 + $0x110] sm:$0xff]
  %v1000 = vld [vmem:[%s2 + $0x118] sm:$0xff]
  %v1001 = vld [vmem:[%s2 + $0x120] sm:$0xff]
  %v1002 = vld [vmem:[%s2 + $0x128] sm:$0xff]
  %v1003 = vld [vmem:[%s2 + $0x130] sm:$0xff]
  %v1004 = vld [vmem:[%s2 + $0x138] sm:$0xff]
  %v1005 = vld [vmem:[%s2 + $0x140] sm:$0xff]
  %v1006 = vld [vmem:[%s2 + $0x148] sm:$0xff]
  %v1007 = vld [vmem:[%s2 + $0x150] sm:$0xff]
  %v1008 = vld [vmem:[%s2 + $0x158] sm:$0xff]
  %v1009 = vld [vmem:[%s2 + $0x160] sm:$0xff]
  %v1010 = vld [vmem:[%s2 + $0x168] sm:$0xff]
  %v1011 = vld [vmem:[%s2 + $0x170] sm:$0xff]
  %v1012 = vld [vmem:[%s2 + $0x178] sm:$0xff]
  %v1013 = vld [vmem:[%s2 + $0x180] sm:$0xff]
  %v1014 = vld [vmem:[%s2 + $0x188] sm:$0xff]
  %v1015 = vld [vmem:[%s2 + $0x190] sm:$0xff]
  %v1016 = vld [vmem:[%s2 + $0x198] sm:$0xff]
  %v1017 = vld [vmem:[%s2 + $0x1a0] sm:$0xff]
  %v1018 = vld [vmem:[%s2 + $0x1a8] sm:$0xff]
  %v1019 = vld [vmem:[%s2 + $0x1b0] sm:$0xff]
  %v1020 = vld [vmem:[%s2 + $0x1b8] sm:$0xff]
  %v1021 = vld [vmem:[%s2 + $0x1c0] sm:$0xff]
  %v1022 = vld [vmem:[%s2 + $0x1c8] sm:$0xff]
  %v1023 = vld [vmem:[%s2 + $0x1d0] sm:$0xff]
  %v1024 = vld [vmem:[%s2 + $0x1d8] sm:$0xff]
  %v1025 = vld [vmem:[%s2 + $0x1e0] sm:$0xff]
  %v1026 = vld [vmem:[%s2 + $0x1e8] sm:$0xff]
  %v1027 = vld [vmem:[%s2 + $0x1f0] sm:$0xff]
  %v1028 = vld [vmem:[%s2 + $0x1f8] sm:$0xff]
  %1029 = vmatpush.msra.mxu0 %v1025
  %1030 = vmatpush.msra.mxu0 %v1021
  %1031 = vmatpush.msra.mxu0 %v1017
  %1032 = vmatpush.msra.mxu0 %v1013
  %1033 = vmatpush.msra.mxu0 %v1009
  %1034 = vmatpush.msra.mxu0 %v1005
  %1035 = vmatpush.msra.mxu0 %v1001
  %1036 = vmatpush.msra.mxu0 %v997
  %1037 = vmatpush.msra.mxu0 %v993
  %1038 = vmatpush.msra.mxu0 %v989
  %1039 = vmatpush.msra.mxu0 %v985
  %1040 = vmatpush.msra.mxu0 %v981
  %1041 = vmatpush.msra.mxu0 %v977
  %1042 = vmatpush.msra.mxu0 %v973
  %1043 = vmatpush.msra.mxu0 %v969
  %1044 = vmatpush.msra.mxu0 %v965
  %1045 = vmatmul.f32.gmra.mxu0 %v964
  %v1046 = vpop.f32.mrf.mxu0
  %v1047 = vadd.f32 0.0, %v1046
  %1048 = vdwg.mxu0
  %1049 = vmatpush.msra.mxu0 %v1026
  %1050 = vmatpush.msra.mxu0 %v1022
  %1051 = vmatpush.msra.mxu0 %v1018
  %1052 = vmatpush.msra.mxu0 %v1014
  %1053 = vmatpush.msra.mxu0 %v1010
  %1054 = vmatpush.msra.mxu0 %v1006
  %1055 = vmatpush.msra.mxu0 %v1002
  %1056 = vmatpush.msra.mxu0 %v998
  %1057 = vmatpush.msra.mxu0 %v994
  %1058 = vmatpush.msra.mxu0 %v990
  %1059 = vmatpush.msra.mxu0 %v986
  %1060 = vmatpush.msra.mxu0 %v982
  %1061 = vmatpush.msra.mxu0 %v978
  %1062 = vmatpush.msra.mxu0 %v974
  %1063 = vmatpush.msra.mxu0 %v970
  %1064 = vmatpush.msra.mxu0 %v966
  %1065 = vmatmul.f32.gmra.mxu0 %v964
  %v1066 = vpop.f32.mrf.mxu0
  %v1067 = vadd.f32 0.0, %v1066
  %1068 = vdwg.mxu0
  %1069 = vmatpush.msra.mxu0 %v1027
  %1070 = vmatpush.msra.mxu0 %v1023
  %1071 = vmatpush.msra.mxu0 %v1019
  %1072 = vmatpush.msra.mxu0 %v1015
  %1073 = vmatpush.msra.mxu0 %v1011
  %1074 = vmatpush.msra.mxu0 %v1007
  %1075 = vmatpush.msra.mxu0 %v1003
  %1076 = vmatpush.msra.mxu0 %v999
  %1077 = vmatpush.msra.mxu0 %v995
  %1078 = vmatpush.msra.mxu0 %v991
  %1079 = vmatpush.msra.mxu0 %v987
  %1080 = vmatpush.msra.mxu0 %v983
  %1081 = vmatpush.msra.mxu0 %v979
  %1082 = vmatpush.msra.mxu0 %v975
  %1083 = vmatpush.msra.mxu0 %v971
  %1084 = vmatpush.msra.mxu0 %v967
  %1085 = vmatmul.f32.gmra.mxu0 %v964
  %v1086 = vpop.f32.mrf.mxu0
  %v1087 = vadd.f32 0.0, %v1086
  %1088 = vdwg.mxu0
  %1089 = vmatpush.msra.mxu0 %v1028
  %1090 = vmatpush.msra.mxu0 %v1024
  %1091 = vmatpush.msra.mxu0 %v1020
  %1092 = vmatpush.msra.mxu0 %v1016
  %1093 = vmatpush.msra.mxu0 %v1012
  %1094 = vmatpush.msra.mxu0 %v1008
  %1095 = vmatpush.msra.mxu0 %v1004
  %1096 = vmatpush.msra.mxu0 %v1000
  %1097 = vmatpush.msra.mxu0 %v996
  %1098 = vmatpush.msra.mxu0 %v992
  %1099 = vmatpush.msra.mxu0 %v988
  %1100 = vmatpush.msra.mxu0 %v984
  %1101 = vmatpush.msra.mxu0 %v980
  %1102 = vmatpush.msra.mxu0 %v976
  %1103 = vmatpush.msra.mxu0 %v972
  %1104 = vmatpush.msra.mxu0 %v968
  %1105 = vmatmul.f32.gmra.mxu0 %v964
  %v1106 = vpop.f32.mrf.mxu0
  %v1107 = vadd.f32 0.0, %v1106
  %1108 = vdwg.mxu0
  %v1113 = vrot.slane %v1067, 6
  %v1114 = vrot.slane %v1087, 4
  %v1115 = vrot.slane %v1107, 2
  %v1116 = vsel %vm180, %v1047, %v1113
  %v1117 = vsel %vm182, %v1114, %v1115
  %v1118 = vsel %vm184, %v1116, %v1117
  %v1120 = vadd.f32 %v963, %v1118
  %v1121 = vxor.u32 %v1120, 2147483648
  %v1122 = vmul.f32 %v1121, 1.442695
  %v1123 = vpow.pop %v1122
  %v1124 = vadd.f32 %v1123, 1.0
  %v1125 = vrcp.pop %v1124
  %v1126 = vmul.f32 %v1124, %v1125
  %v1127 = vsub.f32 1.0, %v1126
  %v1128 = vmul.f32 %v1125, %v1127
  %v1129 = vadd.f32 %v1125, %v1128
  %vm1130 = vweird.f32 %v1124
  %vm1131 = vweird.f32 %v1125
  %vm1132 = vmor %vm1130, %vm1131
  %v1133 = vsel %vm1132, %v1125, %v1129
  %v1134 = vand.u32 2147483647, %v1124
  %vm1135 = vcmp.eq.f32.partialorder %v1134, 8.507059e+37
  %v1136 = vand.u32 %v1124, 2147483648
  %v1137 = vor.u32 1.1754944e-38, %v1136
  %v1138 = vsel %vm1135, %v1137, %v1133
  %v1139 = vmul.f32 1.0, %v1138
  %v1141 = vrot.slane %v1120, 2
  %v1143 = vxor.u32 %v1141, 2147483648
  %v1144 = vmul.f32 %v1143, 1.442695
  %v1145 = vpow.pop %v1144
  %v1146 = vadd.f32 %v1145, 1.0
  %v1147 = vrcp.pop %v1146
  %v1148 = vmul.f32 %v1146, %v1147
  %v1149 = vsub.f32 1.0, %v1148
  %v1150 = vmul.f32 %v1147, %v1149
  %v1151 = vadd.f32 %v1147, %v1150
  %vm1152 = vweird.f32 %v1146
  %vm1153 = vweird.f32 %v1147
  %vm1154 = vmor %vm1152, %vm1153
  %v1155 = vsel %vm1154, %v1147, %v1151
  %v1156 = vand.u32 2147483647, %v1146
  %vm1157 = vcmp.eq.f32.partialorder %v1156, 8.507059e+37
  %v1158 = vand.u32 %v1146, 2147483648
  %v1159 = vor.u32 1.1754944e-38, %v1158
  %v1160 = vsel %vm1157, %v1159, %v1155
  %v1161 = vmul.f32 1.0, %v1160
  %v1162 = vrot.slane %v1120, 4
  %v1164 = vtanh.pop %v1162
  %v1165 = vrot.slane %v1120, 6
  %v1167 = vxor.u32 %v1165, 2147483648
  %v1168 = vmul.f32 %v1167, 1.442695
  %v1169 = vpow.pop %v1168
  %v1170 = vadd.f32 %v1169, 1.0
  %v1171 = vrcp.pop %v1170
  %v1172 = vmul.f32 %v1170, %v1171
  %v1173 = vsub.f32 1.0, %v1172
  %v1174 = vmul.f32 %v1171, %v1173
  %v1175 = vadd.f32 %v1171, %v1174
  %vm1176 = vweird.f32 %v1170
  %vm1177 = vweird.f32 %v1171
  %vm1178 = vmor %vm1176, %vm1177
  %v1179 = vsel %vm1178, %v1171, %v1175
  %v1180 = vand.u32 2147483647, %v1170
  %vm1181 = vcmp.eq.f32.partialorder %v1180, 8.507059e+37
  %v1182 = vand.u32 %v1170, 2147483648
  %v1183 = vor.u32 1.1754944e-38, %v1182
  %v1184 = vsel %vm1181, %v1183, %v1179
  %v1185 = vmul.f32 1.0, %v1184
  %v1186 = vld [vmem:[#allocation3] sm:$0x3]
  %v1187 = vmul.f32 %v1161, %v1186
  %v1188 = vmul.f32 %v1139, %v1164
  %v1189 = vadd.f32 %v1187, %v1188
  %v1190 = vtanh.pop %v1189
  %v1191 = vmul.f32 %v1185, %v1190
  %1192 = vst [vmem:[#allocation3] sm:$0x3] %v1189
  %1193 = vst [vmem:[#allocation2] sm:$0x3] %v1191
  %s1194 = scalar_lea.vmem %s4, 4
  %1195 = vst [vmem:[%s1194] sm:$0x3] %v1191
  %s1196 = scalar_lea.vmem %s1, 16
  %v1197 = vld [vmem:[%s1196] sm:$0xff]
  %v1198 = vld [vmem:[#allocation4] sm:$0x3]
  %v1199 = vld [vmem:[%s3] sm:$0xff]
  %v1200 = vld [vmem:[%s3 + $0x8] sm:$0xff]
  %v1201 = vld [vmem:[%s3 + $0x10] sm:$0xff]
  %v1202 = vld [vmem:[%s3 + $0x18] sm:$0xff]
  %v1203 = vld [vmem:[%s3 + $0x20] sm:$0xff]
  %v1204 = vld [vmem:[%s3 + $0x28] sm:$0xff]
  %v1205 = vld [vmem:[%s3 + $0x30] sm:$0xff]
  %v1206 = vld [vmem:[%s3 + $0x38] sm:$0xff]
  %v1207 = vld [vmem:[%s3 + $0x40] sm:$0xff]
  %v1208 = vld [vmem:[%s3 + $0x48] sm:$0xff]
  %v1209 = vld [vmem:[%s3 + $0x50] sm:$0xff]
  %v1210 = vld [vmem:[%s3 + $0x58] sm:$0xff]
  %v1211 = vld [vmem:[%s3 + $0x60] sm:$0xff]
  %v1212 = vld [vmem:[%s3 + $0x68] sm:$0xff]
  %v1213 = vld [vmem:[%s3 + $0x70] sm:$0xff]
  %v1214 = vld [vmem:[%s3 + $0x78] sm:$0xff]
  %v1215 = vld [vmem:[%s3 + $0x80] sm:$0xff]
  %v1216 = vld [vmem:[%s3 + $0x88] sm:$0xff]
  %v1217 = vld [vmem:[%s3 + $0x90] sm:$0xff]
  %v1218 = vld [vmem:[%s3 + $0x98] sm:$0xff]
  %v1219 = vld [vmem:[%s3 + $0xa0] sm:$0xff]
  %v1220 = vld [vmem:[%s3 + $0xa8] sm:$0xff]
  %v1221 = vld [vmem:[%s3 + $0xb0] sm:$0xff]
  %v1222 = vld [vmem:[%s3 + $0xb8] sm:$0xff]
  %v1223 = vld [vmem:[%s3 + $0xc0] sm:$0xff]
  %v1224 = vld [vmem:[%s3 + $0xc8] sm:$0xff]
  %v1225 = vld [vmem:[%s3 + $0xd0] sm:$0xff]
  %v1226 = vld [vmem:[%s3 + $0xd8] sm:$0xff]
  %v1227 = vld [vmem:[%s3 + $0xe0] sm:$0xff]
  %v1228 = vld [vmem:[%s3 + $0xe8] sm:$0xff]
  %v1229 = vld [vmem:[%s3 + $0xf0] sm:$0xff]
  %v1230 = vld [vmem:[%s3 + $0xf8] sm:$0xff]
  %v1231 = vld [vmem:[%s3 + $0x100] sm:$0xff]
  %v1232 = vld [vmem:[%s3 + $0x108] sm:$0xff]
  %v1233 = vld [vmem:[%s3 + $0x110] sm:$0xff]
  %v1234 = vld [vmem:[%s3 + $0x118] sm:$0xff]
  %v1235 = vld [vmem:[%s3 + $0x120] sm:$0xff]
  %v1236 = vld [vmem:[%s3 + $0x128] sm:$0xff]
  %v1237 = vld [vmem:[%s3 + $0x130] sm:$0xff]
  %v1238 = vld [vmem:[%s3 + $0x138] sm:$0xff]
  %v1239 = vld [vmem:[%s3 + $0x140] sm:$0xff]
  %v1240 = vld [vmem:[%s3 + $0x148] sm:$0xff]
  %v1241 = vld [vmem:[%s3 + $0x150] sm:$0xff]
  %v1242 = vld [vmem:[%s3 + $0x158] sm:$0xff]
  %v1243 = vld [vmem:[%s3 + $0x160] sm:$0xff]
  %v1244 = vld [vmem:[%s3 + $0x168] sm:$0xff]
  %v1245 = vld [vmem:[%s3 + $0x170] sm:$0xff]
  %v1246 = vld [vmem:[%s3 + $0x178] sm:$0xff]
  %v1247 = vld [vmem:[%s3 + $0x180] sm:$0xff]
  %v1248 = vld [vmem:[%s3 + $0x188] sm:$0xff]
  %v1249 = vld [vmem:[%s3 + $0x190] sm:$0xff]
  %v1250 = vld [vmem:[%s3 + $0x198] sm:$0xff]
  %v1251 = vld [vmem:[%s3 + $0x1a0] sm:$0xff]
  %v1252 = vld [vmem:[%s3 + $0x1a8] sm:$0xff]
  %v1253 = vld [vmem:[%s3 + $0x1b0] sm:$0xff]
  %v1254 = vld [vmem:[%s3 + $0x1b8] sm:$0xff]
  %v1255 = vld [vmem:[%s3 + $0x1c0] sm:$0xff]
  %v1256 = vld [vmem:[%s3 + $0x1c8] sm:$0xff]
  %v1257 = vld [vmem:[%s3 + $0x1d0] sm:$0xff]
  %v1258 = vld [vmem:[%s3 + $0x1d8] sm:$0xff]
  %v1259 = vld [vmem:[%s3 + $0x1e0] sm:$0xff]
  %v1260 = vld [vmem:[%s3 + $0x1e8] sm:$0xff]
  %v1261 = vld [vmem:[%s3 + $0x1f0] sm:$0xff]
  %v1262 = vld [vmem:[%s3 + $0x1f8] sm:$0xff]
  %1263 = vmatpush.msra.mxu0 %v1259
  %1264 = vmatpush.msra.mxu0 %v1255
  %1265 = vmatpush.msra.mxu0 %v1251
  %1266 = vmatpush.msra.mxu0 %v1247
  %1267 = vmatpush.msra.mxu0 %v1243
  %1268 = vmatpush.msra.mxu0 %v1239
  %1269 = vmatpush.msra.mxu0 %v1235
  %1270 = vmatpush.msra.mxu0 %v1231
  %1271 = vmatpush.msra.mxu0 %v1227
  %1272 = vmatpush.msra.mxu0 %v1223
  %1273 = vmatpush.msra.mxu0 %v1219
  %1274 = vmatpush.msra.mxu0 %v1215
  %1275 = vmatpush.msra.mxu0 %v1211
  %1276 = vmatpush.msra.mxu0 %v1207
  %1277 = vmatpush.msra.mxu0 %v1203
  %1278 = vmatpush.msra.mxu0 %v1199
  %1279 = vmatmul.f32.gmra.mxu0 %v1198
  %v1280 = vpop.f32.mrf.mxu0
  %v1281 = vadd.f32 0.0, %v1280
  %1282 = vdwg.mxu0
  %1283 = vmatpush.msra.mxu0 %v1260
  %1284 = vmatpush.msra.mxu0 %v1256
  %1285 = vmatpush.msra.mxu0 %v1252
  %1286 = vmatpush.msra.mxu0 %v1248
  %1287 = vmatpush.msra.mxu0 %v1244
  %1288 = vmatpush.msra.mxu0 %v1240
  %1289 = vmatpush.msra.mxu0 %v1236
  %1290 = vmatpush.msra.mxu0 %v1232
  %1291 = vmatpush.msra.mxu0 %v1228
  %1292 = vmatpush.msra.mxu0 %v1224
  %1293 = vmatpush.msra.mxu0 %v1220
  %1294 = vmatpush.msra.mxu0 %v1216
  %1295 = vmatpush.msra.mxu0 %v1212
  %1296 = vmatpush.msra.mxu0 %v1208
  %1297 = vmatpush.msra.mxu0 %v1204
  %1298 = vmatpush.msra.mxu0 %v1200
  %1299 = vmatmul.f32.gmra.mxu0 %v1198
  %v1300 = vpop.f32.mrf.mxu0
  %v1301 = vadd.f32 0.0, %v1300
  %1302 = vdwg.mxu0
  %1303 = vmatpush.msra.mxu0 %v1261
  %1304 = vmatpush.msra.mxu0 %v1257
  %1305 = vmatpush.msra.mxu0 %v1253
  %1306 = vmatpush.msra.mxu0 %v1249
  %1307 = vmatpush.msra.mxu0 %v1245
  %1308 = vmatpush.msra.mxu0 %v1241
  %1309 = vmatpush.msra.mxu0 %v1237
  %1310 = vmatpush.msra.mxu0 %v1233
  %1311 = vmatpush.msra.mxu0 %v1229
  %1312 = vmatpush.msra.mxu0 %v1225
  %1313 = vmatpush.msra.mxu0 %v1221
  %1314 = vmatpush.msra.mxu0 %v1217
  %1315 = vmatpush.msra.mxu0 %v1213
  %1316 = vmatpush.msra.mxu0 %v1209
  %1317 = vmatpush.msra.mxu0 %v1205
  %1318 = vmatpush.msra.mxu0 %v1201
  %1319 = vmatmul.f32.gmra.mxu0 %v1198
  %v1320 = vpop.f32.mrf.mxu0
  %v1321 = vadd.f32 0.0, %v1320
  %1322 = vdwg.mxu0
  %1323 = vmatpush.msra.mxu0 %v1262
  %1324 = vmatpush.msra.mxu0 %v1258
  %1325 = vmatpush.msra.mxu0 %v1254
  %1326 = vmatpush.msra.mxu0 %v1250
  %1327 = vmatpush.msra.mxu0 %v1246
  %1328 = vmatpush.msra.mxu0 %v1242
  %1329 = vmatpush.msra.mxu0 %v1238
  %1330 = vmatpush.msra.mxu0 %v1234
  %1331 = vmatpush.msra.mxu0 %v1230
  %1332 = vmatpush.msra.mxu0 %v1226
  %1333 = vmatpush.msra.mxu0 %v1222
  %1334 = vmatpush.msra.mxu0 %v1218
  %1335 = vmatpush.msra.mxu0 %v1214
  %1336 = vmatpush.msra.mxu0 %v1210
  %1337 = vmatpush.msra.mxu0 %v1206
  %1338 = vmatpush.msra.mxu0 %v1202
  %1339 = vmatmul.f32.gmra.mxu0 %v1198
  %v1340 = vpop.f32.mrf.mxu0
  %v1341 = vadd.f32 0.0, %v1340
  %1342 = vdwg.mxu0
  %v1347 = vrot.slane %v1301, 6
  %v1348 = vrot.slane %v1321, 4
  %v1349 = vrot.slane %v1341, 2
  %v1350 = vsel %vm180, %v1281, %v1347
  %v1351 = vsel %vm182, %v1348, %v1349
  %v1352 = vsel %vm184, %v1350, %v1351
  %v1354 = vadd.f32 %v1197, %v1352
  %v1355 = vxor.u32 %v1354, 2147483648
  %v1356 = vmul.f32 %v1355, 1.442695
  %v1357 = vpow.pop %v1356
  %v1358 = vadd.f32 %v1357, 1.0
  %v1359 = vrcp.pop %v1358
  %v1360 = vmul.f32 %v1358, %v1359
  %v1361 = vsub.f32 1.0, %v1360
  %v1362 = vmul.f32 %v1359, %v1361
  %v1363 = vadd.f32 %v1359, %v1362
  %vm1364 = vweird.f32 %v1358
  %vm1365 = vweird.f32 %v1359
  %vm1366 = vmor %vm1364, %vm1365
  %v1367 = vsel %vm1366, %v1359, %v1363
  %v1368 = vand.u32 2147483647, %v1358
  %vm1369 = vcmp.eq.f32.partialorder %v1368, 8.507059e+37
  %v1370 = vand.u32 %v1358, 2147483648
  %v1371 = vor.u32 1.1754944e-38, %v1370
  %v1372 = vsel %vm1369, %v1371, %v1367
  %v1373 = vmul.f32 1.0, %v1372
  %v1375 = vrot.slane %v1354, 2
  %v1377 = vxor.u32 %v1375, 2147483648
  %v1378 = vmul.f32 %v1377, 1.442695
  %v1379 = vpow.pop %v1378
  %v1380 = vadd.f32 %v1379, 1.0
  %v1381 = vrcp.pop %v1380
  %v1382 = vmul.f32 %v1380, %v1381
  %v1383 = vsub.f32 1.0, %v1382
  %v1384 = vmul.f32 %v1381, %v1383
  %v1385 = vadd.f32 %v1381, %v1384
  %vm1386 = vweird.f32 %v1380
  %vm1387 = vweird.f32 %v1381
  %vm1388 = vmor %vm1386, %vm1387
  %v1389 = vsel %vm1388, %v1381, %v1385
  %v1390 = vand.u32 2147483647, %v1380
  %vm1391 = vcmp.eq.f32.partialorder %v1390, 8.507059e+37
  %v1392 = vand.u32 %v1380, 2147483648
  %v1393 = vor.u32 1.1754944e-38, %v1392
  %v1394 = vsel %vm1391, %v1393, %v1389
  %v1395 = vmul.f32 1.0, %v1394
  %v1396 = vrot.slane %v1354, 4
  %v1398 = vtanh.pop %v1396
  %v1399 = vrot.slane %v1354, 6
  %v1401 = vxor.u32 %v1399, 2147483648
  %v1402 = vmul.f32 %v1401, 1.442695
  %v1403 = vpow.pop %v1402
  %v1404 = vadd.f32 %v1403, 1.0
  %v1405 = vrcp.pop %v1404
  %v1406 = vmul.f32 %v1404, %v1405
  %v1407 = vsub.f32 1.0, %v1406
  %v1408 = vmul.f32 %v1405, %v1407
  %v1409 = vadd.f32 %v1405, %v1408
  %vm1410 = vweird.f32 %v1404
  %vm1411 = vweird.f32 %v1405
  %vm1412 = vmor %vm1410, %vm1411
  %v1413 = vsel %vm1412, %v1405, %v1409
  %v1414 = vand.u32 2147483647, %v1404
  %vm1415 = vcmp.eq.f32.partialorder %v1414, 8.507059e+37
  %v1416 = vand.u32 %v1404, 2147483648
  %v1417 = vor.u32 1.1754944e-38, %v1416
  %v1418 = vsel %vm1415, %v1417, %v1413
  %v1419 = vmul.f32 1.0, %v1418
  %v1420 = vld [vmem:[#allocation5] sm:$0x3]
  %v1421 = vmul.f32 %v1395, %v1420
  %v1422 = vmul.f32 %v1373, %v1398
  %v1423 = vadd.f32 %v1421, %v1422
  %v1424 = vtanh.pop %v1423
  %v1425 = vmul.f32 %v1419, %v1424
  %1426 = vst [vmem:[#allocation5] sm:$0x3] %v1423
  %1427 = vst [vmem:[#allocation4] sm:$0x3] %v1425
  %s1428 = scalar_lea.vmem %s5, 4
  %1429 = vst [vmem:[%s1428] sm:$0x3] %v1425
  %s1430 = scalar_lea.vmem %s0, 24
  %v1431 = vld [vmem:[%s1430] sm:$0xff]
  %v1432 = vld [vmem:[#allocation2] sm:$0x3]
  %v1433 = vld [vmem:[%s2] sm:$0xff]
  %v1434 = vld [vmem:[%s2 + $0x8] sm:$0xff]
  %v1435 = vld [vmem:[%s2 + $0x10] sm:$0xff]
  %v1436 = vld [vmem:[%s2 + $0x18] sm:$0xff]
  %v1437 = vld [vmem:[%s2 + $0x20] sm:$0xff]
  %v1438 = vld [vmem:[%s2 + $0x28] sm:$0xff]
  %v1439 = vld [vmem:[%s2 + $0x30] sm:$0xff]
  %v1440 = vld [vmem:[%s2 + $0x38] sm:$0xff]
  %v1441 = vld [vmem:[%s2 + $0x40] sm:$0xff]
  %v1442 = vld [vmem:[%s2 + $0x48] sm:$0xff]
  %v1443 = vld [vmem:[%s2 + $0x50] sm:$0xff]
  %v1444 = vld [vmem:[%s2 + $0x58] sm:$0xff]
  %v1445 = vld [vmem:[%s2 + $0x60] sm:$0xff]
  %v1446 = vld [vmem:[%s2 + $0x68] sm:$0xff]
  %v1447 = vld [vmem:[%s2 + $0x70] sm:$0xff]
  %v1448 = vld [vmem:[%s2 + $0x78] sm:$0xff]
  %v1449 = vld [vmem:[%s2 + $0x80] sm:$0xff]
  %v1450 = vld [vmem:[%s2 + $0x88] sm:$0xff]
  %v1451 = vld [vmem:[%s2 + $0x90] sm:$0xff]
  %v1452 = vld [vmem:[%s2 + $0x98] sm:$0xff]
  %v1453 = vld [vmem:[%s2 + $0xa0] sm:$0xff]
  %v1454 = vld [vmem:[%s2 + $0xa8] sm:$0xff]
  %v1455 = vld [vmem:[%s2 + $0xb0] sm:$0xff]
  %v1456 = vld [vmem:[%s2 + $0xb8] sm:$0xff]
  %v1457 = vld [vmem:[%s2 + $0xc0] sm:$0xff]
  %v1458 = vld [vmem:[%s2 + $0xc8] sm:$0xff]
  %v1459 = vld [vmem:[%s2 + $0xd0] sm:$0xff]
  %v1460 = vld [vmem:[%s2 + $0xd8] sm:$0xff]
  %v1461 = vld [vmem:[%s2 + $0xe0] sm:$0xff]
  %v1462 = vld [vmem:[%s2 + $0xe8] sm:$0xff]
  %v1463 = vld [vmem:[%s2 + $0xf0] sm:$0xff]
  %v1464 = vld [vmem:[%s2 + $0xf8] sm:$0xff]
  %v1465 = vld [vmem:[%s2 + $0x100] sm:$0xff]
  %v1466 = vld [vmem:[%s2 + $0x108] sm:$0xff]
  %v1467 = vld [vmem:[%s2 + $0x110] sm:$0xff]
  %v1468 = vld [vmem:[%s2 + $0x118] sm:$0xff]
  %v1469 = vld [vmem:[%s2 + $0x120] sm:$0xff]
  %v1470 = vld [vmem:[%s2 + $0x128] sm:$0xff]
  %v1471 = vld [vmem:[%s2 + $0x130] sm:$0xff]
  %v1472 = vld [vmem:[%s2 + $0x138] sm:$0xff]
  %v1473 = vld [vmem:[%s2 + $0x140] sm:$0xff]
  %v1474 = vld [vmem:[%s2 + $0x148] sm:$0xff]
  %v1475 = vld [vmem:[%s2 + $0x150] sm:$0xff]
  %v1476 = vld [vmem:[%s2 + $0x158] sm:$0xff]
  %v1477 = vld [vmem:[%s2 + $0x160] sm:$0xff]
  %v1478 = vld [vmem:[%s2 + $0x168] sm:$0xff]
  %v1479 = vld [vmem:[%s2 + $0x170] sm:$0xff]
  %v1480 = vld [vmem:[%s2 + $0x178] sm:$0xff]
  %v1481 = vld [vmem:[%s2 + $0x180] sm:$0xff]
  %v1482 = vld [vmem:[%s2 + $0x188] sm:$0xff]
  %v1483 = vld [vmem:[%s2 + $0x190] sm:$0xff]
  %v1484 = vld [vmem:[%s2 + $0x198] sm:$0xff]
  %v1485 = vld [vmem:[%s2 + $0x1a0] sm:$0xff]
  %v1486 = vld [vmem:[%s2 + $0x1a8] sm:$0xff]
  %v1487 = vld [vmem:[%s2 + $0x1b0] sm:$0xff]
  %v1488 = vld [vmem:[%s2 + $0x1b8] sm:$0xff]
  %v1489 = vld [vmem:[%s2 + $0x1c0] sm:$0xff]
  %v1490 = vld [vmem:[%s2 + $0x1c8] sm:$0xff]
  %v1491 = vld [vmem:[%s2 + $0x1d0] sm:$0xff]
  %v1492 = vld [vmem:[%s2 + $0x1d8] sm:$0xff]
  %v1493 = vld [vmem:[%s2 + $0x1e0] sm:$0xff]
  %v1494 = vld [vmem:[%s2 + $0x1e8] sm:$0xff]
  %v1495 = vld [vmem:[%s2 + $0x1f0] sm:$0xff]
  %v1496 = vld [vmem:[%s2 + $0x1f8] sm:$0xff]
  %1497 = vmatpush.msra.mxu0 %v1493
  %1498 = vmatpush.msra.mxu0 %v1489
  %1499 = vmatpush.msra.mxu0 %v1485
  %1500 = vmatpush.msra.mxu0 %v1481
  %1501 = vmatpush.msra.mxu0 %v1477
  %1502 = vmatpush.msra.mxu0 %v1473
  %1503 = vmatpush.msra.mxu0 %v1469
  %1504 = vmatpush.msra.mxu0 %v1465
  %1505 = vmatpush.msra.mxu0 %v1461
  %1506 = vmatpush.msra.mxu0 %v1457
  %1507 = vmatpush.msra.mxu0 %v1453
  %1508 = vmatpush.msra.mxu0 %v1449
  %1509 = vmatpush.msra.mxu0 %v1445
  %1510 = vmatpush.msra.mxu0 %v1441
  %1511 = vmatpush.msra.mxu0 %v1437
  %1512 = vmatpush.msra.mxu0 %v1433
  %1513 = vmatmul.f32.gmra.mxu0 %v1432
  %v1514 = vpop.f32.mrf.mxu0
  %v1515 = vadd.f32 0.0, %v1514
  %1516 = vdwg.mxu0
  %1517 = vmatpush.msra.mxu0 %v1494
  %1518 = vmatpush.msra.mxu0 %v1490
  %1519 = vmatpush.msra.mxu0 %v1486
  %1520 = vmatpush.msra.mxu0 %v1482
  %1521 = vmatpush.msra.mxu0 %v1478
  %1522 = vmatpush.msra.mxu0 %v1474
  %1523 = vmatpush.msra.mxu0 %v1470
  %1524 = vmatpush.msra.mxu0 %v1466
  %1525 = vmatpush.msra.mxu0 %v1462
  %1526 = vmatpush.msra.mxu0 %v1458
  %1527 = vmatpush.msra.mxu0 %v1454
  %1528 = vmatpush.msra.mxu0 %v1450
  %1529 = vmatpush.msra.mxu0 %v1446
  %1530 = vmatpush.msra.mxu0 %v1442
  %1531 = vmatpush.msra.mxu0 %v1438
  %1532 = vmatpush.msra.mxu0 %v1434
  %1533 = vmatmul.f32.gmra.mxu0 %v1432
  %v1534 = vpop.f32.mrf.mxu0
  %v1535 = vadd.f32 0.0, %v1534
  %1536 = vdwg.mxu0
  %1537 = vmatpush.msra.mxu0 %v1495
  %1538 = vmatpush.msra.mxu0 %v1491
  %1539 = vmatpush.msra.mxu0 %v1487
  %1540 = vmatpush.msra.mxu0 %v1483
  %1541 = vmatpush.msra.mxu0 %v1479
  %1542 = vmatpush.msra.mxu0 %v1475
  %1543 = vmatpush.msra.mxu0 %v1471
  %1544 = vmatpush.msra.mxu0 %v1467
  %1545 = vmatpush.msra.mxu0 %v1463
  %1546 = vmatpush.msra.mxu0 %v1459
  %1547 = vmatpush.msra.mxu0 %v1455
  %1548 = vmatpush.msra.mxu0 %v1451
  %1549 = vmatpush.msra.mxu0 %v1447
  %1550 = vmatpush.msra.mxu0 %v1443
  %1551 = vmatpush.msra.mxu0 %v1439
  %1552 = vmatpush.msra.mxu0 %v1435
  %1553 = vmatmul.f32.gmra.mxu0 %v1432
  %v1554 = vpop.f32.mrf.mxu0
  %v1555 = vadd.f32 0.0, %v1554
  %1556 = vdwg.mxu0
  %1557 = vmatpush.msra.mxu0 %v1496
  %1558 = vmatpush.msra.mxu0 %v1492
  %1559 = vmatpush.msra.mxu0 %v1488
  %1560 = vmatpush.msra.mxu0 %v1484
  %1561 = vmatpush.msra.mxu0 %v1480
  %1562 = vmatpush.msra.mxu0 %v1476
  %1563 = vmatpush.msra.mxu0 %v1472
  %1564 = vmatpush.msra.mxu0 %v1468
  %1565 = vmatpush.msra.mxu0 %v1464
  %1566 = vmatpush.msra.mxu0 %v1460
  %1567 = vmatpush.msra.mxu0 %v1456
  %1568 = vmatpush.msra.mxu0 %v1452
  %1569 = vmatpush.msra.mxu0 %v1448
  %1570 = vmatpush.msra.mxu0 %v1444
  %1571 = vmatpush.msra.mxu0 %v1440
  %1572 = vmatpush.msra.mxu0 %v1436
  %1573 = vmatmul.f32.gmra.mxu0 %v1432
  %v1574 = vpop.f32.mrf.mxu0
  %v1575 = vadd.f32 0.0, %v1574
  %1576 = vdwg.mxu0
  %v1581 = vrot.slane %v1535, 6
  %v1582 = vrot.slane %v1555, 4
  %v1583 = vrot.slane %v1575, 2
  %v1584 = vsel %vm180, %v1515, %v1581
  %v1585 = vsel %vm182, %v1582, %v1583
  %v1586 = vsel %vm184, %v1584, %v1585
  %v1588 = vadd.f32 %v1431, %v1586
  %v1589 = vxor.u32 %v1588, 2147483648
  %v1590 = vmul.f32 %v1589, 1.442695
  %v1591 = vpow.pop %v1590
  %v1592 = vadd.f32 %v1591, 1.0
  %v1593 = vrcp.pop %v1592
  %v1594 = vmul.f32 %v1592, %v1593
  %v1595 = vsub.f32 1.0, %v1594
  %v1596 = vmul.f32 %v1593, %v1595
  %v1597 = vadd.f32 %v1593, %v1596
  %vm1598 = vweird.f32 %v1592
  %vm1599 = vweird.f32 %v1593
  %vm1600 = vmor %vm1598, %vm1599
  %v1601 = vsel %vm1600, %v1593, %v1597
  %v1602 = vand.u32 2147483647, %v1592
  %vm1603 = vcmp.eq.f32.partialorder %v1602, 8.507059e+37
  %v1604 = vand.u32 %v1592, 2147483648
  %v1605 = vor.u32 1.1754944e-38, %v1604
  %v1606 = vsel %vm1603, %v1605, %v1601
  %v1607 = vmul.f32 1.0, %v1606
  %v1609 = vrot.slane %v1588, 2
  %v1611 = vxor.u32 %v1609, 2147483648
  %v1612 = vmul.f32 %v1611, 1.442695
  %v1613 = vpow.pop %v1612
  %v1614 = vadd.f32 %v1613, 1.0
  %v1615 = vrcp.pop %v1614
  %v1616 = vmul.f32 %v1614, %v1615
  %v1617 = vsub.f32 1.0, %v1616
  %v1618 = vmul.f32 %v1615, %v1617
  %v1619 = vadd.f32 %v1615, %v1618
  %vm1620 = vweird.f32 %v1614
  %vm1621 = vweird.f32 %v1615
  %vm1622 = vmor %vm1620, %vm1621
  %v1623 = vsel %vm1622, %v1615, %v1619
  %v1624 = vand.u32 2147483647, %v1614
  %vm1625 = vcmp.eq.f32.partialorder %v1624, 8.507059e+37
  %v1626 = vand.u32 %v1614, 2147483648
  %v1627 = vor.u32 1.1754944e-38, %v1626
  %v1628 = vsel %vm1625, %v1627, %v1623
  %v1629 = vmul.f32 1.0, %v1628
  %v1630 = vrot.slane %v1588, 4
  %v1632 = vtanh.pop %v1630
  %v1633 = vrot.slane %v1588, 6
  %v1635 = vxor.u32 %v1633, 2147483648
  %v1636 = vmul.f32 %v1635, 1.442695
  %v1637 = vpow.pop %v1636
  %v1638 = vadd.f32 %v1637, 1.0
  %v1639 = vrcp.pop %v1638
  %v1640 = vmul.f32 %v1638, %v1639
  %v1641 = vsub.f32 1.0, %v1640
  %v1642 = vmul.f32 %v1639, %v1641
  %v1643 = vadd.f32 %v1639, %v1642
  %vm1644 = vweird.f32 %v1638
  %vm1645 = vweird.f32 %v1639
  %vm1646 = vmor %vm1644, %vm1645
  %v1647 = vsel %vm1646, %v1639, %v1643
  %v1648 = vand.u32 2147483647, %v1638
  %vm1649 = vcmp.eq.f32.partialorder %v1648, 8.507059e+37
  %v1650 = vand.u32 %v1638, 2147483648
  %v1651 = vor.u32 1.1754944e-38, %v1650
  %v1652 = vsel %vm1649, %v1651, %v1647
  %v1653 = vmul.f32 1.0, %v1652
  %v1654 = vld [vmem:[#allocation3] sm:$0x3]
  %v1655 = vmul.f32 %v1629, %v1654
  %v1656 = vmul.f32 %v1607, %v1632
  %v1657 = vadd.f32 %v1655, %v1656
  %v1658 = vtanh.pop %v1657
  %v1659 = vmul.f32 %v1653, %v1658
  %1660 = vst [vmem:[#allocation3] sm:$0x3] %v1657
  %1661 = vst [vmem:[#allocation2] sm:$0x3] %v1659
  %s1662 = scalar_lea.vmem %s4, 6
  %1663 = vst [vmem:[%s1662] sm:$0x3] %v1659
  %s1664 = scalar_lea.vmem %s1, 24
  %v1665 = vld [vmem:[%s1664] sm:$0xff]
  %v1666 = vld [vmem:[#allocation4] sm:$0x3]
  %v1667 = vld [vmem:[%s3] sm:$0xff]
  %v1668 = vld [vmem:[%s3 + $0x8] sm:$0xff]
  %v1669 = vld [vmem:[%s3 + $0x10] sm:$0xff]
  %v1670 = vld [vmem:[%s3 + $0x18] sm:$0xff]
  %v1671 = vld [vmem:[%s3 + $0x20] sm:$0xff]
  %v1672 = vld [vmem:[%s3 + $0x28] sm:$0xff]
  %v1673 = vld [vmem:[%s3 + $0x30] sm:$0xff]
  %v1674 = vld [vmem:[%s3 + $0x38] sm:$0xff]
  %v1675 = vld [vmem:[%s3 + $0x40] sm:$0xff]
  %v1676 = vld [vmem:[%s3 + $0x48] sm:$0xff]
  %v1677 = vld [vmem:[%s3 + $0x50] sm:$0xff]
  %v1678 = vld [vmem:[%s3 + $0x58] sm:$0xff]
  %v1679 = vld [vmem:[%s3 + $0x60] sm:$0xff]
  %v1680 = vld [vmem:[%s3 + $0x68] sm:$0xff]
  %v1681 = vld [vmem:[%s3 + $0x70] sm:$0xff]
  %v1682 = vld [vmem:[%s3 + $0x78] sm:$0xff]
  %v1683 = vld [vmem:[%s3 + $0x80] sm:$0xff]
  %v1684 = vld [vmem:[%s3 + $0x88] sm:$0xff]
  %v1685 = vld [vmem:[%s3 + $0x90] sm:$0xff]
  %v1686 = vld [vmem:[%s3 + $0x98] sm:$0xff]
  %v1687 = vld [vmem:[%s3 + $0xa0] sm:$0xff]
  %v1688 = vld [vmem:[%s3 + $0xa8] sm:$0xff]
  %v1689 = vld [vmem:[%s3 + $0xb0] sm:$0xff]
  %v1690 = vld [vmem:[%s3 + $0xb8] sm:$0xff]
  %v1691 = vld [vmem:[%s3 + $0xc0] sm:$0xff]
  %v1692 = vld [vmem:[%s3 + $0xc8] sm:$0xff]
  %v1693 = vld [vmem:[%s3 + $0xd0] sm:$0xff]
  %v1694 = vld [vmem:[%s3 + $0xd8] sm:$0xff]
  %v1695 = vld [vmem:[%s3 + $0xe0] sm:$0xff]
  %v1696 = vld [vmem:[%s3 + $0xe8] sm:$0xff]
  %v1697 = vld [vmem:[%s3 + $0xf0] sm:$0xff]
  %v1698 = vld [vmem:[%s3 + $0xf8] sm:$0xff]
  %v1699 = vld [vmem:[%s3 + $0x100] sm:$0xff]
  %v1700 = vld [vmem:[%s3 + $0x108] sm:$0xff]
  %v1701 = vld [vmem:[%s3 + $0x110] sm:$0xff]
  %v1702 = vld [vmem:[%s3 + $0x118] sm:$0xff]
  %v1703 = vld [vmem:[%s3 + $0x120] sm:$0xff]
  %v1704 = vld [vmem:[%s3 + $0x128] sm:$0xff]
  %v1705 = vld [vmem:[%s3 + $0x130] sm:$0xff]
  %v1706 = vld [vmem:[%s3 + $0x138] sm:$0xff]
  %v1707 = vld [vmem:[%s3 + $0x140] sm:$0xff]
  %v1708 = vld [vmem:[%s3 + $0x148] sm:$0xff]
  %v1709 = vld [vmem:[%s3 + $0x150] sm:$0xff]
  %v1710 = vld [vmem:[%s3 + $0x158] sm:$0xff]
  %v1711 = vld [vmem:[%s3 + $0x160] sm:$0xff]
  %v1712 = vld [vmem:[%s3 + $0x168] sm:$0xff]
  %v1713 = vld [vmem:[%s3 + $0x170] sm:$0xff]
  %v1714 = vld [vmem:[%s3 + $0x178] sm:$0xff]
  %v1715 = vld [vmem:[%s3 + $0x180] sm:$0xff]
  %v1716 = vld [vmem:[%s3 + $0x188] sm:$0xff]
  %v1717 = vld [vmem:[%s3 + $0x190] sm:$0xff]
  %v1718 = vld [vmem:[%s3 + $0x198] sm:$0xff]
  %v1719 = vld [vmem:[%s3 + $0x1a0] sm:$0xff]
  %v1720 = vld [vmem:[%s3 + $0x1a8] sm:$0xff]
  %v1721 = vld [vmem:[%s3 + $0x1b0] sm:$0xff]
  %v1722 = vld [vmem:[%s3 + $0x1b8] sm:$0xff]
  %v1723 = vld [vmem:[%s3 + $0x1c0] sm:$0xff]
  %v1724 = vld [vmem:[%s3 + $0x1c8] sm:$0xff]
  %v1725 = vld [vmem:[%s3 + $0x1d0] sm:$0xff]
  %v1726 = vld [vmem:[%s3 + $0x1d8] sm:$0xff]
  %v1727 = vld [vmem:[%s3 + $0x1e0] sm:$0xff]
  %v1728 = vld [vmem:[%s3 + $0x1e8] sm:$0xff]
  %v1729 = vld [vmem:[%s3 + $0x1f0] sm:$0xff]
  %v1730 = vld [vmem:[%s3 + $0x1f8] sm:$0xff]
  %1731 = vmatpush.msra.mxu0 %v1727
  %1732 = vmatpush.msra.mxu0 %v1723
  %1733 = vmatpush.msra.mxu0 %v1719
  %1734 = vmatpush.msra.mxu0 %v1715
  %1735 = vmatpush.msra.mxu0 %v1711
  %1736 = vmatpush.msra.mxu0 %v1707
  %1737 = vmatpush.msra.mxu0 %v1703
  %1738 = vmatpush.msra.mxu0 %v1699
  %1739 = vmatpush.msra.mxu0 %v1695
  %1740 = vmatpush.msra.mxu0 %v1691
  %1741 = vmatpush.msra.mxu0 %v1687
  %1742 = vmatpush.msra.mxu0 %v1683
  %1743 = vmatpush.msra.mxu0 %v1679
  %1744 = vmatpush.msra.mxu0 %v1675
  %1745 = vmatpush.msra.mxu0 %v1671
  %1746 = vmatpush.msra.mxu0 %v1667
  %1747 = vmatmul.f32.gmra.mxu0 %v1666
  %v1748 = vpop.f32.mrf.mxu0
  %v1749 = vadd.f32 0.0, %v1748
  %1750 = vdwg.mxu0
  %1751 = vmatpush.msra.mxu0 %v1728
  %1752 = vmatpush.msra.mxu0 %v1724
  %1753 = vmatpush.msra.mxu0 %v1720
  %1754 = vmatpush.msra.mxu0 %v1716
  %1755 = vmatpush.msra.mxu0 %v1712
  %1756 = vmatpush.msra.mxu0 %v1708
  %1757 = vmatpush.msra.mxu0 %v1704
  %1758 = vmatpush.msra.mxu0 %v1700
  %1759 = vmatpush.msra.mxu0 %v1696
  %1760 = vmatpush.msra.mxu0 %v1692
  %1761 = vmatpush.msra.mxu0 %v1688
  %1762 = vmatpush.msra.mxu0 %v1684
  %1763 = vmatpush.msra.mxu0 %v1680
  %1764 = vmatpush.msra.mxu0 %v1676
  %1765 = vmatpush.msra.mxu0 %v1672
  %1766 = vmatpush.msra.mxu0 %v1668
  %1767 = vmatmul.f32.gmra.mxu0 %v1666
  %v1768 = vpop.f32.mrf.mxu0
  %v1769 = vadd.f32 0.0, %v1768
  %1770 = vdwg.mxu0
  %1771 = vmatpush.msra.mxu0 %v1729
  %1772 = vmatpush.msra.mxu0 %v1725
  %1773 = vmatpush.msra.mxu0 %v1721
  %1774 = vmatpush.msra.mxu0 %v1717
  %1775 = vmatpush.msra.mxu0 %v1713
  %1776 = vmatpush.msra.mxu0 %v1709
  %1777 = vmatpush.msra.mxu0 %v1705
  %1778 = vmatpush.msra.mxu0 %v1701
  %1779 = vmatpush.msra.mxu0 %v1697
  %1780 = vmatpush.msra.mxu0 %v1693
  %1781 = vmatpush.msra.mxu0 %v1689
  %1782 = vmatpush.msra.mxu0 %v1685
  %1783 = vmatpush.msra.mxu0 %v1681
  %1784 = vmatpush.msra.mxu0 %v1677
  %1785 = vmatpush.msra.mxu0 %v1673
  %1786 = vmatpush.msra.mxu0 %v1669
  %1787 = vmatmul.f32.gmra.mxu0 %v1666
  %v1788 = vpop.f32.mrf.mxu0
  %v1789 = vadd.f32 0.0, %v1788
  %1790 = vdwg.mxu0
  %1791 = vmatpush.msra.mxu0 %v1730
  %1792 = vmatpush.msra.mxu0 %v1726
  %1793 = vmatpush.msra.mxu0 %v1722
  %1794 = vmatpush.msra.mxu0 %v1718
  %1795 = vmatpush.msra.mxu0 %v1714
  %1796 = vmatpush.msra.mxu0 %v1710
  %1797 = vmatpush.msra.mxu0 %v1706
  %1798 = vmatpush.msra.mxu0 %v1702
  %1799 = vmatpush.msra.mxu0 %v1698
  %1800 = vmatpush.msra.mxu0 %v1694
  %1801 = vmatpush.msra.mxu0 %v1690
  %1802 = vmatpush.msra.mxu0 %v1686
  %1803 = vmatpush.msra.mxu0 %v1682
  %1804 = vmatpush.msra.mxu0 %v1678
  %1805 = vmatpush.msra.mxu0 %v1674
  %1806 = vmatpush.msra.mxu0 %v1670
  %1807 = vmatmul.f32.gmra.mxu0 %v1666
  %v1808 = vpop.f32.mrf.mxu0
  %v1809 = vadd.f32 0.0, %v1808
  %1810 = vdwg.mxu0
  %v1815 = vrot.slane %v1769, 6
  %v1816 = vrot.slane %v1789, 4
  %v1817 = vrot.slane %v1809, 2
  %v1818 = vsel %vm180, %v1749, %v1815
  %v1819 = vsel %vm182, %v1816, %v1817
  %v1820 = vsel %vm184, %v1818, %v1819
  %v1822 = vadd.f32 %v1665, %v1820
  %v1823 = vxor.u32 %v1822, 2147483648
  %v1824 = vmul.f32 %v1823, 1.442695
  %v1825 = vpow.pop %v1824
  %v1826 = vadd.f32 %v1825, 1.0
  %v1827 = vrcp.pop %v1826
  %v1828 = vmul.f32 %v1826, %v1827
  %v1829 = vsub.f32 1.0, %v1828
  %v1830 = vmul.f32 %v1827, %v1829
  %v1831 = vadd.f32 %v1827, %v1830
  %vm1832 = vweird.f32 %v1826
  %vm1833 = vweird.f32 %v1827
  %vm1834 = vmor %vm1832, %vm1833
  %v1835 = vsel %vm1834, %v1827, %v1831
  %v1836 = vand.u32 2147483647, %v1826
  %vm1837 = vcmp.eq.f32.partialorder %v1836, 8.507059e+37
  %v1838 = vand.u32 %v1826, 2147483648
  %v1839 = vor.u32 1.1754944e-38, %v1838
  %v1840 = vsel %vm1837, %v1839, %v1835
  %v1841 = vmul.f32 1.0, %v1840
  %v1843 = vrot.slane %v1822, 2
  %v1845 = vxor.u32 %v1843, 2147483648
  %v1846 = vmul.f32 %v1845, 1.442695
  %v1847 = vpow.pop %v1846
  %v1848 = vadd.f32 %v1847, 1.0
  %v1849 = vrcp.pop %v1848
  %v1850 = vmul.f32 %v1848, %v1849
  %v1851 = vsub.f32 1.0, %v1850
  %v1852 = vmul.f32 %v1849, %v1851
  %v1853 = vadd.f32 %v1849, %v1852
  %vm1854 = vweird.f32 %v1848
  %vm1855 = vweird.f32 %v1849
  %vm1856 = vmor %vm1854, %vm1855
  %v1857 = vsel %vm1856, %v1849, %v1853
  %v1858 = vand.u32 2147483647, %v1848
  %vm1859 = vcmp.eq.f32.partialorder %v1858, 8.507059e+37
  %v1860 = vand.u32 %v1848, 2147483648
  %v1861 = vor.u32 1.1754944e-38, %v1860
  %v1862 = vsel %vm1859, %v1861, %v1857
  %v1863 = vmul.f32 1.0, %v1862
  %v1864 = vrot.slane %v1822, 4
  %v1866 = vtanh.pop %v1864
  %v1867 = vrot.slane %v1822, 6
  %v1869 = vxor.u32 %v1867, 2147483648
  %v1870 = vmul.f32 %v1869, 1.442695
  %v1871 = vpow.pop %v1870
  %v1872 = vadd.f32 %v1871, 1.0
  %v1873 = vrcp.pop %v1872
  %v1874 = vmul.f32 %v1872, %v1873
  %v1875 = vsub.f32 1.0, %v1874
  %v1876 = vmul.f32 %v1873, %v1875
  %v1877 = vadd.f32 %v1873, %v1876
  %vm1878 = vweird.f32 %v1872
  %vm1879 = vweird.f32 %v1873
  %vm1880 = vmor %vm1878, %vm1879
  %v1881 = vsel %vm1880, %v1873, %v1877
  %v1882 = vand.u32 2147483647, %v1872
  %vm1883 = vcmp.eq.f32.partialorder %v1882, 8.507059e+37
  %v1884 = vand.u32 %v1872, 2147483648
  %v1885 = vor.u32 1.1754944e-38, %v1884
  %v1886 = vsel %vm1883, %v1885, %v1881
  %v1887 = vmul.f32 1.0, %v1886
  %v1888 = vld [vmem:[#allocation5] sm:$0x3]
  %v1889 = vmul.f32 %v1863, %v1888
  %v1890 = vmul.f32 %v1841, %v1866
  %v1891 = vadd.f32 %v1889, %v1890
  %v1892 = vtanh.pop %v1891
  %v1893 = vmul.f32 %v1887, %v1892
  %1894 = vst [vmem:[#allocation5] sm:$0x3] %v1891
  %1895 = vst [vmem:[#allocation4] sm:$0x3] %v1893
  %s1896 = scalar_lea.vmem %s5, 6
  %1897 = vst [vmem:[%s1896] sm:$0x3] %v1893
  %s1898 = scalar_lea.vmem %s0, 32
  %v1899 = vld [vmem:[%s1898] sm:$0xff]
  %v1900 = vld [vmem:[#allocation2] sm:$0x3]
  %v1901 = vld [vmem:[%s2] sm:$0xff]
  %v1902 = vld [vmem:[%s2 + $0x8] sm:$0xff]
  %v1903 = vld [vmem:[%s2 + $0x10] sm:$0xff]
  %v1904 = vld [vmem:[%s2 + $0x18] sm:$0xff]
  %v1905 = vld [vmem:[%s2 + $0x20] sm:$0xff]
  %v1906 = vld [vmem:[%s2 + $0x28] sm:$0xff]
  %v1907 = vld [vmem:[%s2 + $0x30] sm:$0xff]
  %v1908 = vld [vmem:[%s2 + $0x38] sm:$0xff]
  %v1909 = vld [vmem:[%s2 + $0x40] sm:$0xff]
  %v1910 = vld [vmem:[%s2 + $0x48] sm:$0xff]
  %v1911 = vld [vmem:[%s2 + $0x50] sm:$0xff]
  %v1912 = vld [vmem:[%s2 + $0x58] sm:$0xff]
  %v1913 = vld [vmem:[%s2 + $0x60] sm:$0xff]
  %v1914 = vld [vmem:[%s2 + $0x68] sm:$0xff]
  %v1915 = vld [vmem:[%s2 + $0x70] sm:$0xff]
  %v1916 = vld [vmem:[%s2 + $0x78] sm:$0xff]
  %v1917 = vld [vmem:[%s2 + $0x80] sm:$0xff]
  %v1918 = vld [vmem:[%s2 + $0x88] sm:$0xff]
  %v1919 = vld [vmem:[%s2 + $0x90] sm:$0xff]
  %v1920 = vld [vmem:[%s2 + $0x98] sm:$0xff]
  %v1921 = vld [vmem:[%s2 + $0xa0] sm:$0xff]
  %v1922 = vld [vmem:[%s2 + $0xa8] sm:$0xff]
  %v1923 = vld [vmem:[%s2 + $0xb0] sm:$0xff]
  %v1924 = vld [vmem:[%s2 + $0xb8] sm:$0xff]
  %v1925 = vld [vmem:[%s2 + $0xc0] sm:$0xff]
  %v1926 = vld [vmem:[%s2 + $0xc8] sm:$0xff]
  %v1927 = vld [vmem:[%s2 + $0xd0] sm:$0xff]
  %v1928 = vld [vmem:[%s2 + $0xd8] sm:$0xff]
  %v1929 = vld [vmem:[%s2 + $0xe0] sm:$0xff]
  %v1930 = vld [vmem:[%s2 + $0xe8] sm:$0xff]
  %v1931 = vld [vmem:[%s2 + $0xf0] sm:$0xff]
  %v1932 = vld [vmem:[%s2 + $0xf8] sm:$0xff]
  %v1933 = vld [vmem:[%s2 + $0x100] sm:$0xff]
  %v1934 = vld [vmem:[%s2 + $0x108] sm:$0xff]
  %v1935 = vld [vmem:[%s2 + $0x110] sm:$0xff]
  %v1936 = vld [vmem:[%s2 + $0x118] sm:$0xff]
  %v1937 = vld [vmem:[%s2 + $0x120] sm:$0xff]
  %v1938 = vld [vmem:[%s2 + $0x128] sm:$0xff]
  %v1939 = vld [vmem:[%s2 + $0x130] sm:$0xff]
  %v1940 = vld [vmem:[%s2 + $0x138] sm:$0xff]
  %v1941 = vld [vmem:[%s2 + $0x140] sm:$0xff]
  %v1942 = vld [vmem:[%s2 + $0x148] sm:$0xff]
  %v1943 = vld [vmem:[%s2 + $0x150] sm:$0xff]
  %v1944 = vld [vmem:[%s2 + $0x158] sm:$0xff]
  %v1945 = vld [vmem:[%s2 + $0x160] sm:$0xff]
  %v1946 = vld [vmem:[%s2 + $0x168] sm:$0xff]
  %v1947 = vld [vmem:[%s2 + $0x170] sm:$0xff]
  %v1948 = vld [vmem:[%s2 + $0x178] sm:$0xff]
  %v1949 = vld [vmem:[%s2 + $0x180] sm:$0xff]
  %v1950 = vld [vmem:[%s2 + $0x188] sm:$0xff]
  %v1951 = vld [vmem:[%s2 + $0x190] sm:$0xff]
  %v1952 = vld [vmem:[%s2 + $0x198] sm:$0xff]
  %v1953 = vld [vmem:[%s2 + $0x1a0] sm:$0xff]
  %v1954 = vld [vmem:[%s2 + $0x1a8] sm:$0xff]
  %v1955 = vld [vmem:[%s2 + $0x1b0] sm:$0xff]
  %v1956 = vld [vmem:[%s2 + $0x1b8] sm:$0xff]
  %v1957 = vld [vmem:[%s2 + $0x1c0] sm:$0xff]
  %v1958 = vld [vmem:[%s2 + $0x1c8] sm:$0xff]
  %v1959 = vld [vmem:[%s2 + $0x1d0] sm:$0xff]
  %v1960 = vld [vmem:[%s2 + $0x1d8] sm:$0xff]
  %v1961 = vld [vmem:[%s2 + $0x1e0] sm:$0xff]
  %v1962 = vld [vmem:[%s2 + $0x1e8] sm:$0xff]
  %v1963 = vld [vmem:[%s2 + $0x1f0] sm:$0xff]
  %v1964 = vld [vmem:[%s2 + $0x1f8] sm:$0xff]
  %1965 = vmatpush.msra.mxu0 %v1961
  %1966 = vmatpush.msra.mxu0 %v1957
  %1967 = vmatpush.msra.mxu0 %v1953
  %1968 = vmatpush.msra.mxu0 %v1949
  %1969 = vmatpush.msra.mxu0 %v1945
  %1970 = vmatpush.msra.mxu0 %v1941
  %1971 = vmatpush.msra.mxu0 %v1937
  %1972 = vmatpush.msra.mxu0 %v1933
  %1973 = vmatpush.msra.mxu0 %v1929
  %1974 = vmatpush.msra.mxu0 %v1925
  %1975 = vmatpush.msra.mxu0 %v1921
  %1976 = vmatpush.msra.mxu0 %v1917
  %1977 = vmatpush.msra.mxu0 %v1913
  %1978 = vmatpush.msra.mxu0 %v1909
  %1979 = vmatpush.msra.mxu0 %v1905
  %1980 = vmatpush.msra.mxu0 %v1901
  %1981 = vmatmul.f32.gmra.mxu0 %v1900
  %v1982 = vpop.f32.mrf.mxu0
  %v1983 = vadd.f32 0.0, %v1982
  %1984 = vdwg.mxu0
  %1985 = vmatpush.msra.mxu0 %v1962
  %1986 = vmatpush.msra.mxu0 %v1958
  %1987 = vmatpush.msra.mxu0 %v1954
  %1988 = vmatpush.msra.mxu0 %v1950
  %1989 = vmatpush.msra.mxu0 %v1946
  %1990 = vmatpush.msra.mxu0 %v1942
  %1991 = vmatpush.msra.mxu0 %v1938
  %1992 = vmatpush.msra.mxu0 %v1934
  %1993 = vmatpush.msra.mxu0 %v1930
  %1994 = vmatpush.msra.mxu0 %v1926
  %1995 = vmatpush.msra.mxu0 %v1922
  %1996 = vmatpush.msra.mxu0 %v1918
  %1997 = vmatpush.msra.mxu0 %v1914
  %1998 = vmatpush.msra.mxu0 %v1910
  %1999 = vmatpush.msra.mxu0 %v1906
  %2000 = vmatpush.msra.mxu0 %v1902
  %2001 = vmatmul.f32.gmra.mxu0 %v1900
  %v2002 = vpop.f32.mrf.mxu0
  %v2003 = vadd.f32 0.0, %v2002
  %2004 = vdwg.mxu0
  %2005 = vmatpush.msra.mxu0 %v1963
  %2006 = vmatpush.msra.mxu0 %v1959
  %2007 = vmatpush.msra.mxu0 %v1955
  %2008 = vmatpush.msra.mxu0 %v1951
  %2009 = vmatpush.msra.mxu0 %v1947
  %2010 = vmatpush.msra.mxu0 %v1943
  %2011 = vmatpush.msra.mxu0 %v1939
  %2012 = vmatpush.msra.mxu0 %v1935
  %2013 = vmatpush.msra.mxu0 %v1931
  %2014 = vmatpush.msra.mxu0 %v1927
  %2015 = vmatpush.msra.mxu0 %v1923
  %2016 = vmatpush.msra.mxu0 %v1919
  %2017 = vmatpush.msra.mxu0 %v1915
  %2018 = vmatpush.msra.mxu0 %v1911
  %2019 = vmatpush.msra.mxu0 %v1907
  %2020 = vmatpush.msra.mxu0 %v1903
  %2021 = vmatmul.f32.gmra.mxu0 %v1900
  %v2022 = vpop.f32.mrf.mxu0
  %v2023 = vadd.f32 0.0, %v2022
  %2024 = vdwg.mxu0
  %2025 = vmatpush.msra.mxu0 %v1964
  %2026 = vmatpush.msra.mxu0 %v1960
  %2027 = vmatpush.msra.mxu0 %v1956
  %2028 = vmatpush.msra.mxu0 %v1952
  %2029 = vmatpush.msra.mxu0 %v1948
  %2030 = vmatpush.msra.mxu0 %v1944
  %2031 = vmatpush.msra.mxu0 %v1940
  %2032 = vmatpush.msra.mxu0 %v1936
  %2033 = vmatpush.msra.mxu0 %v1932
  %2034 = vmatpush.msra.mxu0 %v1928
  %2035 = vmatpush.msra.mxu0 %v1924
  %2036 = vmatpush.msra.mxu0 %v1920
  %2037 = vmatpush.msra.mxu0 %v1916
  %2038 = vmatpush.msra.mxu0 %v1912
  %2039 = vmatpush.msra.mxu0 %v1908
  %2040 = vmatpush.msra.mxu0 %v1904
  %2041 = vmatmul.f32.gmra.mxu0 %v1900
  %v2042 = vpop.f32.mrf.mxu0
  %v2043 = vadd.f32 0.0, %v2042
  %2044 = vdwg.mxu0
  %v2049 = vrot.slane %v2003, 6
  %v2050 = vrot.slane %v2023, 4
  %v2051 = vrot.slane %v2043, 2
  %v2052 = vsel %vm180, %v1983, %v2049
  %v2053 = vsel %vm182, %v2050, %v2051
  %v2054 = vsel %vm184, %v2052, %v2053
  %v2056 = vadd.f32 %v1899, %v2054
  %v2057 = vxor.u32 %v2056, 2147483648
  %v2058 = vmul.f32 %v2057, 1.442695
  %v2059 = vpow.pop %v2058
  %v2060 = vadd.f32 %v2059, 1.0
  %v2061 = vrcp.pop %v2060
  %v2062 = vmul.f32 %v2060, %v2061
  %v2063 = vsub.f32 1.0, %v2062
  %v2064 = vmul.f32 %v2061, %v2063
  %v2065 = vadd.f32 %v2061, %v2064
  %vm2066 = vweird.f32 %v2060
  %vm2067 = vweird.f32 %v2061
  %vm2068 = vmor %vm2066, %vm2067
  %v2069 = vsel %vm2068, %v2061, %v2065
  %v2070 = vand.u32 2147483647, %v2060
  %vm2071 = vcmp.eq.f32.partialorder %v2070, 8.507059e+37
  %v2072 = vand.u32 %v2060, 2147483648
  %v2073 = vor.u32 1.1754944e-38, %v2072
  %v2074 = vsel %vm2071, %v2073, %v2069
  %v2075 = vmul.f32 1.0, %v2074
  %v2077 = vrot.slane %v2056, 2
  %v2079 = vxor.u32 %v2077, 2147483648
  %v2080 = vmul.f32 %v2079, 1.442695
  %v2081 = vpow.pop %v2080
  %v2082 = vadd.f32 %v2081, 1.0
  %v2083 = vrcp.pop %v2082
  %v2084 = vmul.f32 %v2082, %v2083
  %v2085 = vsub.f32 1.0, %v2084
  %v2086 = vmul.f32 %v2083, %v2085
  %v2087 = vadd.f32 %v2083, %v2086
  %vm2088 = vweird.f32 %v2082
  %vm2089 = vweird.f32 %v2083
  %vm2090 = vmor %vm2088, %vm2089
  %v2091 = vsel %vm2090, %v2083, %v2087
  %v2092 = vand.u32 2147483647, %v2082
  %vm2093 = vcmp.eq.f32.partialorder %v2092, 8.507059e+37
  %v2094 = vand.u32 %v2082, 2147483648
  %v2095 = vor.u32 1.1754944e-38, %v2094
  %v2096 = vsel %vm2093, %v2095, %v2091
  %v2097 = vmul.f32 1.0, %v2096
  %v2098 = vrot.slane %v2056, 4
  %v2100 = vtanh.pop %v2098
  %v2101 = vrot.slane %v2056, 6
  %v2103 = vxor.u32 %v2101, 2147483648
  %v2104 = vmul.f32 %v2103, 1.442695
  %v2105 = vpow.pop %v2104
  %v2106 = vadd.f32 %v2105, 1.0
  %v2107 = vrcp.pop %v2106
  %v2108 = vmul.f32 %v2106, %v2107
  %v2109 = vsub.f32 1.0, %v2108
  %v2110 = vmul.f32 %v2107, %v2109
  %v2111 = vadd.f32 %v2107, %v2110
  %vm2112 = vweird.f32 %v2106
  %vm2113 = vweird.f32 %v2107
  %vm2114 = vmor %vm2112, %vm2113
  %v2115 = vsel %vm2114, %v2107, %v2111
  %v2116 = vand.u32 2147483647, %v2106
  %vm2117 = vcmp.eq.f32.partialorder %v2116, 8.507059e+37
  %v2118 = vand.u32 %v2106, 2147483648
  %v2119 = vor.u32 1.1754944e-38, %v2118
  %v2120 = vsel %vm2117, %v2119, %v2115
  %v2121 = vmul.f32 1.0, %v2120
  %v2122 = vld [vmem:[#allocation3] sm:$0x3]
  %v2123 = vmul.f32 %v2097, %v2122
  %v2124 = vmul.f32 %v2075, %v2100
  %v2125 = vadd.f32 %v2123, %v2124
  %v2126 = vtanh.pop %v2125
  %v2127 = vmul.f32 %v2121, %v2126
  %2128 = vst [vmem:[#allocation3] sm:$0x3] %v2125
  %2129 = vst [vmem:[#allocation2] sm:$0x3] %v2127
  %s2130 = scalar_lea.vmem %s4, 8
  %2131 = vst [vmem:[%s2130] sm:$0x3] %v2127
  %s2132 = scalar_lea.vmem %s1, 32
  %v2133 = vld [vmem:[%s2132] sm:$0xff]
  %v2134 = vld [vmem:[#allocation4] sm:$0x3]
  %v2135 = vld [vmem:[%s3] sm:$0xff]
  %v2136 = vld [vmem:[%s3 + $0x8] sm:$0xff]
  %v2137 = vld [vmem:[%s3 + $0x10] sm:$0xff]
  %v2138 = vld [vmem:[%s3 + $0x18] sm:$0xff]
  %v2139 = vld [vmem:[%s3 + $0x20] sm:$0xff]
  %v2140 = vld [vmem:[%s3 + $0x28] sm:$0xff]
  %v2141 = vld [vmem:[%s3 + $0x30] sm:$0xff]
  %v2142 = vld [vmem:[%s3 + $0x38] sm:$0xff]
  %v2143 = vld [vmem:[%s3 + $0x40] sm:$0xff]
  %v2144 = vld [vmem:[%s3 + $0x48] sm:$0xff]
  %v2145 = vld [vmem:[%s3 + $0x50] sm:$0xff]
  %v2146 = vld [vmem:[%s3 + $0x58] sm:$0xff]
  %v2147 = vld [vmem:[%s3 + $0x60] sm:$0xff]
  %v2148 = vld [vmem:[%s3 + $0x68] sm:$0xff]
  %v2149 = vld [vmem:[%s3 + $0x70] sm:$0xff]
  %v2150 = vld [vmem:[%s3 + $0x78] sm:$0xff]
  %v2151 = vld [vmem:[%s3 + $0x80] sm:$0xff]
  %v2152 = vld [vmem:[%s3 + $0x88] sm:$0xff]
  %v2153 = vld [vmem:[%s3 + $0x90] sm:$0xff]
  %v2154 = vld [vmem:[%s3 + $0x98] sm:$0xff]
  %v2155 = vld [vmem:[%s3 + $0xa0] sm:$0xff]
  %v2156 = vld [vmem:[%s3 + $0xa8] sm:$0xff]
  %v2157 = vld [vmem:[%s3 + $0xb0] sm:$0xff]
  %v2158 = vld [vmem:[%s3 + $0xb8] sm:$0xff]
  %v2159 = vld [vmem:[%s3 + $0xc0] sm:$0xff]
  %v2160 = vld [vmem:[%s3 + $0xc8] sm:$0xff]
  %v2161 = vld [vmem:[%s3 + $0xd0] sm:$0xff]
  %v2162 = vld [vmem:[%s3 + $0xd8] sm:$0xff]
  %v2163 = vld [vmem:[%s3 + $0xe0] sm:$0xff]
  %v2164 = vld [vmem:[%s3 + $0xe8] sm:$0xff]
  %v2165 = vld [vmem:[%s3 + $0xf0] sm:$0xff]
  %v2166 = vld [vmem:[%s3 + $0xf8] sm:$0xff]
  %v2167 = vld [vmem:[%s3 + $0x100] sm:$0xff]
  %v2168 = vld [vmem:[%s3 + $0x108] sm:$0xff]
  %v2169 = vld [vmem:[%s3 + $0x110] sm:$0xff]
  %v2170 = vld [vmem:[%s3 + $0x118] sm:$0xff]
  %v2171 = vld [vmem:[%s3 + $0x120] sm:$0xff]
  %v2172 = vld [vmem:[%s3 + $0x128] sm:$0xff]
  %v2173 = vld [vmem:[%s3 + $0x130] sm:$0xff]
  %v2174 = vld [vmem:[%s3 + $0x138] sm:$0xff]
  %v2175 = vld [vmem:[%s3 + $0x140] sm:$0xff]
  %v2176 = vld [vmem:[%s3 + $0x148] sm:$0xff]
  %v2177 = vld [vmem:[%s3 + $0x150] sm:$0xff]
  %v2178 = vld [vmem:[%s3 + $0x158] sm:$0xff]
  %v2179 = vld [vmem:[%s3 + $0x160] sm:$0xff]
  %v2180 = vld [vmem:[%s3 + $0x168] sm:$0xff]
  %v2181 = vld [vmem:[%s3 + $0x170] sm:$0xff]
  %v2182 = vld [vmem:[%s3 + $0x178] sm:$0xff]
  %v2183 = vld [vmem:[%s3 + $0x180] sm:$0xff]
  %v2184 = vld [vmem:[%s3 + $0x188] sm:$0xff]
  %v2185 = vld [vmem:[%s3 + $0x190] sm:$0xff]
  %v2186 = vld [vmem:[%s3 + $0x198] sm:$0xff]
  %v2187 = vld [vmem:[%s3 + $0x1a0] sm:$0xff]
  %v2188 = vld [vmem:[%s3 + $0x1a8] sm:$0xff]
  %v2189 = vld [vmem:[%s3 + $0x1b0] sm:$0xff]
  %v2190 = vld [vmem:[%s3 + $0x1b8] sm:$0xff]
  %v2191 = vld [vmem:[%s3 + $0x1c0] sm:$0xff]
  %v2192 = vld [vmem:[%s3 + $0x1c8] sm:$0xff]
  %v2193 = vld [vmem:[%s3 + $0x1d0] sm:$0xff]
  %v2194 = vld [vmem:[%s3 + $0x1d8] sm:$0xff]
  %v2195 = vld [vmem:[%s3 + $0x1e0] sm:$0xff]
  %v2196 = vld [vmem:[%s3 + $0x1e8] sm:$0xff]
  %v2197 = vld [vmem:[%s3 + $0x1f0] sm:$0xff]
  %v2198 = vld [vmem:[%s3 + $0x1f8] sm:$0xff]
  %2199 = vmatpush.msra.mxu0 %v2195
  %2200 = vmatpush.msra.mxu0 %v2191
  %2201 = vmatpush.msra.mxu0 %v2187
  %2202 = vmatpush.msra.mxu0 %v2183
  %2203 = vmatpush.msra.mxu0 %v2179
  %2204 = vmatpush.msra.mxu0 %v2175
  %2205 = vmatpush.msra.mxu0 %v2171
  %2206 = vmatpush.msra.mxu0 %v2167
  %2207 = vmatpush.msra.mxu0 %v2163
  %2208 = vmatpush.msra.mxu0 %v2159
  %2209 = vmatpush.msra.mxu0 %v2155
  %2210 = vmatpush.msra.mxu0 %v2151
  %2211 = vmatpush.msra.mxu0 %v2147
  %2212 = vmatpush.msra.mxu0 %v2143
  %2213 = vmatpush.msra.mxu0 %v2139
  %2214 = vmatpush.msra.mxu0 %v2135
  %2215 = vmatmul.f32.gmra.mxu0 %v2134
  %v2216 = vpop.f32.mrf.mxu0
  %v2217 = vadd.f32 0.0, %v2216
  %2218 = vdwg.mxu0
  %2219 = vmatpush.msra.mxu0 %v2196
  %2220 = vmatpush.msra.mxu0 %v2192
  %2221 = vmatpush.msra.mxu0 %v2188
  %2222 = vmatpush.msra.mxu0 %v2184
  %2223 = vmatpush.msra.mxu0 %v2180
  %2224 = vmatpush.msra.mxu0 %v2176
  %2225 = vmatpush.msra.mxu0 %v2172
  %2226 = vmatpush.msra.mxu0 %v2168
  %2227 = vmatpush.msra.mxu0 %v2164
  %2228 = vmatpush.msra.mxu0 %v2160
  %2229 = vmatpush.msra.mxu0 %v2156
  %2230 = vmatpush.msra.mxu0 %v2152
  %2231 = vmatpush.msra.mxu0 %v2148
  %2232 = vmatpush.msra.mxu0 %v2144
  %2233 = vmatpush.msra.mxu0 %v2140
  %2234 = vmatpush.msra.mxu0 %v2136
  %2235 = vmatmul.f32.gmra.mxu0 %v2134
  %v2236 = vpop.f32.mrf.mxu0
  %v2237 = vadd.f32 0.0, %v2236
  %2238 = vdwg.mxu0
  %2239 = vmatpush.msra.mxu0 %v2197
  %2240 = vmatpush.msra.mxu0 %v2193
  %2241 = vmatpush.msra.mxu0 %v2189
  %2242 = vmatpush.msra.mxu0 %v2185
  %2243 = vmatpush.msra.mxu0 %v2181
  %2244 = vmatpush.msra.mxu0 %v2177
  %2245 = vmatpush.msra.mxu0 %v2173
  %2246 = vmatpush.msra.mxu0 %v2169
  %2247 = vmatpush.msra.mxu0 %v2165
  %2248 = vmatpush.msra.mxu0 %v2161
  %2249 = vmatpush.msra.mxu0 %v2157
  %2250 = vmatpush.msra.mxu0 %v2153
  %2251 = vmatpush.msra.mxu0 %v2149
  %2252 = vmatpush.msra.mxu0 %v2145
  %2253 = vmatpush.msra.mxu0 %v2141
  %2254 = vmatpush.msra.mxu0 %v2137
  %2255 = vmatmul.f32.gmra.mxu0 %v2134
  %v2256 = vpop.f32.mrf.mxu0
  %v2257 = vadd.f32 0.0, %v2256
  %2258 = vdwg.mxu0
  %2259 = vmatpush.msra.mxu0 %v2198
  %2260 = vmatpush.msra.mxu0 %v2194
  %2261 = vmatpush.msra.mxu0 %v2190
  %2262 = vmatpush.msra.mxu0 %v2186
  %2263 = vmatpush.msra.mxu0 %v2182
  %2264 = vmatpush.msra.mxu0 %v2178
  %2265 = vmatpush.msra.mxu0 %v2174
  %2266 = vmatpush.msra.mxu0 %v2170
  %2267 = vmatpush.msra.mxu0 %v2166
  %2268 = vmatpush.msra.mxu0 %v2162
  %2269 = vmatpush.msra.mxu0 %v2158
  %2270 = vmatpush.msra.mxu0 %v2154
  %2271 = vmatpush.msra.mxu0 %v2150
  %2272 = vmatpush.msra.mxu0 %v2146
  %2273 = vmatpush.msra.mxu0 %v2142
  %2274 = vmatpush.msra.mxu0 %v2138
  %2275 = vmatmul.f32.gmra.mxu0 %v2134
  %v2276 = vpop.f32.mrf.mxu0
  %v2277 = vadd.f32 0.0, %v2276
  %2278 = vdwg.mxu0
  %v2283 = vrot.slane %v2237, 6
  %v2284 = vrot.slane %v2257, 4
  %v2285 = vrot.slane %v2277, 2
  %v2286 = vsel %vm180, %v2217, %v2283
  %v2287 = vsel %vm182, %v2284, %v2285
  %v2288 = vsel %vm184, %v2286, %v2287
  %v2290 = vadd.f32 %v2133, %v2288
  %v2291 = vxor.u32 %v2290, 2147483648
  %v2292 = vmul.f32 %v2291, 1.442695
  %v2293 = vpow.pop %v2292
  %v2294 = vadd.f32 %v2293, 1.0
  %v2295 = vrcp.pop %v2294
  %v2296 = vmul.f32 %v2294, %v2295
  %v2297 = vsub.f32 1.0, %v2296
  %v2298 = vmul.f32 %v2295, %v2297
  %v2299 = vadd.f32 %v2295, %v2298
  %vm2300 = vweird.f32 %v2294
  %vm2301 = vweird.f32 %v2295
  %vm2302 = vmor %vm2300, %vm2301
  %v2303 = vsel %vm2302, %v2295, %v2299
  %v2304 = vand.u32 2147483647, %v2294
  %vm2305 = vcmp.eq.f32.partialorder %v2304, 8.507059e+37
  %v2306 = vand.u32 %v2294, 2147483648
  %v2307 = vor.u32 1.1754944e-38, %v2306
  %v2308 = vsel %vm2305, %v2307, %v2303
  %v2309 = vmul.f32 1.0, %v2308
  %v2311 = vrot.slane %v2290, 2
  %v2313 = vxor.u32 %v2311, 2147483648
  %v2314 = vmul.f32 %v2313, 1.442695
  %v2315 = vpow.pop %v2314
  %v2316 = vadd.f32 %v2315, 1.0
  %v2317 = vrcp.pop %v2316
  %v2318 = vmul.f32 %v2316, %v2317
  %v2319 = vsub.f32 1.0, %v2318
  %v2320 = vmul.f32 %v2317, %v2319
  %v2321 = vadd.f32 %v2317, %v2320
  %vm2322 = vweird.f32 %v2316
  %vm2323 = vweird.f32 %v2317
  %vm2324 = vmor %vm2322, %vm2323
  %v2325 = vsel %vm2324, %v2317, %v2321
  %v2326 = vand.u32 2147483647, %v2316
  %vm2327 = vcmp.eq.f32.partialorder %v2326, 8.507059e+37
  %v2328 = vand.u32 %v2316, 2147483648
  %v2329 = vor.u32 1.1754944e-38, %v2328
  %v2330 = vsel %vm2327, %v2329, %v2325
  %v2331 = vmul.f32 1.0, %v2330
  %v2332 = vrot.slane %v2290, 4
  %v2334 = vtanh.pop %v2332
  %v2335 = vrot.slane %v2290, 6
  %v2337 = vxor.u32 %v2335, 2147483648
  %v2338 = vmul.f32 %v2337, 1.442695
  %v2339 = vpow.pop %v2338
  %v2340 = vadd.f32 %v2339, 1.0
  %v2341 = vrcp.pop %v2340
  %v2342 = vmul.f32 %v2340, %v2341
  %v2343 = vsub.f32 1.0, %v2342
  %v2344 = vmul.f32 %v2341, %v2343
  %v2345 = vadd.f32 %v2341, %v2344
  %vm2346 = vweird.f32 %v2340
  %vm2347 = vweird.f32 %v2341
  %vm2348 = vmor %vm2346, %vm2347
  %v2349 = vsel %vm2348, %v2341, %v2345
  %v2350 = vand.u32 2147483647, %v2340
  %vm2351 = vcmp.eq.f32.partialorder %v2350, 8.507059e+37
  %v2352 = vand.u32 %v2340, 2147483648
  %v2353 = vor.u32 1.1754944e-38, %v2352
  %v2354 = vsel %vm2351, %v2353, %v2349
  %v2355 = vmul.f32 1.0, %v2354
  %v2356 = vld [vmem:[#allocation5] sm:$0x3]
  %v2357 = vmul.f32 %v2331, %v2356
  %v2358 = vmul.f32 %v2309, %v2334
  %v2359 = vadd.f32 %v2357, %v2358
  %v2360 = vtanh.pop %v2359
  %v2361 = vmul.f32 %v2355, %v2360
  %2362 = vst [vmem:[#allocation5] sm:$0x3] %v2359
  %2363 = vst [vmem:[#allocation4] sm:$0x3] %v2361
  %s2364 = scalar_lea.vmem %s5, 8
  %2365 = vst [vmem:[%s2364] sm:$0x3] %v2361
  %s2366 = scalar_lea.vmem %s0, 40
  %v2367 = vld [vmem:[%s2366] sm:$0xff]
  %v2368 = vld [vmem:[#allocation2] sm:$0x3]
  %v2369 = vld [vmem:[%s2] sm:$0xff]
  %v2370 = vld [vmem:[%s2 + $0x8] sm:$0xff]
  %v2371 = vld [vmem:[%s2 + $0x10] sm:$0xff]
  %v2372 = vld [vmem:[%s2 + $0x18] sm:$0xff]
  %v2373 = vld [vmem:[%s2 + $0x20] sm:$0xff]
  %v2374 = vld [vmem:[%s2 + $0x28] sm:$0xff]
  %v2375 = vld [vmem:[%s2 + $0x30] sm:$0xff]
  %v2376 = vld [vmem:[%s2 + $0x38] sm:$0xff]
  %v2377 = vld [vmem:[%s2 + $0x40] sm:$0xff]
  %v2378 = vld [vmem:[%s2 + $0x48] sm:$0xff]
  %v2379 = vld [vmem:[%s2 + $0x50] sm:$0xff]
  %v2380 = vld [vmem:[%s2 + $0x58] sm:$0xff]
  %v2381 = vld [vmem:[%s2 + $0x60] sm:$0xff]
  %v2382 = vld [vmem:[%s2 + $0x68] sm:$0xff]
  %v2383 = vld [vmem:[%s2 + $0x70] sm:$0xff]
  %v2384 = vld [vmem:[%s2 + $0x78] sm:$0xff]
  %v2385 = vld [vmem:[%s2 + $0x80] sm:$0xff]
  %v2386 = vld [vmem:[%s2 + $0x88] sm:$0xff]
  %v2387 = vld [vmem:[%s2 + $0x90] sm:$0xff]
  %v2388 = vld [vmem:[%s2 + $0x98] sm:$0xff]
  %v2389 = vld [vmem:[%s2 + $0xa0] sm:$0xff]
  %v2390 = vld [vmem:[%s2 + $0xa8] sm:$0xff]
  %v2391 = vld [vmem:[%s2 + $0xb0] sm:$0xff]
  %v2392 = vld [vmem:[%s2 + $0xb8] sm:$0xff]
  %v2393 = vld [vmem:[%s2 + $0xc0] sm:$0xff]
  %v2394 = vld [vmem:[%s2 + $0xc8] sm:$0xff]
  %v2395 = vld [vmem:[%s2 + $0xd0] sm:$0xff]
  %v2396 = vld [vmem:[%s2 + $0xd8] sm:$0xff]
  %v2397 = vld [vmem:[%s2 + $0xe0] sm:$0xff]
  %v2398 = vld [vmem:[%s2 + $0xe8] sm:$0xff]
  %v2399 = vld [vmem:[%s2 + $0xf0] sm:$0xff]
  %v2400 = vld [vmem:[%s2 + $0xf8] sm:$0xff]
  %v2401 = vld [vmem:[%s2 + $0x100] sm:$0xff]
  %v2402 = vld [vmem:[%s2 + $0x108] sm:$0xff]
  %v2403 = vld [vmem:[%s2 + $0x110] sm:$0xff]
  %v2404 = vld [vmem:[%s2 + $0x118] sm:$0xff]
  %v2405 = vld [vmem:[%s2 + $0x120] sm:$0xff]
  %v2406 = vld [vmem:[%s2 + $0x128] sm:$0xff]
  %v2407 = vld [vmem:[%s2 + $0x130] sm:$0xff]
  %v2408 = vld [vmem:[%s2 + $0x138] sm:$0xff]
  %v2409 = vld [vmem:[%s2 + $0x140] sm:$0xff]
  %v2410 = vld [vmem:[%s2 + $0x148] sm:$0xff]
  %v2411 = vld [vmem:[%s2 + $0x150] sm:$0xff]
  %v2412 = vld [vmem:[%s2 + $0x158] sm:$0xff]
  %v2413 = vld [vmem:[%s2 + $0x160] sm:$0xff]
  %v2414 = vld [vmem:[%s2 + $0x168] sm:$0xff]
  %v2415 = vld [vmem:[%s2 + $0x170] sm:$0xff]
  %v2416 = vld [vmem:[%s2 + $0x178] sm:$0xff]
  %v2417 = vld [vmem:[%s2 + $0x180] sm:$0xff]
  %v2418 = vld [vmem:[%s2 + $0x188] sm:$0xff]
  %v2419 = vld [vmem:[%s2 + $0x190] sm:$0xff]
  %v2420 = vld [vmem:[%s2 + $0x198] sm:$0xff]
  %v2421 = vld [vmem:[%s2 + $0x1a0] sm:$0xff]
  %v2422 = vld [vmem:[%s2 + $0x1a8] sm:$0xff]
  %v2423 = vld [vmem:[%s2 + $0x1b0] sm:$0xff]
  %v2424 = vld [vmem:[%s2 + $0x1b8] sm:$0xff]
  %v2425 = vld [vmem:[%s2 + $0x1c0] sm:$0xff]
  %v2426 = vld [vmem:[%s2 + $0x1c8] sm:$0xff]
  %v2427 = vld [vmem:[%s2 + $0x1d0] sm:$0xff]
  %v2428 = vld [vmem:[%s2 + $0x1d8] sm:$0xff]
  %v2429 = vld [vmem:[%s2 + $0x1e0] sm:$0xff]
  %v2430 = vld [vmem:[%s2 + $0x1e8] sm:$0xff]
  %v2431 = vld [vmem:[%s2 + $0x1f0] sm:$0xff]
  %v2432 = vld [vmem:[%s2 + $0x1f8] sm:$0xff]
  %2433 = vmatpush.msra.mxu0 %v2429
  %2434 = vmatpush.msra.mxu0 %v2425
  %2435 = vmatpush.msra.mxu0 %v2421
  %2436 = vmatpush.msra.mxu0 %v2417
  %2437 = vmatpush.msra.mxu0 %v2413
  %2438 = vmatpush.msra.mxu0 %v2409
  %2439 = vmatpush.msra.mxu0 %v2405
  %2440 = vmatpush.msra.mxu0 %v2401
  %2441 = vmatpush.msra.mxu0 %v2397
  %2442 = vmatpush.msra.mxu0 %v2393
  %2443 = vmatpush.msra.mxu0 %v2389
  %2444 = vmatpush.msra.mxu0 %v2385
  %2445 = vmatpush.msra.mxu0 %v2381
  %2446 = vmatpush.msra.mxu0 %v2377
  %2447 = vmatpush.msra.mxu0 %v2373
  %2448 = vmatpush.msra.mxu0 %v2369
  %2449 = vmatmul.f32.gmra.mxu0 %v2368
  %v2450 = vpop.f32.mrf.mxu0
  %v2451 = vadd.f32 0.0, %v2450
  %2452 = vdwg.mxu0
  %2453 = vmatpush.msra.mxu0 %v2430
  %2454 = vmatpush.msra.mxu0 %v2426
  %2455 = vmatpush.msra.mxu0 %v2422
  %2456 = vmatpush.msra.mxu0 %v2418
  %2457 = vmatpush.msra.mxu0 %v2414
  %2458 = vmatpush.msra.mxu0 %v2410
  %2459 = vmatpush.msra.mxu0 %v2406
  %2460 = vmatpush.msra.mxu0 %v2402
  %2461 = vmatpush.msra.mxu0 %v2398
  %2462 = vmatpush.msra.mxu0 %v2394
  %2463 = vmatpush.msra.mxu0 %v2390
  %2464 = vmatpush.msra.mxu0 %v2386
  %2465 = vmatpush.msra.mxu0 %v2382
  %2466 = vmatpush.msra.mxu0 %v2378
  %2467 = vmatpush.msra.mxu0 %v2374
  %2468 = vmatpush.msra.mxu0 %v2370
  %2469 = vmatmul.f32.gmra.mxu0 %v2368
  %v2470 = vpop.f32.mrf.mxu0
  %v2471 = vadd.f32 0.0, %v2470
  %2472 = vdwg.mxu0
  %2473 = vmatpush.msra.mxu0 %v2431
  %2474 = vmatpush.msra.mxu0 %v2427
  %2475 = vmatpush.msra.mxu0 %v2423
  %2476 = vmatpush.msra.mxu0 %v2419
  %2477 = vmatpush.msra.mxu0 %v2415
  %2478 = vmatpush.msra.mxu0 %v2411
  %2479 = vmatpush.msra.mxu0 %v2407
  %2480 = vmatpush.msra.mxu0 %v2403
  %2481 = vmatpush.msra.mxu0 %v2399
  %2482 = vmatpush.msra.mxu0 %v2395
  %2483 = vmatpush.msra.mxu0 %v2391
  %2484 = vmatpush.msra.mxu0 %v2387
  %2485 = vmatpush.msra.mxu0 %v2383
  %2486 = vmatpush.msra.mxu0 %v2379
  %2487 = vmatpush.msra.mxu0 %v2375
  %2488 = vmatpush.msra.mxu0 %v2371
  %2489 = vmatmul.f32.gmra.mxu0 %v2368
  %v2490 = vpop.f32.mrf.mxu0
  %v2491 = vadd.f32 0.0, %v2490
  %2492 = vdwg.mxu0
  %2493 = vmatpush.msra.mxu0 %v2432
  %2494 = vmatpush.msra.mxu0 %v2428
  %2495 = vmatpush.msra.mxu0 %v2424
  %2496 = vmatpush.msra.mxu0 %v2420
  %2497 = vmatpush.msra.mxu0 %v2416
  %2498 = vmatpush.msra.mxu0 %v2412
  %2499 = vmatpush.msra.mxu0 %v2408
  %2500 = vmatpush.msra.mxu0 %v2404
  %2501 = vmatpush.msra.mxu0 %v2400
  %2502 = vmatpush.msra.mxu0 %v2396
  %2503 = vmatpush.msra.mxu0 %v2392
  %2504 = vmatpush.msra.mxu0 %v2388
  %2505 = vmatpush.msra.mxu0 %v2384
  %2506 = vmatpush.msra.mxu0 %v2380
  %2507 = vmatpush.msra.mxu0 %v2376
  %2508 = vmatpush.msra.mxu0 %v2372
  %2509 = vmatmul.f32.gmra.mxu0 %v2368
  %v2510 = vpop.f32.mrf.mxu0
  %v2511 = vadd.f32 0.0, %v2510
  %2512 = vdwg.mxu0
  %v2517 = vrot.slane %v2471, 6
  %v2518 = vrot.slane %v2491, 4
  %v2519 = vrot.slane %v2511, 2
  %v2520 = vsel %vm180, %v2451, %v2517
  %v2521 = vsel %vm182, %v2518, %v2519
  %v2522 = vsel %vm184, %v2520, %v2521
  %v2524 = vadd.f32 %v2367, %v2522
  %v2525 = vxor.u32 %v2524, 2147483648
  %v2526 = vmul.f32 %v2525, 1.442695
  %v2527 = vpow.pop %v2526
  %v2528 = vadd.f32 %v2527, 1.0
  %v2529 = vrcp.pop %v2528
  %v2530 = vmul.f32 %v2528, %v2529
  %v2531 = vsub.f32 1.0, %v2530
  %v2532 = vmul.f32 %v2529, %v2531
  %v2533 = vadd.f32 %v2529, %v2532
  %vm2534 = vweird.f32 %v2528
  %vm2535 = vweird.f32 %v2529
  %vm2536 = vmor %vm2534, %vm2535
  %v2537 = vsel %vm2536, %v2529, %v2533
  %v2538 = vand.u32 2147483647, %v2528
  %vm2539 = vcmp.eq.f32.partialorder %v2538, 8.507059e+37
  %v2540 = vand.u32 %v2528, 2147483648
  %v2541 = vor.u32 1.1754944e-38, %v2540
  %v2542 = vsel %vm2539, %v2541, %v2537
  %v2543 = vmul.f32 1.0, %v2542
  %v2545 = vrot.slane %v2524, 2
  %v2547 = vxor.u32 %v2545, 2147483648
  %v2548 = vmul.f32 %v2547, 1.442695
  %v2549 = vpow.pop %v2548
  %v2550 = vadd.f32 %v2549, 1.0
  %v2551 = vrcp.pop %v2550
  %v2552 = vmul.f32 %v2550, %v2551
  %v2553 = vsub.f32 1.0, %v2552
  %v2554 = vmul.f32 %v2551, %v2553
  %v2555 = vadd.f32 %v2551, %v2554
  %vm2556 = vweird.f32 %v2550
  %vm2557 = vweird.f32 %v2551
  %vm2558 = vmor %vm2556, %vm2557
  %v2559 = vsel %vm2558, %v2551, %v2555
  %v2560 = vand.u32 2147483647, %v2550
  %vm2561 = vcmp.eq.f32.partialorder %v2560, 8.507059e+37
  %v2562 = vand.u32 %v2550, 2147483648
  %v2563 = vor.u32 1.1754944e-38, %v2562
  %v2564 = vsel %vm2561, %v2563, %v2559
  %v2565 = vmul.f32 1.0, %v2564
  %v2566 = vrot.slane %v2524, 4
  %v2568 = vtanh.pop %v2566
  %v2569 = vrot.slane %v2524, 6
  %v2571 = vxor.u32 %v2569, 2147483648
  %v2572 = vmul.f32 %v2571, 1.442695
  %v2573 = vpow.pop %v2572
  %v2574 = vadd.f32 %v2573, 1.0
  %v2575 = vrcp.pop %v2574
  %v2576 = vmul.f32 %v2574, %v2575
  %v2577 = vsub.f32 1.0, %v2576
  %v2578 = vmul.f32 %v2575, %v2577
  %v2579 = vadd.f32 %v2575, %v2578
  %vm2580 = vweird.f32 %v2574
  %vm2581 = vweird.f32 %v2575
  %vm2582 = vmor %vm2580, %vm2581
  %v2583 = vsel %vm2582, %v2575, %v2579
  %v2584 = vand.u32 2147483647, %v2574
  %vm2585 = vcmp.eq.f32.partialorder %v2584, 8.507059e+37
  %v2586 = vand.u32 %v2574, 2147483648
  %v2587 = vor.u32 1.1754944e-38, %v2586
  %v2588 = vsel %vm2585, %v2587, %v2583
  %v2589 = vmul.f32 1.0, %v2588
  %v2590 = vld [vmem:[#allocation3] sm:$0x3]
  %v2591 = vmul.f32 %v2565, %v2590
  %v2592 = vmul.f32 %v2543, %v2568
  %v2593 = vadd.f32 %v2591, %v2592
  %v2594 = vtanh.pop %v2593
  %v2595 = vmul.f32 %v2589, %v2594
  %2596 = vst [vmem:[#allocation3] sm:$0x3] %v2593
  %2597 = vst [vmem:[#allocation2] sm:$0x3] %v2595
  %s2598 = scalar_lea.vmem %s4, 10
  %2599 = vst [vmem:[%s2598] sm:$0x3] %v2595
  %s2600 = scalar_lea.vmem %s1, 40
  %v2601 = vld [vmem:[%s2600] sm:$0xff]
  %v2602 = vld [vmem:[#allocation4] sm:$0x3]
  %v2603 = vld [vmem:[%s3] sm:$0xff]
  %v2604 = vld [vmem:[%s3 + $0x8] sm:$0xff]
  %v2605 = vld [vmem:[%s3 + $0x10] sm:$0xff]
  %v2606 = vld [vmem:[%s3 + $0x18] sm:$0xff]
  %v2607 = vld [vmem:[%s3 + $0x20] sm:$0xff]
  %v2608 = vld [vmem:[%s3 + $0x28] sm:$0xff]
  %v2609 = vld [vmem:[%s3 + $0x30] sm:$0xff]
  %v2610 = vld [vmem:[%s3 + $0x38] sm:$0xff]
  %v2611 = vld [vmem:[%s3 + $0x40] sm:$0xff]
  %v2612 = vld [vmem:[%s3 + $0x48] sm:$0xff]
  %v2613 = vld [vmem:[%s3 + $0x50] sm:$0xff]
  %v2614 = vld [vmem:[%s3 + $0x58] sm:$0xff]
  %v2615 = vld [vmem:[%s3 + $0x60] sm:$0xff]
  %v2616 = vld [vmem:[%s3 + $0x68] sm:$0xff]
  %v2617 = vld [vmem:[%s3 + $0x70] sm:$0xff]
  %v2618 = vld [vmem:[%s3 + $0x78] sm:$0xff]
  %v2619 = vld [vmem:[%s3 + $0x80] sm:$0xff]
  %v2620 = vld [vmem:[%s3 + $0x88] sm:$0xff]
  %v2621 = vld [vmem:[%s3 + $0x90] sm:$0xff]
  %v2622 = vld [vmem:[%s3 + $0x98] sm:$0xff]
  %v2623 = vld [vmem:[%s3 + $0xa0] sm:$0xff]
  %v2624 = vld [vmem:[%s3 + $0xa8] sm:$0xff]
  %v2625 = vld [vmem:[%s3 + $0xb0] sm:$0xff]
  %v2626 = vld [vmem:[%s3 + $0xb8] sm:$0xff]
  %v2627 = vld [vmem:[%s3 + $0xc0] sm:$0xff]
  %v2628 = vld [vmem:[%s3 + $0xc8] sm:$0xff]
  %v2629 = vld [vmem:[%s3 + $0xd0] sm:$0xff]
  %v2630 = vld [vmem:[%s3 + $0xd8] sm:$0xff]
  %v2631 = vld [vmem:[%s3 + $0xe0] sm:$0xff]
  %v2632 = vld [vmem:[%s3 + $0xe8] sm:$0xff]
  %v2633 = vld [vmem:[%s3 + $0xf0] sm:$0xff]
  %v2634 = vld [vmem:[%s3 + $0xf8] sm:$0xff]
  %v2635 = vld [vmem:[%s3 + $0x100] sm:$0xff]
  %v2636 = vld [vmem:[%s3 + $0x108] sm:$0xff]
  %v2637 = vld [vmem:[%s3 + $0x110] sm:$0xff]
  %v2638 = vld [vmem:[%s3 + $0x118] sm:$0xff]
  %v2639 = vld [vmem:[%s3 + $0x120] sm:$0xff]
  %v2640 = vld [vmem:[%s3 + $0x128] sm:$0xff]
  %v2641 = vld [vmem:[%s3 + $0x130] sm:$0xff]
  %v2642 = vld [vmem:[%s3 + $0x138] sm:$0xff]
  %v2643 = vld [vmem:[%s3 + $0x140] sm:$0xff]
  %v2644 = vld [vmem:[%s3 + $0x148] sm:$0xff]
  %v2645 = vld [vmem:[%s3 + $0x150] sm:$0xff]
  %v2646 = vld [vmem:[%s3 + $0x158] sm:$0xff]
  %v2647 = vld [vmem:[%s3 + $0x160] sm:$0xff]
  %v2648 = vld [vmem:[%s3 + $0x168] sm:$0xff]
  %v2649 = vld [vmem:[%s3 + $0x170] sm:$0xff]
  %v2650 = vld [vmem:[%s3 + $0x178] sm:$0xff]
  %v2651 = vld [vmem:[%s3 + $0x180] sm:$0xff]
  %v2652 = vld [vmem:[%s3 + $0x188] sm:$0xff]
  %v2653 = vld [vmem:[%s3 + $0x190] sm:$0xff]
  %v2654 = vld [vmem:[%s3 + $0x198] sm:$0xff]
  %v2655 = vld [vmem:[%s3 + $0x1a0] sm:$0xff]
  %v2656 = vld [vmem:[%s3 + $0x1a8] sm:$0xff]
  %v2657 = vld [vmem:[%s3 + $0x1b0] sm:$0xff]
  %v2658 = vld [vmem:[%s3 + $0x1b8] sm:$0xff]
  %v2659 = vld [vmem:[%s3 + $0x1c0] sm:$0xff]
  %v2660 = vld [vmem:[%s3 + $0x1c8] sm:$0xff]
  %v2661 = vld [vmem:[%s3 + $0x1d0] sm:$0xff]
  %v2662 = vld [vmem:[%s3 + $0x1d8] sm:$0xff]
  %v2663 = vld [vmem:[%s3 + $0x1e0] sm:$0xff]
  %v2664 = vld [vmem:[%s3 + $0x1e8] sm:$0xff]
  %v2665 = vld [vmem:[%s3 + $0x1f0] sm:$0xff]
  %v2666 = vld [vmem:[%s3 + $0x1f8] sm:$0xff]
  %2667 = vmatpush.msra.mxu0 %v2663
  %2668 = vmatpush.msra.mxu0 %v2659
  %2669 = vmatpush.msra.mxu0 %v2655
  %2670 = vmatpush.msra.mxu0 %v2651
  %2671 = vmatpush.msra.mxu0 %v2647
  %2672 = vmatpush.msra.mxu0 %v2643
  %2673 = vmatpush.msra.mxu0 %v2639
  %2674 = vmatpush.msra.mxu0 %v2635
  %2675 = vmatpush.msra.mxu0 %v2631
  %2676 = vmatpush.msra.mxu0 %v2627
  %2677 = vmatpush.msra.mxu0 %v2623
  %2678 = vmatpush.msra.mxu0 %v2619
  %2679 = vmatpush.msra.mxu0 %v2615
  %2680 = vmatpush.msra.mxu0 %v2611
  %2681 = vmatpush.msra.mxu0 %v2607
  %2682 = vmatpush.msra.mxu0 %v2603
  %2683 = vmatmul.f32.gmra.mxu0 %v2602
  %v2684 = vpop.f32.mrf.mxu0
  %v2685 = vadd.f32 0.0, %v2684
  %2686 = vdwg.mxu0
  %2687 = vmatpush.msra.mxu0 %v2664
  %2688 = vmatpush.msra.mxu0 %v2660
  %2689 = vmatpush.msra.mxu0 %v2656
  %2690 = vmatpush.msra.mxu0 %v2652
  %2691 = vmatpush.msra.mxu0 %v2648
  %2692 = vmatpush.msra.mxu0 %v2644
  %2693 = vmatpush.msra.mxu0 %v2640
  %2694 = vmatpush.msra.mxu0 %v2636
  %2695 = vmatpush.msra.mxu0 %v2632
  %2696 = vmatpush.msra.mxu0 %v2628
  %2697 = vmatpush.msra.mxu0 %v2624
  %2698 = vmatpush.msra.mxu0 %v2620
  %2699 = vmatpush.msra.mxu0 %v2616
  %2700 = vmatpush.msra.mxu0 %v2612
  %2701 = vmatpush.msra.mxu0 %v2608
  %2702 = vmatpush.msra.mxu0 %v2604
  %2703 = vmatmul.f32.gmra.mxu0 %v2602
  %v2704 = vpop.f32.mrf.mxu0
  %v2705 = vadd.f32 0.0, %v2704
  %2706 = vdwg.mxu0
  %2707 = vmatpush.msra.mxu0 %v2665
  %2708 = vmatpush.msra.mxu0 %v2661
  %2709 = vmatpush.msra.mxu0 %v2657
  %2710 = vmatpush.msra.mxu0 %v2653
  %2711 = vmatpush.msra.mxu0 %v2649
  %2712 = vmatpush.msra.mxu0 %v2645
  %2713 = vmatpush.msra.mxu0 %v2641
  %2714 = vmatpush.msra.mxu0 %v2637
  %2715 = vmatpush.msra.mxu0 %v2633
  %2716 = vmatpush.msra.mxu0 %v2629
  %2717 = vmatpush.msra.mxu0 %v2625
  %2718 = vmatpush.msra.mxu0 %v2621
  %2719 = vmatpush.msra.mxu0 %v2617
  %2720 = vmatpush.msra.mxu0 %v2613
  %2721 = vmatpush.msra.mxu0 %v2609
  %2722 = vmatpush.msra.mxu0 %v2605
  %2723 = vmatmul.f32.gmra.mxu0 %v2602
  %v2724 = vpop.f32.mrf.mxu0
  %v2725 = vadd.f32 0.0, %v2724
  %2726 = vdwg.mxu0
  %2727 = vmatpush.msra.mxu0 %v2666
  %2728 = vmatpush.msra.mxu0 %v2662
  %2729 = vmatpush.msra.mxu0 %v2658
  %2730 = vmatpush.msra.mxu0 %v2654
  %2731 = vmatpush.msra.mxu0 %v2650
  %2732 = vmatpush.msra.mxu0 %v2646
  %2733 = vmatpush.msra.mxu0 %v2642
  %2734 = vmatpush.msra.mxu0 %v2638
  %2735 = vmatpush.msra.mxu0 %v2634
  %2736 = vmatpush.msra.mxu0 %v2630
  %2737 = vmatpush.msra.mxu0 %v2626
  %2738 = vmatpush.msra.mxu0 %v2622
  %2739 = vmatpush.msra.mxu0 %v2618
  %2740 = vmatpush.msra.mxu0 %v2614
  %2741 = vmatpush.msra.mxu0 %v2610
  %2742 = vmatpush.msra.mxu0 %v2606
  %2743 = vmatmul.f32.gmra.mxu0 %v2602
  %v2744 = vpop.f32.mrf.mxu0
  %v2745 = vadd.f32 0.0, %v2744
  %2746 = vdwg.mxu0
  %v2751 = vrot.slane %v2705, 6
  %v2752 = vrot.slane %v2725, 4
  %v2753 = vrot.slane %v2745, 2
  %v2754 = vsel %vm180, %v2685, %v2751
  %v2755 = vsel %vm182, %v2752, %v2753
  %v2756 = vsel %vm184, %v2754, %v2755
  %v2758 = vadd.f32 %v2601, %v2756
  %v2759 = vxor.u32 %v2758, 2147483648
  %v2760 = vmul.f32 %v2759, 1.442695
  %v2761 = vpow.pop %v2760
  %v2762 = vadd.f32 %v2761, 1.0
  %v2763 = vrcp.pop %v2762
  %v2764 = vmul.f32 %v2762, %v2763
  %v2765 = vsub.f32 1.0, %v2764
  %v2766 = vmul.f32 %v2763, %v2765
  %v2767 = vadd.f32 %v2763, %v2766
  %vm2768 = vweird.f32 %v2762
  %vm2769 = vweird.f32 %v2763
  %vm2770 = vmor %vm2768, %vm2769
  %v2771 = vsel %vm2770, %v2763, %v2767
  %v2772 = vand.u32 2147483647, %v2762
  %vm2773 = vcmp.eq.f32.partialorder %v2772, 8.507059e+37
  %v2774 = vand.u32 %v2762, 2147483648
  %v2775 = vor.u32 1.1754944e-38, %v2774
  %v2776 = vsel %vm2773, %v2775, %v2771
  %v2777 = vmul.f32 1.0, %v2776
  %v2779 = vrot.slane %v2758, 2
  %v2781 = vxor.u32 %v2779, 2147483648
  %v2782 = vmul.f32 %v2781, 1.442695
  %v2783 = vpow.pop %v2782
  %v2784 = vadd.f32 %v2783, 1.0
  %v2785 = vrcp.pop %v2784
  %v2786 = vmul.f32 %v2784, %v2785
  %v2787 = vsub.f32 1.0, %v2786
  %v2788 = vmul.f32 %v2785, %v2787
  %v2789 = vadd.f32 %v2785, %v2788
  %vm2790 = vweird.f32 %v2784
  %vm2791 = vweird.f32 %v2785
  %vm2792 = vmor %vm2790, %vm2791
  %v2793 = vsel %vm2792, %v2785, %v2789
  %v2794 = vand.u32 2147483647, %v2784
  %vm2795 = vcmp.eq.f32.partialorder %v2794, 8.507059e+37
  %v2796 = vand.u32 %v2784, 2147483648
  %v2797 = vor.u32 1.1754944e-38, %v2796
  %v2798 = vsel %vm2795, %v2797, %v2793
  %v2799 = vmul.f32 1.0, %v2798
  %v2800 = vrot.slane %v2758, 4
  %v2802 = vtanh.pop %v2800
  %v2803 = vrot.slane %v2758, 6
  %v2805 = vxor.u32 %v2803, 2147483648
  %v2806 = vmul.f32 %v2805, 1.442695
  %v2807 = vpow.pop %v2806
  %v2808 = vadd.f32 %v2807, 1.0
  %v2809 = vrcp.pop %v2808
  %v2810 = vmul.f32 %v2808, %v2809
  %v2811 = vsub.f32 1.0, %v2810
  %v2812 = vmul.f32 %v2809, %v2811
  %v2813 = vadd.f32 %v2809, %v2812
  %vm2814 = vweird.f32 %v2808
  %vm2815 = vweird.f32 %v2809
  %vm2816 = vmor %vm2814, %vm2815
  %v2817 = vsel %vm2816, %v2809, %v2813
  %v2818 = vand.u32 2147483647, %v2808
  %vm2819 = vcmp.eq.f32.partialorder %v2818, 8.507059e+37
  %v2820 = vand.u32 %v2808, 2147483648
  %v2821 = vor.u32 1.1754944e-38, %v2820
  %v2822 = vsel %vm2819, %v2821, %v2817
  %v2823 = vmul.f32 1.0, %v2822
  %v2824 = vld [vmem:[#allocation5] sm:$0x3]
  %v2825 = vmul.f32 %v2799, %v2824
  %v2826 = vmul.f32 %v2777, %v2802
  %v2827 = vadd.f32 %v2825, %v2826
  %v2828 = vtanh.pop %v2827
  %v2829 = vmul.f32 %v2823, %v2828
  %2830 = vst [vmem:[#allocation5] sm:$0x3] %v2827
  %2831 = vst [vmem:[#allocation4] sm:$0x3] %v2829
  %s2832 = scalar_lea.vmem %s5, 10
  %2833 = vst [vmem:[%s2832] sm:$0x3] %v2829
  %s2834 = scalar_lea.vmem %s0, 48
  %v2835 = vld [vmem:[%s2834] sm:$0xff]
  %v2836 = vld [vmem:[#allocation2] sm:$0x3]
  %v2837 = vld [vmem:[%s2] sm:$0xff]
  %v2838 = vld [vmem:[%s2 + $0x8] sm:$0xff]
  %v2839 = vld [vmem:[%s2 + $0x10] sm:$0xff]
  %v2840 = vld [vmem:[%s2 + $0x18] sm:$0xff]
  %v2841 = vld [vmem:[%s2 + $0x20] sm:$0xff]
  %v2842 = vld [vmem:[%s2 + $0x28] sm:$0xff]
  %v2843 = vld [vmem:[%s2 + $0x30] sm:$0xff]
  %v2844 = vld [vmem:[%s2 + $0x38] sm:$0xff]
  %v2845 = vld [vmem:[%s2 + $0x40] sm:$0xff]
  %v2846 = vld [vmem:[%s2 + $0x48] sm:$0xff]
  %v2847 = vld [vmem:[%s2 + $0x50] sm:$0xff]
  %v2848 = vld [vmem:[%s2 + $0x58] sm:$0xff]
  %v2849 = vld [vmem:[%s2 + $0x60] sm:$0xff]
  %v2850 = vld [vmem:[%s2 + $0x68] sm:$0xff]
  %v2851 = vld [vmem:[%s2 + $0x70] sm:$0xff]
  %v2852 = vld [vmem:[%s2 + $0x78] sm:$0xff]
  %v2853 = vld [vmem:[%s2 + $0x80] sm:$0xff]
  %v2854 = vld [vmem:[%s2 + $0x88] sm:$0xff]
  %v2855 = vld [vmem:[%s2 + $0x90] sm:$0xff]
  %v2856 = vld [vmem:[%s2 + $0x98] sm:$0xff]
  %v2857 = vld [vmem:[%s2 + $0xa0] sm:$0xff]
  %v2858 = vld [vmem:[%s2 + $0xa8] sm:$0xff]
  %v2859 = vld [vmem:[%s2 + $0xb0] sm:$0xff]
  %v2860 = vld [vmem:[%s2 + $0xb8] sm:$0xff]
  %v2861 = vld [vmem:[%s2 + $0xc0] sm:$0xff]
  %v2862 = vld [vmem:[%s2 + $0xc8] sm:$0xff]
  %v2863 = vld [vmem:[%s2 + $0xd0] sm:$0xff]
  %v2864 = vld [vmem:[%s2 + $0xd8] sm:$0xff]
  %v2865 = vld [vmem:[%s2 + $0xe0] sm:$0xff]
  %v2866 = vld [vmem:[%s2 + $0xe8] sm:$0xff]
  %v2867 = vld [vmem:[%s2 + $0xf0] sm:$0xff]
  %v2868 = vld [vmem:[%s2 + $0xf8] sm:$0xff]
  %v2869 = vld [vmem:[%s2 + $0x100] sm:$0xff]
  %v2870 = vld [vmem:[%s2 + $0x108] sm:$0xff]
  %v2871 = vld [vmem:[%s2 + $0x110] sm:$0xff]
  %v2872 = vld [vmem:[%s2 + $0x118] sm:$0xff]
  %v2873 = vld [vmem:[%s2 + $0x120] sm:$0xff]
  %v2874 = vld [vmem:[%s2 + $0x128] sm:$0xff]
  %v2875 = vld [vmem:[%s2 + $0x130] sm:$0xff]
  %v2876 = vld [vmem:[%s2 + $0x138] sm:$0xff]
  %v2877 = vld [vmem:[%s2 + $0x140] sm:$0xff]
  %v2878 = vld [vmem:[%s2 + $0x148] sm:$0xff]
  %v2879 = vld [vmem:[%s2 + $0x150] sm:$0xff]
  %v2880 = vld [vmem:[%s2 + $0x158] sm:$0xff]
  %v2881 = vld [vmem:[%s2 + $0x160] sm:$0xff]
  %v2882 = vld [vmem:[%s2 + $0x168] sm:$0xff]
  %v2883 = vld [vmem:[%s2 + $0x170] sm:$0xff]
  %v2884 = vld [vmem:[%s2 + $0x178] sm:$0xff]
  %v2885 = vld [vmem:[%s2 + $0x180] sm:$0xff]
  %v2886 = vld [vmem:[%s2 + $0x188] sm:$0xff]
  %v2887 = vld [vmem:[%s2 + $0x190] sm:$0xff]
  %v2888 = vld [vmem:[%s2 + $0x198] sm:$0xff]
  %v2889 = vld [vmem:[%s2 + $0x1a0] sm:$0xff]
  %v2890 = vld [vmem:[%s2 + $0x1a8] sm:$0xff]
  %v2891 = vld [vmem:[%s2 + $0x1b0] sm:$0xff]
  %v2892 = vld [vmem:[%s2 + $0x1b8] sm:$0xff]
  %v2893 = vld [vmem:[%s2 + $0x1c0] sm:$0xff]
  %v2894 = vld [vmem:[%s2 + $0x1c8] sm:$0xff]
  %v2895 = vld [vmem:[%s2 + $0x1d0] sm:$0xff]
  %v2896 = vld [vmem:[%s2 + $0x1d8] sm:$0xff]
  %v2897 = vld [vmem:[%s2 + $0x1e0] sm:$0xff]
  %v2898 = vld [vmem:[%s2 + $0x1e8] sm:$0xff]
  %v2899 = vld [vmem:[%s2 + $0x1f0] sm:$0xff]
  %v2900 = vld [vmem:[%s2 + $0x1f8] sm:$0xff]
  %2901 = vmatpush.msra.mxu0 %v2897
  %2902 = vmatpush.msra.mxu0 %v2893
  %2903 = vmatpush.msra.mxu0 %v2889
  %2904 = vmatpush.msra.mxu0 %v2885
  %2905 = vmatpush.msra.mxu0 %v2881
  %2906 = vmatpush.msra.mxu0 %v2877
  %2907 = vmatpush.msra.mxu0 %v2873
  %2908 = vmatpush.msra.mxu0 %v2869
  %2909 = vmatpush.msra.mxu0 %v2865
  %2910 = vmatpush.msra.mxu0 %v2861
  %2911 = vmatpush.msra.mxu0 %v2857
  %2912 = vmatpush.msra.mxu0 %v2853
  %2913 = vmatpush.msra.mxu0 %v2849
  %2914 = vmatpush.msra.mxu0 %v2845
  %2915 = vmatpush.msra.mxu0 %v2841
  %2916 = vmatpush.msra.mxu0 %v2837
  %2917 = vmatmul.f32.gmra.mxu0 %v2836
  %v2918 = vpop.f32.mrf.mxu0
  %v2919 = vadd.f32 0.0, %v2918
  %2920 = vdwg.mxu0
  %2921 = vmatpush.msra.mxu0 %v2898
  %2922 = vmatpush.msra.mxu0 %v2894
  %2923 = vmatpush.msra.mxu0 %v2890
  %2924 = vmatpush.msra.mxu0 %v2886
  %2925 = vmatpush.msra.mxu0 %v2882
  %2926 = vmatpush.msra.mxu0 %v2878
  %2927 = vmatpush.msra.mxu0 %v2874
  %2928 = vmatpush.msra.mxu0 %v2870
  %2929 = vmatpush.msra.mxu0 %v2866
  %2930 = vmatpush.msra.mxu0 %v2862
  %2931 = vmatpush.msra.mxu0 %v2858
  %2932 = vmatpush.msra.mxu0 %v2854
  %2933 = vmatpush.msra.mxu0 %v2850
  %2934 = vmatpush.msra.mxu0 %v2846
  %2935 = vmatpush.msra.mxu0 %v2842
  %2936 = vmatpush.msra.mxu0 %v2838
  %2937 = vmatmul.f32.gmra.mxu0 %v2836
  %v2938 = vpop.f32.mrf.mxu0
  %v2939 = vadd.f32 0.0, %v2938
  %2940 = vdwg.mxu0
  %2941 = vmatpush.msra.mxu0 %v2899
  %2942 = vmatpush.msra.mxu0 %v2895
  %2943 = vmatpush.msra.mxu0 %v2891
  %2944 = vmatpush.msra.mxu0 %v2887
  %2945 = vmatpush.msra.mxu0 %v2883
  %2946 = vmatpush.msra.mxu0 %v2879
  %2947 = vmatpush.msra.mxu0 %v2875
  %2948 = vmatpush.msra.mxu0 %v2871
  %2949 = vmatpush.msra.mxu0 %v2867
  %2950 = vmatpush.msra.mxu0 %v2863
  %2951 = vmatpush.msra.mxu0 %v2859
  %2952 = vmatpush.msra.mxu0 %v2855
  %2953 = vmatpush.msra.mxu0 %v2851
  %2954 = vmatpush.msra.mxu0 %v2847
  %2955 = vmatpush.msra.mxu0 %v2843
  %2956 = vmatpush.msra.mxu0 %v2839
  %2957 = vmatmul.f32.gmra.mxu0 %v2836
  %v2958 = vpop.f32.mrf.mxu0
  %v2959 = vadd.f32 0.0, %v2958
  %2960 = vdwg.mxu0
  %2961 = vmatpush.msra.mxu0 %v2900
  %2962 = vmatpush.msra.mxu0 %v2896
  %2963 = vmatpush.msra.mxu0 %v2892
  %2964 = vmatpush.msra.mxu0 %v2888
  %2965 = vmatpush.msra.mxu0 %v2884
  %2966 = vmatpush.msra.mxu0 %v2880
  %2967 = vmatpush.msra.mxu0 %v2876
  %2968 = vmatpush.msra.mxu0 %v2872
  %2969 = vmatpush.msra.mxu0 %v2868
  %2970 = vmatpush.msra.mxu0 %v2864
  %2971 = vmatpush.msra.mxu0 %v2860
  %2972 = vmatpush.msra.mxu0 %v2856
  %2973 = vmatpush.msra.mxu0 %v2852
  %2974 = vmatpush.msra.mxu0 %v2848
  %2975 = vmatpush.msra.mxu0 %v2844
  %2976 = vmatpush.msra.mxu0 %v2840
  %2977 = vmatmul.f32.gmra.mxu0 %v2836
  %v2978 = vpop.f32.mrf.mxu0
  %v2979 = vadd.f32 0.0, %v2978
  %2980 = vdwg.mxu0
  %v2985 = vrot.slane %v2939, 6
  %v2986 = vrot.slane %v2959, 4
  %v2987 = vrot.slane %v2979, 2
  %v2988 = vsel %vm180, %v2919, %v2985
  %v2989 = vsel %vm182, %v2986, %v2987
  %v2990 = vsel %vm184, %v2988, %v2989
  %v2992 = vadd.f32 %v2835, %v2990
  %v2993 = vxor.u32 %v2992, 2147483648
  %v2994 = vmul.f32 %v2993, 1.442695
  %v2995 = vpow.pop %v2994
  %v2996 = vadd.f32 %v2995, 1.0
  %v2997 = vrcp.pop %v2996
  %v2998 = vmul.f32 %v2996, %v2997
  %v2999 = vsub.f32 1.0, %v2998
  %v3000 = vmul.f32 %v2997, %v2999
  %v3001 = vadd.f32 %v2997, %v3000
  %vm3002 = vweird.f32 %v2996
  %vm3003 = vweird.f32 %v2997
  %vm3004 = vmor %vm3002, %vm3003
  %v3005 = vsel %vm3004, %v2997, %v3001
  %v3006 = vand.u32 2147483647, %v2996
  %vm3007 = vcmp.eq.f32.partialorder %v3006, 8.507059e+37
  %v3008 = vand.u32 %v2996, 2147483648
  %v3009 = vor.u32 1.1754944e-38, %v3008
  %v3010 = vsel %vm3007, %v3009, %v3005
  %v3011 = vmul.f32 1.0, %v3010
  %v3013 = vrot.slane %v2992, 2
  %v3015 = vxor.u32 %v3013, 2147483648
  %v3016 = vmul.f32 %v3015, 1.442695
  %v3017 = vpow.pop %v3016
  %v3018 = vadd.f32 %v3017, 1.0
  %v3019 = vrcp.pop %v3018
  %v3020 = vmul.f32 %v3018, %v3019
  %v3021 = vsub.f32 1.0, %v3020
  %v3022 = vmul.f32 %v3019, %v3021
  %v3023 = vadd.f32 %v3019, %v3022
  %vm3024 = vweird.f32 %v3018
  %vm3025 = vweird.f32 %v3019
  %vm3026 = vmor %vm3024, %vm3025
  %v3027 = vsel %vm3026, %v3019, %v3023
  %v3028 = vand.u32 2147483647, %v3018
  %vm3029 = vcmp.eq.f32.partialorder %v3028, 8.507059e+37
  %v3030 = vand.u32 %v3018, 2147483648
  %v3031 = vor.u32 1.1754944e-38, %v3030
  %v3032 = vsel %vm3029, %v3031, %v3027
  %v3033 = vmul.f32 1.0, %v3032
  %v3034 = vrot.slane %v2992, 4
  %v3036 = vtanh.pop %v3034
  %v3037 = vrot.slane %v2992, 6
  %v3039 = vxor.u32 %v3037, 2147483648
  %v3040 = vmul.f32 %v3039, 1.442695
  %v3041 = vpow.pop %v3040
  %v3042 = vadd.f32 %v3041, 1.0
  %v3043 = vrcp.pop %v3042
  %v3044 = vmul.f32 %v3042, %v3043
  %v3045 = vsub.f32 1.0, %v3044
  %v3046 = vmul.f32 %v3043, %v3045
  %v3047 = vadd.f32 %v3043, %v3046
  %vm3048 = vweird.f32 %v3042
  %vm3049 = vweird.f32 %v3043
  %vm3050 = vmor %vm3048, %vm3049
  %v3051 = vsel %vm3050, %v3043, %v3047
  %v3052 = vand.u32 2147483647, %v3042
  %vm3053 = vcmp.eq.f32.partialorder %v3052, 8.507059e+37
  %v3054 = vand.u32 %v3042, 2147483648
  %v3055 = vor.u32 1.1754944e-38, %v3054
  %v3056 = vsel %vm3053, %v3055, %v3051
  %v3057 = vmul.f32 1.0, %v3056
  %v3058 = vld [vmem:[#allocation3] sm:$0x3]
  %v3059 = vmul.f32 %v3033, %v3058
  %v3060 = vmul.f32 %v3011, %v3036
  %v3061 = vadd.f32 %v3059, %v3060
  %v3062 = vtanh.pop %v3061
  %v3063 = vmul.f32 %v3057, %v3062
  %3064 = vst [vmem:[#allocation3] sm:$0x3] %v3061
  %3065 = vst [vmem:[#allocation2] sm:$0x3] %v3063
  %s3066 = scalar_lea.vmem %s4, 12
  %3067 = vst [vmem:[%s3066] sm:$0x3] %v3063
  %s3068 = scalar_lea.vmem %s1, 48
  %v3069 = vld [vmem:[%s3068] sm:$0xff]
  %v3070 = vld [vmem:[#allocation4] sm:$0x3]
  %v3071 = vld [vmem:[%s3] sm:$0xff]
  %v3072 = vld [vmem:[%s3 + $0x8] sm:$0xff]
  %v3073 = vld [vmem:[%s3 + $0x10] sm:$0xff]
  %v3074 = vld [vmem:[%s3 + $0x18] sm:$0xff]
  %v3075 = vld [vmem:[%s3 + $0x20] sm:$0xff]
  %v3076 = vld [vmem:[%s3 + $0x28] sm:$0xff]
  %v3077 = vld [vmem:[%s3 + $0x30] sm:$0xff]
  %v3078 = vld [vmem:[%s3 + $0x38] sm:$0xff]
  %v3079 = vld [vmem:[%s3 + $0x40] sm:$0xff]
  %v3080 = vld [vmem:[%s3 + $0x48] sm:$0xff]
  %v3081 = vld [vmem:[%s3 + $0x50] sm:$0xff]
  %v3082 = vld [vmem:[%s3 + $0x58] sm:$0xff]
  %v3083 = vld [vmem:[%s3 + $0x60] sm:$0xff]
  %v3084 = vld [vmem:[%s3 + $0x68] sm:$0xff]
  %v3085 = vld [vmem:[%s3 + $0x70] sm:$0xff]
  %v3086 = vld [vmem:[%s3 + $0x78] sm:$0xff]
  %v3087 = vld [vmem:[%s3 + $0x80] sm:$0xff]
  %v3088 = vld [vmem:[%s3 + $0x88] sm:$0xff]
  %v3089 = vld [vmem:[%s3 + $0x90] sm:$0xff]
  %v3090 = vld [vmem:[%s3 + $0x98] sm:$0xff]
  %v3091 = vld [vmem:[%s3 + $0xa0] sm:$0xff]
  %v3092 = vld [vmem:[%s3 + $0xa8] sm:$0xff]
  %v3093 = vld [vmem:[%s3 + $0xb0] sm:$0xff]
  %v3094 = vld [vmem:[%s3 + $0xb8] sm:$0xff]
  %v3095 = vld [vmem:[%s3 + $0xc0] sm:$0xff]
  %v3096 = vld [vmem:[%s3 + $0xc8] sm:$0xff]
  %v3097 = vld [vmem:[%s3 + $0xd0] sm:$0xff]
  %v3098 = vld [vmem:[%s3 + $0xd8] sm:$0xff]
  %v3099 = vld [vmem:[%s3 + $0xe0] sm:$0xff]
  %v3100 = vld [vmem:[%s3 + $0xe8] sm:$0xff]
  %v3101 = vld [vmem:[%s3 + $0xf0] sm:$0xff]
  %v3102 = vld [vmem:[%s3 + $0xf8] sm:$0xff]
  %v3103 = vld [vmem:[%s3 + $0x100] sm:$0xff]
  %v3104 = vld [vmem:[%s3 + $0x108] sm:$0xff]
  %v3105 = vld [vmem:[%s3 + $0x110] sm:$0xff]
  %v3106 = vld [vmem:[%s3 + $0x118] sm:$0xff]
  %v3107 = vld [vmem:[%s3 + $0x120] sm:$0xff]
  %v3108 = vld [vmem:[%s3 + $0x128] sm:$0xff]
  %v3109 = vld [vmem:[%s3 + $0x130] sm:$0xff]
  %v3110 = vld [vmem:[%s3 + $0x138] sm:$0xff]
  %v3111 = vld [vmem:[%s3 + $0x140] sm:$0xff]
  %v3112 = vld [vmem:[%s3 + $0x148] sm:$0xff]
  %v3113 = vld [vmem:[%s3 + $0x150] sm:$0xff]
  %v3114 = vld [vmem:[%s3 + $0x158] sm:$0xff]
  %v3115 = vld [vmem:[%s3 + $0x160] sm:$0xff]
  %v3116 = vld [vmem:[%s3 + $0x168] sm:$0xff]
  %v3117 = vld [vmem:[%s3 + $0x170] sm:$0xff]
  %v3118 = vld [vmem:[%s3 + $0x178] sm:$0xff]
  %v3119 = vld [vmem:[%s3 + $0x180] sm:$0xff]
  %v3120 = vld [vmem:[%s3 + $0x188] sm:$0xff]
  %v3121 = vld [vmem:[%s3 + $0x190] sm:$0xff]
  %v3122 = vld [vmem:[%s3 + $0x198] sm:$0xff]
  %v3123 = vld [vmem:[%s3 + $0x1a0] sm:$0xff]
  %v3124 = vld [vmem:[%s3 + $0x1a8] sm:$0xff]
  %v3125 = vld [vmem:[%s3 + $0x1b0] sm:$0xff]
  %v3126 = vld [vmem:[%s3 + $0x1b8] sm:$0xff]
  %v3127 = vld [vmem:[%s3 + $0x1c0] sm:$0xff]
  %v3128 = vld [vmem:[%s3 + $0x1c8] sm:$0xff]
  %v3129 = vld [vmem:[%s3 + $0x1d0] sm:$0xff]
  %v3130 = vld [vmem:[%s3 + $0x1d8] sm:$0xff]
  %v3131 = vld [vmem:[%s3 + $0x1e0] sm:$0xff]
  %v3132 = vld [vmem:[%s3 + $0x1e8] sm:$0xff]
  %v3133 = vld [vmem:[%s3 + $0x1f0] sm:$0xff]
  %v3134 = vld [vmem:[%s3 + $0x1f8] sm:$0xff]
  %3135 = vmatpush.msra.mxu0 %v3131
  %3136 = vmatpush.msra.mxu0 %v3127
  %3137 = vmatpush.msra.mxu0 %v3123
  %3138 = vmatpush.msra.mxu0 %v3119
  %3139 = vmatpush.msra.mxu0 %v3115
  %3140 = vmatpush.msra.mxu0 %v3111
  %3141 = vmatpush.msra.mxu0 %v3107
  %3142 = vmatpush.msra.mxu0 %v3103
  %3143 = vmatpush.msra.mxu0 %v3099
  %3144 = vmatpush.msra.mxu0 %v3095
  %3145 = vmatpush.msra.mxu0 %v3091
  %3146 = vmatpush.msra.mxu0 %v3087
  %3147 = vmatpush.msra.mxu0 %v3083
  %3148 = vmatpush.msra.mxu0 %v3079
  %3149 = vmatpush.msra.mxu0 %v3075
  %3150 = vmatpush.msra.mxu0 %v3071
  %3151 = vmatmul.f32.gmra.mxu0 %v3070
  %v3152 = vpop.f32.mrf.mxu0
  %v3153 = vadd.f32 0.0, %v3152
  %3154 = vdwg.mxu0
  %3155 = vmatpush.msra.mxu0 %v3132
  %3156 = vmatpush.msra.mxu0 %v3128
  %3157 = vmatpush.msra.mxu0 %v3124
  %3158 = vmatpush.msra.mxu0 %v3120
  %3159 = vmatpush.msra.mxu0 %v3116
  %3160 = vmatpush.msra.mxu0 %v3112
  %3161 = vmatpush.msra.mxu0 %v3108
  %3162 = vmatpush.msra.mxu0 %v3104
  %3163 = vmatpush.msra.mxu0 %v3100
  %3164 = vmatpush.msra.mxu0 %v3096
  %3165 = vmatpush.msra.mxu0 %v3092
  %3166 = vmatpush.msra.mxu0 %v3088
  %3167 = vmatpush.msra.mxu0 %v3084
  %3168 = vmatpush.msra.mxu0 %v3080
  %3169 = vmatpush.msra.mxu0 %v3076
  %3170 = vmatpush.msra.mxu0 %v3072
  %3171 = vmatmul.f32.gmra.mxu0 %v3070
  %v3172 = vpop.f32.mrf.mxu0
  %v3173 = vadd.f32 0.0, %v3172
  %3174 = vdwg.mxu0
  %3175 = vmatpush.msra.mxu0 %v3133
  %3176 = vmatpush.msra.mxu0 %v3129
  %3177 = vmatpush.msra.mxu0 %v3125
  %3178 = vmatpush.msra.mxu0 %v3121
  %3179 = vmatpush.msra.mxu0 %v3117
  %3180 = vmatpush.msra.mxu0 %v3113
  %3181 = vmatpush.msra.mxu0 %v3109
  %3182 = vmatpush.msra.mxu0 %v3105
  %3183 = vmatpush.msra.mxu0 %v3101
  %3184 = vmatpush.msra.mxu0 %v3097
  %3185 = vmatpush.msra.mxu0 %v3093
  %3186 = vmatpush.msra.mxu0 %v3089
  %3187 = vmatpush.msra.mxu0 %v3085
  %3188 = vmatpush.msra.mxu0 %v3081
  %3189 = vmatpush.msra.mxu0 %v3077
  %3190 = vmatpush.msra.mxu0 %v3073
  %3191 = vmatmul.f32.gmra.mxu0 %v3070
  %v3192 = vpop.f32.mrf.mxu0
  %v3193 = vadd.f32 0.0, %v3192
  %3194 = vdwg.mxu0
  %3195 = vmatpush.msra.mxu0 %v3134
  %3196 = vmatpush.msra.mxu0 %v3130
  %3197 = vmatpush.msra.mxu0 %v3126
  %3198 = vmatpush.msra.mxu0 %v3122
  %3199 = vmatpush.msra.mxu0 %v3118
  %3200 = vmatpush.msra.mxu0 %v3114
  %3201 = vmatpush.msra.mxu0 %v3110
  %3202 = vmatpush.msra.mxu0 %v3106
  %3203 = vmatpush.msra.mxu0 %v3102
  %3204 = vmatpush.msra.mxu0 %v3098
  %3205 = vmatpush.msra.mxu0 %v3094
  %3206 = vmatpush.msra.mxu0 %v3090
  %3207 = vmatpush.msra.mxu0 %v3086
  %3208 = vmatpush.msra.mxu0 %v3082
  %3209 = vmatpush.msra.mxu0 %v3078
  %3210 = vmatpush.msra.mxu0 %v3074
  %3211 = vmatmul.f32.gmra.mxu0 %v3070
  %v3212 = vpop.f32.mrf.mxu0
  %v3213 = vadd.f32 0.0, %v3212
  %3214 = vdwg.mxu0
  %v3219 = vrot.slane %v3173, 6
  %v3220 = vrot.slane %v3193, 4
  %v3221 = vrot.slane %v3213, 2
  %v3222 = vsel %vm180, %v3153, %v3219
  %v3223 = vsel %vm182, %v3220, %v3221
  %v3224 = vsel %vm184, %v3222, %v3223
  %v3226 = vadd.f32 %v3069, %v3224
  %v3227 = vxor.u32 %v3226, 2147483648
  %v3228 = vmul.f32 %v3227, 1.442695
  %v3229 = vpow.pop %v3228
  %v3230 = vadd.f32 %v3229, 1.0
  %v3231 = vrcp.pop %v3230
  %v3232 = vmul.f32 %v3230, %v3231
  %v3233 = vsub.f32 1.0, %v3232
  %v3234 = vmul.f32 %v3231, %v3233
  %v3235 = vadd.f32 %v3231, %v3234
  %vm3236 = vweird.f32 %v3230
  %vm3237 = vweird.f32 %v3231
  %vm3238 = vmor %vm3236, %vm3237
  %v3239 = vsel %vm3238, %v3231, %v3235
  %v3240 = vand.u32 2147483647, %v3230
  %vm3241 = vcmp.eq.f32.partialorder %v3240, 8.507059e+37
  %v3242 = vand.u32 %v3230, 2147483648
  %v3243 = vor.u32 1.1754944e-38, %v3242
  %v3244 = vsel %vm3241, %v3243, %v3239
  %v3245 = vmul.f32 1.0, %v3244
  %v3247 = vrot.slane %v3226, 2
  %v3249 = vxor.u32 %v3247, 2147483648
  %v3250 = vmul.f32 %v3249, 1.442695
  %v3251 = vpow.pop %v3250
  %v3252 = vadd.f32 %v3251, 1.0
  %v3253 = vrcp.pop %v3252
  %v3254 = vmul.f32 %v3252, %v3253
  %v3255 = vsub.f32 1.0, %v3254
  %v3256 = vmul.f32 %v3253, %v3255
  %v3257 = vadd.f32 %v3253, %v3256
  %vm3258 = vweird.f32 %v3252
  %vm3259 = vweird.f32 %v3253
  %vm3260 = vmor %vm3258, %vm3259
  %v3261 = vsel %vm3260, %v3253, %v3257
  %v3262 = vand.u32 2147483647, %v3252
  %vm3263 = vcmp.eq.f32.partialorder %v3262, 8.507059e+37
  %v3264 = vand.u32 %v3252, 2147483648
  %v3265 = vor.u32 1.1754944e-38, %v3264
  %v3266 = vsel %vm3263, %v3265, %v3261
  %v3267 = vmul.f32 1.0, %v3266
  %v3268 = vrot.slane %v3226, 4
  %v3270 = vtanh.pop %v3268
  %v3271 = vrot.slane %v3226, 6
  %v3273 = vxor.u32 %v3271, 2147483648
  %v3274 = vmul.f32 %v3273, 1.442695
  %v3275 = vpow.pop %v3274
  %v3276 = vadd.f32 %v3275, 1.0
  %v3277 = vrcp.pop %v3276
  %v3278 = vmul.f32 %v3276, %v3277
  %v3279 = vsub.f32 1.0, %v3278
  %v3280 = vmul.f32 %v3277, %v3279
  %v3281 = vadd.f32 %v3277, %v3280
  %vm3282 = vweird.f32 %v3276
  %vm3283 = vweird.f32 %v3277
  %vm3284 = vmor %vm3282, %vm3283
  %v3285 = vsel %vm3284, %v3277, %v3281
  %v3286 = vand.u32 2147483647, %v3276
  %vm3287 = vcmp.eq.f32.partialorder %v3286, 8.507059e+37
  %v3288 = vand.u32 %v3276, 2147483648
  %v3289 = vor.u32 1.1754944e-38, %v3288
  %v3290 = vsel %vm3287, %v3289, %v3285
  %v3291 = vmul.f32 1.0, %v3290
  %v3292 = vld [vmem:[#allocation5] sm:$0x3]
  %v3293 = vmul.f32 %v3267, %v3292
  %v3294 = vmul.f32 %v3245, %v3270
  %v3295 = vadd.f32 %v3293, %v3294
  %v3296 = vtanh.pop %v3295
  %v3297 = vmul.f32 %v3291, %v3296
  %3298 = vst [vmem:[#allocation5] sm:$0x3] %v3295
  %3299 = vst [vmem:[#allocation4] sm:$0x3] %v3297
  %s3300 = scalar_lea.vmem %s5, 12
  %3301 = vst [vmem:[%s3300] sm:$0x3] %v3297
  %s3302 = scalar_lea.vmem %s0, 56
  %v3303 = vld [vmem:[%s3302] sm:$0xff]
  %v3304 = vld [vmem:[#allocation2] sm:$0x3]
  %v3305 = vld [vmem:[%s2] sm:$0xff]
  %v3306 = vld [vmem:[%s2 + $0x8] sm:$0xff]
  %v3307 = vld [vmem:[%s2 + $0x10] sm:$0xff]
  %v3308 = vld [vmem:[%s2 + $0x18] sm:$0xff]
  %v3309 = vld [vmem:[%s2 + $0x20] sm:$0xff]
  %v3310 = vld [vmem:[%s2 + $0x28] sm:$0xff]
  %v3311 = vld [vmem:[%s2 + $0x30] sm:$0xff]
  %v3312 = vld [vmem:[%s2 + $0x38] sm:$0xff]
  %v3313 = vld [vmem:[%s2 + $0x40] sm:$0xff]
  %v3314 = vld [vmem:[%s2 + $0x48] sm:$0xff]
  %v3315 = vld [vmem:[%s2 + $0x50] sm:$0xff]
  %v3316 = vld [vmem:[%s2 + $0x58] sm:$0xff]
  %v3317 = vld [vmem:[%s2 + $0x60] sm:$0xff]
  %v3318 = vld [vmem:[%s2 + $0x68] sm:$0xff]
  %v3319 = vld [vmem:[%s2 + $0x70] sm:$0xff]
  %v3320 = vld [vmem:[%s2 + $0x78] sm:$0xff]
  %v3321 = vld [vmem:[%s2 + $0x80] sm:$0xff]
  %v3322 = vld [vmem:[%s2 + $0x88] sm:$0xff]
  %v3323 = vld [vmem:[%s2 + $0x90] sm:$0xff]
  %v3324 = vld [vmem:[%s2 + $0x98] sm:$0xff]
  %v3325 = vld [vmem:[%s2 + $0xa0] sm:$0xff]
  %v3326 = vld [vmem:[%s2 + $0xa8] sm:$0xff]
  %v3327 = vld [vmem:[%s2 + $0xb0] sm:$0xff]
  %v3328 = vld [vmem:[%s2 + $0xb8] sm:$0xff]
  %v3329 = vld [vmem:[%s2 + $0xc0] sm:$0xff]
  %v3330 = vld [vmem:[%s2 + $0xc8] sm:$0xff]
  %v3331 = vld [vmem:[%s2 + $0xd0] sm:$0xff]
  %v3332 = vld [vmem:[%s2 + $0xd8] sm:$0xff]
  %v3333 = vld [vmem:[%s2 + $0xe0] sm:$0xff]
  %v3334 = vld [vmem:[%s2 + $0xe8] sm:$0xff]
  %v3335 = vld [vmem:[%s2 + $0xf0] sm:$0xff]
  %v3336 = vld [vmem:[%s2 + $0xf8] sm:$0xff]
  %v3337 = vld [vmem:[%s2 + $0x100] sm:$0xff]
  %v3338 = vld [vmem:[%s2 + $0x108] sm:$0xff]
  %v3339 = vld [vmem:[%s2 + $0x110] sm:$0xff]
  %v3340 = vld [vmem:[%s2 + $0x118] sm:$0xff]
  %v3341 = vld [vmem:[%s2 + $0x120] sm:$0xff]
  %v3342 = vld [vmem:[%s2 + $0x128] sm:$0xff]
  %v3343 = vld [vmem:[%s2 + $0x130] sm:$0xff]
  %v3344 = vld [vmem:[%s2 + $0x138] sm:$0xff]
  %v3345 = vld [vmem:[%s2 + $0x140] sm:$0xff]
  %v3346 = vld [vmem:[%s2 + $0x148] sm:$0xff]
  %v3347 = vld [vmem:[%s2 + $0x150] sm:$0xff]
  %v3348 = vld [vmem:[%s2 + $0x158] sm:$0xff]
  %v3349 = vld [vmem:[%s2 + $0x160] sm:$0xff]
  %v3350 = vld [vmem:[%s2 + $0x168] sm:$0xff]
  %v3351 = vld [vmem:[%s2 + $0x170] sm:$0xff]
  %v3352 = vld [vmem:[%s2 + $0x178] sm:$0xff]
  %v3353 = vld [vmem:[%s2 + $0x180] sm:$0xff]
  %v3354 = vld [vmem:[%s2 + $0x188] sm:$0xff]
  %v3355 = vld [vmem:[%s2 + $0x190] sm:$0xff]
  %v3356 = vld [vmem:[%s2 + $0x198] sm:$0xff]
  %v3357 = vld [vmem:[%s2 + $0x1a0] sm:$0xff]
  %v3358 = vld [vmem:[%s2 + $0x1a8] sm:$0xff]
  %v3359 = vld [vmem:[%s2 + $0x1b0] sm:$0xff]
  %v3360 = vld [vmem:[%s2 + $0x1b8] sm:$0xff]
  %v3361 = vld [vmem:[%s2 + $0x1c0] sm:$0xff]
  %v3362 = vld [vmem:[%s2 + $0x1c8] sm:$0xff]
  %v3363 = vld [vmem:[%s2 + $0x1d0] sm:$0xff]
  %v3364 = vld [vmem:[%s2 + $0x1d8] sm:$0xff]
  %v3365 = vld [vmem:[%s2 + $0x1e0] sm:$0xff]
  %v3366 = vld [vmem:[%s2 + $0x1e8] sm:$0xff]
  %v3367 = vld [vmem:[%s2 + $0x1f0] sm:$0xff]
  %v3368 = vld [vmem:[%s2 + $0x1f8] sm:$0xff]
  %3369 = vmatpush.msra.mxu0 %v3365
  %3370 = vmatpush.msra.mxu0 %v3361
  %3371 = vmatpush.msra.mxu0 %v3357
  %3372 = vmatpush.msra.mxu0 %v3353
  %3373 = vmatpush.msra.mxu0 %v3349
  %3374 = vmatpush.msra.mxu0 %v3345
  %3375 = vmatpush.msra.mxu0 %v3341
  %3376 = vmatpush.msra.mxu0 %v3337
  %3377 = vmatpush.msra.mxu0 %v3333
  %3378 = vmatpush.msra.mxu0 %v3329
  %3379 = vmatpush.msra.mxu0 %v3325
  %3380 = vmatpush.msra.mxu0 %v3321
  %3381 = vmatpush.msra.mxu0 %v3317
  %3382 = vmatpush.msra.mxu0 %v3313
  %3383 = vmatpush.msra.mxu0 %v3309
  %3384 = vmatpush.msra.mxu0 %v3305
  %3385 = vmatmul.f32.gmra.mxu0 %v3304
  %v3386 = vpop.f32.mrf.mxu0
  %v3387 = vadd.f32 0.0, %v3386
  %3388 = vdwg.mxu0
  %3389 = vmatpush.msra.mxu0 %v3366
  %3390 = vmatpush.msra.mxu0 %v3362
  %3391 = vmatpush.msra.mxu0 %v3358
  %3392 = vmatpush.msra.mxu0 %v3354
  %3393 = vmatpush.msra.mxu0 %v3350
  %3394 = vmatpush.msra.mxu0 %v3346
  %3395 = vmatpush.msra.mxu0 %v3342
  %3396 = vmatpush.msra.mxu0 %v3338
  %3397 = vmatpush.msra.mxu0 %v3334
  %3398 = vmatpush.msra.mxu0 %v3330
  %3399 = vmatpush.msra.mxu0 %v3326
  %3400 = vmatpush.msra.mxu0 %v3322
  %3401 = vmatpush.msra.mxu0 %v3318
  %3402 = vmatpush.msra.mxu0 %v3314
  %3403 = vmatpush.msra.mxu0 %v3310
  %3404 = vmatpush.msra.mxu0 %v3306
  %3405 = vmatmul.f32.gmra.mxu0 %v3304
  %v3406 = vpop.f32.mrf.mxu0
  %v3407 = vadd.f32 0.0, %v3406
  %3408 = vdwg.mxu0
  %3409 = vmatpush.msra.mxu0 %v3367
  %3410 = vmatpush.msra.mxu0 %v3363
  %3411 = vmatpush.msra.mxu0 %v3359
  %3412 = vmatpush.msra.mxu0 %v3355
  %3413 = vmatpush.msra.mxu0 %v3351
  %3414 = vmatpush.msra.mxu0 %v3347
  %3415 = vmatpush.msra.mxu0 %v3343
  %3416 = vmatpush.msra.mxu0 %v3339
  %3417 = vmatpush.msra.mxu0 %v3335
  %3418 = vmatpush.msra.mxu0 %v3331
  %3419 = vmatpush.msra.mxu0 %v3327
  %3420 = vmatpush.msra.mxu0 %v3323
  %3421 = vmatpush.msra.mxu0 %v3319
  %3422 = vmatpush.msra.mxu0 %v3315
  %3423 = vmatpush.msra.mxu0 %v3311
  %3424 = vmatpush.msra.mxu0 %v3307
  %3425 = vmatmul.f32.gmra.mxu0 %v3304
  %v3426 = vpop.f32.mrf.mxu0
  %v3427 = vadd.f32 0.0, %v3426
  %3428 = vdwg.mxu0
  %3429 = vmatpush.msra.mxu0 %v3368
  %3430 = vmatpush.msra.mxu0 %v3364
  %3431 = vmatpush.msra.mxu0 %v3360
  %3432 = vmatpush.msra.mxu0 %v3356
  %3433 = vmatpush.msra.mxu0 %v3352
  %3434 = vmatpush.msra.mxu0 %v3348
  %3435 = vmatpush.msra.mxu0 %v3344
  %3436 = vmatpush.msra.mxu0 %v3340
  %3437 = vmatpush.msra.mxu0 %v3336
  %3438 = vmatpush.msra.mxu0 %v3332
  %3439 = vmatpush.msra.mxu0 %v3328
  %3440 = vmatpush.msra.mxu0 %v3324
  %3441 = vmatpush.msra.mxu0 %v3320
  %3442 = vmatpush.msra.mxu0 %v3316
  %3443 = vmatpush.msra.mxu0 %v3312
  %3444 = vmatpush.msra.mxu0 %v3308
  %3445 = vmatmul.f32.gmra.mxu0 %v3304
  %v3446 = vpop.f32.mrf.mxu0
  %v3447 = vadd.f32 0.0, %v3446
  %3448 = vdwg.mxu0
  %v3453 = vrot.slane %v3407, 6
  %v3454 = vrot.slane %v3427, 4
  %v3455 = vrot.slane %v3447, 2
  %v3456 = vsel %vm180, %v3387, %v3453
  %v3457 = vsel %vm182, %v3454, %v3455
  %v3458 = vsel %vm184, %v3456, %v3457
  %v3460 = vadd.f32 %v3303, %v3458
  %v3461 = vxor.u32 %v3460, 2147483648
  %v3462 = vmul.f32 %v3461, 1.442695
  %v3463 = vpow.pop %v3462
  %v3464 = vadd.f32 %v3463, 1.0
  %v3465 = vrcp.pop %v3464
  %v3466 = vmul.f32 %v3464, %v3465
  %v3467 = vsub.f32 1.0, %v3466
  %v3468 = vmul.f32 %v3465, %v3467
  %v3469 = vadd.f32 %v3465, %v3468
  %vm3470 = vweird.f32 %v3464
  %vm3471 = vweird.f32 %v3465
  %vm3472 = vmor %vm3470, %vm3471
  %v3473 = vsel %vm3472, %v3465, %v3469
  %v3474 = vand.u32 2147483647, %v3464
  %vm3475 = vcmp.eq.f32.partialorder %v3474, 8.507059e+37
  %v3476 = vand.u32 %v3464, 2147483648
  %v3477 = vor.u32 1.1754944e-38, %v3476
  %v3478 = vsel %vm3475, %v3477, %v3473
  %v3479 = vmul.f32 1.0, %v3478
  %v3481 = vrot.slane %v3460, 2
  %v3483 = vxor.u32 %v3481, 2147483648
  %v3484 = vmul.f32 %v3483, 1.442695
  %v3485 = vpow.pop %v3484
  %v3486 = vadd.f32 %v3485, 1.0
  %v3487 = vrcp.pop %v3486
  %v3488 = vmul.f32 %v3486, %v3487
  %v3489 = vsub.f32 1.0, %v3488
  %v3490 = vmul.f32 %v3487, %v3489
  %v3491 = vadd.f32 %v3487, %v3490
  %vm3492 = vweird.f32 %v3486
  %vm3493 = vweird.f32 %v3487
  %vm3494 = vmor %vm3492, %vm3493
  %v3495 = vsel %vm3494, %v3487, %v3491
  %v3496 = vand.u32 2147483647, %v3486
  %vm3497 = vcmp.eq.f32.partialorder %v3496, 8.507059e+37
  %v3498 = vand.u32 %v3486, 2147483648
  %v3499 = vor.u32 1.1754944e-38, %v3498
  %v3500 = vsel %vm3497, %v3499, %v3495
  %v3501 = vmul.f32 1.0, %v3500
  %v3502 = vrot.slane %v3460, 4
  %v3504 = vtanh.pop %v3502
  %v3505 = vrot.slane %v3460, 6
  %v3507 = vxor.u32 %v3505, 2147483648
  %v3508 = vmul.f32 %v3507, 1.442695
  %v3509 = vpow.pop %v3508
  %v3510 = vadd.f32 %v3509, 1.0
  %v3511 = vrcp.pop %v3510
  %v3512 = vmul.f32 %v3510, %v3511
  %v3513 = vsub.f32 1.0, %v3512
  %v3514 = vmul.f32 %v3511, %v3513
  %v3515 = vadd.f32 %v3511, %v3514
  %vm3516 = vweird.f32 %v3510
  %vm3517 = vweird.f32 %v3511
  %vm3518 = vmor %vm3516, %vm3517
  %v3519 = vsel %vm3518, %v3511, %v3515
  %v3520 = vand.u32 2147483647, %v3510
  %vm3521 = vcmp.eq.f32.partialorder %v3520, 8.507059e+37
  %v3522 = vand.u32 %v3510, 2147483648
  %v3523 = vor.u32 1.1754944e-38, %v3522
  %v3524 = vsel %vm3521, %v3523, %v3519
  %v3525 = vmul.f32 1.0, %v3524
  %v3526 = vld [vmem:[#allocation3] sm:$0x3]
  %v3527 = vmul.f32 %v3501, %v3526
  %v3528 = vmul.f32 %v3479, %v3504
  %v3529 = vadd.f32 %v3527, %v3528
  %v3530 = vtanh.pop %v3529
  %v3531 = vmul.f32 %v3525, %v3530
  %3532 = vst [vmem:[#allocation3] sm:$0x3] %v3529
  %3533 = vst [vmem:[#allocation2] sm:$0x3] %v3531
  %s3534 = scalar_lea.vmem %s4, 14
  %3535 = vst [vmem:[%s3534] sm:$0x3] %v3531
  %s3536 = scalar_lea.vmem %s1, 56
  %v3537 = vld [vmem:[%s3536] sm:$0xff]
  %v3538 = vld [vmem:[#allocation4] sm:$0x3]
  %v3539 = vld [vmem:[%s3] sm:$0xff]
  %v3540 = vld [vmem:[%s3 + $0x8] sm:$0xff]
  %v3541 = vld [vmem:[%s3 + $0x10] sm:$0xff]
  %v3542 = vld [vmem:[%s3 + $0x18] sm:$0xff]
  %v3543 = vld [vmem:[%s3 + $0x20] sm:$0xff]
  %v3544 = vld [vmem:[%s3 + $0x28] sm:$0xff]
  %v3545 = vld [vmem:[%s3 + $0x30] sm:$0xff]
  %v3546 = vld [vmem:[%s3 + $0x38] sm:$0xff]
  %v3547 = vld [vmem:[%s3 + $0x40] sm:$0xff]
  %v3548 = vld [vmem:[%s3 + $0x48] sm:$0xff]
  %v3549 = vld [vmem:[%s3 + $0x50] sm:$0xff]
  %v3550 = vld [vmem:[%s3 + $0x58] sm:$0xff]
  %v3551 = vld [vmem:[%s3 + $0x60] sm:$0xff]
  %v3552 = vld [vmem:[%s3 + $0x68] sm:$0xff]
  %v3553 = vld [vmem:[%s3 + $0x70] sm:$0xff]
  %v3554 = vld [vmem:[%s3 + $0x78] sm:$0xff]
  %v3555 = vld [vmem:[%s3 + $0x80] sm:$0xff]
  %v3556 = vld [vmem:[%s3 + $0x88] sm:$0xff]
  %v3557 = vld [vmem:[%s3 + $0x90] sm:$0xff]
  %v3558 = vld [vmem:[%s3 + $0x98] sm:$0xff]
  %v3559 = vld [vmem:[%s3 + $0xa0] sm:$0xff]
  %v3560 = vld [vmem:[%s3 + $0xa8] sm:$0xff]
  %v3561 = vld [vmem:[%s3 + $0xb0] sm:$0xff]
  %v3562 = vld [vmem:[%s3 + $0xb8] sm:$0xff]
  %v3563 = vld [vmem:[%s3 + $0xc0] sm:$0xff]
  %v3564 = vld [vmem:[%s3 + $0xc8] sm:$0xff]
  %v3565 = vld [vmem:[%s3 + $0xd0] sm:$0xff]
  %v3566 = vld [vmem:[%s3 + $0xd8] sm:$0xff]
  %v3567 = vld [vmem:[%s3 + $0xe0] sm:$0xff]
  %v3568 = vld [vmem:[%s3 + $0xe8] sm:$0xff]
  %v3569 = vld [vmem:[%s3 + $0xf0] sm:$0xff]
  %v3570 = vld [vmem:[%s3 + $0xf8] sm:$0xff]
  %v3571 = vld [vmem:[%s3 + $0x100] sm:$0xff]
  %v3572 = vld [vmem:[%s3 + $0x108] sm:$0xff]
  %v3573 = vld [vmem:[%s3 + $0x110] sm:$0xff]
  %v3574 = vld [vmem:[%s3 + $0x118] sm:$0xff]
  %v3575 = vld [vmem:[%s3 + $0x120] sm:$0xff]
  %v3576 = vld [vmem:[%s3 + $0x128] sm:$0xff]
  %v3577 = vld [vmem:[%s3 + $0x130] sm:$0xff]
  %v3578 = vld [vmem:[%s3 + $0x138] sm:$0xff]
  %v3579 = vld [vmem:[%s3 + $0x140] sm:$0xff]
  %v3580 = vld [vmem:[%s3 + $0x148] sm:$0xff]
  %v3581 = vld [vmem:[%s3 + $0x150] sm:$0xff]
  %v3582 = vld [vmem:[%s3 + $0x158] sm:$0xff]
  %v3583 = vld [vmem:[%s3 + $0x160] sm:$0xff]
  %v3584 = vld [vmem:[%s3 + $0x168] sm:$0xff]
  %v3585 = vld [vmem:[%s3 + $0x170] sm:$0xff]
  %v3586 = vld [vmem:[%s3 + $0x178] sm:$0xff]
  %v3587 = vld [vmem:[%s3 + $0x180] sm:$0xff]
  %v3588 = vld [vmem:[%s3 + $0x188] sm:$0xff]
  %v3589 = vld [vmem:[%s3 + $0x190] sm:$0xff]
  %v3590 = vld [vmem:[%s3 + $0x198] sm:$0xff]
  %v3591 = vld [vmem:[%s3 + $0x1a0] sm:$0xff]
  %v3592 = vld [vmem:[%s3 + $0x1a8] sm:$0xff]
  %v3593 = vld [vmem:[%s3 + $0x1b0] sm:$0xff]
  %v3594 = vld [vmem:[%s3 + $0x1b8] sm:$0xff]
  %v3595 = vld [vmem:[%s3 + $0x1c0] sm:$0xff]
  %v3596 = vld [vmem:[%s3 + $0x1c8] sm:$0xff]
  %v3597 = vld [vmem:[%s3 + $0x1d0] sm:$0xff]
  %v3598 = vld [vmem:[%s3 + $0x1d8] sm:$0xff]
  %v3599 = vld [vmem:[%s3 + $0x1e0] sm:$0xff]
  %v3600 = vld [vmem:[%s3 + $0x1e8] sm:$0xff]
  %v3601 = vld [vmem:[%s3 + $0x1f0] sm:$0xff]
  %v3602 = vld [vmem:[%s3 + $0x1f8] sm:$0xff]
  %3603 = vmatpush.msra.mxu0 %v3599
  %3604 = vmatpush.msra.mxu0 %v3595
  %3605 = vmatpush.msra.mxu0 %v3591
  %3606 = vmatpush.msra.mxu0 %v3587
  %3607 = vmatpush.msra.mxu0 %v3583
  %3608 = vmatpush.msra.mxu0 %v3579
  %3609 = vmatpush.msra.mxu0 %v3575
  %3610 = vmatpush.msra.mxu0 %v3571
  %3611 = vmatpush.msra.mxu0 %v3567
  %3612 = vmatpush.msra.mxu0 %v3563
  %3613 = vmatpush.msra.mxu0 %v3559
  %3614 = vmatpush.msra.mxu0 %v3555
  %3615 = vmatpush.msra.mxu0 %v3551
  %3616 = vmatpush.msra.mxu0 %v3547
  %3617 = vmatpush.msra.mxu0 %v3543
  %3618 = vmatpush.msra.mxu0 %v3539
  %3619 = vmatmul.f32.gmra.mxu0 %v3538
  %v3620 = vpop.f32.mrf.mxu0
  %v3621 = vadd.f32 0.0, %v3620
  %3622 = vdwg.mxu0
  %3623 = vmatpush.msra.mxu0 %v3600
  %3624 = vmatpush.msra.mxu0 %v3596
  %3625 = vmatpush.msra.mxu0 %v3592
  %3626 = vmatpush.msra.mxu0 %v3588
  %3627 = vmatpush.msra.mxu0 %v3584
  %3628 = vmatpush.msra.mxu0 %v3580
  %3629 = vmatpush.msra.mxu0 %v3576
  %3630 = vmatpush.msra.mxu0 %v3572
  %3631 = vmatpush.msra.mxu0 %v3568
  %3632 = vmatpush.msra.mxu0 %v3564
  %3633 = vmatpush.msra.mxu0 %v3560
  %3634 = vmatpush.msra.mxu0 %v3556
  %3635 = vmatpush.msra.mxu0 %v3552
  %3636 = vmatpush.msra.mxu0 %v3548
  %3637 = vmatpush.msra.mxu0 %v3544
  %3638 = vmatpush.msra.mxu0 %v3540
  %3639 = vmatmul.f32.gmra.mxu0 %v3538
  %v3640 = vpop.f32.mrf.mxu0
  %v3641 = vadd.f32 0.0, %v3640
  %3642 = vdwg.mxu0
  %3643 = vmatpush.msra.mxu0 %v3601
  %3644 = vmatpush.msra.mxu0 %v3597
  %3645 = vmatpush.msra.mxu0 %v3593
  %3646 = vmatpush.msra.mxu0 %v3589
  %3647 = vmatpush.msra.mxu0 %v3585
  %3648 = vmatpush.msra.mxu0 %v3581
  %3649 = vmatpush.msra.mxu0 %v3577
  %3650 = vmatpush.msra.mxu0 %v3573
  %3651 = vmatpush.msra.mxu0 %v3569
  %3652 = vmatpush.msra.mxu0 %v3565
  %3653 = vmatpush.msra.mxu0 %v3561
  %3654 = vmatpush.msra.mxu0 %v3557
  %3655 = vmatpush.msra.mxu0 %v3553
  %3656 = vmatpush.msra.mxu0 %v3549
  %3657 = vmatpush.msra.mxu0 %v3545
  %3658 = vmatpush.msra.mxu0 %v3541
  %3659 = vmatmul.f32.gmra.mxu0 %v3538
  %v3660 = vpop.f32.mrf.mxu0
  %v3661 = vadd.f32 0.0, %v3660
  %3662 = vdwg.mxu0
  %3663 = vmatpush.msra.mxu0 %v3602
  %3664 = vmatpush.msra.mxu0 %v3598
  %3665 = vmatpush.msra.mxu0 %v3594
  %3666 = vmatpush.msra.mxu0 %v3590
  %3667 = vmatpush.msra.mxu0 %v3586
  %3668 = vmatpush.msra.mxu0 %v3582
  %3669 = vmatpush.msra.mxu0 %v3578
  %3670 = vmatpush.msra.mxu0 %v3574
  %3671 = vmatpush.msra.mxu0 %v3570
  %3672 = vmatpush.msra.mxu0 %v3566
  %3673 = vmatpush.msra.mxu0 %v3562
  %3674 = vmatpush.msra.mxu0 %v3558
  %3675 = vmatpush.msra.mxu0 %v3554
  %3676 = vmatpush.msra.mxu0 %v3550
  %3677 = vmatpush.msra.mxu0 %v3546
  %3678 = vmatpush.msra.mxu0 %v3542
  %3679 = vmatmul.f32.gmra.mxu0 %v3538
  %v3680 = vpop.f32.mrf.mxu0
  %v3681 = vadd.f32 0.0, %v3680
  %3682 = vdwg.mxu0
  %v3687 = vrot.slane %v3641, 6
  %v3688 = vrot.slane %v3661, 4
  %v3689 = vrot.slane %v3681, 2
  %v3690 = vsel %vm180, %v3621, %v3687
  %v3691 = vsel %vm182, %v3688, %v3689
  %v3692 = vsel %vm184, %v3690, %v3691
  %v3694 = vadd.f32 %v3537, %v3692
  %v3695 = vxor.u32 %v3694, 2147483648
  %v3696 = vmul.f32 %v3695, 1.442695
  %v3697 = vpow.pop %v3696
  %v3698 = vadd.f32 %v3697, 1.0
  %v3699 = vrcp.pop %v3698
  %v3700 = vmul.f32 %v3698, %v3699
  %v3701 = vsub.f32 1.0, %v3700
  %v3702 = vmul.f32 %v3699, %v3701
  %v3703 = vadd.f32 %v3699, %v3702
  %vm3704 = vweird.f32 %v3698
  %vm3705 = vweird.f32 %v3699
  %vm3706 = vmor %vm3704, %vm3705
  %v3707 = vsel %vm3706, %v3699, %v3703
  %v3708 = vand.u32 2147483647, %v3698
  %vm3709 = vcmp.eq.f32.partialorder %v3708, 8.507059e+37
  %v3710 = vand.u32 %v3698, 2147483648
  %v3711 = vor.u32 1.1754944e-38, %v3710
  %v3712 = vsel %vm3709, %v3711, %v3707
  %v3713 = vmul.f32 1.0, %v3712
  %v3715 = vrot.slane %v3694, 2
  %v3717 = vxor.u32 %v3715, 2147483648
  %v3718 = vmul.f32 %v3717, 1.442695
  %v3719 = vpow.pop %v3718
  %v3720 = vadd.f32 %v3719, 1.0
  %v3721 = vrcp.pop %v3720
  %v3722 = vmul.f32 %v3720, %v3721
  %v3723 = vsub.f32 1.0, %v3722
  %v3724 = vmul.f32 %v3721, %v3723
  %v3725 = vadd.f32 %v3721, %v3724
  %vm3726 = vweird.f32 %v3720
  %vm3727 = vweird.f32 %v3721
  %vm3728 = vmor %vm3726, %vm3727
  %v3729 = vsel %vm3728, %v3721, %v3725
  %v3730 = vand.u32 2147483647, %v3720
  %vm3731 = vcmp.eq.f32.partialorder %v3730, 8.507059e+37
  %v3732 = vand.u32 %v3720, 2147483648
  %v3733 = vor.u32 1.1754944e-38, %v3732
  %v3734 = vsel %vm3731, %v3733, %v3729
  %v3735 = vmul.f32 1.0, %v3734
  %v3736 = vrot.slane %v3694, 4
  %v3738 = vtanh.pop %v3736
  %v3739 = vrot.slane %v3694, 6
  %v3741 = vxor.u32 %v3739, 2147483648
  %v3742 = vmul.f32 %v3741, 1.442695
  %v3743 = vpow.pop %v3742
  %v3744 = vadd.f32 %v3743, 1.0
  %v3745 = vrcp.pop %v3744
  %v3746 = vmul.f32 %v3744, %v3745
  %v3747 = vsub.f32 1.0, %v3746
  %v3748 = vmul.f32 %v3745, %v3747
  %v3749 = vadd.f32 %v3745, %v3748
  %vm3750 = vweird.f32 %v3744
  %vm3751 = vweird.f32 %v3745
  %vm3752 = vmor %vm3750, %vm3751
  %v3753 = vsel %vm3752, %v3745, %v3749
  %v3754 = vand.u32 2147483647, %v3744
  %vm3755 = vcmp.eq.f32.partialorder %v3754, 8.507059e+37
  %v3756 = vand.u32 %v3744, 2147483648
  %v3757 = vor.u32 1.1754944e-38, %v3756
  %v3758 = vsel %vm3755, %v3757, %v3753
  %v3759 = vmul.f32 1.0, %v3758
  %v3760 = vld [vmem:[#allocation5] sm:$0x3]
  %v3761 = vmul.f32 %v3735, %v3760
  %v3762 = vmul.f32 %v3713, %v3738
  %v3763 = vadd.f32 %v3761, %v3762
  %v3764 = vtanh.pop %v3763
  %v3765 = vmul.f32 %v3759, %v3764
  %3766 = vst [vmem:[#allocation5] sm:$0x3] %v3763
  %3767 = vst [vmem:[#allocation4] sm:$0x3] %v3765
  %s3768 = scalar_lea.vmem %s5, 14
  %3769 = vst [vmem:[%s3768] sm:$0x3] %v3765
  // Predicated region
  $region22: #{char_ner_forward.2} parent=0 // pred_check
    _
  $region23: #{char_ner_forward.2} parent=0 // pred_check_branch
    %3771 = sbr.rel (0) target = $region25
  $region24: #{char_ner_forward.2} parent=0 // pred_region
    _
  $region25: #{char_ner_forward.2} parent=0 // pred_fallthru
    _
  // Predicated region
  $region26: #{char_ner_forward.2} parent=0 // pred_check
    _
  $region27: #{char_ner_forward.2} parent=0 // pred_check_branch
    %3773 = sbr.rel (0) target = $region29
  $region28: #{char_ner_forward.2} parent=0 // pred_region
    _
  $region29: #{char_ner_forward.2} parent=0 // pred_fallthru
    _
  // Predicated region
  $region30: #{char_ner_forward.2} parent=0 // pred_check
    _
  $region31: #{char_ner_forward.2} parent=0 // pred_check_branch
    %3775 = sbr.rel (0) target = $region33
  $region32: #{char_ner_forward.2} parent=0 // pred_region
    _
  $region33: #{char_ner_forward.2} parent=0 // pred_fallthru
    _
  // Predicated region
  $region34: #{char_ner_forward.2} parent=0 // pred_check
    _
  $region35: #{char_ner_forward.2} parent=0 // pred_check_branch
    %3777 = sbr.rel (0) target = $region37
  $region36: #{char_ner_forward.2} parent=0 // pred_region
    _
  $region37: #{char_ner_forward.2} parent=0 // pred_fallthru
    _

</llo_original>
